<compile_context>
chip_gen: v5e
topology: v5e:2x2
jax: 0.10.0
libtpu: 0.0.40
codegen_flags: <defaults>
</compile_context>

<pallas_src>
import functools

import jax
import jax.numpy as jnp
from jax.experimental import pallas as pl
from jax.experimental.pallas import tpu as pltpu

EPS = 1e-5
_VMEM_LIMIT = 48 * 1024 * 1024          # <= ~48 MiB per the v7x (64 MiB VMEM) guidance
_FUSED_VMEM_BUDGET = 12 * 1024 * 1024   # fused single-kernel path only below this


# ======================= fused single-kernel path (small shapes) ==============
def _fused_residual_kernel(x_ref, wcat_ref, w2_ref, w3_ref,
                           gbs_ref, gb1_ref, gb2_ref, gb3_ref, o_ref,
                           *, N, H, W, Cmid, Cout):
    """Whole residual block in one kernel; exact BN stats computed in-kernel."""
    M = N * H * W
    HW = H * W
    inv_m = 1.0 / M

    def bn_apply(v, gb_ref):
        # exact, mean-centered batch statistics in f32 (no sum-of-squares trick)
        mean = jnp.sum(v, axis=0, keepdims=True) * inv_m
        c = v - mean
        var = jnp.sum(c * c, axis=0, keepdims=True) * inv_m
        scale = gb_ref[0:1, :] * jax.lax.rsqrt(var + EPS)
        return c * scale + gb_ref[1:2, :]

    # skip + conv1 as ONE fused 1x1 matmul (bf16 operands, f32 accumulation)
    y = jnp.dot(x_ref[...], wcat_ref[...], preferred_element_type=jnp.float32)
    skip = bn_apply(y[:, :Cout], gbs_ref)                      # BN_skip
    h = jnp.maximum(bn_apply(y[:, Cout:], gb1_ref), 0.0)       # BN1 + ReLU (f32)

    # 3x3 conv: nine accumulated shifted-view matmuls per image (no im2col buffer)
    y2_parts = []
    for n in range(N):                                         # N static & small here
        hn = h[n * HW:(n + 1) * HW, :].reshape(H, W, Cmid)
        zr = jnp.zeros((1, W, Cmid), hn.dtype)
        hp = jnp.concatenate([zr, hn, zr], axis=0)             # (H+2, W, C)
        zc = jnp.zeros((H + 2, 1, Cmid), hn.dtype)
        hp = jnp.concatenate([zc, hp, zc], axis=1)             # (H+2, W+2, C)
        acc = jnp.zeros((HW, Cmid), jnp.float32)
        for t in range(9):
            ky, kx = t // 3, t % 3
            patch = hp[ky:ky + H, kx:kx + W, :].reshape(HW, Cmid).astype(jnp.bfloat16)
            acc = acc + jnp.dot(patch, w2_ref[t],
                                preferred_element_type=jnp.float32)
        y2_parts.append(acc)
    y2 = y2_parts[0] if N == 1 else jnp.concatenate(y2_parts, axis=0)   # (M, Cmid)

    h2 = jnp.maximum(bn_apply(y2, gb2_ref), 0.0).astype(jnp.bfloat16)   # BN2 + ReLU
    y3 = jnp.dot(h2, w3_ref[...], preferred_element_type=jnp.float32)   # conv3 1x1
    # BN3 + residual add; the module's trailing self.relu(out) result is discarded,
    # so there is intentionally no final ReLU.
    o_ref[...] = bn_apply(y3, gb3_ref) + skip


def _residual_forward_fused(x, p):
    N, H, W, Cin = x.shape
    Cmid = p["w1"].shape[1]
    Cout = p["w3"].shape[1]
    M = N * H * W
    Ccat = Cout + Cmid

    x2d = x.reshape(M, Cin).astype(jnp.bfloat16)
    w_cat = jnp.concatenate([p["w_skip"], p["w1"]], axis=1).astype(jnp.bfloat16)
    w2 = p["w2"].reshape(9, Cmid, Cmid).astype(jnp.bfloat16)
    w3 = p["w3"].astype(jnp.bfloat16)
    gbs = jnp.concatenate([p["gs"], p["bs"]], axis=0).astype(jnp.float32)
    gb1 = jnp.concatenate([p["g1"], p["b1"]], axis=0).astype(jnp.float32)
    gb2 = jnp.concatenate([p["g2"], p["b2"]], axis=0).astype(jnp.float32)
    gb3 = jnp.concatenate([p["g3"], p["b3"]], axis=0).astype(jnp.float32)

    kern = functools.partial(_fused_residual_kernel,
                             N=N, H=H, W=W, Cmid=Cmid, Cout=Cout)
    out2d = pl.pallas_call(
        kern,
        out_shape=jax.ShapeDtypeStruct((M, Cout), jnp.float32),
        compiler_params=pltpu.CompilerParams(vmem_limit_bytes=_VMEM_LIMIT),
        cost_estimate=pl.CostEstimate(
            flops=2 * M * (Cin * Ccat + 9 * Cmid * Cmid + Cmid * Cout) + 24 * M * Cmid,
            transcendentals=2 * (Cout + Cmid),
            bytes_accessed=2 * M * Cin + 4 * M * Cout
            + 2 * (Cin * Ccat + 9 * Cmid * Cmid + Cmid * Cout)),
    )(x2d, w_cat, w2, w3, gbs, gb1, gb2, gb3)
    return out2d.reshape(N, H, W, Cout)


def _fused_bytes_estimate(N, H, W, Cin, Cmid, Cout):
    """Rough upper bound on live VMEM values inside the fused kernel."""
    M = N * H * W
    per_row = 4 * (Cin + 2 * (Cout + Cmid) + 8 * Cmid + 3 * Cout)
    weights = 4 * (Cin * (Cout + Cmid) + 9 * Cmid * Cmid + Cmid * Cout)
    return M * per_row + weights + 64 * 1024


# ========================= tiled multi-pass path (large shapes) ===============
def _k1_fused_1x1(x_ref, w_ref, ycat_ref, st_ref):
    """Fused skip+conv1 1x1 matmul; one contiguous bf16 store + f32 partial stats."""
    y = jnp.dot(x_ref[...], w_ref[...], preferred_element_type=jnp.float32)
    ycat_ref[...] = y.astype(ycat_ref.dtype)                  # single lane-dense store
    inv = 1.0 / y.shape[0]
    mean = jnp.sum(y, axis=0, keepdims=True) * inv            # tile mean (f32)
    c = y - mean
    st_ref[0] = jnp.concatenate(
        [mean, jnp.sum(c * c, axis=0, keepdims=True)], axis=0)  # (2, Ccat): mean, M2


def _k2_conv3x3(y1_ref, bn1_ref, w2_ref, y2_ref, st_ref):
    """BN1-apply + ReLU fused with the 3x3 conv as 9 accumulated shifted matmuls."""
    _, H, W, C = y1_ref.shape
    HW = H * W
    scale = bn1_ref[0:1, :]
    shift = bn1_ref[1:2, :]
    h = jnp.maximum(y1_ref[0].astype(jnp.float32) * scale + shift, 0.0)  # (H,W,C) f32
    # zero-pad 1 pixel in H and W on the register value (only the halo materializes)
    zr = jnp.zeros((1, W, C), h.dtype)
    hp = jnp.concatenate([zr, h, zr], axis=0)                  # (H+2, W, C)
    zc = jnp.zeros((H + 2, 1, C), h.dtype)
    hp = jnp.concatenate([zc, hp, zc], axis=1)                 # (H+2, W+2, C)
    acc = jnp.zeros((HW, C), jnp.float32)
    for t in range(9):                                         # 9 taps, same vmatmul count
        ky, kx = t // 3, t % 3
        patch = hp[ky:ky + H, kx:kx + W, :].reshape(HW, C).astype(jnp.bfloat16)
        acc = acc + jnp.dot(patch, w2_ref[t], preferred_element_type=jnp.float32)
    y2_ref[0] = acc.reshape(H, W, C).astype(y2_ref.dtype)      # bf16 store
    inv = 1.0 / HW
    mean = jnp.sum(acc, axis=0, keepdims=True) * inv
    c = acc - mean
    st_ref[0] = jnp.concatenate(
        [mean, jnp.sum(c * c, axis=0, keepdims=True)], axis=0)


def _k3_conv3(y2_ref, bn2_ref, w3_ref, y3_ref, st_ref):
    """BN2-apply + ReLU fused with the conv3 1x1 matmul + f32 partial stats."""
    scale = bn2_ref[0:1, :]
    shift = bn2_ref[1:2, :]
    h = jnp.maximum(y2_ref[...].astype(jnp.float32) * scale + shift,
                    0.0).astype(jnp.bfloat16)
    y3 = jnp.dot(h, w3_ref[...], preferred_element_type=jnp.float32)
    y3_ref[...] = y3.astype(y3_ref.dtype)                      # bf16 store
    inv = 1.0 / y3.shape[0]
    mean = jnp.sum(y3, axis=0, keepdims=True) * inv
    c = y3 - mean
    st_ref[0] = jnp.concatenate(
        [mean, jnp.sum(c * c, axis=0, keepdims=True)], axis=0)


def _k4_bn_add(y3_ref, ys_ref, p_ref, o_ref):
    """BN3-apply + BN_skip-apply + residual add, lane-dense (rows, W*Cout).

    No final ReLU: the PyTorch module discards the result of its trailing relu.
    """
    o_ref[...] = (y3_ref[...].astype(jnp.float32) * p_ref[0:1, :] + p_ref[1:2, :]
                  + ys_ref[...].astype(jnp.float32) * p_ref[2:3, :] + p_ref[3:4, :])


def _pick_row_tile(n_rows, bytes_per_row, target_bytes=2 << 20, cap=1024):
    """Largest divisor of n_rows that is <= cap and ~target bytes per operand.

    Prefers multiples of 8 (sublane alignment).  No whole-array fallback: the
    result is always bounded by `cap` and the byte budget.
    """
    limit = min(cap, n_rows, max(1, target_bytes // max(1, bytes_per_row)))
    best, best8 = 1, 0
    d = 1
    while d * d <= n_rows:
        if n_rows % d == 0:
            for t in (d, n_rows // d):
                if t <= limit:
                    best = max(best, t)
                    if t % 8 == 0:
                        best8 = max(best8, t)
        d += 1
    # TODO(synk): for row counts with no usable divisor (e.g. prime), pad the row
    #             dim and mask the remainder tile instead of shrinking the tile.
    return best8 if best8 else best


def _combine_stats(st, tile_count, total):
    """Combine per-tile (mean, centered-M2) partials (equal counts) exactly."""
    means = st[:, 0, :]
    m2s = st[:, 1, :]
    mean = jnp.mean(means, axis=0)
    var = (jnp.sum(m2s, axis=0)
           + tile_count * jnp.sum(jnp.square(means - mean), axis=0)) / total
    return mean, jnp.maximum(var, 0.0)


def _bn_scale_shift(gamma, beta, mean, var):
    scale = gamma.reshape(-1) * jax.lax.rsqrt(var + EPS)
    shift = beta.reshape(-1) - mean * scale
    return jnp.stack([scale, shift], axis=0)                   # (2, C) f32


def _residual_forward_tiled(x, p):
    N, H, W, Cin = x.shape
    Cmid = p["w1"].shape[1]
    Cout = p["w3"].shape[1]
    M = N * H * W
    Ccat = Cout + Cmid

    x2d = x.reshape(M, Cin).astype(jnp.bfloat16)
    w_cat = jnp.concatenate([p["w_skip"], p["w1"]], axis=1).astype(jnp.bfloat16)
    w2 = p["w2"].reshape(9, Cmid, Cmid).astype(jnp.bfloat16)
    w3 = p["w3"].astype(jnp.bfloat16)

    cparams = pltpu.CompilerParams(dimension_semantics=("parallel",),
                                   vmem_limit_bytes=_VMEM_LIMIT)

    # ---- pass 1: fused skip+conv1 matmul, one bf16 output + partial stats ----
    TM1 = _pick_row_tile(M, 2 * max(Cin, Ccat))
    nt1 = M // TM1
    y_cat, st1 = pl.pallas_call(
        _k1_fused_1x1,
        grid=(nt1,),
        in_specs=[pl.BlockSpec((TM1, Cin), lambda i: (i, 0)),
                  pl.BlockSpec((Cin, Ccat), lambda i: (0, 0))],
        out_specs=[pl.BlockSpec((TM1, Ccat), lambda i: (i, 0)),
                   pl.BlockSpec((1, 2, Ccat), lambda i: (i, 0, 0))],
        out_shape=(jax.ShapeDtypeStruct((M, Ccat), jnp.bfloat16),
                   jax.ShapeDtypeStruct((nt1, 2, Ccat), jnp.float32)),
        compiler_params=cparams,
        cost_estimate=pl.CostEstimate(
            flops=2 * M * Cin * Ccat + 4 * M * Ccat, transcendentals=0,
            bytes_accessed=2 * M * (Cin + Ccat) + 2 * Cin * Ccat),
    )(x2d, w_cat)

    mean_s, var_s = _combine_stats(st1[:, :, :Cout], TM1, M)
    mean1, var1 = _combine_stats(st1[:, :, Cout:], TM1, M)
    bn_skip = _bn_scale_shift(p["gs"], p["bs"], mean_s, var_s)   # (2, Cout)
    bn1 = _bn_scale_shift(p["g1"], p["b1"], mean1, var1)         # (2, Cmid)

    y_skip = y_cat[:, :Cout]                                     # wrapper-side views
    y1_img = y_cat[:, Cout:].reshape(N, H, W, Cmid)

    # ---- pass 2: BN1+ReLU fused with 3x3 conv (9 accumulated shifted matmuls) ----
    # TODO(synk): halo row-tiling for very large H*W or tiny N (v7x grid balance).
    y2_img, st2 = pl.pallas_call(
        _k2_conv3x3,
        grid=(N,),
        in_specs=[pl.BlockSpec((1, H, W, Cmid), lambda n: (n, 0, 0, 0)),
                  pl.BlockSpec((2, Cmid), lambda n: (0, 0)),
                  pl.BlockSpec((9, Cmid, Cmid), lambda n: (0, 0, 0))],
        out_specs=[pl.BlockSpec((1, H, W, Cmid), lambda n: (n, 0, 0, 0)),
                   pl.BlockSpec((1, 2, Cmid), lambda n: (n, 0, 0))],
        out_shape=(jax.ShapeDtypeStruct((N, H, W, Cmid), jnp.bfloat16),
                   jax.ShapeDtypeStruct((N, 2, Cmid), jnp.float32)),
        compiler_params=cparams,
        cost_estimate=pl.CostEstimate(
            flops=2 * M * 9 * Cmid * Cmid + 8 * M * Cmid, transcendentals=0,
            bytes_accessed=4 * M * Cmid + 2 * 9 * Cmid * Cmid),
    )(y1_img, bn1, w2)

    mean2, var2 = _combine_stats(st2, H * W, M)
    bn2 = _bn_scale_shift(p["g2"], p["b2"], mean2, var2)         # (2, Cmid)

    # ---- pass 3: BN2+ReLU fused with conv3 matmul + partial stats ------------
    y2_flat = y2_img.reshape(M, Cmid)
    TM3 = _pick_row_tile(M, 2 * max(Cmid, Cout))
    nt3 = M // TM3
    y3, st3 = pl.pallas_call(
        _k3_conv3,
        grid=(nt3,),
        in_specs=[pl.BlockSpec((TM3, Cmid), lambda i: (i, 0)),
                  pl.BlockSpec((2, Cmid), lambda i: (0, 0)),
                  pl.BlockSpec((Cmid, Cout), lambda i: (0, 0))],
        out_specs=[pl.BlockSpec((TM3, Cout), lambda i: (i, 0)),
                   pl.BlockSpec((1, 2, Cout), lambda i: (i, 0, 0))],
        out_shape=(jax.ShapeDtypeStruct((M, Cout), jnp.bfloat16),
                   jax.ShapeDtypeStruct((nt3, 2, Cout), jnp.float32)),
        compiler_params=cparams,
        cost_estimate=pl.CostEstimate(
            flops=2 * M * Cmid * Cout + 6 * M * Cmid, transcendentals=0,
            bytes_accessed=2 * M * (Cmid + Cout) + 2 * Cmid * Cout),
    )(y2_flat, bn2, w3)

    mean3, var3 = _combine_stats(st3, TM3, M)
    bn3 = _bn_scale_shift(p["g3"], p["b3"], mean3, var3)         # (2, Cout)

    # ---- pass 4: BN3 + BN_skip apply + residual add (lane-dense layout) ------
    NH, WC = N * H, W * Cout
    TR = _pick_row_tile(NH, 4 * WC)
    pcat = jnp.concatenate([jnp.tile(bn3, (1, W)), jnp.tile(bn_skip, (1, W))],
                           axis=0)                               # (4, W*Cout)
    out_w = pl.pallas_call(
        _k4_bn_add,
        grid=(NH // TR,),
        in_specs=[pl.BlockSpec((TR, WC), lambda i: (i, 0)),
                  pl.BlockSpec((TR, WC), lambda i: (i, 0)),
                  pl.BlockSpec((4, WC), lambda i: (0, 0))],
        out_specs=pl.BlockSpec((TR, WC), lambda i: (i, 0)),
        out_shape=jax.ShapeDtypeStruct((NH, WC), jnp.float32),
        compiler_params=cparams,
        cost_estimate=pl.CostEstimate(
            flops=4 * M * Cout, transcendentals=0,
            bytes_accessed=2 * M * Cout * 2 + 4 * M * Cout + 4 * 4 * WC),
    )(y3.reshape(NH, WC), y_skip.reshape(NH, WC), pcat)

    return out_w.reshape(N, H, W, Cout)


# ================================ entry point =================================
def residual_forward(x, p, *, force_tiled=False):
    """x: (N, H, W, Cin) float32 NHWC.  Returns (N, H, W, Cout) float32."""
    N, H, W, Cin = x.shape
    Cmid = p["w1"].shape[1]
    Cout = p["w3"].shape[1]
    if (not force_tiled) and N <= 8 and \
            _fused_bytes_estimate(N, H, W, Cin, Cmid, Cout) <= _FUSED_VMEM_BUDGET:
        return _residual_forward_fused(x, p)
    return _residual_forward_tiled(x, p)


# ------------------------- pure-JAX references --------------------------------
def _bn_ref(y, g, b):
    mean = jnp.mean(y, axis=(0, 1, 2), keepdims=True)
    var = jnp.mean(jnp.square(y - mean), axis=(0, 1, 2), keepdims=True)
    return (y - mean) * (g.reshape(1, 1, 1, -1) * jax.lax.rsqrt(var + EPS)) \
        + b.reshape(1, 1, 1, -1)


def residual_ref(x, p, matmul_dtype=jnp.float32):
    """Reference. matmul_dtype=bf16 mirrors the kernel's MXU precision policy."""
    def mm(a, w):
        return jnp.einsum("nhwc,co->nhwo", a.astype(matmul_dtype),
                          w.astype(matmul_dtype),
                          preferred_element_type=jnp.float32)

    skip = _bn_ref(mm(x, p["w_skip"]), p["gs"], p["bs"])
    h = jax.nn.relu(_bn_ref(mm(x, p["w1"]), p["g1"], p["b1"]))
    hc = jax.lax.conv_general_dilated(
        h.astype(matmul_dtype), p["w2"].astype(matmul_dtype), (1, 1), "SAME",
        dimension_numbers=("NHWC", "HWIO", "NHWC"),
        preferred_element_type=jnp.float32)
    h = jax.nn.relu(_bn_ref(hc, p["g2"], p["b2"]))
    out = _bn_ref(mm(h, p["w3"]), p["g3"], p["b3"])
    return out + skip   # trailing self.relu(out) is discarded in PyTorch


def init_params(key, inp_dim, out_dim):
    out_dim_half = max(1, out_dim // 2)
    ks = jax.random.split(key, 12)
    return {
        "w_skip": jax.random.normal(ks[0], (inp_dim, out_dim), jnp.float32) * 0.2,
        "w1":     jax.random.normal(ks[1], (inp_dim, out_dim_half), jnp.float32) * 0.2,
        "w2":     jax.random.normal(ks[2], (3, 3, out_dim_half, out_dim_half), jnp.float32) * 0.1,
        "w3":     jax.random.normal(ks[3], (out_dim_half, out_dim), jnp.float32) * 0.2,
        "gs": 1.0 + 0.1 * jax.random.normal(ks[4], (1, out_dim), jnp.float32),
        "bs": 0.1 * jax.random.normal(ks[5], (1, out_dim), jnp.float32),
        "g1": 1.0 + 0.1 * jax.random.normal(ks[6], (1, out_dim_half), jnp.float32),
        "b1": 0.1 * jax.random.normal(ks[7], (1, out_dim_half), jnp.float32),
        "g2": 1.0 + 0.1 * jax.random.normal(ks[8], (1, out_dim_half), jnp.float32),
        "b2": 0.1 * jax.random.normal(ks[9], (1, out_dim_half), jnp.float32),
        "g3": 1.0 + 0.1 * jax.random.normal(ks[10], (1, out_dim), jnp.float32),
        "b3": 0.1 * jax.random.normal(ks[11], (1, out_dim), jnp.float32),
    }


if __name__ == "__main__":
    N, H, W = 2, 16, 16
    inp_dim, out_dim = 4, 8

    key = jax.random.PRNGKey(0)
    kx, kp = jax.random.split(key)
    # PyTorch input would be NCHW (2, 4, 16, 16); kernel uses NHWC (2, 16, 16, 4).
    x = jax.random.normal(kx, (N, H, W, inp_dim), jnp.float32)
    params = init_params(kp, inp_dim, out_dim)

    fwd = jax.jit(residual_forward)                          # fused path at this size
    fwd_tiled = jax.jit(functools.partial(residual_forward, force_tiled=True))

    out = jax.block_until_ready(fwd(x, params))
    out_tiled = jax.block_until_ready(fwd_tiled(x, params))

    ref_mirror = residual_ref(x, params, jnp.bfloat16)       # same precision policy
    ref_f32 = residual_ref(x, params, jnp.float32)           # full-f32 semantics

    assert out.shape == (N, H, W, out_dim)
    assert jnp.allclose(out, ref_mirror, rtol=5e-3, atol=5e-3), \
        f"fused vs mirror max abs err = {jnp.max(jnp.abs(out - ref_mirror))}"
    assert jnp.allclose(out, ref_f32, rtol=5e-2, atol=5e-2), \
        f"fused vs f32 max abs err = {jnp.max(jnp.abs(out - ref_f32))}"

    assert out_tiled.shape == (N, H, W, out_dim)
    # tiled path stores bf16 intermediates -> compare against the f32 reference
    # with the (documented) looser tolerance.
    assert jnp.allclose(out_tiled, ref_f32, rtol=5e-2, atol=5e-2), \
        f"tiled vs f32 max abs err = {jnp.max(jnp.abs(out_tiled - ref_f32))}"

    print("KERNEL_OK")
</pallas_src>

<mosaic_0001>
module attributes {stable_mosaic.version = 11 : i64} {
  func.func @_fused_residual_kernel(%arg0: memref<512x4xbf16, #tpu.memory_space<vmem>>, %arg1: memref<4x12xbf16, #tpu.memory_space<vmem>>, %arg2: memref<9x4x4xbf16, #tpu.memory_space<vmem>>, %arg3: memref<4x8xbf16, #tpu.memory_space<vmem>>, %arg4: memref<2x8xf32, #tpu.memory_space<vmem>>, %arg5: memref<2x4xf32, #tpu.memory_space<vmem>>, %arg6: memref<2x4xf32, #tpu.memory_space<vmem>>, %arg7: memref<2x8xf32, #tpu.memory_space<vmem>>, %arg8: memref<512x8xf32, #tpu.memory_space<vmem>>) attributes {dimension_semantics = [], scalar_prefetch = 0 : i64, scratch_operands = 0 : i64, tpu.core_type = #tpu.core_type<tc>} {
    %c0 = arith.constant 0 : index
    %c0_0 = arith.constant 0 : index
    %0 = vector.load %arg0[%c0, %c0_0] : memref<512x4xbf16, #tpu.memory_space<vmem>>, vector<512x4xbf16>
    %c0_1 = arith.constant 0 : index
    %c0_2 = arith.constant 0 : index
    %1 = vector.load %arg1[%c0_1, %c0_2] : memref<4x12xbf16, #tpu.memory_space<vmem>>, vector<4x12xbf16>
    %cst = arith.constant dense<0.000000e+00> : vector<512x12xf32>
    %2 = tpu.matmul %0, %1, %cst {dimension_numbers = #tpu.dot_dimension_numbers<[1], [0], [0], [1], [0, 0, 1, 1], [], []>} : vector<512x4xbf16>, vector<4x12xbf16>, vector<512x12xf32> -> vector<512x12xf32>
    %3 = vector.extract_strided_slice %2 {offsets = [0, 0], sizes = [512, 8], strides = [1, 1]} : vector<512x12xf32> to vector<512x8xf32>
    %cst_3 = arith.constant dense<0.000000e+00> : vector<8xf32>
    %4 = vector.multi_reduction <add>, %3, %cst_3 [0] : vector<512x8xf32> to vector<8xf32>
    %5 = vector.shape_cast %4 : vector<8xf32> to vector<1x8xf32>
    %cst_4 = arith.constant 0.001953125 : f32
    %6 = vector.broadcast %cst_4 : f32 to vector<1x8xf32>
    %7 = arith.mulf %5, %6 : vector<1x8xf32>
    %8 = vector.broadcast %7 : vector<1x8xf32> to vector<512x8xf32>
    %9 = arith.subf %3, %8 : vector<512x8xf32>
    %10 = arith.mulf %9, %9 : vector<512x8xf32>
    %cst_5 = arith.constant dense<0.000000e+00> : vector<8xf32>
    %11 = vector.multi_reduction <add>, %10, %cst_5 [0] : vector<512x8xf32> to vector<8xf32>
    %12 = vector.shape_cast %11 : vector<8xf32> to vector<1x8xf32>
    %cst_6 = arith.constant 0.001953125 : f32
    %13 = vector.broadcast %cst_6 : f32 to vector<1x8xf32>
    %14 = arith.mulf %12, %13 : vector<1x8xf32>
    %c0_7 = arith.constant 0 : index
    %c0_8 = arith.constant 0 : index
    %15 = vector.load %arg4[%c0_7, %c0_8] : memref<2x8xf32, #tpu.memory_space<vmem>>, vector<1x8xf32>
    %cst_9 = arith.constant 9.99999974E-6 : f32
    %16 = vector.broadcast %cst_9 : f32 to vector<1x8xf32>
    %17 = arith.addf %14, %16 : vector<1x8xf32>
    %18 = math.rsqrt %17 : vector<1x8xf32>
    %19 = arith.mulf %15, %18 : vector<1x8xf32>
    %20 = vector.broadcast %19 : vector<1x8xf32> to vector<512x8xf32>
    %21 = arith.mulf %9, %20 : vector<512x8xf32>
    %c1 = arith.constant 1 : index
    %c0_10 = arith.constant 0 : index
    %22 = vector.load %arg4[%c1, %c0_10] : memref<2x8xf32, #tpu.memory_space<vmem>>, vector<1x8xf32>
    %23 = vector.broadcast %22 : vector<1x8xf32> to vector<512x8xf32>
    %24 = arith.addf %21, %23 : vector<512x8xf32>
    %25 = vector.extract_strided_slice %2 {offsets = [0, 8], sizes = [512, 4], strides = [1, 1]} : vector<512x12xf32> to vector<512x4xf32>
    %cst_11 = arith.constant dense<0.000000e+00> : vector<4xf32>
    %26 = vector.multi_reduction <add>, %25, %cst_11 [0] : vector<512x4xf32> to vector<4xf32>
    %27 = vector.shape_cast %26 : vector<4xf32> to vector<1x4xf32>
    %cst_12 = arith.constant 0.001953125 : f32
    %28 = vector.broadcast %cst_12 : f32 to vector<1x4xf32>
    %29 = arith.mulf %27, %28 : vector<1x4xf32>
    %30 = vector.broadcast %29 : vector<1x4xf32> to vector<512x4xf32>
    %31 = arith.subf %25, %30 : vector<512x4xf32>
    %32 = arith.mulf %31, %31 : vector<512x4xf32>
    %cst_13 = arith.constant dense<0.000000e+00> : vector<4xf32>
    %33 = vector.multi_reduction <add>, %32, %cst_13 [0] : vector<512x4xf32> to vector<4xf32>
    %34 = vector.shape_cast %33 : vector<4xf32> to vector<1x4xf32>
    %cst_14 = arith.constant 0.001953125 : f32
    %35 = vector.broadcast %cst_14 : f32 to vector<1x4xf32>
    %36 = arith.mulf %34, %35 : vector<1x4xf32>
    %c0_15 = arith.constant 0 : index
    %c0_16 = arith.constant 0 : index
    %37 = vector.load %arg5[%c0_15, %c0_16] : memref<2x4xf32, #tpu.memory_space<vmem>>, vector<1x4xf32>
    %cst_17 = arith.constant 9.99999974E-6 : f32
    %38 = vector.broadcast %cst_17 : f32 to vector<1x4xf32>
    %39 = arith.addf %36, %38 : vector<1x4xf32>
    %40 = math.rsqrt %39 : vector<1x4xf32>
    %41 = arith.mulf %37, %40 : vector<1x4xf32>
    %42 = vector.broadcast %41 : vector<1x4xf32> to vector<512x4xf32>
    %43 = arith.mulf %31, %42 : vector<512x4xf32>
    %c1_18 = arith.constant 1 : index
    %c0_19 = arith.constant 0 : index
    %44 = vector.load %arg5[%c1_18, %c0_19] : memref<2x4xf32, #tpu.memory_space<vmem>>, vector<1x4xf32>
    %45 = vector.broadcast %44 : vector<1x4xf32> to vector<512x4xf32>
    %46 = arith.addf %43, %45 : vector<512x4xf32>
    %cst_20 = arith.constant 0.000000e+00 : f32
    %47 = vector.broadcast %cst_20 : f32 to vector<512x4xf32>
    %48 = arith.maximumf %46, %47 : vector<512x4xf32>
    %49 = vector.extract_strided_slice %48 {offsets = [0, 0], sizes = [256, 4], strides = [1, 1]} : vector<512x4xf32> to vector<256x4xf32>
    %50 = vector.shape_cast %49 : vector<256x4xf32> to vector<16x16x4xf32>
    %cst_21 = arith.constant 0.000000e+00 : f32
    %51 = vector.broadcast %cst_21 : f32 to vector<1x16x4xf32>
    %52 = tpu.concatenate %51, %50, %51 in 0 : vector<1x16x4xf32>, vector<16x16x4xf32>, vector<1x16x4xf32> -> vector<18x16x4xf32>
    %cst_22 = arith.constant 0.000000e+00 : f32
    %53 = vector.broadcast %cst_22 : f32 to vector<18x1x4xf32>
    %54 = tpu.concatenate %53, %52, %53 in 1 : vector<18x1x4xf32>, vector<18x16x4xf32>, vector<18x1x4xf32> -> vector<18x18x4xf32>
    %cst_23 = arith.constant 0.000000e+00 : f32
    %55 = vector.broadcast %cst_23 : f32 to vector<256x4xf32>
    %56 = vector.extract_strided_slice %54 {offsets = [0, 0, 0], sizes = [16, 16, 4], strides = [1, 1, 1]} : vector<18x18x4xf32> to vector<16x16x4xf32>
    %57 = vector.shape_cast %56 : vector<16x16x4xf32> to vector<256x4xf32>
    %58 = arith.truncf %57 : vector<256x4xf32> to vector<256x4xbf16>
    %c0_24 = arith.constant 0 : index
    %c0_25 = arith.constant 0 : index
    %c0_26 = arith.constant 0 : index
    %59 = vector.load %arg2[%c0_24, %c0_25, %c0_26] : memref<9x4x4xbf16, #tpu.memory_space<vmem>>, vector<1x4x4xbf16>
    %60 = vector.shape_cast %59 : vector<1x4x4xbf16> to vector<4x4xbf16>
    %cst_27 = arith.constant dense<0.000000e+00> : vector<256x4xf32>
    %61 = tpu.matmul %58, %60, %cst_27 {dimension_numbers = #tpu.dot_dimension_numbers<[1], [0], [0], [1], [0, 0, 1, 1], [], []>} : vector<256x4xbf16>, vector<4x4xbf16>, vector<256x4xf32> -> vector<256x4xf32>
    %62 = arith.addf %55, %61 : vector<256x4xf32>
    %63 = vector.extract_strided_slice %54 {offsets = [0, 1, 0], sizes = [16, 16, 4], strides = [1, 1, 1]} : vector<18x18x4xf32> to vector<16x16x4xf32>
    %64 = vector.shape_cast %63 : vector<16x16x4xf32> to vector<256x4xf32>
    %65 = arith.truncf %64 : vector<256x4xf32> to vector<256x4xbf16>
    %c1_28 = arith.constant 1 : index
    %c0_29 = arith.constant 0 : index
    %c0_30 = arith.constant 0 : index
    %66 = vector.load %arg2[%c1_28, %c0_29, %c0_30] : memref<9x4x4xbf16, #tpu.memory_space<vmem>>, vector<1x4x4xbf16>
    %67 = vector.shape_cast %66 : vector<1x4x4xbf16> to vector<4x4xbf16>
    %cst_31 = arith.constant dense<0.000000e+00> : vector<256x4xf32>
    %68 = tpu.matmul %65, %67, %cst_31 {dimension_numbers = #tpu.dot_dimension_numbers<[1], [0], [0], [1], [0, 0, 1, 1], [], []>} : vector<256x4xbf16>, vector<4x4xbf16>, vector<256x4xf32> -> vector<256x4xf32>
    %69 = arith.addf %62, %68 : vector<256x4xf32>
    %70 = vector.extract_strided_slice %54 {offsets = [0, 2, 0], sizes = [16, 16, 4], strides = [1, 1, 1]} : vector<18x18x4xf32> to vector<16x16x4xf32>
    %71 = vector.shape_cast %70 : vector<16x16x4xf32> to vector<256x4xf32>
    %72 = arith.truncf %71 : vector<256x4xf32> to vector<256x4xbf16>
    %c2 = arith.constant 2 : index
    %c0_32 = arith.constant 0 : index
    %c0_33 = arith.constant 0 : index
    %73 = vector.load %arg2[%c2, %c0_32, %c0_33] : memref<9x4x4xbf16, #tpu.memory_space<vmem>>, vector<1x4x4xbf16>
    %74 = vector.shape_cast %73 : vector<1x4x4xbf16> to vector<4x4xbf16>
    %cst_34 = arith.constant dense<0.000000e+00> : vector<256x4xf32>
    %75 = tpu.matmul %72, %74, %cst_34 {dimension_numbers = #tpu.dot_dimension_numbers<[1], [0], [0], [1], [0, 0, 1, 1], [], []>} : vector<256x4xbf16>, vector<4x4xbf16>, vector<256x4xf32> -> vector<256x4xf32>
    %76 = arith.addf %69, %75 : vector<256x4xf32>
    %77 = vector.extract_strided_slice %54 {offsets = [1, 0, 0], sizes = [16, 16, 4], strides = [1, 1, 1]} : vector<18x18x4xf32> to vector<16x16x4xf32>
    %78 = vector.shape_cast %77 : vector<16x16x4xf32> to vector<256x4xf32>
    %79 = arith.truncf %78 : vector<256x4xf32> to vector<256x4xbf16>
    %c3 = arith.constant 3 : index
    %c0_35 = arith.constant 0 : index
    %c0_36 = arith.constant 0 : index
    %80 = vector.load %arg2[%c3, %c0_35, %c0_36] : memref<9x4x4xbf16, #tpu.memory_space<vmem>>, vector<1x4x4xbf16>
    %81 = vector.shape_cast %80 : vector<1x4x4xbf16> to vector<4x4xbf16>
    %cst_37 = arith.constant dense<0.000000e+00> : vector<256x4xf32>
    %82 = tpu.matmul %79, %81, %cst_37 {dimension_numbers = #tpu.dot_dimension_numbers<[1], [0], [0], [1], [0, 0, 1, 1], [], []>} : vector<256x4xbf16>, vector<4x4xbf16>, vector<256x4xf32> -> vector<256x4xf32>
    %83 = arith.addf %76, %82 : vector<256x4xf32>
    %84 = vector.extract_strided_slice %54 {offsets = [1, 1, 0], sizes = [16, 16, 4], strides = [1, 1, 1]} : vector<18x18x4xf32> to vector<16x16x4xf32>
    %85 = vector.shape_cast %84 : vector<16x16x4xf32> to vector<256x4xf32>
    %86 = arith.truncf %85 : vector<256x4xf32> to vector<256x4xbf16>
    %c4 = arith.constant 4 : index
    %c0_38 = arith.constant 0 : index
    %c0_39 = arith.constant 0 : index
    %87 = vector.load %arg2[%c4, %c0_38, %c0_39] : memref<9x4x4xbf16, #tpu.memory_space<vmem>>, vector<1x4x4xbf16>
    %88 = vector.shape_cast %87 : vector<1x4x4xbf16> to vector<4x4xbf16>
    %cst_40 = arith.constant dense<0.000000e+00> : vector<256x4xf32>
    %89 = tpu.matmul %86, %88, %cst_40 {dimension_numbers = #tpu.dot_dimension_numbers<[1], [0], [0], [1], [0, 0, 1, 1], [], []>} : vector<256x4xbf16>, vector<4x4xbf16>, vector<256x4xf32> -> vector<256x4xf32>
    %90 = arith.addf %83, %89 : vector<256x4xf32>
    %91 = vector.extract_strided_slice %54 {offsets = [1, 2, 0], sizes = [16, 16, 4], strides = [1, 1, 1]} : vector<18x18x4xf32> to vector<16x16x4xf32>
    %92 = vector.shape_cast %91 : vector<16x16x4xf32> to vector<256x4xf32>
    %93 = arith.truncf %92 : vector<256x4xf32> to vector<256x4xbf16>
    %c5 = arith.constant 5 : index
    %c0_41 = arith.constant 0 : index
    %c0_42 = arith.constant 0 : index
    %94 = vector.load %arg2[%c5, %c0_41, %c0_42] : memref<9x4x4xbf16, #tpu.memory_space<vmem>>, vector<1x4x4xbf16>
    %95 = vector.shape_cast %94 : vector<1x4x4xbf16> to vector<4x4xbf16>
    %cst_43 = arith.constant dense<0.000000e+00> : vector<256x4xf32>
    %96 = tpu.matmul %93, %95, %cst_43 {dimension_numbers = #tpu.dot_dimension_numbers<[1], [0], [0], [1], [0, 0, 1, 1], [], []>} : vector<256x4xbf16>, vector<4x4xbf16>, vector<256x4xf32> -> vector<256x4xf32>
    %97 = arith.addf %90, %96 : vector<256x4xf32>
    %98 = vector.extract_strided_slice %54 {offsets = [2, 0, 0], sizes = [16, 16, 4], strides = [1, 1, 1]} : vector<18x18x4xf32> to vector<16x16x4xf32>
    %99 = vector.shape_cast %98 : vector<16x16x4xf32> to vector<256x4xf32>
    %100 = arith.truncf %99 : vector<256x4xf32> to vector<256x4xbf16>
    %c6 = arith.constant 6 : index
    %c0_44 = arith.constant 0 : index
    %c0_45 = arith.constant 0 : index
    %101 = vector.load %arg2[%c6, %c0_44, %c0_45] : memref<9x4x4xbf16, #tpu.memory_space<vmem>>, vector<1x4x4xbf16>
    %102 = vector.shape_cast %101 : vector<1x4x4xbf16> to vector<4x4xbf16>
    %cst_46 = arith.constant dense<0.000000e+00> : vector<256x4xf32>
    %103 = tpu.matmul %100, %102, %cst_46 {dimension_numbers = #tpu.dot_dimension_numbers<[1], [0], [0], [1], [0, 0, 1, 1], [], []>} : vector<256x4xbf16>, vector<4x4xbf16>, vector<256x4xf32> -> vector<256x4xf32>
    %104 = arith.addf %97, %103 : vector<256x4xf32>
    %105 = vector.extract_strided_slice %54 {offsets = [2, 1, 0], sizes = [16, 16, 4], strides = [1, 1, 1]} : vector<18x18x4xf32> to vector<16x16x4xf32>
    %106 = vector.shape_cast %105 : vector<16x16x4xf32> to vector<256x4xf32>
    %107 = arith.truncf %106 : vector<256x4xf32> to vector<256x4xbf16>
    %c7 = arith.constant 7 : index
    %c0_47 = arith.constant 0 : index
    %c0_48 = arith.constant 0 : index
    %108 = vector.load %arg2[%c7, %c0_47, %c0_48] : memref<9x4x4xbf16, #tpu.memory_space<vmem>>, vector<1x4x4xbf16>
    %109 = vector.shape_cast %108 : vector<1x4x4xbf16> to vector<4x4xbf16>
    %cst_49 = arith.constant dense<0.000000e+00> : vector<256x4xf32>
    %110 = tpu.matmul %107, %109, %cst_49 {dimension_numbers = #tpu.dot_dimension_numbers<[1], [0], [0], [1], [0, 0, 1, 1], [], []>} : vector<256x4xbf16>, vector<4x4xbf16>, vector<256x4xf32> -> vector<256x4xf32>
    %111 = arith.addf %104, %110 : vector<256x4xf32>
    %112 = vector.extract_strided_slice %54 {offsets = [2, 2, 0], sizes = [16, 16, 4], strides = [1, 1, 1]} : vector<18x18x4xf32> to vector<16x16x4xf32>
    %113 = vector.shape_cast %112 : vector<16x16x4xf32> to vector<256x4xf32>
    %114 = arith.truncf %113 : vector<256x4xf32> to vector<256x4xbf16>
    %c8 = arith.constant 8 : index
    %c0_50 = arith.constant 0 : index
    %c0_51 = arith.constant 0 : index
    %115 = vector.load %arg2[%c8, %c0_50, %c0_51] : memref<9x4x4xbf16, #tpu.memory_space<vmem>>, vector<1x4x4xbf16>
    %116 = vector.shape_cast %115 : vector<1x4x4xbf16> to vector<4x4xbf16>
    %cst_52 = arith.constant dense<0.000000e+00> : vector<256x4xf32>
    %117 = tpu.matmul %114, %116, %cst_52 {dimension_numbers = #tpu.dot_dimension_numbers<[1], [0], [0], [1], [0, 0, 1, 1], [], []>} : vector<256x4xbf16>, vector<4x4xbf16>, vector<256x4xf32> -> vector<256x4xf32>
    %118 = arith.addf %111, %117 : vector<256x4xf32>
    %119 = vector.extract_strided_slice %48 {offsets = [256, 0], sizes = [256, 4], strides = [1, 1]} : vector<512x4xf32> to vector<256x4xf32>
    %120 = vector.shape_cast %119 : vector<256x4xf32> to vector<16x16x4xf32>
    %cst_53 = arith.constant 0.000000e+00 : f32
    %121 = vector.broadcast %cst_53 : f32 to vector<1x16x4xf32>
    %122 = tpu.concatenate %121, %120, %121 in 0 : vector<1x16x4xf32>, vector<16x16x4xf32>, vector<1x16x4xf32> -> vector<18x16x4xf32>
    %cst_54 = arith.constant 0.000000e+00 : f32
    %123 = vector.broadcast %cst_54 : f32 to vector<18x1x4xf32>
    %124 = tpu.concatenate %123, %122, %123 in 1 : vector<18x1x4xf32>, vector<18x16x4xf32>, vector<18x1x4xf32> -> vector<18x18x4xf32>
    %cst_55 = arith.constant 0.000000e+00 : f32
    %125 = vector.broadcast %cst_55 : f32 to vector<256x4xf32>
    %126 = vector.extract_strided_slice %124 {offsets = [0, 0, 0], sizes = [16, 16, 4], strides = [1, 1, 1]} : vector<18x18x4xf32> to vector<16x16x4xf32>
    %127 = vector.shape_cast %126 : vector<16x16x4xf32> to vector<256x4xf32>
    %128 = arith.truncf %127 : vector<256x4xf32> to vector<256x4xbf16>
    %c0_56 = arith.constant 0 : index
    %c0_57 = arith.constant 0 : index
    %c0_58 = arith.constant 0 : index
    %129 = vector.load %arg2[%c0_56, %c0_57, %c0_58] : memref<9x4x4xbf16, #tpu.memory_space<vmem>>, vector<1x4x4xbf16>
    %130 = vector.shape_cast %129 : vector<1x4x4xbf16> to vector<4x4xbf16>
    %cst_59 = arith.constant dense<0.000000e+00> : vector<256x4xf32>
    %131 = tpu.matmul %128, %130, %cst_59 {dimension_numbers = #tpu.dot_dimension_numbers<[1], [0], [0], [1], [0, 0, 1, 1], [], []>} : vector<256x4xbf16>, vector<4x4xbf16>, vector<256x4xf32> -> vector<256x4xf32>
    %132 = arith.addf %125, %131 : vector<256x4xf32>
    %133 = vector.extract_strided_slice %124 {offsets = [0, 1, 0], sizes = [16, 16, 4], strides = [1, 1, 1]} : vector<18x18x4xf32> to vector<16x16x4xf32>
    %134 = vector.shape_cast %133 : vector<16x16x4xf32> to vector<256x4xf32>
    %135 = arith.truncf %134 : vector<256x4xf32> to vector<256x4xbf16>
    %c1_60 = arith.constant 1 : index
    %c0_61 = arith.constant 0 : index
    %c0_62 = arith.constant 0 : index
    %136 = vector.load %arg2[%c1_60, %c0_61, %c0_62] : memref<9x4x4xbf16, #tpu.memory_space<vmem>>, vector<1x4x4xbf16>
    %137 = vector.shape_cast %136 : vector<1x4x4xbf16> to vector<4x4xbf16>
    %cst_63 = arith.constant dense<0.000000e+00> : vector<256x4xf32>
    %138 = tpu.matmul %135, %137, %cst_63 {dimension_numbers = #tpu.dot_dimension_numbers<[1], [0], [0], [1], [0, 0, 1, 1], [], []>} : vector<256x4xbf16>, vector<4x4xbf16>, vector<256x4xf32> -> vector<256x4xf32>
    %139 = arith.addf %132, %138 : vector<256x4xf32>
    %140 = vector.extract_strided_slice %124 {offsets = [0, 2, 0], sizes = [16, 16, 4], strides = [1, 1, 1]} : vector<18x18x4xf32> to vector<16x16x4xf32>
    %141 = vector.shape_cast %140 : vector<16x16x4xf32> to vector<256x4xf32>
    %142 = arith.truncf %141 : vector<256x4xf32> to vector<256x4xbf16>
    %c2_64 = arith.constant 2 : index
    %c0_65 = arith.constant 0 : index
    %c0_66 = arith.constant 0 : index
    %143 = vector.load %arg2[%c2_64, %c0_65, %c0_66] : memref<9x4x4xbf16, #tpu.memory_space<vmem>>, vector<1x4x4xbf16>
    %144 = vector.shape_cast %143 : vector<1x4x4xbf16> to vector<4x4xbf16>
    %cst_67 = arith.constant dense<0.000000e+00> : vector<256x4xf32>
    %145 = tpu.matmul %142, %144, %cst_67 {dimension_numbers = #tpu.dot_dimension_numbers<[1], [0], [0], [1], [0, 0, 1, 1], [], []>} : vector<256x4xbf16>, vector<4x4xbf16>, vector<256x4xf32> -> vector<256x4xf32>
    %146 = arith.addf %139, %145 : vector<256x4xf32>
    %147 = vector.extract_strided_slice %124 {offsets = [1, 0, 0], sizes = [16, 16, 4], strides = [1, 1, 1]} : vector<18x18x4xf32> to vector<16x16x4xf32>
    %148 = vector.shape_cast %147 : vector<16x16x4xf32> to vector<256x4xf32>
    %149 = arith.truncf %148 : vector<256x4xf32> to vector<256x4xbf16>
    %c3_68 = arith.constant 3 : index
    %c0_69 = arith.constant 0 : index
    %c0_70 = arith.constant 0 : index
    %150 = vector.load %arg2[%c3_68, %c0_69, %c0_70] : memref<9x4x4xbf16, #tpu.memory_space<vmem>>, vector<1x4x4xbf16>
    %151 = vector.shape_cast %150 : vector<1x4x4xbf16> to vector<4x4xbf16>
    %cst_71 = arith.constant dense<0.000000e+00> : vector<256x4xf32>
    %152 = tpu.matmul %149, %151, %cst_71 {dimension_numbers = #tpu.dot_dimension_numbers<[1], [0], [0], [1], [0, 0, 1, 1], [], []>} : vector<256x4xbf16>, vector<4x4xbf16>, vector<256x4xf32> -> vector<256x4xf32>
    %153 = arith.addf %146, %152 : vector<256x4xf32>
    %154 = vector.extract_strided_slice %124 {offsets = [1, 1, 0], sizes = [16, 16, 4], strides = [1, 1, 1]} : vector<18x18x4xf32> to vector<16x16x4xf32>
    %155 = vector.shape_cast %154 : vector<16x16x4xf32> to vector<256x4xf32>
    %156 = arith.truncf %155 : vector<256x4xf32> to vector<256x4xbf16>
    %c4_72 = arith.constant 4 : index
    %c0_73 = arith.constant 0 : index
    %c0_74 = arith.constant 0 : index
    %157 = vector.load %arg2[%c4_72, %c0_73, %c0_74] : memref<9x4x4xbf16, #tpu.memory_space<vmem>>, vector<1x4x4xbf16>
    %158 = vector.shape_cast %157 : vector<1x4x4xbf16> to vector<4x4xbf16>
    %cst_75 = arith.constant dense<0.000000e+00> : vector<256x4xf32>
    %159 = tpu.matmul %156, %158, %cst_75 {dimension_numbers = #tpu.dot_dimension_numbers<[1], [0], [0], [1], [0, 0, 1, 1], [], []>} : vector<256x4xbf16>, vector<4x4xbf16>, vector<256x4xf32> -> vector<256x4xf32>
    %160 = arith.addf %153, %159 : vector<256x4xf32>
    %161 = vector.extract_strided_slice %124 {offsets = [1, 2, 0], sizes = [16, 16, 4], strides = [1, 1, 1]} : vector<18x18x4xf32> to vector<16x16x4xf32>
    %162 = vector.shape_cast %161 : vector<16x16x4xf32> to vector<256x4xf32>
    %163 = arith.truncf %162 : vector<256x4xf32> to vector<256x4xbf16>
    %c5_76 = arith.constant 5 : index
    %c0_77 = arith.constant 0 : index
    %c0_78 = arith.constant 0 : index
    %164 = vector.load %arg2[%c5_76, %c0_77, %c0_78] : memref<9x4x4xbf16, #tpu.memory_space<vmem>>, vector<1x4x4xbf16>
    %165 = vector.shape_cast %164 : vector<1x4x4xbf16> to vector<4x4xbf16>
    %cst_79 = arith.constant dense<0.000000e+00> : vector<256x4xf32>
    %166 = tpu.matmul %163, %165, %cst_79 {dimension_numbers = #tpu.dot_dimension_numbers<[1], [0], [0], [1], [0, 0, 1, 1], [], []>} : vector<256x4xbf16>, vector<4x4xbf16>, vector<256x4xf32> -> vector<256x4xf32>
    %167 = arith.addf %160, %166 : vector<256x4xf32>
    %168 = vector.extract_strided_slice %124 {offsets = [2, 0, 0], sizes = [16, 16, 4], strides = [1, 1, 1]} : vector<18x18x4xf32> to vector<16x16x4xf32>
    %169 = vector.shape_cast %168 : vector<16x16x4xf32> to vector<256x4xf32>
    %170 = arith.truncf %169 : vector<256x4xf32> to vector<256x4xbf16>
    %c6_80 = arith.constant 6 : index
    %c0_81 = arith.constant 0 : index
    %c0_82 = arith.constant 0 : index
    %171 = vector.load %arg2[%c6_80, %c0_81, %c0_82] : memref<9x4x4xbf16, #tpu.memory_space<vmem>>, vector<1x4x4xbf16>
    %172 = vector.shape_cast %171 : vector<1x4x4xbf16> to vector<4x4xbf16>
    %cst_83 = arith.constant dense<0.000000e+00> : vector<256x4xf32>
    %173 = tpu.matmul %170, %172, %cst_83 {dimension_numbers = #tpu.dot_dimension_numbers<[1], [0], [0], [1], [0, 0, 1, 1], [], []>} : vector<256x4xbf16>, vector<4x4xbf16>, vector<256x4xf32> -> vector<256x4xf32>
    %174 = arith.addf %167, %173 : vector<256x4xf32>
    %175 = vector.extract_strided_slice %124 {offsets = [2, 1, 0], sizes = [16, 16, 4], strides = [1, 1, 1]} : vector<18x18x4xf32> to vector<16x16x4xf32>
    %176 = vector.shape_cast %175 : vector<16x16x4xf32> to vector<256x4xf32>
    %177 = arith.truncf %176 : vector<256x4xf32> to vector<256x4xbf16>
    %c7_84 = arith.constant 7 : index
    %c0_85 = arith.constant 0 : index
    %c0_86 = arith.constant 0 : index
    %178 = vector.load %arg2[%c7_84, %c0_85, %c0_86] : memref<9x4x4xbf16, #tpu.memory_space<vmem>>, vector<1x4x4xbf16>
    %179 = vector.shape_cast %178 : vector<1x4x4xbf16> to vector<4x4xbf16>
    %cst_87 = arith.constant dense<0.000000e+00> : vector<256x4xf32>
    %180 = tpu.matmul %177, %179, %cst_87 {dimension_numbers = #tpu.dot_dimension_numbers<[1], [0], [0], [1], [0, 0, 1, 1], [], []>} : vector<256x4xbf16>, vector<4x4xbf16>, vector<256x4xf32> -> vector<256x4xf32>
    %181 = arith.addf %174, %180 : vector<256x4xf32>
    %182 = vector.extract_strided_slice %124 {offsets = [2, 2, 0], sizes = [16, 16, 4], strides = [1, 1, 1]} : vector<18x18x4xf32> to vector<16x16x4xf32>
    %183 = vector.shape_cast %182 : vector<16x16x4xf32> to vector<256x4xf32>
    %184 = arith.truncf %183 : vector<256x4xf32> to vector<256x4xbf16>
    %c8_88 = arith.constant 8 : index
    %c0_89 = arith.constant 0 : index
    %c0_90 = arith.constant 0 : index
    %185 = vector.load %arg2[%c8_88, %c0_89, %c0_90] : memref<9x4x4xbf16, #tpu.memory_space<vmem>>, vector<1x4x4xbf16>
    %186 = vector.shape_cast %185 : vector<1x4x4xbf16> to vector<4x4xbf16>
    %cst_91 = arith.constant dense<0.000000e+00> : vector<256x4xf32>
    %187 = tpu.matmul %184, %186, %cst_91 {dimension_numbers = #tpu.dot_dimension_numbers<[1], [0], [0], [1], [0, 0, 1, 1], [], []>} : vector<256x4xbf16>, vector<4x4xbf16>, vector<256x4xf32> -> vector<256x4xf32>
    %188 = arith.addf %181, %187 : vector<256x4xf32>
    %189 = tpu.concatenate %118, %188 in 0 : vector<256x4xf32>, vector<256x4xf32> -> vector<512x4xf32>
    %cst_92 = arith.constant dense<0.000000e+00> : vector<4xf32>
    %190 = vector.multi_reduction <add>, %189, %cst_92 [0] : vector<512x4xf32> to vector<4xf32>
    %191 = vector.shape_cast %190 : vector<4xf32> to vector<1x4xf32>
    %cst_93 = arith.constant 0.001953125 : f32
    %192 = vector.broadcast %cst_93 : f32 to vector<1x4xf32>
    %193 = arith.mulf %191, %192 : vector<1x4xf32>
    %194 = vector.broadcast %193 : vector<1x4xf32> to vector<512x4xf32>
    %195 = arith.subf %189, %194 : vector<512x4xf32>
    %196 = arith.mulf %195, %195 : vector<512x4xf32>
    %cst_94 = arith.constant dense<0.000000e+00> : vector<4xf32>
    %197 = vector.multi_reduction <add>, %196, %cst_94 [0] : vector<512x4xf32> to vector<4xf32>
    %198 = vector.shape_cast %197 : vector<4xf32> to vector<1x4xf32>
    %cst_95 = arith.constant 0.001953125 : f32
    %199 = vector.broadcast %cst_95 : f32 to vector<1x4xf32>
    %200 = arith.mulf %198, %199 : vector<1x4xf32>
    %c0_96 = arith.constant 0 : index
    %c0_97 = arith.constant 0 : index
    %201 = vector.load %arg6[%c0_96, %c0_97] : memref<2x4xf32, #tpu.memory_space<vmem>>, vector<1x4xf32>
    %cst_98 = arith.constant 9.99999974E-6 : f32
    %202 = vector.broadcast %cst_98 : f32 to vector<1x4xf32>
    %203 = arith.addf %200, %202 : vector<1x4xf32>
    %204 = math.rsqrt %203 : vector<1x4xf32>
    %205 = arith.mulf %201, %204 : vector<1x4xf32>
    %206 = vector.broadcast %205 : vector<1x4xf32> to vector<512x4xf32>
    %207 = arith.mulf %195, %206 : vector<512x4xf32>
    %c1_99 = arith.constant 1 : index
    %c0_100 = arith.constant 0 : index
    %208 = vector.load %arg6[%c1_99, %c0_100] : memref<2x4xf32, #tpu.memory_space<vmem>>, vector<1x4xf32>
    %209 = vector.broadcast %208 : vector<1x4xf32> to vector<512x4xf32>
    %210 = arith.addf %207, %209 : vector<512x4xf32>
    %cst_101 = arith.constant 0.000000e+00 : f32
    %211 = vector.broadcast %cst_101 : f32 to vector<512x4xf32>
    %212 = arith.maximumf %210, %211 : vector<512x4xf32>
    %213 = arith.truncf %212 : vector<512x4xf32> to vector<512x4xbf16>
    %c0_102 = arith.constant 0 : index
    %c0_103 = arith.constant 0 : index
    %214 = vector.load %arg3[%c0_102, %c0_103] : memref<4x8xbf16, #tpu.memory_space<vmem>>, vector<4x8xbf16>
    %cst_104 = arith.constant dense<0.000000e+00> : vector<512x8xf32>
    %215 = tpu.matmul %213, %214, %cst_104 {dimension_numbers = #tpu.dot_dimension_numbers<[1], [0], [0], [1], [0, 0, 1, 1], [], []>} : vector<512x4xbf16>, vector<4x8xbf16>, vector<512x8xf32> -> vector<512x8xf32>
    %cst_105 = arith.constant dense<0.000000e+00> : vector<8xf32>
    %216 = vector.multi_reduction <add>, %215, %cst_105 [0] : vector<512x8xf32> to vector<8xf32>
    %217 = vector.shape_cast %216 : vector<8xf32> to vector<1x8xf32>
    %cst_106 = arith.constant 0.001953125 : f32
    %218 = vector.broadcast %cst_106 : f32 to vector<1x8xf32>
    %219 = arith.mulf %217, %218 : vector<1x8xf32>
    %220 = vector.broadcast %219 : vector<1x8xf32> to vector<512x8xf32>
    %221 = arith.subf %215, %220 : vector<512x8xf32>
    %222 = arith.mulf %221, %221 : vector<512x8xf32>
    %cst_107 = arith.constant dense<0.000000e+00> : vector<8xf32>
    %223 = vector.multi_reduction <add>, %222, %cst_107 [0] : vector<512x8xf32> to vector<8xf32>
    %224 = vector.shape_cast %223 : vector<8xf32> to vector<1x8xf32>
    %cst_108 = arith.constant 0.001953125 : f32
    %225 = vector.broadcast %cst_108 : f32 to vector<1x8xf32>
    %226 = arith.mulf %224, %225 : vector<1x8xf32>
    %c0_109 = arith.constant 0 : index
    %c0_110 = arith.constant 0 : index
    %227 = vector.load %arg7[%c0_109, %c0_110] : memref<2x8xf32, #tpu.memory_space<vmem>>, vector<1x8xf32>
    %cst_111 = arith.constant 9.99999974E-6 : f32
    %228 = vector.broadcast %cst_111 : f32 to vector<1x8xf32>
    %229 = arith.addf %226, %228 : vector<1x8xf32>
    %230 = math.rsqrt %229 : vector<1x8xf32>
    %231 = arith.mulf %227, %230 : vector<1x8xf32>
    %232 = vector.broadcast %231 : vector<1x8xf32> to vector<512x8xf32>
    %233 = arith.mulf %221, %232 : vector<512x8xf32>
    %c1_112 = arith.constant 1 : index
    %c0_113 = arith.constant 0 : index
    %234 = vector.load %arg7[%c1_112, %c0_113] : memref<2x8xf32, #tpu.memory_space<vmem>>, vector<1x8xf32>
    %235 = vector.broadcast %234 : vector<1x8xf32> to vector<512x8xf32>
    %236 = arith.addf %233, %235 : vector<512x8xf32>
    %237 = arith.addf %236, %24 : vector<512x8xf32>
    %c0_114 = arith.constant 0 : index
    %c0_115 = arith.constant 0 : index
    %238 = vector.load %arg8[%c0_114, %c0_115] : memref<512x8xf32, #tpu.memory_space<vmem>>, vector<512x8xf32>
    tpu.vector_store %arg8[%c0_114, %c0_115], %237 {strides = array<i32>} : memref<512x8xf32, #tpu.memory_space<vmem>>, vector<512x8xf32>,
    return
  }
}

</mosaic_0001>

<llo_original>
// kernel: residual_forward.1
$region0: #{residual_forward.1}
  #allocation0 [shape = 'u32[]', space=smem, size = 0x4, offset = 0x4, fixed_abs, tag = 'smem constant byte address 0x4 - core index']
  #allocation1 [shape = 'u32[72,128]{1,0:T(1,128)}', space=vmem, size = 0x9000, scoped, tag = 'internal scratch']
  %s0 = inlined_call_operand.vmem [shape: bf16[512,4], index: 0, kind: input, shape index: {}]
  %s1 = inlined_call_operand.vmem [shape: bf16[4,12], index: 1, kind: input, shape index: {}]
  %s2 = inlined_call_operand.vmem [shape: bf16[9,4,4], index: 2, kind: input, shape index: {}]
  %s3 = inlined_call_operand.vmem [shape: bf16[4,8], index: 3, kind: input, shape index: {}]
  %s4 = inlined_call_operand.vmem [shape: f32[2,8], index: 4, kind: input, shape index: {}]
  %s5 = inlined_call_operand.vmem [shape: f32[2,4], index: 5, kind: input, shape index: {}]
  %s6 = inlined_call_operand.vmem [shape: f32[2,4], index: 6, kind: input, shape index: {}]
  %s7 = inlined_call_operand.vmem [shape: f32[2,8], index: 7, kind: input, shape index: {}]
  %s8 = inlined_call_operand.vmem [shape: f32[512,8], index: 8, kind: output, shape index: {}]
  %s9 = sld [smem:[#allocation0]]
  $region42: #{residual_forward.1} parent=0
    _
  %s11 = ssub.s32 1, %s9
  %s12 = scalar_select 0, %s11, %s9
  // Predicated region
  $region2: #{residual_forward.1} parent=0 // pred_check
    _
  $region3: #{residual_forward.1} parent=0 // pred_check_branch
    %14 = sbr.rel (0) target = $region5
  $region4: #{residual_forward.1} parent=0 // pred_region
    _
  $region5: #{residual_forward.1} parent=0 // pred_fallthru
    _
  // Predicated region
  $region6: #{residual_forward.1} parent=0 // pred_check
    _
  $region7: #{residual_forward.1} parent=0 // pred_check_branch
    %16 = sbr.rel (0) target = $region9
  $region8: #{residual_forward.1} parent=0 // pred_region
    _
  $region9: #{residual_forward.1} parent=0 // pred_fallthru
    _
  // Predicated region
  $region10: #{residual_forward.1} parent=0 // pred_check
    _
  $region11: #{residual_forward.1} parent=0 // pred_check_branch
    %18 = sbr.rel (0) target = $region13
  $region12: #{residual_forward.1} parent=0 // pred_region
    _
  $region13: #{residual_forward.1} parent=0 // pred_fallthru
    _
  // Predicated region
  $region14: #{residual_forward.1} parent=0 // pred_check
    _
  $region15: #{residual_forward.1} parent=0 // pred_check_branch
    %20 = sbr.rel (0) target = $region17
  $region16: #{residual_forward.1} parent=0 // pred_region
    _
  $region17: #{residual_forward.1} parent=0 // pred_fallthru
    _
  // Predicated region
  $region18: #{residual_forward.1} parent=0 // pred_check
    _
  $region19: #{residual_forward.1} parent=0 // pred_check_branch
    %22 = sbr.rel (0) target = $region21
  $region20: #{residual_forward.1} parent=0 // pred_region
    _
  $region21: #{residual_forward.1} parent=0 // pred_fallthru
    _
  // Predicated region
  $region22: #{residual_forward.1} parent=0 // pred_check
    _
  $region23: #{residual_forward.1} parent=0 // pred_check_branch
    %24 = sbr.rel (0) target = $region25
  $region24: #{residual_forward.1} parent=0 // pred_region
    _
  $region25: #{residual_forward.1} parent=0 // pred_fallthru
    _
  // Predicated region
  $region26: #{residual_forward.1} parent=0 // pred_check
    _
  $region27: #{residual_forward.1} parent=0 // pred_check_branch
    %26 = sbr.rel (0) target = $region29
  $region28: #{residual_forward.1} parent=0 // pred_region
    _
  $region29: #{residual_forward.1} parent=0 // pred_fallthru
    _
  // Predicated region
  $region30: #{residual_forward.1} parent=0 // pred_check
    _
  $region31: #{residual_forward.1} parent=0 // pred_check_branch
    %28 = sbr.rel (0) target = $region33
  $region32: #{residual_forward.1} parent=0 // pred_region
    _
  $region33: #{residual_forward.1} parent=0 // pred_fallthru
    _
  %v30 = vld [vmem:[%s0] sm:$0xf]
  %v31 = vld [vmem:[%s0 + $0x4] sm:$0xf]
  %v32 = vld [vmem:[%s0 + $0x8] sm:$0xf]
  %v33 = vld [vmem:[%s0 + $0xc] sm:$0xf]
  %v34 = vld [vmem:[%s0 + $0x10] sm:$0xf]
  %v35 = vld [vmem:[%s0 + $0x14] sm:$0xf]
  %v36 = vld [vmem:[%s0 + $0x18] sm:$0xf]
  %v37 = vld [vmem:[%s0 + $0x1c] sm:$0xf]
  %v38 = vld [vmem:[%s0 + $0x20] sm:$0xf]
  %v39 = vld [vmem:[%s0 + $0x24] sm:$0xf]
  %v40 = vld [vmem:[%s0 + $0x28] sm:$0xf]
  %v41 = vld [vmem:[%s0 + $0x2c] sm:$0xf]
  %v42 = vld [vmem:[%s0 + $0x30] sm:$0xf]
  %v43 = vld [vmem:[%s0 + $0x34] sm:$0xf]
  %v44 = vld [vmem:[%s0 + $0x38] sm:$0xf]
  %v45 = vld [vmem:[%s0 + $0x3c] sm:$0xf]
  %v46 = vld [vmem:[%s0 + $0x40] sm:$0xf]
  %v47 = vld [vmem:[%s0 + $0x44] sm:$0xf]
  %v48 = vld [vmem:[%s0 + $0x48] sm:$0xf]
  %v49 = vld [vmem:[%s0 + $0x4c] sm:$0xf]
  %v50 = vld [vmem:[%s0 + $0x50] sm:$0xf]
  %v51 = vld [vmem:[%s0 + $0x54] sm:$0xf]
  %v52 = vld [vmem:[%s0 + $0x58] sm:$0xf]
  %v53 = vld [vmem:[%s0 + $0x5c] sm:$0xf]
  %v54 = vld [vmem:[%s0 + $0x60] sm:$0xf]
  %v55 = vld [vmem:[%s0 + $0x64] sm:$0xf]
  %v56 = vld [vmem:[%s0 + $0x68] sm:$0xf]
  %v57 = vld [vmem:[%s0 + $0x6c] sm:$0xf]
  %v58 = vld [vmem:[%s0 + $0x70] sm:$0xf]
  %v59 = vld [vmem:[%s0 + $0x74] sm:$0xf]
  %v60 = vld [vmem:[%s0 + $0x78] sm:$0xf]
  %v61 = vld [vmem:[%s0 + $0x7c] sm:$0xf]
  %v62 = vld [vmem:[%s0 + $0x80] sm:$0xf]
  %v63 = vld [vmem:[%s0 + $0x84] sm:$0xf]
  %v64 = vld [vmem:[%s0 + $0x88] sm:$0xf]
  %v65 = vld [vmem:[%s0 + $0x8c] sm:$0xf]
  %v66 = vld [vmem:[%s0 + $0x90] sm:$0xf]
  %v67 = vld [vmem:[%s0 + $0x94] sm:$0xf]
  %v68 = vld [vmem:[%s0 + $0x98] sm:$0xf]
  %v69 = vld [vmem:[%s0 + $0x9c] sm:$0xf]
  %v70 = vld [vmem:[%s0 + $0xa0] sm:$0xf]
  %v71 = vld [vmem:[%s0 + $0xa4] sm:$0xf]
  %v72 = vld [vmem:[%s0 + $0xa8] sm:$0xf]
  %v73 = vld [vmem:[%s0 + $0xac] sm:$0xf]
  %v74 = vld [vmem:[%s0 + $0xb0] sm:$0xf]
  %v75 = vld [vmem:[%s0 + $0xb4] sm:$0xf]
  %v76 = vld [vmem:[%s0 + $0xb8] sm:$0xf]
  %v77 = vld [vmem:[%s0 + $0xbc] sm:$0xf]
  %v78 = vld [vmem:[%s0 + $0xc0] sm:$0xf]
  %v79 = vld [vmem:[%s0 + $0xc4] sm:$0xf]
  %v80 = vld [vmem:[%s0 + $0xc8] sm:$0xf]
  %v81 = vld [vmem:[%s0 + $0xcc] sm:$0xf]
  %v82 = vld [vmem:[%s0 + $0xd0] sm:$0xf]
  %v83 = vld [vmem:[%s0 + $0xd4] sm:$0xf]
  %v84 = vld [vmem:[%s0 + $0xd8] sm:$0xf]
  %v85 = vld [vmem:[%s0 + $0xdc] sm:$0xf]
  %v86 = vld [vmem:[%s0 + $0xe0] sm:$0xf]
  %v87 = vld [vmem:[%s0 + $0xe4] sm:$0xf]
  %v88 = vld [vmem:[%s0 + $0xe8] sm:$0xf]
  %v89 = vld [vmem:[%s0 + $0xec] sm:$0xf]
  %v90 = vld [vmem:[%s0 + $0xf0] sm:$0xf]
  %v91 = vld [vmem:[%s0 + $0xf4] sm:$0xf]
  %v92 = vld [vmem:[%s0 + $0xf8] sm:$0xf]
  %v93 = vld [vmem:[%s0 + $0xfc] sm:$0xf]
  %v94 = vld [vmem:[%s1] sm:$0x3]
  %v159 = vunpack.c.l.b16 %v30
  %v160 = vunpack.c.l.b16 %v31
  %v161 = vunpack.c.l.b16 %v32
  %v162 = vunpack.c.l.b16 %v33
  %v163 = vunpack.c.l.b16 %v34
  %v164 = vunpack.c.l.b16 %v35
  %v165 = vunpack.c.l.b16 %v36
  %v166 = vunpack.c.l.b16 %v37
  %v167 = vunpack.c.l.b16 %v38
  %v168 = vunpack.c.l.b16 %v39
  %v169 = vunpack.c.l.b16 %v40
  %v170 = vunpack.c.l.b16 %v41
  %v171 = vunpack.c.l.b16 %v42
  %v172 = vunpack.c.l.b16 %v43
  %v173 = vunpack.c.l.b16 %v44
  %v174 = vunpack.c.l.b16 %v45
  %v175 = vunpack.c.l.b16 %v46
  %v176 = vunpack.c.l.b16 %v47
  %v177 = vunpack.c.l.b16 %v48
  %v178 = vunpack.c.l.b16 %v49
  %v179 = vunpack.c.l.b16 %v50
  %v180 = vunpack.c.l.b16 %v51
  %v181 = vunpack.c.l.b16 %v52
  %v182 = vunpack.c.l.b16 %v53
  %v183 = vunpack.c.l.b16 %v54
  %v184 = vunpack.c.l.b16 %v55
  %v185 = vunpack.c.l.b16 %v56
  %v186 = vunpack.c.l.b16 %v57
  %v187 = vunpack.c.l.b16 %v58
  %v188 = vunpack.c.l.b16 %v59
  %v189 = vunpack.c.l.b16 %v60
  %v190 = vunpack.c.l.b16 %v61
  %v191 = vunpack.c.l.b16 %v62
  %v192 = vunpack.c.l.b16 %v63
  %v193 = vunpack.c.l.b16 %v64
  %v194 = vunpack.c.l.b16 %v65
  %v195 = vunpack.c.l.b16 %v66
  %v196 = vunpack.c.l.b16 %v67
  %v197 = vunpack.c.l.b16 %v68
  %v198 = vunpack.c.l.b16 %v69
  %v199 = vunpack.c.l.b16 %v70
  %v200 = vunpack.c.l.b16 %v71
  %v201 = vunpack.c.l.b16 %v72
  %v202 = vunpack.c.l.b16 %v73
  %v203 = vunpack.c.l.b16 %v74
  %v204 = vunpack.c.l.b16 %v75
  %v205 = vunpack.c.l.b16 %v76
  %v206 = vunpack.c.l.b16 %v77
  %v207 = vunpack.c.l.b16 %v78
  %v208 = vunpack.c.l.b16 %v79
  %v209 = vunpack.c.l.b16 %v80
  %v210 = vunpack.c.l.b16 %v81
  %v211 = vunpack.c.l.b16 %v82
  %v212 = vunpack.c.l.b16 %v83
  %v213 = vunpack.c.l.b16 %v84
  %v214 = vunpack.c.l.b16 %v85
  %v215 = vunpack.c.l.b16 %v86
  %v216 = vunpack.c.l.b16 %v87
  %v217 = vunpack.c.l.b16 %v88
  %v218 = vunpack.c.l.b16 %v89
  %v219 = vunpack.c.l.b16 %v90
  %v220 = vunpack.c.l.b16 %v91
  %v221 = vunpack.c.l.b16 %v92
  %v222 = vunpack.c.l.b16 %v93
  %v223 = vpack.c.b16 %v160, %v159
  %v224 = vpack.c.b16 %v162, %v161
  %v225 = vpack.c.b16 %v164, %v163
  %v226 = vpack.c.b16 %v166, %v165
  %v227 = vpack.c.b16 %v168, %v167
  %v228 = vpack.c.b16 %v170, %v169
  %v229 = vpack.c.b16 %v172, %v171
  %v230 = vpack.c.b16 %v174, %v173
  %v231 = vpack.c.b16 %v176, %v175
  %v232 = vpack.c.b16 %v178, %v177
  %v233 = vpack.c.b16 %v180, %v179
  %v234 = vpack.c.b16 %v182, %v181
  %v235 = vpack.c.b16 %v184, %v183
  %v236 = vpack.c.b16 %v186, %v185
  %v237 = vpack.c.b16 %v188, %v187
  %v238 = vpack.c.b16 %v190, %v189
  %v239 = vpack.c.b16 %v192, %v191
  %v240 = vpack.c.b16 %v194, %v193
  %v241 = vpack.c.b16 %v196, %v195
  %v242 = vpack.c.b16 %v198, %v197
  %v243 = vpack.c.b16 %v200, %v199
  %v244 = vpack.c.b16 %v202, %v201
  %v245 = vpack.c.b16 %v204, %v203
  %v246 = vpack.c.b16 %v206, %v205
  %v247 = vpack.c.b16 %v208, %v207
  %v248 = vpack.c.b16 %v210, %v209
  %v249 = vpack.c.b16 %v212, %v211
  %v250 = vpack.c.b16 %v214, %v213
  %v251 = vpack.c.b16 %v216, %v215
  %v252 = vpack.c.b16 %v218, %v217
  %v253 = vpack.c.b16 %v220, %v219
  %v254 = vpack.c.b16 %v222, %v221
  %vm255 = vcmask 31744
  %v257 = vsel %vm255, %v223, 0
  %v260 = vsel %vm255, %v224, 0
  %v263 = vsel %vm255, %v225, 0
  %v266 = vsel %vm255, %v226, 0
  %v269 = vsel %vm255, %v227, 0
  %v272 = vsel %vm255, %v228, 0
  %v275 = vsel %vm255, %v229, 0
  %v278 = vsel %vm255, %v230, 0
  %v281 = vsel %vm255, %v231, 0
  %v284 = vsel %vm255, %v232, 0
  %v287 = vsel %vm255, %v233, 0
  %v290 = vsel %vm255, %v234, 0
  %v293 = vsel %vm255, %v235, 0
  %v296 = vsel %vm255, %v236, 0
  %v299 = vsel %vm255, %v237, 0
  %v302 = vsel %vm255, %v238, 0
  %v305 = vsel %vm255, %v239, 0
  %v308 = vsel %vm255, %v240, 0
  %v311 = vsel %vm255, %v241, 0
  %v314 = vsel %vm255, %v242, 0
  %v317 = vsel %vm255, %v243, 0
  %v320 = vsel %vm255, %v244, 0
  %v323 = vsel %vm255, %v245, 0
  %v326 = vsel %vm255, %v246, 0
  %v329 = vsel %vm255, %v247, 0
  %v332 = vsel %vm255, %v248, 0
  %v335 = vsel %vm255, %v249, 0
  %v338 = vsel %vm255, %v250, 0
  %v341 = vsel %vm255, %v251, 0
  %v344 = vsel %vm255, %v252, 0
  %v347 = vsel %vm255, %v253, 0
  %v350 = vsel %vm255, %v254, 0
  %vm352 = vcmask 1041408
  %v354 = vsel %vm352, %v94, 0
  %356 = vmatpush.bf16.msra.mxu0 0
  %357 = vmatpush.bf16.msra.mxu0 0
  %358 = vmatpush.bf16.msra.mxu0 0
  %359 = vmatpush.bf16.msra.mxu0 0
  %360 = vmatpush.bf16.msra.mxu0 0
  %361 = vmatpush.bf16.msra.mxu0 0
  %362 = vmatpush.bf16.msra.mxu0 0
  %363 = vmatpush.bf16.msra.mxu0 %v354
  %364 = vmatmul.bf16.gmra.mxu0 %v257
  %v365 = vpop.f32.mrf.mxu0
  %v366 = vadd.f32 0.0, %v365
  %v367 = vpop.f32.mrf.mxu0
  %v368 = vadd.f32 0.0, %v367
  %369 = vmatmul.bf16.gmra.mxu0 %v260
  %v370 = vpop.f32.mrf.mxu0
  %v371 = vadd.f32 0.0, %v370
  %v372 = vpop.f32.mrf.mxu0
  %v373 = vadd.f32 0.0, %v372
  %374 = vmatmul.bf16.gmra.mxu0 %v263
  %v375 = vpop.f32.mrf.mxu0
  %v376 = vadd.f32 0.0, %v375
  %v377 = vpop.f32.mrf.mxu0
  %v378 = vadd.f32 0.0, %v377
  %379 = vmatmul.bf16.gmra.mxu0 %v266
  %v380 = vpop.f32.mrf.mxu0
  %v381 = vadd.f32 0.0, %v380
  %v382 = vpop.f32.mrf.mxu0
  %v383 = vadd.f32 0.0, %v382
  %384 = vmatmul.bf16.gmra.mxu0 %v269
  %v385 = vpop.f32.mrf.mxu0
  %v386 = vadd.f32 0.0, %v385
  %v387 = vpop.f32.mrf.mxu0
  %v388 = vadd.f32 0.0, %v387
  %389 = vmatmul.bf16.gmra.mxu0 %v272
  %v390 = vpop.f32.mrf.mxu0
  %v391 = vadd.f32 0.0, %v390
  %v392 = vpop.f32.mrf.mxu0
  %v393 = vadd.f32 0.0, %v392
  %394 = vmatmul.bf16.gmra.mxu0 %v275
  %v395 = vpop.f32.mrf.mxu0
  %v396 = vadd.f32 0.0, %v395
  %v397 = vpop.f32.mrf.mxu0
  %v398 = vadd.f32 0.0, %v397
  %399 = vmatmul.bf16.gmra.mxu0 %v278
  %v400 = vpop.f32.mrf.mxu0
  %v401 = vadd.f32 0.0, %v400
  %v402 = vpop.f32.mrf.mxu0
  %v403 = vadd.f32 0.0, %v402
  %404 = vmatmul.bf16.gmra.mxu0 %v281
  %v405 = vpop.f32.mrf.mxu0
  %v406 = vadd.f32 0.0, %v405
  %v407 = vpop.f32.mrf.mxu0
  %v408 = vadd.f32 0.0, %v407
  %409 = vmatmul.bf16.gmra.mxu0 %v284
  %v410 = vpop.f32.mrf.mxu0
  %v411 = vadd.f32 0.0, %v410
  %v412 = vpop.f32.mrf.mxu0
  %v413 = vadd.f32 0.0, %v412
  %414 = vmatmul.bf16.gmra.mxu0 %v287
  %v415 = vpop.f32.mrf.mxu0
  %v416 = vadd.f32 0.0, %v415
  %v417 = vpop.f32.mrf.mxu0
  %v418 = vadd.f32 0.0, %v417
  %419 = vmatmul.bf16.gmra.mxu0 %v290
  %v420 = vpop.f32.mrf.mxu0
  %v421 = vadd.f32 0.0, %v420
  %v422 = vpop.f32.mrf.mxu0
  %v423 = vadd.f32 0.0, %v422
  %424 = vmatmul.bf16.gmra.mxu0 %v293
  %v425 = vpop.f32.mrf.mxu0
  %v426 = vadd.f32 0.0, %v425
  %v427 = vpop.f32.mrf.mxu0
  %v428 = vadd.f32 0.0, %v427
  %429 = vmatmul.bf16.gmra.mxu0 %v296
  %v430 = vpop.f32.mrf.mxu0
  %v431 = vadd.f32 0.0, %v430
  %v432 = vpop.f32.mrf.mxu0
  %v433 = vadd.f32 0.0, %v432
  %434 = vmatmul.bf16.gmra.mxu0 %v299
  %v435 = vpop.f32.mrf.mxu0
  %v436 = vadd.f32 0.0, %v435
  %v437 = vpop.f32.mrf.mxu0
  %v438 = vadd.f32 0.0, %v437
  %439 = vmatmul.bf16.gmra.mxu0 %v302
  %v440 = vpop.f32.mrf.mxu0
  %v441 = vadd.f32 0.0, %v440
  %v442 = vpop.f32.mrf.mxu0
  %v443 = vadd.f32 0.0, %v442
  %444 = vmatmul.bf16.gmra.mxu0 %v305
  %v445 = vpop.f32.mrf.mxu0
  %v446 = vadd.f32 0.0, %v445
  %v447 = vpop.f32.mrf.mxu0
  %v448 = vadd.f32 0.0, %v447
  %449 = vmatmul.bf16.gmra.mxu0 %v308
  %v450 = vpop.f32.mrf.mxu0
  %v451 = vadd.f32 0.0, %v450
  %v452 = vpop.f32.mrf.mxu0
  %v453 = vadd.f32 0.0, %v452
  %454 = vmatmul.bf16.gmra.mxu0 %v311
  %v455 = vpop.f32.mrf.mxu0
  %v456 = vadd.f32 0.0, %v455
  %v457 = vpop.f32.mrf.mxu0
  %v458 = vadd.f32 0.0, %v457
  %459 = vmatmul.bf16.gmra.mxu0 %v314
  %v460 = vpop.f32.mrf.mxu0
  %v461 = vadd.f32 0.0, %v460
  %v462 = vpop.f32.mrf.mxu0
  %v463 = vadd.f32 0.0, %v462
  %464 = vmatmul.bf16.gmra.mxu0 %v317
  %v465 = vpop.f32.mrf.mxu0
  %v466 = vadd.f32 0.0, %v465
  %v467 = vpop.f32.mrf.mxu0
  %v468 = vadd.f32 0.0, %v467
  %469 = vmatmul.bf16.gmra.mxu0 %v320
  %v470 = vpop.f32.mrf.mxu0
  %v471 = vadd.f32 0.0, %v470
  %v472 = vpop.f32.mrf.mxu0
  %v473 = vadd.f32 0.0, %v472
  %474 = vmatmul.bf16.gmra.mxu0 %v323
  %v475 = vpop.f32.mrf.mxu0
  %v476 = vadd.f32 0.0, %v475
  %v477 = vpop.f32.mrf.mxu0
  %v478 = vadd.f32 0.0, %v477
  %479 = vmatmul.bf16.gmra.mxu0 %v326
  %v480 = vpop.f32.mrf.mxu0
  %v481 = vadd.f32 0.0, %v480
  %v482 = vpop.f32.mrf.mxu0
  %v483 = vadd.f32 0.0, %v482
  %484 = vmatmul.bf16.gmra.mxu0 %v329
  %v485 = vpop.f32.mrf.mxu0
  %v486 = vadd.f32 0.0, %v485
  %v487 = vpop.f32.mrf.mxu0
  %v488 = vadd.f32 0.0, %v487
  %489 = vmatmul.bf16.gmra.mxu0 %v332
  %v490 = vpop.f32.mrf.mxu0
  %v491 = vadd.f32 0.0, %v490
  %v492 = vpop.f32.mrf.mxu0
  %v493 = vadd.f32 0.0, %v492
  %494 = vmatmul.bf16.gmra.mxu0 %v335
  %v495 = vpop.f32.mrf.mxu0
  %v496 = vadd.f32 0.0, %v495
  %v497 = vpop.f32.mrf.mxu0
  %v498 = vadd.f32 0.0, %v497
  %499 = vmatmul.bf16.gmra.mxu0 %v338
  %v500 = vpop.f32.mrf.mxu0
  %v501 = vadd.f32 0.0, %v500
  %v502 = vpop.f32.mrf.mxu0
  %v503 = vadd.f32 0.0, %v502
  %504 = vmatmul.bf16.gmra.mxu0 %v341
  %v505 = vpop.f32.mrf.mxu0
  %v506 = vadd.f32 0.0, %v505
  %v507 = vpop.f32.mrf.mxu0
  %v508 = vadd.f32 0.0, %v507
  %509 = vmatmul.bf16.gmra.mxu0 %v344
  %v510 = vpop.f32.mrf.mxu0
  %v511 = vadd.f32 0.0, %v510
  %v512 = vpop.f32.mrf.mxu0
  %v513 = vadd.f32 0.0, %v512
  %514 = vmatmul.bf16.gmra.mxu0 %v347
  %v515 = vpop.f32.mrf.mxu0
  %v516 = vadd.f32 0.0, %v515
  %v517 = vpop.f32.mrf.mxu0
  %v518 = vadd.f32 0.0, %v517
  %519 = vmatmul.bf16.gmra.mxu0 %v350
  %v520 = vpop.f32.mrf.mxu0
  %v521 = vadd.f32 0.0, %v520
  %v522 = vpop.f32.mrf.mxu0
  %v523 = vadd.f32 0.0, %v522
  %524 = vdwg.mxu0
  %vm525 = vcmask 64512
  %v526 = vsel %vm525, %v366, 0.0
  %v527 = vsel %vm525, %v368, 0.0
  %v528 = vadd.f32 %v526, %v527
  %v529 = vsel %vm525, %v371, 0.0
  %v530 = vadd.f32 %v528, %v529
  %v531 = vsel %vm525, %v373, 0.0
  %v532 = vadd.f32 %v530, %v531
  %v533 = vsel %vm525, %v376, 0.0
  %v534 = vadd.f32 %v532, %v533
  %v535 = vsel %vm525, %v378, 0.0
  %v536 = vadd.f32 %v534, %v535
  %v537 = vsel %vm525, %v381, 0.0
  %v538 = vadd.f32 %v536, %v537
  %v539 = vsel %vm525, %v383, 0.0
  %v540 = vadd.f32 %v538, %v539
  %v541 = vsel %vm525, %v386, 0.0
  %v542 = vadd.f32 %v540, %v541
  %v543 = vsel %vm525, %v388, 0.0
  %v544 = vadd.f32 %v542, %v543
  %v545 = vsel %vm525, %v391, 0.0
  %v546 = vadd.f32 %v544, %v545
  %v547 = vsel %vm525, %v393, 0.0
  %v548 = vadd.f32 %v546, %v547
  %v549 = vsel %vm525, %v396, 0.0
  %v550 = vadd.f32 %v548, %v549
  %v551 = vsel %vm525, %v398, 0.0
  %v552 = vadd.f32 %v550, %v551
  %v553 = vsel %vm525, %v401, 0.0
  %v554 = vadd.f32 %v552, %v553
  %v555 = vsel %vm525, %v403, 0.0
  %v556 = vadd.f32 %v554, %v555
  %v557 = vsel %vm525, %v406, 0.0
  %v558 = vadd.f32 %v556, %v557
  %v559 = vsel %vm525, %v408, 0.0
  %v560 = vadd.f32 %v558, %v559
  %v561 = vsel %vm525, %v411, 0.0
  %v562 = vadd.f32 %v560, %v561
  %v563 = vsel %vm525, %v413, 0.0
  %v564 = vadd.f32 %v562, %v563
  %v565 = vsel %vm525, %v416, 0.0
  %v566 = vadd.f32 %v564, %v565
  %v567 = vsel %vm525, %v418, 0.0
  %v568 = vadd.f32 %v566, %v567
  %v569 = vsel %vm525, %v421, 0.0
  %v570 = vadd.f32 %v568, %v569
  %v571 = vsel %vm525, %v423, 0.0
  %v572 = vadd.f32 %v570, %v571
  %v573 = vsel %vm525, %v426, 0.0
  %v574 = vadd.f32 %v572, %v573
  %v575 = vsel %vm525, %v428, 0.0
  %v576 = vadd.f32 %v574, %v575
  %v577 = vsel %vm525, %v431, 0.0
  %v578 = vadd.f32 %v576, %v577
  %v579 = vsel %vm525, %v433, 0.0
  %v580 = vadd.f32 %v578, %v579
  %v581 = vsel %vm525, %v436, 0.0
  %v582 = vadd.f32 %v580, %v581
  %v583 = vsel %vm525, %v438, 0.0
  %v584 = vadd.f32 %v582, %v583
  %v585 = vsel %vm525, %v441, 0.0
  %v586 = vadd.f32 %v584, %v585
  %v587 = vsel %vm525, %v443, 0.0
  %v588 = vadd.f32 %v586, %v587
  %v589 = vsel %vm525, %v446, 0.0
  %v590 = vadd.f32 %v588, %v589
  %v591 = vsel %vm525, %v448, 0.0
  %v592 = vadd.f32 %v590, %v591
  %v593 = vsel %vm525, %v451, 0.0
  %v594 = vadd.f32 %v592, %v593
  %v595 = vsel %vm525, %v453, 0.0
  %v596 = vadd.f32 %v594, %v595
  %v597 = vsel %vm525, %v456, 0.0
  %v598 = vadd.f32 %v596, %v597
  %v599 = vsel %vm525, %v458, 0.0
  %v600 = vadd.f32 %v598, %v599
  %v601 = vsel %vm525, %v461, 0.0
  %v602 = vadd.f32 %v600, %v601
  %v603 = vsel %vm525, %v463, 0.0
  %v604 = vadd.f32 %v602, %v603
  %v605 = vsel %vm525, %v466, 0.0
  %v606 = vadd.f32 %v604, %v605
  %v607 = vsel %vm525, %v468, 0.0
  %v608 = vadd.f32 %v606, %v607
  %v609 = vsel %vm525, %v471, 0.0
  %v610 = vadd.f32 %v608, %v609
  %v611 = vsel %vm525, %v473, 0.0
  %v612 = vadd.f32 %v610, %v611
  %v613 = vsel %vm525, %v476, 0.0
  %v614 = vadd.f32 %v612, %v613
  %v615 = vsel %vm525, %v478, 0.0
  %v616 = vadd.f32 %v614, %v615
  %v617 = vsel %vm525, %v481, 0.0
  %v618 = vadd.f32 %v616, %v617
  %v619 = vsel %vm525, %v483, 0.0
  %v620 = vadd.f32 %v618, %v619
  %v621 = vsel %vm525, %v486, 0.0
  %v622 = vadd.f32 %v620, %v621
  %v623 = vsel %vm525, %v488, 0.0
  %v624 = vadd.f32 %v622, %v623
  %v625 = vsel %vm525, %v491, 0.0
  %v626 = vadd.f32 %v624, %v625
  %v627 = vsel %vm525, %v493, 0.0
  %v628 = vadd.f32 %v626, %v627
  %v629 = vsel %vm525, %v496, 0.0
  %v630 = vadd.f32 %v628, %v629
  %v631 = vsel %vm525, %v498, 0.0
  %v632 = vadd.f32 %v630, %v631
  %v633 = vsel %vm525, %v501, 0.0
  %v634 = vadd.f32 %v632, %v633
  %v635 = vsel %vm525, %v503, 0.0
  %v636 = vadd.f32 %v634, %v635
  %v637 = vsel %vm525, %v506, 0.0
  %v638 = vadd.f32 %v636, %v637
  %v639 = vsel %vm525, %v508, 0.0
  %v640 = vadd.f32 %v638, %v639
  %v641 = vsel %vm525, %v511, 0.0
  %v642 = vadd.f32 %v640, %v641
  %v643 = vsel %vm525, %v513, 0.0
  %v644 = vadd.f32 %v642, %v643
  %v645 = vsel %vm525, %v516, 0.0
  %v646 = vadd.f32 %v644, %v645
  %v647 = vsel %vm525, %v518, 0.0
  %v648 = vadd.f32 %v646, %v647
  %v649 = vsel %vm525, %v521, 0.0
  %v650 = vadd.f32 %v648, %v649
  %v651 = vsel %vm525, %v523, 0.0
  %v652 = vadd.f32 %v650, %v651
  %v653 = vrot.slane %v652, 4
  %v654 = vadd.f32 %v652, %v653
  %v655 = vrot.slane %v654, 2
  %v656 = vadd.f32 %v654, %v655
  %v657 = vrot.slane %v656, 1
  %v658 = vadd.f32 %v656, %v657
  %v659 = vmul.f32 %v658, 0.001953125
  %v660 = vsub.f32 %v366, %v659
  %v661 = vsub.f32 %v368, %v659
  %v662 = vsub.f32 %v371, %v659
  %v663 = vsub.f32 %v373, %v659
  %v664 = vsub.f32 %v376, %v659
  %v665 = vsub.f32 %v378, %v659
  %v666 = vsub.f32 %v381, %v659
  %v667 = vsub.f32 %v383, %v659
  %v668 = vsub.f32 %v386, %v659
  %v669 = vsub.f32 %v388, %v659
  %v670 = vsub.f32 %v391, %v659
  %v671 = vsub.f32 %v393, %v659
  %v672 = vsub.f32 %v396, %v659
  %v673 = vsub.f32 %v398, %v659
  %v674 = vsub.f32 %v401, %v659
  %v675 = vsub.f32 %v403, %v659
  %v676 = vsub.f32 %v406, %v659
  %v677 = vsub.f32 %v408, %v659
  %v678 = vsub.f32 %v411, %v659
  %v679 = vsub.f32 %v413, %v659
  %v680 = vsub.f32 %v416, %v659
  %v681 = vsub.f32 %v418, %v659
  %v682 = vsub.f32 %v421, %v659
  %v683 = vsub.f32 %v423, %v659
  %v684 = vsub.f32 %v426, %v659
  %v685 = vsub.f32 %v428, %v659
  %v686 = vsub.f32 %v431, %v659
  %v687 = vsub.f32 %v433, %v659
  %v688 = vsub.f32 %v436, %v659
  %v689 = vsub.f32 %v438, %v659
  %v690 = vsub.f32 %v441, %v659
  %v691 = vsub.f32 %v443, %v659
  %v692 = vsub.f32 %v446, %v659
  %v693 = vsub.f32 %v448, %v659
  %v694 = vsub.f32 %v451, %v659
  %v695 = vsub.f32 %v453, %v659
  %v696 = vsub.f32 %v456, %v659
  %v697 = vsub.f32 %v458, %v659
  %v698 = vsub.f32 %v461, %v659
  %v699 = vsub.f32 %v463, %v659
  %v700 = vsub.f32 %v466, %v659
  %v701 = vsub.f32 %v468, %v659
  %v702 = vsub.f32 %v471, %v659
  %v703 = vsub.f32 %v473, %v659
  %v704 = vsub.f32 %v476, %v659
  %v705 = vsub.f32 %v478, %v659
  %v706 = vsub.f32 %v481, %v659
  %v707 = vsub.f32 %v483, %v659
  %v708 = vsub.f32 %v486, %v659
  %v709 = vsub.f32 %v488, %v659
  %v710 = vsub.f32 %v491, %v659
  %v711 = vsub.f32 %v493, %v659
  %v712 = vsub.f32 %v496, %v659
  %v713 = vsub.f32 %v498, %v659
  %v714 = vsub.f32 %v501, %v659
  %v715 = vsub.f32 %v503, %v659
  %v716 = vsub.f32 %v506, %v659
  %v717 = vsub.f32 %v508, %v659
  %v718 = vsub.f32 %v511, %v659
  %v719 = vsub.f32 %v513, %v659
  %v720 = vsub.f32 %v516, %v659
  %v721 = vsub.f32 %v518, %v659
  %v722 = vsub.f32 %v521, %v659
  %v723 = vsub.f32 %v523, %v659
  %v724 = vmul.f32 %v660, %v660
  %v725 = vmul.f32 %v661, %v661
  %v726 = vmul.f32 %v662, %v662
  %v727 = vmul.f32 %v663, %v663
  %v728 = vmul.f32 %v664, %v664
  %v729 = vmul.f32 %v665, %v665
  %v730 = vmul.f32 %v666, %v666
  %v731 = vmul.f32 %v667, %v667
  %v732 = vmul.f32 %v668, %v668
  %v733 = vmul.f32 %v669, %v669
  %v734 = vmul.f32 %v670, %v670
  %v735 = vmul.f32 %v671, %v671
  %v736 = vmul.f32 %v672, %v672
  %v737 = vmul.f32 %v673, %v673
  %v738 = vmul.f32 %v674, %v674
  %v739 = vmul.f32 %v675, %v675
  %v740 = vmul.f32 %v676, %v676
  %v741 = vmul.f32 %v677, %v677
  %v742 = vmul.f32 %v678, %v678
  %v743 = vmul.f32 %v679, %v679
  %v744 = vmul.f32 %v680, %v680
  %v745 = vmul.f32 %v681, %v681
  %v746 = vmul.f32 %v682, %v682
  %v747 = vmul.f32 %v683, %v683
  %v748 = vmul.f32 %v684, %v684
  %v749 = vmul.f32 %v685, %v685
  %v750 = vmul.f32 %v686, %v686
  %v751 = vmul.f32 %v687, %v687
  %v752 = vmul.f32 %v688, %v688
  %v753 = vmul.f32 %v689, %v689
  %v754 = vmul.f32 %v690, %v690
  %v755 = vmul.f32 %v691, %v691
  %v756 = vmul.f32 %v692, %v692
  %v757 = vmul.f32 %v693, %v693
  %v758 = vmul.f32 %v694, %v694
  %v759 = vmul.f32 %v695, %v695
  %v760 = vmul.f32 %v696, %v696
  %v761 = vmul.f32 %v697, %v697
  %v762 = vmul.f32 %v698, %v698
  %v763 = vmul.f32 %v699, %v699
  %v764 = vmul.f32 %v700, %v700
  %v765 = vmul.f32 %v701, %v701
  %v766 = vmul.f32 %v702, %v702
  %v767 = vmul.f32 %v703, %v703
  %v768 = vmul.f32 %v704, %v704
  %v769 = vmul.f32 %v705, %v705
  %v770 = vmul.f32 %v706, %v706
  %v771 = vmul.f32 %v707, %v707
  %v772 = vmul.f32 %v708, %v708
  %v773 = vmul.f32 %v709, %v709
  %v774 = vmul.f32 %v710, %v710
  %v775 = vmul.f32 %v711, %v711
  %v776 = vmul.f32 %v712, %v712
  %v777 = vmul.f32 %v713, %v713
  %v778 = vmul.f32 %v714, %v714
  %v779 = vmul.f32 %v715, %v715
  %v780 = vmul.f32 %v716, %v716
  %v781 = vmul.f32 %v717, %v717
  %v782 = vmul.f32 %v718, %v718
  %v783 = vmul.f32 %v719, %v719
  %v784 = vmul.f32 %v720, %v720
  %v785 = vmul.f32 %v721, %v721
  %v786 = vmul.f32 %v722, %v722
  %v787 = vmul.f32 %v723, %v723
  %v788 = vsel %vm525, %v724, 0.0
  %v789 = vsel %vm525, %v725, 0.0
  %v790 = vadd.f32 %v788, %v789
  %v791 = vsel %vm525, %v726, 0.0
  %v792 = vadd.f32 %v790, %v791
  %v793 = vsel %vm525, %v727, 0.0
  %v794 = vadd.f32 %v792, %v793
  %v795 = vsel %vm525, %v728, 0.0
  %v796 = vadd.f32 %v794, %v795
  %v797 = vsel %vm525, %v729, 0.0
  %v798 = vadd.f32 %v796, %v797
  %v799 = vsel %vm525, %v730, 0.0
  %v800 = vadd.f32 %v798, %v799
  %v801 = vsel %vm525, %v731, 0.0
  %v802 = vadd.f32 %v800, %v801
  %v803 = vsel %vm525, %v732, 0.0
  %v804 = vadd.f32 %v802, %v803
  %v805 = vsel %vm525, %v733, 0.0
  %v806 = vadd.f32 %v804, %v805
  %v807 = vsel %vm525, %v734, 0.0
  %v808 = vadd.f32 %v806, %v807
  %v809 = vsel %vm525, %v735, 0.0
  %v810 = vadd.f32 %v808, %v809
  %v811 = vsel %vm525, %v736, 0.0
  %v812 = vadd.f32 %v810, %v811
  %v813 = vsel %vm525, %v737, 0.0
  %v814 = vadd.f32 %v812, %v813
  %v815 = vsel %vm525, %v738, 0.0
  %v816 = vadd.f32 %v814, %v815
  %v817 = vsel %vm525, %v739, 0.0
  %v818 = vadd.f32 %v816, %v817
  %v819 = vsel %vm525, %v740, 0.0
  %v820 = vadd.f32 %v818, %v819
  %v821 = vsel %vm525, %v741, 0.0
  %v822 = vadd.f32 %v820, %v821
  %v823 = vsel %vm525, %v742, 0.0
  %v824 = vadd.f32 %v822, %v823
  %v825 = vsel %vm525, %v743, 0.0
  %v826 = vadd.f32 %v824, %v825
  %v827 = vsel %vm525, %v744, 0.0
  %v828 = vadd.f32 %v826, %v827
  %v829 = vsel %vm525, %v745, 0.0
  %v830 = vadd.f32 %v828, %v829
  %v831 = vsel %vm525, %v746, 0.0
  %v832 = vadd.f32 %v830, %v831
  %v833 = vsel %vm525, %v747, 0.0
  %v834 = vadd.f32 %v832, %v833
  %v835 = vsel %vm525, %v748, 0.0
  %v836 = vadd.f32 %v834, %v835
  %v837 = vsel %vm525, %v749, 0.0
  %v838 = vadd.f32 %v836, %v837
  %v839 = vsel %vm525, %v750, 0.0
  %v840 = vadd.f32 %v838, %v839
  %v841 = vsel %vm525, %v751, 0.0
  %v842 = vadd.f32 %v840, %v841
  %v843 = vsel %vm525, %v752, 0.0
  %v844 = vadd.f32 %v842, %v843
  %v845 = vsel %vm525, %v753, 0.0
  %v846 = vadd.f32 %v844, %v845
  %v847 = vsel %vm525, %v754, 0.0
  %v848 = vadd.f32 %v846, %v847
  %v849 = vsel %vm525, %v755, 0.0
  %v850 = vadd.f32 %v848, %v849
  %v851 = vsel %vm525, %v756, 0.0
  %v852 = vadd.f32 %v850, %v851
  %v853 = vsel %vm525, %v757, 0.0
  %v854 = vadd.f32 %v852, %v853
  %v855 = vsel %vm525, %v758, 0.0
  %v856 = vadd.f32 %v854, %v855
  %v857 = vsel %vm525, %v759, 0.0
  %v858 = vadd.f32 %v856, %v857
  %v859 = vsel %vm525, %v760, 0.0
  %v860 = vadd.f32 %v858, %v859
  %v861 = vsel %vm525, %v761, 0.0
  %v862 = vadd.f32 %v860, %v861
  %v863 = vsel %vm525, %v762, 0.0
  %v864 = vadd.f32 %v862, %v863
  %v865 = vsel %vm525, %v763, 0.0
  %v866 = vadd.f32 %v864, %v865
  %v867 = vsel %vm525, %v764, 0.0
  %v868 = vadd.f32 %v866, %v867
  %v869 = vsel %vm525, %v765, 0.0
  %v870 = vadd.f32 %v868, %v869
  %v871 = vsel %vm525, %v766, 0.0
  %v872 = vadd.f32 %v870, %v871
  %v873 = vsel %vm525, %v767, 0.0
  %v874 = vadd.f32 %v872, %v873
  %v875 = vsel %vm525, %v768, 0.0
  %v876 = vadd.f32 %v874, %v875
  %v877 = vsel %vm525, %v769, 0.0
  %v878 = vadd.f32 %v876, %v877
  %v879 = vsel %vm525, %v770, 0.0
  %v880 = vadd.f32 %v878, %v879
  %v881 = vsel %vm525, %v771, 0.0
  %v882 = vadd.f32 %v880, %v881
  %v883 = vsel %vm525, %v772, 0.0
  %v884 = vadd.f32 %v882, %v883
  %v885 = vsel %vm525, %v773, 0.0
  %v886 = vadd.f32 %v884, %v885
  %v887 = vsel %vm525, %v774, 0.0
  %v888 = vadd.f32 %v886, %v887
  %v889 = vsel %vm525, %v775, 0.0
  %v890 = vadd.f32 %v888, %v889
  %v891 = vsel %vm525, %v776, 0.0
  %v892 = vadd.f32 %v890, %v891
  %v893 = vsel %vm525, %v777, 0.0
  %v894 = vadd.f32 %v892, %v893
  %v895 = vsel %vm525, %v778, 0.0
  %v896 = vadd.f32 %v894, %v895
  %v897 = vsel %vm525, %v779, 0.0
  %v898 = vadd.f32 %v896, %v897
  %v899 = vsel %vm525, %v780, 0.0
  %v900 = vadd.f32 %v898, %v899
  %v901 = vsel %vm525, %v781, 0.0
  %v902 = vadd.f32 %v900, %v901
  %v903 = vsel %vm525, %v782, 0.0
  %v904 = vadd.f32 %v902, %v903
  %v905 = vsel %vm525, %v783, 0.0
  %v906 = vadd.f32 %v904, %v905
  %v907 = vsel %vm525, %v784, 0.0
  %v908 = vadd.f32 %v906, %v907
  %v909 = vsel %vm525, %v785, 0.0
  %v910 = vadd.f32 %v908, %v909
  %v911 = vsel %vm525, %v786, 0.0
  %v912 = vadd.f32 %v910, %v911
  %v913 = vsel %vm525, %v787, 0.0
  %v914 = vadd.f32 %v912, %v913
  %v915 = vrot.slane %v914, 4
  %v916 = vadd.f32 %v914, %v915
  %v917 = vrot.slane %v916, 2
  %v918 = vadd.f32 %v916, %v917
  %v919 = vrot.slane %v918, 1
  %v920 = vadd.f32 %v918, %v919
  %v921 = vmul.f32 %v920, 0.001953125
  %v922 = vld [vmem:[%s4] sm:$0x1]
  %v923 = vadd.f32 %v921, 1e-05
  %v924 = vrsqrt.pop %v923
  %v925 = vmul.f32 %v924, %v923
  %v926 = vmul.f32 %v925, %v924
  %v927 = vmul.f32 0.5, %v926
  %v928 = vsub.f32 1.5, %v927
  %v929 = vmul.f32 %v924, %v928
  %vm930 = vweird.f32 %v923
  %vm931 = vweird.f32 %v924
  %vm932 = vmor %vm930, %vm931
  %v933 = vsel %vm932, %v924, %v929
  %v934 = vmul.f32 %v922, %v933
  %v935 = vperm.slane %v934, 0
  %v936 = vmul.f32 %v660, %v935
  %v937 = vmul.f32 %v661, %v935
  %v938 = vmul.f32 %v662, %v935
  %v939 = vmul.f32 %v663, %v935
  %v940 = vmul.f32 %v664, %v935
  %v941 = vmul.f32 %v665, %v935
  %v942 = vmul.f32 %v666, %v935
  %v943 = vmul.f32 %v667, %v935
  %v944 = vmul.f32 %v668, %v935
  %v945 = vmul.f32 %v669, %v935
  %v946 = vmul.f32 %v670, %v935
  %v947 = vmul.f32 %v671, %v935
  %v948 = vmul.f32 %v672, %v935
  %v949 = vmul.f32 %v673, %v935
  %v950 = vmul.f32 %v674, %v935
  %v951 = vmul.f32 %v675, %v935
  %v952 = vmul.f32 %v676, %v935
  %v953 = vmul.f32 %v677, %v935
  %v954 = vmul.f32 %v678, %v935
  %v955 = vmul.f32 %v679, %v935
  %v956 = vmul.f32 %v680, %v935
  %v957 = vmul.f32 %v681, %v935
  %v958 = vmul.f32 %v682, %v935
  %v959 = vmul.f32 %v683, %v935
  %v960 = vmul.f32 %v684, %v935
  %v961 = vmul.f32 %v685, %v935
  %v962 = vmul.f32 %v686, %v935
  %v963 = vmul.f32 %v687, %v935
  %v964 = vmul.f32 %v688, %v935
  %v965 = vmul.f32 %v689, %v935
  %v966 = vmul.f32 %v690, %v935
  %v967 = vmul.f32 %v691, %v935
  %v968 = vmul.f32 %v692, %v935
  %v969 = vmul.f32 %v693, %v935
  %v970 = vmul.f32 %v694, %v935
  %v971 = vmul.f32 %v695, %v935
  %v972 = vmul.f32 %v696, %v935
  %v973 = vmul.f32 %v697, %v935
  %v974 = vmul.f32 %v698, %v935
  %v975 = vmul.f32 %v699, %v935
  %v976 = vmul.f32 %v700, %v935
  %v977 = vmul.f32 %v701, %v935
  %v978 = vmul.f32 %v702, %v935
  %v979 = vmul.f32 %v703, %v935
  %v980 = vmul.f32 %v704, %v935
  %v981 = vmul.f32 %v705, %v935
  %v982 = vmul.f32 %v706, %v935
  %v983 = vmul.f32 %v707, %v935
  %v984 = vmul.f32 %v708, %v935
  %v985 = vmul.f32 %v709, %v935
  %v986 = vmul.f32 %v710, %v935
  %v987 = vmul.f32 %v711, %v935
  %v988 = vmul.f32 %v712, %v935
  %v989 = vmul.f32 %v713, %v935
  %v990 = vmul.f32 %v714, %v935
  %v991 = vmul.f32 %v715, %v935
  %v992 = vmul.f32 %v716, %v935
  %v993 = vmul.f32 %v717, %v935
  %v994 = vmul.f32 %v718, %v935
  %v995 = vmul.f32 %v719, %v935
  %v996 = vmul.f32 %v720, %v935
  %v997 = vmul.f32 %v721, %v935
  %v998 = vmul.f32 %v722, %v935
  %v999 = vmul.f32 %v723, %v935
  %v1000 = vld [vmem:[%s4 + $0x1] sm:$0x1]
  %v1001 = vperm.slane %v1000, 0
  %v1002 = vadd.f32 %v936, %v1001
  %v1003 = vadd.f32 %v937, %v1001
  %v1004 = vadd.f32 %v938, %v1001
  %v1005 = vadd.f32 %v939, %v1001
  %v1006 = vadd.f32 %v940, %v1001
  %v1007 = vadd.f32 %v941, %v1001
  %v1008 = vadd.f32 %v942, %v1001
  %v1009 = vadd.f32 %v943, %v1001
  %v1010 = vadd.f32 %v944, %v1001
  %v1011 = vadd.f32 %v945, %v1001
  %v1012 = vadd.f32 %v946, %v1001
  %v1013 = vadd.f32 %v947, %v1001
  %v1014 = vadd.f32 %v948, %v1001
  %v1015 = vadd.f32 %v949, %v1001
  %v1016 = vadd.f32 %v950, %v1001
  %v1017 = vadd.f32 %v951, %v1001
  %v1018 = vadd.f32 %v952, %v1001
  %v1019 = vadd.f32 %v953, %v1001
  %v1020 = vadd.f32 %v954, %v1001
  %v1021 = vadd.f32 %v955, %v1001
  %v1022 = vadd.f32 %v956, %v1001
  %v1023 = vadd.f32 %v957, %v1001
  %v1024 = vadd.f32 %v958, %v1001
  %v1025 = vadd.f32 %v959, %v1001
  %v1026 = vadd.f32 %v960, %v1001
  %v1027 = vadd.f32 %v961, %v1001
  %v1028 = vadd.f32 %v962, %v1001
  %v1029 = vadd.f32 %v963, %v1001
  %v1030 = vadd.f32 %v964, %v1001
  %v1031 = vadd.f32 %v965, %v1001
  %v1032 = vadd.f32 %v966, %v1001
  %v1033 = vadd.f32 %v967, %v1001
  %v1034 = vadd.f32 %v968, %v1001
  %v1035 = vadd.f32 %v969, %v1001
  %v1036 = vadd.f32 %v970, %v1001
  %v1037 = vadd.f32 %v971, %v1001
  %v1038 = vadd.f32 %v972, %v1001
  %v1039 = vadd.f32 %v973, %v1001
  %v1040 = vadd.f32 %v974, %v1001
  %v1041 = vadd.f32 %v975, %v1001
  %v1042 = vadd.f32 %v976, %v1001
  %v1043 = vadd.f32 %v977, %v1001
  %v1044 = vadd.f32 %v978, %v1001
  %v1045 = vadd.f32 %v979, %v1001
  %v1046 = vadd.f32 %v980, %v1001
  %v1047 = vadd.f32 %v981, %v1001
  %v1048 = vadd.f32 %v982, %v1001
  %v1049 = vadd.f32 %v983, %v1001
  %v1050 = vadd.f32 %v984, %v1001
  %v1051 = vadd.f32 %v985, %v1001
  %v1052 = vadd.f32 %v986, %v1001
  %v1053 = vadd.f32 %v987, %v1001
  %v1054 = vadd.f32 %v988, %v1001
  %v1055 = vadd.f32 %v989, %v1001
  %v1056 = vadd.f32 %v990, %v1001
  %v1057 = vadd.f32 %v991, %v1001
  %v1058 = vadd.f32 %v992, %v1001
  %v1059 = vadd.f32 %v993, %v1001
  %v1060 = vadd.f32 %v994, %v1001
  %v1061 = vadd.f32 %v995, %v1001
  %v1062 = vadd.f32 %v996, %v1001
  %v1063 = vadd.f32 %v997, %v1001
  %v1064 = vadd.f32 %v998, %v1001
  %v1065 = vadd.f32 %v999, %v1001
  %vm1066 = vcmask 97344
  %v1067 = vsel %vm1066, %v366, 0.0
  %v1068 = vsel %vm1066, %v368, 0.0
  %v1069 = vadd.f32 %v1067, %v1068
  %v1070 = vsel %vm1066, %v371, 0.0
  %v1071 = vadd.f32 %v1069, %v1070
  %v1072 = vsel %vm1066, %v373, 0.0
  %v1073 = vadd.f32 %v1071, %v1072
  %v1074 = vsel %vm1066, %v376, 0.0
  %v1075 = vadd.f32 %v1073, %v1074
  %v1076 = vsel %vm1066, %v378, 0.0
  %v1077 = vadd.f32 %v1075, %v1076
  %v1078 = vsel %vm1066, %v381, 0.0
  %v1079 = vadd.f32 %v1077, %v1078
  %v1080 = vsel %vm1066, %v383, 0.0
  %v1081 = vadd.f32 %v1079, %v1080
  %v1082 = vsel %vm1066, %v386, 0.0
  %v1083 = vadd.f32 %v1081, %v1082
  %v1084 = vsel %vm1066, %v388, 0.0
  %v1085 = vadd.f32 %v1083, %v1084
  %v1086 = vsel %vm1066, %v391, 0.0
  %v1087 = vadd.f32 %v1085, %v1086
  %v1088 = vsel %vm1066, %v393, 0.0
  %v1089 = vadd.f32 %v1087, %v1088
  %v1090 = vsel %vm1066, %v396, 0.0
  %v1091 = vadd.f32 %v1089, %v1090
  %v1092 = vsel %vm1066, %v398, 0.0
  %v1093 = vadd.f32 %v1091, %v1092
  %v1094 = vsel %vm1066, %v401, 0.0
  %v1095 = vadd.f32 %v1093, %v1094
  %v1096 = vsel %vm1066, %v403, 0.0
  %v1097 = vadd.f32 %v1095, %v1096
  %v1098 = vsel %vm1066, %v406, 0.0
  %v1099 = vadd.f32 %v1097, %v1098
  %v1100 = vsel %vm1066, %v408, 0.0
  %v1101 = vadd.f32 %v1099, %v1100
  %v1102 = vsel %vm1066, %v411, 0.0
  %v1103 = vadd.f32 %v1101, %v1102
  %v1104 = vsel %vm1066, %v413, 0.0
  %v1105 = vadd.f32 %v1103, %v1104
  %v1106 = vsel %vm1066, %v416, 0.0
  %v1107 = vadd.f32 %v1105, %v1106
  %v1108 = vsel %vm1066, %v418, 0.0
  %v1109 = vadd.f32 %v1107, %v1108
  %v1110 = vsel %vm1066, %v421, 0.0
  %v1111 = vadd.f32 %v1109, %v1110
  %v1112 = vsel %vm1066, %v423, 0.0
  %v1113 = vadd.f32 %v1111, %v1112
  %v1114 = vsel %vm1066, %v426, 0.0
  %v1115 = vadd.f32 %v1113, %v1114
  %v1116 = vsel %vm1066, %v428, 0.0
  %v1117 = vadd.f32 %v1115, %v1116
  %v1118 = vsel %vm1066, %v431, 0.0
  %v1119 = vadd.f32 %v1117, %v1118
  %v1120 = vsel %vm1066, %v433, 0.0
  %v1121 = vadd.f32 %v1119, %v1120
  %v1122 = vsel %vm1066, %v436, 0.0
  %v1123 = vadd.f32 %v1121, %v1122
  %v1124 = vsel %vm1066, %v438, 0.0
  %v1125 = vadd.f32 %v1123, %v1124
  %v1126 = vsel %vm1066, %v441, 0.0
  %v1127 = vadd.f32 %v1125, %v1126
  %v1128 = vsel %vm1066, %v443, 0.0
  %v1129 = vadd.f32 %v1127, %v1128
  %v1130 = vsel %vm1066, %v446, 0.0
  %v1131 = vadd.f32 %v1129, %v1130
  %v1132 = vsel %vm1066, %v448, 0.0
  %v1133 = vadd.f32 %v1131, %v1132
  %v1134 = vsel %vm1066, %v451, 0.0
  %v1135 = vadd.f32 %v1133, %v1134
  %v1136 = vsel %vm1066, %v453, 0.0
  %v1137 = vadd.f32 %v1135, %v1136
  %v1138 = vsel %vm1066, %v456, 0.0
  %v1139 = vadd.f32 %v1137, %v1138
  %v1140 = vsel %vm1066, %v458, 0.0
  %v1141 = vadd.f32 %v1139, %v1140
  %v1142 = vsel %vm1066, %v461, 0.0
  %v1143 = vadd.f32 %v1141, %v1142
  %v1144 = vsel %vm1066, %v463, 0.0
  %v1145 = vadd.f32 %v1143, %v1144
  %v1146 = vsel %vm1066, %v466, 0.0
  %v1147 = vadd.f32 %v1145, %v1146
  %v1148 = vsel %vm1066, %v468, 0.0
  %v1149 = vadd.f32 %v1147, %v1148
  %v1150 = vsel %vm1066, %v471, 0.0
  %v1151 = vadd.f32 %v1149, %v1150
  %v1152 = vsel %vm1066, %v473, 0.0
  %v1153 = vadd.f32 %v1151, %v1152
  %v1154 = vsel %vm1066, %v476, 0.0
  %v1155 = vadd.f32 %v1153, %v1154
  %v1156 = vsel %vm1066, %v478, 0.0
  %v1157 = vadd.f32 %v1155, %v1156
  %v1158 = vsel %vm1066, %v481, 0.0
  %v1159 = vadd.f32 %v1157, %v1158
  %v1160 = vsel %vm1066, %v483, 0.0
  %v1161 = vadd.f32 %v1159, %v1160
  %v1162 = vsel %vm1066, %v486, 0.0
  %v1163 = vadd.f32 %v1161, %v1162
  %v1164 = vsel %vm1066, %v488, 0.0
  %v1165 = vadd.f32 %v1163, %v1164
  %v1166 = vsel %vm1066, %v491, 0.0
  %v1167 = vadd.f32 %v1165, %v1166
  %v1168 = vsel %vm1066, %v493, 0.0
  %v1169 = vadd.f32 %v1167, %v1168
  %v1170 = vsel %vm1066, %v496, 0.0
  %v1171 = vadd.f32 %v1169, %v1170
  %v1172 = vsel %vm1066, %v498, 0.0
  %v1173 = vadd.f32 %v1171, %v1172
  %v1174 = vsel %vm1066, %v501, 0.0
  %v1175 = vadd.f32 %v1173, %v1174
  %v1176 = vsel %vm1066, %v503, 0.0
  %v1177 = vadd.f32 %v1175, %v1176
  %v1178 = vsel %vm1066, %v506, 0.0
  %v1179 = vadd.f32 %v1177, %v1178
  %v1180 = vsel %vm1066, %v508, 0.0
  %v1181 = vadd.f32 %v1179, %v1180
  %v1182 = vsel %vm1066, %v511, 0.0
  %v1183 = vadd.f32 %v1181, %v1182
  %v1184 = vsel %vm1066, %v513, 0.0
  %v1185 = vadd.f32 %v1183, %v1184
  %v1186 = vsel %vm1066, %v516, 0.0
  %v1187 = vadd.f32 %v1185, %v1186
  %v1188 = vsel %vm1066, %v518, 0.0
  %v1189 = vadd.f32 %v1187, %v1188
  %v1190 = vsel %vm1066, %v521, 0.0
  %v1191 = vadd.f32 %v1189, %v1190
  %v1192 = vsel %vm1066, %v523, 0.0
  %v1193 = vadd.f32 %v1191, %v1192
  %v1194 = vrot.slane %v1193, 4
  %v1195 = vadd.f32 %v1193, %v1194
  %v1196 = vrot.slane %v1195, 2
  %v1197 = vadd.f32 %v1195, %v1196
  %v1198 = vrot.slane %v1197, 1
  %v1199 = vadd.f32 %v1197, %v1198
  %v1200 = vmul.f32 %v1199, 0.001953125
  %v1201 = vsub.f32 %v366, %v1200
  %v1202 = vsub.f32 %v368, %v1200
  %v1203 = vsub.f32 %v371, %v1200
  %v1204 = vsub.f32 %v373, %v1200
  %v1205 = vsub.f32 %v376, %v1200
  %v1206 = vsub.f32 %v378, %v1200
  %v1207 = vsub.f32 %v381, %v1200
  %v1208 = vsub.f32 %v383, %v1200
  %v1209 = vsub.f32 %v386, %v1200
  %v1210 = vsub.f32 %v388, %v1200
  %v1211 = vsub.f32 %v391, %v1200
  %v1212 = vsub.f32 %v393, %v1200
  %v1213 = vsub.f32 %v396, %v1200
  %v1214 = vsub.f32 %v398, %v1200
  %v1215 = vsub.f32 %v401, %v1200
  %v1216 = vsub.f32 %v403, %v1200
  %v1217 = vsub.f32 %v406, %v1200
  %v1218 = vsub.f32 %v408, %v1200
  %v1219 = vsub.f32 %v411, %v1200
  %v1220 = vsub.f32 %v413, %v1200
  %v1221 = vsub.f32 %v416, %v1200
  %v1222 = vsub.f32 %v418, %v1200
  %v1223 = vsub.f32 %v421, %v1200
  %v1224 = vsub.f32 %v423, %v1200
  %v1225 = vsub.f32 %v426, %v1200
  %v1226 = vsub.f32 %v428, %v1200
  %v1227 = vsub.f32 %v431, %v1200
  %v1228 = vsub.f32 %v433, %v1200
  %v1229 = vsub.f32 %v436, %v1200
  %v1230 = vsub.f32 %v438, %v1200
  %v1231 = vsub.f32 %v441, %v1200
  %v1232 = vsub.f32 %v443, %v1200
  %v1233 = vsub.f32 %v446, %v1200
  %v1234 = vsub.f32 %v448, %v1200
  %v1235 = vsub.f32 %v451, %v1200
  %v1236 = vsub.f32 %v453, %v1200
  %v1237 = vsub.f32 %v456, %v1200
  %v1238 = vsub.f32 %v458, %v1200
  %v1239 = vsub.f32 %v461, %v1200
  %v1240 = vsub.f32 %v463, %v1200
  %v1241 = vsub.f32 %v466, %v1200
  %v1242 = vsub.f32 %v468, %v1200
  %v1243 = vsub.f32 %v471, %v1200
  %v1244 = vsub.f32 %v473, %v1200
  %v1245 = vsub.f32 %v476, %v1200
  %v1246 = vsub.f32 %v478, %v1200
  %v1247 = vsub.f32 %v481, %v1200
  %v1248 = vsub.f32 %v483, %v1200
  %v1249 = vsub.f32 %v486, %v1200
  %v1250 = vsub.f32 %v488, %v1200
  %v1251 = vsub.f32 %v491, %v1200
  %v1252 = vsub.f32 %v493, %v1200
  %v1253 = vsub.f32 %v496, %v1200
  %v1254 = vsub.f32 %v498, %v1200
  %v1255 = vsub.f32 %v501, %v1200
  %v1256 = vsub.f32 %v503, %v1200
  %v1257 = vsub.f32 %v506, %v1200
  %v1258 = vsub.f32 %v508, %v1200
  %v1259 = vsub.f32 %v511, %v1200
  %v1260 = vsub.f32 %v513, %v1200
  %v1261 = vsub.f32 %v516, %v1200
  %v1262 = vsub.f32 %v518, %v1200
  %v1263 = vsub.f32 %v521, %v1200
  %v1264 = vsub.f32 %v523, %v1200
  %v1265 = vmul.f32 %v1201, %v1201
  %v1266 = vmul.f32 %v1202, %v1202
  %v1267 = vmul.f32 %v1203, %v1203
  %v1268 = vmul.f32 %v1204, %v1204
  %v1269 = vmul.f32 %v1205, %v1205
  %v1270 = vmul.f32 %v1206, %v1206
  %v1271 = vmul.f32 %v1207, %v1207
  %v1272 = vmul.f32 %v1208, %v1208
  %v1273 = vmul.f32 %v1209, %v1209
  %v1274 = vmul.f32 %v1210, %v1210
  %v1275 = vmul.f32 %v1211, %v1211
  %v1276 = vmul.f32 %v1212, %v1212
  %v1277 = vmul.f32 %v1213, %v1213
  %v1278 = vmul.f32 %v1214, %v1214
  %v1279 = vmul.f32 %v1215, %v1215
  %v1280 = vmul.f32 %v1216, %v1216
  %v1281 = vmul.f32 %v1217, %v1217
  %v1282 = vmul.f32 %v1218, %v1218
  %v1283 = vmul.f32 %v1219, %v1219
  %v1284 = vmul.f32 %v1220, %v1220
  %v1285 = vmul.f32 %v1221, %v1221
  %v1286 = vmul.f32 %v1222, %v1222
  %v1287 = vmul.f32 %v1223, %v1223
  %v1288 = vmul.f32 %v1224, %v1224
  %v1289 = vmul.f32 %v1225, %v1225
  %v1290 = vmul.f32 %v1226, %v1226
  %v1291 = vmul.f32 %v1227, %v1227
  %v1292 = vmul.f32 %v1228, %v1228
  %v1293 = vmul.f32 %v1229, %v1229
  %v1294 = vmul.f32 %v1230, %v1230
  %v1295 = vmul.f32 %v1231, %v1231
  %v1296 = vmul.f32 %v1232, %v1232
  %v1297 = vmul.f32 %v1233, %v1233
  %v1298 = vmul.f32 %v1234, %v1234
  %v1299 = vmul.f32 %v1235, %v1235
  %v1300 = vmul.f32 %v1236, %v1236
  %v1301 = vmul.f32 %v1237, %v1237
  %v1302 = vmul.f32 %v1238, %v1238
  %v1303 = vmul.f32 %v1239, %v1239
  %v1304 = vmul.f32 %v1240, %v1240
  %v1305 = vmul.f32 %v1241, %v1241
  %v1306 = vmul.f32 %v1242, %v1242
  %v1307 = vmul.f32 %v1243, %v1243
  %v1308 = vmul.f32 %v1244, %v1244
  %v1309 = vmul.f32 %v1245, %v1245
  %v1310 = vmul.f32 %v1246, %v1246
  %v1311 = vmul.f32 %v1247, %v1247
  %v1312 = vmul.f32 %v1248, %v1248
  %v1313 = vmul.f32 %v1249, %v1249
  %v1314 = vmul.f32 %v1250, %v1250
  %v1315 = vmul.f32 %v1251, %v1251
  %v1316 = vmul.f32 %v1252, %v1252
  %v1317 = vmul.f32 %v1253, %v1253
  %v1318 = vmul.f32 %v1254, %v1254
  %v1319 = vmul.f32 %v1255, %v1255
  %v1320 = vmul.f32 %v1256, %v1256
  %v1321 = vmul.f32 %v1257, %v1257
  %v1322 = vmul.f32 %v1258, %v1258
  %v1323 = vmul.f32 %v1259, %v1259
  %v1324 = vmul.f32 %v1260, %v1260
  %v1325 = vmul.f32 %v1261, %v1261
  %v1326 = vmul.f32 %v1262, %v1262
  %v1327 = vmul.f32 %v1263, %v1263
  %v1328 = vmul.f32 %v1264, %v1264
  %v1329 = vsel %vm1066, %v1265, 0.0
  %v1330 = vsel %vm1066, %v1266, 0.0
  %v1331 = vadd.f32 %v1329, %v1330
  %v1332 = vsel %vm1066, %v1267, 0.0
  %v1333 = vadd.f32 %v1331, %v1332
  %v1334 = vsel %vm1066, %v1268, 0.0
  %v1335 = vadd.f32 %v1333, %v1334
  %v1336 = vsel %vm1066, %v1269, 0.0
  %v1337 = vadd.f32 %v1335, %v1336
  %v1338 = vsel %vm1066, %v1270, 0.0
  %v1339 = vadd.f32 %v1337, %v1338
  %v1340 = vsel %vm1066, %v1271, 0.0
  %v1341 = vadd.f32 %v1339, %v1340
  %v1342 = vsel %vm1066, %v1272, 0.0
  %v1343 = vadd.f32 %v1341, %v1342
  %v1344 = vsel %vm1066, %v1273, 0.0
  %v1345 = vadd.f32 %v1343, %v1344
  %v1346 = vsel %vm1066, %v1274, 0.0
  %v1347 = vadd.f32 %v1345, %v1346
  %v1348 = vsel %vm1066, %v1275, 0.0
  %v1349 = vadd.f32 %v1347, %v1348
  %v1350 = vsel %vm1066, %v1276, 0.0
  %v1351 = vadd.f32 %v1349, %v1350
  %v1352 = vsel %vm1066, %v1277, 0.0
  %v1353 = vadd.f32 %v1351, %v1352
  %v1354 = vsel %vm1066, %v1278, 0.0
  %v1355 = vadd.f32 %v1353, %v1354
  %v1356 = vsel %vm1066, %v1279, 0.0
  %v1357 = vadd.f32 %v1355, %v1356
  %v1358 = vsel %vm1066, %v1280, 0.0
  %v1359 = vadd.f32 %v1357, %v1358
  %v1360 = vsel %vm1066, %v1281, 0.0
  %v1361 = vadd.f32 %v1359, %v1360
  %v1362 = vsel %vm1066, %v1282, 0.0
  %v1363 = vadd.f32 %v1361, %v1362
  %v1364 = vsel %vm1066, %v1283, 0.0
  %v1365 = vadd.f32 %v1363, %v1364
  %v1366 = vsel %vm1066, %v1284, 0.0
  %v1367 = vadd.f32 %v1365, %v1366
  %v1368 = vsel %vm1066, %v1285, 0.0
  %v1369 = vadd.f32 %v1367, %v1368
  %v1370 = vsel %vm1066, %v1286, 0.0
  %v1371 = vadd.f32 %v1369, %v1370
  %v1372 = vsel %vm1066, %v1287, 0.0
  %v1373 = vadd.f32 %v1371, %v1372
  %v1374 = vsel %vm1066, %v1288, 0.0
  %v1375 = vadd.f32 %v1373, %v1374
  %v1376 = vsel %vm1066, %v1289, 0.0
  %v1377 = vadd.f32 %v1375, %v1376
  %v1378 = vsel %vm1066, %v1290, 0.0
  %v1379 = vadd.f32 %v1377, %v1378
  %v1380 = vsel %vm1066, %v1291, 0.0
  %v1381 = vadd.f32 %v1379, %v1380
  %v1382 = vsel %vm1066, %v1292, 0.0
  %v1383 = vadd.f32 %v1381, %v1382
  %v1384 = vsel %vm1066, %v1293, 0.0
  %v1385 = vadd.f32 %v1383, %v1384
  %v1386 = vsel %vm1066, %v1294, 0.0
  %v1387 = vadd.f32 %v1385, %v1386
  %v1388 = vsel %vm1066, %v1295, 0.0
  %v1389 = vadd.f32 %v1387, %v1388
  %v1390 = vsel %vm1066, %v1296, 0.0
  %v1391 = vadd.f32 %v1389, %v1390
  %v1392 = vsel %vm1066, %v1297, 0.0
  %v1393 = vadd.f32 %v1391, %v1392
  %v1394 = vsel %vm1066, %v1298, 0.0
  %v1395 = vadd.f32 %v1393, %v1394
  %v1396 = vsel %vm1066, %v1299, 0.0
  %v1397 = vadd.f32 %v1395, %v1396
  %v1398 = vsel %vm1066, %v1300, 0.0
  %v1399 = vadd.f32 %v1397, %v1398
  %v1400 = vsel %vm1066, %v1301, 0.0
  %v1401 = vadd.f32 %v1399, %v1400
  %v1402 = vsel %vm1066, %v1302, 0.0
  %v1403 = vadd.f32 %v1401, %v1402
  %v1404 = vsel %vm1066, %v1303, 0.0
  %v1405 = vadd.f32 %v1403, %v1404
  %v1406 = vsel %vm1066, %v1304, 0.0
  %v1407 = vadd.f32 %v1405, %v1406
  %v1408 = vsel %vm1066, %v1305, 0.0
  %v1409 = vadd.f32 %v1407, %v1408
  %v1410 = vsel %vm1066, %v1306, 0.0
  %v1411 = vadd.f32 %v1409, %v1410
  %v1412 = vsel %vm1066, %v1307, 0.0
  %v1413 = vadd.f32 %v1411, %v1412
  %v1414 = vsel %vm1066, %v1308, 0.0
  %v1415 = vadd.f32 %v1413, %v1414
  %v1416 = vsel %vm1066, %v1309, 0.0
  %v1417 = vadd.f32 %v1415, %v1416
  %v1418 = vsel %vm1066, %v1310, 0.0
  %v1419 = vadd.f32 %v1417, %v1418
  %v1420 = vsel %vm1066, %v1311, 0.0
  %v1421 = vadd.f32 %v1419, %v1420
  %v1422 = vsel %vm1066, %v1312, 0.0
  %v1423 = vadd.f32 %v1421, %v1422
  %v1424 = vsel %vm1066, %v1313, 0.0
  %v1425 = vadd.f32 %v1423, %v1424
  %v1426 = vsel %vm1066, %v1314, 0.0
  %v1427 = vadd.f32 %v1425, %v1426
  %v1428 = vsel %vm1066, %v1315, 0.0
  %v1429 = vadd.f32 %v1427, %v1428
  %v1430 = vsel %vm1066, %v1316, 0.0
  %v1431 = vadd.f32 %v1429, %v1430
  %v1432 = vsel %vm1066, %v1317, 0.0
  %v1433 = vadd.f32 %v1431, %v1432
  %v1434 = vsel %vm1066, %v1318, 0.0
  %v1435 = vadd.f32 %v1433, %v1434
  %v1436 = vsel %vm1066, %v1319, 0.0
  %v1437 = vadd.f32 %v1435, %v1436
  %v1438 = vsel %vm1066, %v1320, 0.0
  %v1439 = vadd.f32 %v1437, %v1438
  %v1440 = vsel %vm1066, %v1321, 0.0
  %v1441 = vadd.f32 %v1439, %v1440
  %v1442 = vsel %vm1066, %v1322, 0.0
  %v1443 = vadd.f32 %v1441, %v1442
  %v1444 = vsel %vm1066, %v1323, 0.0
  %v1445 = vadd.f32 %v1443, %v1444
  %v1446 = vsel %vm1066, %v1324, 0.0
  %v1447 = vadd.f32 %v1445, %v1446
  %v1448 = vsel %vm1066, %v1325, 0.0
  %v1449 = vadd.f32 %v1447, %v1448
  %v1450 = vsel %vm1066, %v1326, 0.0
  %v1451 = vadd.f32 %v1449, %v1450
  %v1452 = vsel %vm1066, %v1327, 0.0
  %v1453 = vadd.f32 %v1451, %v1452
  %v1454 = vsel %vm1066, %v1328, 0.0
  %v1455 = vadd.f32 %v1453, %v1454
  %v1456 = vrot.slane %v1455, 4
  %v1457 = vadd.f32 %v1455, %v1456
  %v1458 = vrot.slane %v1457, 2
  %v1459 = vadd.f32 %v1457, %v1458
  %v1460 = vrot.slane %v1459, 1
  %v1461 = vadd.f32 %v1459, %v1460
  %v1462 = vmul.f32 %v1461, 0.001953125
  %v1463 = vld [vmem:[%s5] sm:$0x1]
  %v1464 = vadd.f32 %v1462, 1e-05
  %v1465 = vrsqrt.pop %v1464
  %v1466 = vmul.f32 %v1465, %v1464
  %v1467 = vmul.f32 %v1466, %v1465
  %v1468 = vmul.f32 0.5, %v1467
  %v1469 = vsub.f32 1.5, %v1468
  %v1470 = vmul.f32 %v1465, %v1469
  %vm1471 = vweird.f32 %v1464
  %vm1472 = vweird.f32 %v1465
  %vm1473 = vmor %vm1471, %vm1472
  %v1474 = vsel %vm1473, %v1465, %v1470
  %1476 = vrot.lane.b32.xlu0 %v1474, 120
  %v1477 = vpop.permute.xlu0 %1476
  %v1479 = vmul.f32 %v1463, %v1477
  %v1480 = vperm.slane %v1479, 0
  %1482 = vrot.lane.b32.xlu0 %v1480, 8
  %v1483 = vpop.permute.xlu0 %1482
  %v1485 = vmul.f32 %v1201, %v1483
  %v1486 = vmul.f32 %v1202, %v1483
  %v1487 = vmul.f32 %v1203, %v1483
  %v1488 = vmul.f32 %v1204, %v1483
  %v1489 = vmul.f32 %v1205, %v1483
  %v1490 = vmul.f32 %v1206, %v1483
  %v1491 = vmul.f32 %v1207, %v1483
  %v1492 = vmul.f32 %v1208, %v1483
  %v1493 = vmul.f32 %v1209, %v1483
  %v1494 = vmul.f32 %v1210, %v1483
  %v1495 = vmul.f32 %v1211, %v1483
  %v1496 = vmul.f32 %v1212, %v1483
  %v1497 = vmul.f32 %v1213, %v1483
  %v1498 = vmul.f32 %v1214, %v1483
  %v1499 = vmul.f32 %v1215, %v1483
  %v1500 = vmul.f32 %v1216, %v1483
  %v1501 = vmul.f32 %v1217, %v1483
  %v1502 = vmul.f32 %v1218, %v1483
  %v1503 = vmul.f32 %v1219, %v1483
  %v1504 = vmul.f32 %v1220, %v1483
  %v1505 = vmul.f32 %v1221, %v1483
  %v1506 = vmul.f32 %v1222, %v1483
  %v1507 = vmul.f32 %v1223, %v1483
  %v1508 = vmul.f32 %v1224, %v1483
  %v1509 = vmul.f32 %v1225, %v1483
  %v1510 = vmul.f32 %v1226, %v1483
  %v1511 = vmul.f32 %v1227, %v1483
  %v1512 = vmul.f32 %v1228, %v1483
  %v1513 = vmul.f32 %v1229, %v1483
  %v1514 = vmul.f32 %v1230, %v1483
  %v1515 = vmul.f32 %v1231, %v1483
  %v1516 = vmul.f32 %v1232, %v1483
  %v1517 = vmul.f32 %v1233, %v1483
  %v1518 = vmul.f32 %v1234, %v1483
  %v1519 = vmul.f32 %v1235, %v1483
  %v1520 = vmul.f32 %v1236, %v1483
  %v1521 = vmul.f32 %v1237, %v1483
  %v1522 = vmul.f32 %v1238, %v1483
  %v1523 = vmul.f32 %v1239, %v1483
  %v1524 = vmul.f32 %v1240, %v1483
  %v1525 = vmul.f32 %v1241, %v1483
  %v1526 = vmul.f32 %v1242, %v1483
  %v1527 = vmul.f32 %v1243, %v1483
  %v1528 = vmul.f32 %v1244, %v1483
  %v1529 = vmul.f32 %v1245, %v1483
  %v1530 = vmul.f32 %v1246, %v1483
  %v1531 = vmul.f32 %v1247, %v1483
  %v1532 = vmul.f32 %v1248, %v1483
  %v1533 = vmul.f32 %v1249, %v1483
  %v1534 = vmul.f32 %v1250, %v1483
  %v1535 = vmul.f32 %v1251, %v1483
  %v1536 = vmul.f32 %v1252, %v1483
  %v1537 = vmul.f32 %v1253, %v1483
  %v1538 = vmul.f32 %v1254, %v1483
  %v1539 = vmul.f32 %v1255, %v1483
  %v1540 = vmul.f32 %v1256, %v1483
  %v1541 = vmul.f32 %v1257, %v1483
  %v1542 = vmul.f32 %v1258, %v1483
  %v1543 = vmul.f32 %v1259, %v1483
  %v1544 = vmul.f32 %v1260, %v1483
  %v1545 = vmul.f32 %v1261, %v1483
  %v1546 = vmul.f32 %v1262, %v1483
  %v1547 = vmul.f32 %v1263, %v1483
  %v1548 = vmul.f32 %v1264, %v1483
  %v1549 = vld [vmem:[%s5 + $0x1] sm:$0x1]
  %v1550 = vperm.slane %v1549, 0
  %1552 = vrot.lane.b32.xlu0 %v1550, 8
  %v1553 = vpop.permute.xlu0 %1552
  %v1555 = vadd.f32 %v1485, %v1553
  %v1556 = vadd.f32 %v1486, %v1553
  %v1557 = vadd.f32 %v1487, %v1553
  %v1558 = vadd.f32 %v1488, %v1553
  %v1559 = vadd.f32 %v1489, %v1553
  %v1560 = vadd.f32 %v1490, %v1553
  %v1561 = vadd.f32 %v1491, %v1553
  %v1562 = vadd.f32 %v1492, %v1553
  %v1563 = vadd.f32 %v1493, %v1553
  %v1564 = vadd.f32 %v1494, %v1553
  %v1565 = vadd.f32 %v1495, %v1553
  %v1566 = vadd.f32 %v1496, %v1553
  %v1567 = vadd.f32 %v1497, %v1553
  %v1568 = vadd.f32 %v1498, %v1553
  %v1569 = vadd.f32 %v1499, %v1553
  %v1570 = vadd.f32 %v1500, %v1553
  %v1571 = vadd.f32 %v1501, %v1553
  %v1572 = vadd.f32 %v1502, %v1553
  %v1573 = vadd.f32 %v1503, %v1553
  %v1574 = vadd.f32 %v1504, %v1553
  %v1575 = vadd.f32 %v1505, %v1553
  %v1576 = vadd.f32 %v1506, %v1553
  %v1577 = vadd.f32 %v1507, %v1553
  %v1578 = vadd.f32 %v1508, %v1553
  %v1579 = vadd.f32 %v1509, %v1553
  %v1580 = vadd.f32 %v1510, %v1553
  %v1581 = vadd.f32 %v1511, %v1553
  %v1582 = vadd.f32 %v1512, %v1553
  %v1583 = vadd.f32 %v1513, %v1553
  %v1584 = vadd.f32 %v1514, %v1553
  %v1585 = vadd.f32 %v1515, %v1553
  %v1586 = vadd.f32 %v1516, %v1553
  %v1587 = vadd.f32 %v1517, %v1553
  %v1588 = vadd.f32 %v1518, %v1553
  %v1589 = vadd.f32 %v1519, %v1553
  %v1590 = vadd.f32 %v1520, %v1553
  %v1591 = vadd.f32 %v1521, %v1553
  %v1592 = vadd.f32 %v1522, %v1553
  %v1593 = vadd.f32 %v1523, %v1553
  %v1594 = vadd.f32 %v1524, %v1553
  %v1595 = vadd.f32 %v1525, %v1553
  %v1596 = vadd.f32 %v1526, %v1553
  %v1597 = vadd.f32 %v1527, %v1553
  %v1598 = vadd.f32 %v1528, %v1553
  %v1599 = vadd.f32 %v1529, %v1553
  %v1600 = vadd.f32 %v1530, %v1553
  %v1601 = vadd.f32 %v1531, %v1553
  %v1602 = vadd.f32 %v1532, %v1553
  %v1603 = vadd.f32 %v1533, %v1553
  %v1604 = vadd.f32 %v1534, %v1553
  %v1605 = vadd.f32 %v1535, %v1553
  %v1606 = vadd.f32 %v1536, %v1553
  %v1607 = vadd.f32 %v1537, %v1553
  %v1608 = vadd.f32 %v1538, %v1553
  %v1609 = vadd.f32 %v1539, %v1553
  %v1610 = vadd.f32 %v1540, %v1553
  %v1611 = vadd.f32 %v1541, %v1553
  %v1612 = vadd.f32 %v1542, %v1553
  %v1613 = vadd.f32 %v1543, %v1553
  %v1614 = vadd.f32 %v1544, %v1553
  %v1615 = vadd.f32 %v1545, %v1553
  %v1616 = vadd.f32 %v1546, %v1553
  %v1617 = vadd.f32 %v1547, %v1553
  %v1618 = vadd.f32 %v1548, %v1553
  %v1619 = vmax.f32 %v1555, 0.0
  %v1620 = vmax.f32 %v1556, 0.0
  %v1621 = vmax.f32 %v1557, 0.0
  %v1622 = vmax.f32 %v1558, 0.0
  %v1623 = vmax.f32 %v1559, 0.0
  %v1624 = vmax.f32 %v1560, 0.0
  %v1625 = vmax.f32 %v1561, 0.0
  %v1626 = vmax.f32 %v1562, 0.0
  %v1627 = vmax.f32 %v1563, 0.0
  %v1628 = vmax.f32 %v1564, 0.0
  %v1629 = vmax.f32 %v1565, 0.0
  %v1630 = vmax.f32 %v1566, 0.0
  %v1631 = vmax.f32 %v1567, 0.0
  %v1632 = vmax.f32 %v1568, 0.0
  %v1633 = vmax.f32 %v1569, 0.0
  %v1634 = vmax.f32 %v1570, 0.0
  %v1635 = vmax.f32 %v1571, 0.0
  %v1636 = vmax.f32 %v1572, 0.0
  %v1637 = vmax.f32 %v1573, 0.0
  %v1638 = vmax.f32 %v1574, 0.0
  %v1639 = vmax.f32 %v1575, 0.0
  %v1640 = vmax.f32 %v1576, 0.0
  %v1641 = vmax.f32 %v1577, 0.0
  %v1642 = vmax.f32 %v1578, 0.0
  %v1643 = vmax.f32 %v1579, 0.0
  %v1644 = vmax.f32 %v1580, 0.0
  %v1645 = vmax.f32 %v1581, 0.0
  %v1646 = vmax.f32 %v1582, 0.0
  %v1647 = vmax.f32 %v1583, 0.0
  %v1648 = vmax.f32 %v1584, 0.0
  %v1649 = vmax.f32 %v1585, 0.0
  %v1650 = vmax.f32 %v1586, 0.0
  %v1651 = vmax.f32 %v1587, 0.0
  %v1652 = vmax.f32 %v1588, 0.0
  %v1653 = vmax.f32 %v1589, 0.0
  %v1654 = vmax.f32 %v1590, 0.0
  %v1655 = vmax.f32 %v1591, 0.0
  %v1656 = vmax.f32 %v1592, 0.0
  %v1657 = vmax.f32 %v1593, 0.0
  %v1658 = vmax.f32 %v1594, 0.0
  %v1659 = vmax.f32 %v1595, 0.0
  %v1660 = vmax.f32 %v1596, 0.0
  %v1661 = vmax.f32 %v1597, 0.0
  %v1662 = vmax.f32 %v1598, 0.0
  %v1663 = vmax.f32 %v1599, 0.0
  %v1664 = vmax.f32 %v1600, 0.0
  %v1665 = vmax.f32 %v1601, 0.0
  %v1666 = vmax.f32 %v1602, 0.0
  %v1667 = vmax.f32 %v1603, 0.0
  %v1668 = vmax.f32 %v1604, 0.0
  %v1669 = vmax.f32 %v1605, 0.0
  %v1670 = vmax.f32 %v1606, 0.0
  %v1671 = vmax.f32 %v1607, 0.0
  %v1672 = vmax.f32 %v1608, 0.0
  %v1673 = vmax.f32 %v1609, 0.0
  %v1674 = vmax.f32 %v1610, 0.0
  %v1675 = vmax.f32 %v1611, 0.0
  %v1676 = vmax.f32 %v1612, 0.0
  %v1677 = vmax.f32 %v1613, 0.0
  %v1678 = vmax.f32 %v1614, 0.0
  %v1679 = vmax.f32 %v1615, 0.0
  %v1680 = vmax.f32 %v1616, 0.0
  %v1681 = vmax.f32 %v1617, 0.0
  %v1682 = vmax.f32 %v1618, 0.0
  %1715 = vrot.lane.b32.xlu0 %v1619, 120
  %v1716 = vpop.permute.xlu0 %1715
  %1717 = vrot.lane.b32.xlu0 %v1620, 120
  %v1718 = vpop.permute.xlu0 %1717
  %1719 = vrot.lane.b32.xlu0 %v1621, 120
  %v1720 = vpop.permute.xlu0 %1719
  %1721 = vrot.lane.b32.xlu0 %v1622, 120
  %v1722 = vpop.permute.xlu0 %1721
  %1723 = vrot.lane.b32.xlu0 %v1623, 120
  %v1724 = vpop.permute.xlu0 %1723
  %1725 = vrot.lane.b32.xlu0 %v1624, 120
  %v1726 = vpop.permute.xlu0 %1725
  %1727 = vrot.lane.b32.xlu0 %v1625, 120
  %v1728 = vpop.permute.xlu0 %1727
  %1729 = vrot.lane.b32.xlu0 %v1626, 120
  %v1730 = vpop.permute.xlu0 %1729
  %1731 = vrot.lane.b32.xlu0 %v1627, 120
  %v1732 = vpop.permute.xlu0 %1731
  %1733 = vrot.lane.b32.xlu0 %v1628, 120
  %v1734 = vpop.permute.xlu0 %1733
  %1735 = vrot.lane.b32.xlu0 %v1629, 120
  %v1736 = vpop.permute.xlu0 %1735
  %1737 = vrot.lane.b32.xlu0 %v1630, 120
  %v1738 = vpop.permute.xlu0 %1737
  %1739 = vrot.lane.b32.xlu0 %v1631, 120
  %v1740 = vpop.permute.xlu0 %1739
  %1741 = vrot.lane.b32.xlu0 %v1632, 120
  %v1742 = vpop.permute.xlu0 %1741
  %1743 = vrot.lane.b32.xlu0 %v1633, 120
  %v1744 = vpop.permute.xlu0 %1743
  %1745 = vrot.lane.b32.xlu0 %v1634, 120
  %v1746 = vpop.permute.xlu0 %1745
  %1747 = vrot.lane.b32.xlu0 %v1635, 120
  %v1748 = vpop.permute.xlu0 %1747
  %1749 = vrot.lane.b32.xlu0 %v1636, 120
  %v1750 = vpop.permute.xlu0 %1749
  %1751 = vrot.lane.b32.xlu0 %v1637, 120
  %v1752 = vpop.permute.xlu0 %1751
  %1753 = vrot.lane.b32.xlu0 %v1638, 120
  %v1754 = vpop.permute.xlu0 %1753
  %1755 = vrot.lane.b32.xlu0 %v1639, 120
  %v1756 = vpop.permute.xlu0 %1755
  %1757 = vrot.lane.b32.xlu0 %v1640, 120
  %v1758 = vpop.permute.xlu0 %1757
  %1759 = vrot.lane.b32.xlu0 %v1641, 120
  %v1760 = vpop.permute.xlu0 %1759
  %1761 = vrot.lane.b32.xlu0 %v1642, 120
  %v1762 = vpop.permute.xlu0 %1761
  %1763 = vrot.lane.b32.xlu0 %v1643, 120
  %v1764 = vpop.permute.xlu0 %1763
  %1765 = vrot.lane.b32.xlu0 %v1644, 120
  %v1766 = vpop.permute.xlu0 %1765
  %1767 = vrot.lane.b32.xlu0 %v1645, 120
  %v1768 = vpop.permute.xlu0 %1767
  %1769 = vrot.lane.b32.xlu0 %v1646, 120
  %v1770 = vpop.permute.xlu0 %1769
  %1771 = vrot.lane.b32.xlu0 %v1647, 120
  %v1772 = vpop.permute.xlu0 %1771
  %1773 = vrot.lane.b32.xlu0 %v1648, 120
  %v1774 = vpop.permute.xlu0 %1773
  %1775 = vrot.lane.b32.xlu0 %v1649, 120
  %v1776 = vpop.permute.xlu0 %1775
  %1777 = vrot.lane.b32.xlu0 %v1650, 120
  %v1778 = vpop.permute.xlu0 %1777
  %vm1780 = vcmask 1040384
  %v1781 = vrot.slane 0.0, 7
  %v1782 = vsel %vm1780, %v1781, %v1781
  %v1783 = vrot.slane %v1716, 7
  %v1784 = vrot.slane %v1718, 7
  %v1785 = vsel %vm1780, %v1783, %v1784
  %v1786 = vrot.slane %v1720, 7
  %v1787 = vrot.slane %v1722, 7
  %v1788 = vsel %vm1780, %v1786, %v1787
  %v1789 = vrot.slane %v1724, 7
  %v1790 = vrot.slane %v1726, 7
  %v1791 = vsel %vm1780, %v1789, %v1790
  %v1792 = vrot.slane %v1728, 7
  %v1793 = vrot.slane %v1730, 7
  %v1794 = vsel %vm1780, %v1792, %v1793
  %v1795 = vrot.slane %v1732, 7
  %v1796 = vrot.slane %v1734, 7
  %v1797 = vsel %vm1780, %v1795, %v1796
  %v1798 = vrot.slane %v1736, 7
  %v1799 = vrot.slane %v1738, 7
  %v1800 = vsel %vm1780, %v1798, %v1799
  %v1801 = vrot.slane %v1740, 7
  %v1802 = vrot.slane %v1742, 7
  %v1803 = vsel %vm1780, %v1801, %v1802
  %v1804 = vrot.slane %v1744, 7
  %v1805 = vrot.slane %v1746, 7
  %v1806 = vsel %vm1780, %v1804, %v1805
  %v1807 = vrot.slane %v1748, 7
  %v1808 = vrot.slane %v1750, 7
  %v1809 = vsel %vm1780, %v1807, %v1808
  %v1810 = vrot.slane %v1752, 7
  %v1811 = vrot.slane %v1754, 7
  %v1812 = vsel %vm1780, %v1810, %v1811
  %v1813 = vrot.slane %v1756, 7
  %v1814 = vrot.slane %v1758, 7
  %v1815 = vsel %vm1780, %v1813, %v1814
  %v1816 = vrot.slane %v1760, 7
  %v1817 = vrot.slane %v1762, 7
  %v1818 = vsel %vm1780, %v1816, %v1817
  %v1819 = vrot.slane %v1764, 7
  %v1820 = vrot.slane %v1766, 7
  %v1821 = vsel %vm1780, %v1819, %v1820
  %v1822 = vrot.slane %v1768, 7
  %v1823 = vrot.slane %v1770, 7
  %v1824 = vsel %vm1780, %v1822, %v1823
  %v1825 = vrot.slane %v1772, 7
  %v1826 = vrot.slane %v1774, 7
  %v1827 = vsel %vm1780, %v1825, %v1826
  %v1828 = vrot.slane %v1776, 7
  %v1829 = vrot.slane %v1778, 7
  %v1830 = vsel %vm1780, %v1828, %v1829
  %v1881 = vsel %vm1780, 0.0, %v1781
  %v1882 = vsel %vm1780, 0.0, %v1783
  %v1883 = vsel %vm1780, 0.0, %v1786
  %v1884 = vsel %vm1780, 0.0, %v1789
  %v1885 = vsel %vm1780, 0.0, %v1792
  %v1886 = vsel %vm1780, 0.0, %v1795
  %v1887 = vsel %vm1780, 0.0, %v1798
  %v1888 = vsel %vm1780, 0.0, %v1801
  %v1889 = vsel %vm1780, 0.0, %v1804
  %v1890 = vsel %vm1780, 0.0, %v1807
  %v1891 = vsel %vm1780, 0.0, %v1810
  %v1892 = vsel %vm1780, 0.0, %v1813
  %v1893 = vsel %vm1780, 0.0, %v1816
  %v1894 = vsel %vm1780, 0.0, %v1819
  %v1895 = vsel %vm1780, 0.0, %v1822
  %v1896 = vsel %vm1780, 0.0, %v1825
  %v1897 = vsel %vm1780, 0.0, %v1828
  %v1898 = vsel %vm1780, %v1781, 0.0
  %v1899 = vsel %vm1780, %v1784, 0.0
  %v1900 = vsel %vm1780, %v1787, 0.0
  %v1901 = vsel %vm1780, %v1790, 0.0
  %v1902 = vsel %vm1780, %v1793, 0.0
  %v1903 = vsel %vm1780, %v1796, 0.0
  %v1904 = vsel %vm1780, %v1799, 0.0
  %v1905 = vsel %vm1780, %v1802, 0.0
  %v1906 = vsel %vm1780, %v1805, 0.0
  %v1907 = vsel %vm1780, %v1808, 0.0
  %v1908 = vsel %vm1780, %v1811, 0.0
  %v1909 = vsel %vm1780, %v1814, 0.0
  %v1910 = vsel %vm1780, %v1817, 0.0
  %v1911 = vsel %vm1780, %v1820, 0.0
  %v1912 = vsel %vm1780, %v1823, 0.0
  %v1913 = vsel %vm1780, %v1826, 0.0
  %v1914 = vsel %vm1780, %v1829, 0.0
  %v1915 = vpack.c.bf16 %v1782, %v1881
  %v1916 = vpack.c.bf16 %v1785, %v1882
  %v1917 = vpack.c.bf16 %v1788, %v1883
  %v1918 = vpack.c.bf16 %v1791, %v1884
  %v1919 = vpack.c.bf16 %v1794, %v1885
  %v1920 = vpack.c.bf16 %v1797, %v1886
  %v1921 = vpack.c.bf16 %v1800, %v1887
  %v1922 = vpack.c.bf16 %v1803, %v1888
  %v1923 = vpack.c.bf16 %v1806, %v1889
  %v1924 = vpack.c.bf16 %v1809, %v1890
  %v1925 = vpack.c.bf16 %v1812, %v1891
  %v1926 = vpack.c.bf16 %v1815, %v1892
  %v1927 = vpack.c.bf16 %v1818, %v1893
  %v1928 = vpack.c.bf16 %v1821, %v1894
  %v1929 = vpack.c.bf16 %v1824, %v1895
  %v1930 = vpack.c.bf16 %v1827, %v1896
  %v1931 = vld [vmem:[%s2] sm:$0x3]
  %vm1964 = vcmask 1046528
  %v1965 = vrot.slane %v1881, 1
  %v1966 = vrot.slane %v1782, 1
  %v1967 = vsel %vm1964, %v1965, %v1966
  %v1968 = vrot.slane %v1898, 1
  %v1969 = vsel %vm1964, %v1966, %v1968
  %v1970 = vrot.slane %v1882, 1
  %v1971 = vrot.slane %v1785, 1
  %v1972 = vsel %vm1964, %v1970, %v1971
  %v1973 = vrot.slane %v1899, 1
  %v1974 = vsel %vm1964, %v1971, %v1973
  %v1975 = vrot.slane %v1883, 1
  %v1976 = vrot.slane %v1788, 1
  %v1977 = vsel %vm1964, %v1975, %v1976
  %v1978 = vrot.slane %v1900, 1
  %v1979 = vsel %vm1964, %v1976, %v1978
  %v1980 = vrot.slane %v1884, 1
  %v1981 = vrot.slane %v1791, 1
  %v1982 = vsel %vm1964, %v1980, %v1981
  %v1983 = vrot.slane %v1901, 1
  %v1984 = vsel %vm1964, %v1981, %v1983
  %v1985 = vrot.slane %v1885, 1
  %v1986 = vrot.slane %v1794, 1
  %v1987 = vsel %vm1964, %v1985, %v1986
  %v1988 = vrot.slane %v1902, 1
  %v1989 = vsel %vm1964, %v1986, %v1988
  %v1990 = vrot.slane %v1886, 1
  %v1991 = vrot.slane %v1797, 1
  %v1992 = vsel %vm1964, %v1990, %v1991
  %v1993 = vrot.slane %v1903, 1
  %v1994 = vsel %vm1964, %v1991, %v1993
  %v1995 = vrot.slane %v1887, 1
  %v1996 = vrot.slane %v1800, 1
  %v1997 = vsel %vm1964, %v1995, %v1996
  %v1998 = vrot.slane %v1904, 1
  %v1999 = vsel %vm1964, %v1996, %v1998
  %v2000 = vrot.slane %v1888, 1
  %v2001 = vrot.slane %v1803, 1
  %v2002 = vsel %vm1964, %v2000, %v2001
  %v2003 = vrot.slane %v1905, 1
  %v2004 = vsel %vm1964, %v2001, %v2003
  %v2005 = vrot.slane %v1889, 1
  %v2006 = vrot.slane %v1806, 1
  %v2007 = vsel %vm1964, %v2005, %v2006
  %v2008 = vrot.slane %v1906, 1
  %v2009 = vsel %vm1964, %v2006, %v2008
  %v2010 = vrot.slane %v1890, 1
  %v2011 = vrot.slane %v1809, 1
  %v2012 = vsel %vm1964, %v2010, %v2011
  %v2013 = vrot.slane %v1907, 1
  %v2014 = vsel %vm1964, %v2011, %v2013
  %v2015 = vrot.slane %v1891, 1
  %v2016 = vrot.slane %v1812, 1
  %v2017 = vsel %vm1964, %v2015, %v2016
  %v2018 = vrot.slane %v1908, 1
  %v2019 = vsel %vm1964, %v2016, %v2018
  %v2020 = vrot.slane %v1892, 1
  %v2021 = vrot.slane %v1815, 1
  %v2022 = vsel %vm1964, %v2020, %v2021
  %v2023 = vrot.slane %v1909, 1
  %v2024 = vsel %vm1964, %v2021, %v2023
  %v2025 = vrot.slane %v1893, 1
  %v2026 = vrot.slane %v1818, 1
  %v2027 = vsel %vm1964, %v2025, %v2026
  %v2028 = vrot.slane %v1910, 1
  %v2029 = vsel %vm1964, %v2026, %v2028
  %v2030 = vrot.slane %v1894, 1
  %v2031 = vrot.slane %v1821, 1
  %v2032 = vsel %vm1964, %v2030, %v2031
  %v2033 = vrot.slane %v1911, 1
  %v2034 = vsel %vm1964, %v2031, %v2033
  %v2035 = vrot.slane %v1895, 1
  %v2036 = vrot.slane %v1824, 1
  %v2037 = vsel %vm1964, %v2035, %v2036
  %v2038 = vrot.slane %v1912, 1
  %v2039 = vsel %vm1964, %v2036, %v2038
  %v2040 = vrot.slane %v1896, 1
  %v2041 = vrot.slane %v1827, 1
  %v2042 = vsel %vm1964, %v2040, %v2041
  %v2043 = vrot.slane %v1913, 1
  %v2044 = vsel %vm1964, %v2041, %v2043
  %v2077 = vpack.c.bf16 %v1969, %v1967
  %v2078 = vpack.c.bf16 %v1974, %v1972
  %v2079 = vpack.c.bf16 %v1979, %v1977
  %v2080 = vpack.c.bf16 %v1984, %v1982
  %v2081 = vpack.c.bf16 %v1989, %v1987
  %v2082 = vpack.c.bf16 %v1994, %v1992
  %v2083 = vpack.c.bf16 %v1999, %v1997
  %v2084 = vpack.c.bf16 %v2004, %v2002
  %v2085 = vpack.c.bf16 %v2009, %v2007
  %v2086 = vpack.c.bf16 %v2014, %v2012
  %v2087 = vpack.c.bf16 %v2019, %v2017
  %v2088 = vpack.c.bf16 %v2024, %v2022
  %v2089 = vpack.c.bf16 %v2029, %v2027
  %v2090 = vpack.c.bf16 %v2034, %v2032
  %v2091 = vpack.c.bf16 %v2039, %v2037
  %v2092 = vpack.c.bf16 %v2044, %v2042
  %s2093 = scalar_lea.vmem %s2, 2
  %v2094 = vld [vmem:[%s2093] sm:$0x3]
  %v2096 = vsel %vm255, %v2077, 0
  %v2099 = vsel %vm255, %v2078, 0
  %v2102 = vsel %vm255, %v2079, 0
  %v2105 = vsel %vm255, %v2080, 0
  %v2108 = vsel %vm255, %v2081, 0
  %v2111 = vsel %vm255, %v2082, 0
  %v2114 = vsel %vm255, %v2083, 0
  %v2117 = vsel %vm255, %v2084, 0
  %v2120 = vsel %vm255, %v2085, 0
  %v2123 = vsel %vm255, %v2086, 0
  %v2126 = vsel %vm255, %v2087, 0
  %v2129 = vsel %vm255, %v2088, 0
  %v2132 = vsel %vm255, %v2089, 0
  %v2135 = vsel %vm255, %v2090, 0
  %v2138 = vsel %vm255, %v2091, 0
  %v2141 = vsel %vm255, %v2092, 0
  %v2144 = vsel %vm352, %v2094, 0
  %2146 = vmatpush.bf16.msra.mxu0 0
  %2147 = vmatpush.bf16.msra.mxu0 0
  %2148 = vmatpush.bf16.msra.mxu0 0
  %2149 = vmatpush.bf16.msra.mxu0 0
  %2150 = vmatpush.bf16.msra.mxu0 0
  %2151 = vmatpush.bf16.msra.mxu0 0
  %2152 = vmatpush.bf16.msra.mxu0 0
  %2153 = vmatpush.bf16.msra.mxu0 %v2144
  %2154 = vmatmul.bf16.gmra.mxu0 %v2096
  %v2155 = vpop.f32.mrf.mxu0
  %v2156 = vadd.f32 0.0, %v2155
  %v2157 = vpop.f32.mrf.mxu0
  %v2158 = vadd.f32 0.0, %v2157
  %2159 = vmatmul.bf16.gmra.mxu0 %v2099
  %v2160 = vpop.f32.mrf.mxu0
  %v2161 = vadd.f32 0.0, %v2160
  %v2162 = vpop.f32.mrf.mxu0
  %v2163 = vadd.f32 0.0, %v2162
  %2164 = vmatmul.bf16.gmra.mxu0 %v2102
  %v2165 = vpop.f32.mrf.mxu0
  %v2166 = vadd.f32 0.0, %v2165
  %v2167 = vpop.f32.mrf.mxu0
  %v2168 = vadd.f32 0.0, %v2167
  %2169 = vmatmul.bf16.gmra.mxu0 %v2105
  %v2170 = vpop.f32.mrf.mxu0
  %v2171 = vadd.f32 0.0, %v2170
  %v2172 = vpop.f32.mrf.mxu0
  %v2173 = vadd.f32 0.0, %v2172
  %2174 = vmatmul.bf16.gmra.mxu0 %v2108
  %v2175 = vpop.f32.mrf.mxu0
  %v2176 = vadd.f32 0.0, %v2175
  %v2177 = vpop.f32.mrf.mxu0
  %v2178 = vadd.f32 0.0, %v2177
  %2179 = vmatmul.bf16.gmra.mxu0 %v2111
  %v2180 = vpop.f32.mrf.mxu0
  %v2181 = vadd.f32 0.0, %v2180
  %v2182 = vpop.f32.mrf.mxu0
  %v2183 = vadd.f32 0.0, %v2182
  %2184 = vmatmul.bf16.gmra.mxu0 %v2114
  %v2185 = vpop.f32.mrf.mxu0
  %v2186 = vadd.f32 0.0, %v2185
  %v2187 = vpop.f32.mrf.mxu0
  %v2188 = vadd.f32 0.0, %v2187
  %2189 = vmatmul.bf16.gmra.mxu0 %v2117
  %v2190 = vpop.f32.mrf.mxu0
  %v2191 = vadd.f32 0.0, %v2190
  %v2192 = vpop.f32.mrf.mxu0
  %v2193 = vadd.f32 0.0, %v2192
  %2194 = vmatmul.bf16.gmra.mxu0 %v2120
  %v2195 = vpop.f32.mrf.mxu0
  %v2196 = vadd.f32 0.0, %v2195
  %v2197 = vpop.f32.mrf.mxu0
  %v2198 = vadd.f32 0.0, %v2197
  %2199 = vmatmul.bf16.gmra.mxu0 %v2123
  %v2200 = vpop.f32.mrf.mxu0
  %v2201 = vadd.f32 0.0, %v2200
  %v2202 = vpop.f32.mrf.mxu0
  %v2203 = vadd.f32 0.0, %v2202
  %2204 = vmatmul.bf16.gmra.mxu0 %v2126
  %v2205 = vpop.f32.mrf.mxu0
  %v2206 = vadd.f32 0.0, %v2205
  %v2207 = vpop.f32.mrf.mxu0
  %v2208 = vadd.f32 0.0, %v2207
  %2209 = vmatmul.bf16.gmra.mxu0 %v2129
  %v2210 = vpop.f32.mrf.mxu0
  %v2211 = vadd.f32 0.0, %v2210
  %v2212 = vpop.f32.mrf.mxu0
  %v2213 = vadd.f32 0.0, %v2212
  %2214 = vmatmul.bf16.gmra.mxu0 %v2132
  %v2215 = vpop.f32.mrf.mxu0
  %v2216 = vadd.f32 0.0, %v2215
  %v2217 = vpop.f32.mrf.mxu0
  %v2218 = vadd.f32 0.0, %v2217
  %2219 = vmatmul.bf16.gmra.mxu0 %v2135
  %v2220 = vpop.f32.mrf.mxu0
  %v2221 = vadd.f32 0.0, %v2220
  %v2222 = vpop.f32.mrf.mxu0
  %v2223 = vadd.f32 0.0, %v2222
  %2224 = vmatmul.bf16.gmra.mxu0 %v2138
  %v2225 = vpop.f32.mrf.mxu0
  %v2226 = vadd.f32 0.0, %v2225
  %v2227 = vpop.f32.mrf.mxu0
  %v2228 = vadd.f32 0.0, %v2227
  %2229 = vmatmul.bf16.gmra.mxu0 %v2141
  %v2230 = vpop.f32.mrf.mxu0
  %v2231 = vadd.f32 0.0, %v2230
  %v2232 = vpop.f32.mrf.mxu0
  %v2233 = vadd.f32 0.0, %v2232
  %2234 = vdwg.mxu0
  %v2236 = vsel %vm255, %v1915, 0
  %v2239 = vsel %vm255, %v1916, 0
  %v2242 = vsel %vm255, %v1917, 0
  %v2245 = vsel %vm255, %v1918, 0
  %v2248 = vsel %vm255, %v1919, 0
  %v2251 = vsel %vm255, %v1920, 0
  %v2254 = vsel %vm255, %v1921, 0
  %v2257 = vsel %vm255, %v1922, 0
  %v2260 = vsel %vm255, %v1923, 0
  %v2263 = vsel %vm255, %v1924, 0
  %v2266 = vsel %vm255, %v1925, 0
  %v2269 = vsel %vm255, %v1926, 0
  %v2272 = vsel %vm255, %v1927, 0
  %v2275 = vsel %vm255, %v1928, 0
  %v2278 = vsel %vm255, %v1929, 0
  %v2281 = vsel %vm255, %v1930, 0
  %v2284 = vsel %vm352, %v1931, 0
  %2286 = vmatpush.bf16.msra.mxu0 0
  %2287 = vmatpush.bf16.msra.mxu0 0
  %2288 = vmatpush.bf16.msra.mxu0 0
  %2289 = vmatpush.bf16.msra.mxu0 0
  %2290 = vmatpush.bf16.msra.mxu0 0
  %2291 = vmatpush.bf16.msra.mxu0 0
  %2292 = vmatpush.bf16.msra.mxu0 0
  %2293 = vmatpush.bf16.msra.mxu0 %v2284
  %2294 = vmatmul.bf16.gmra.mxu0 %v2236
  %v2295 = vpop.f32.mrf.mxu0
  %v2296 = vadd.f32 %v2156, %v2295
  %v2297 = vpop.f32.mrf.mxu0
  %v2298 = vadd.f32 %v2158, %v2297
  %2299 = vmatmul.bf16.gmra.mxu0 %v2239
  %v2300 = vpop.f32.mrf.mxu0
  %v2301 = vadd.f32 %v2161, %v2300
  %v2302 = vpop.f32.mrf.mxu0
  %v2303 = vadd.f32 %v2163, %v2302
  %2304 = vmatmul.bf16.gmra.mxu0 %v2242
  %v2305 = vpop.f32.mrf.mxu0
  %v2306 = vadd.f32 %v2166, %v2305
  %v2307 = vpop.f32.mrf.mxu0
  %v2308 = vadd.f32 %v2168, %v2307
  %2309 = vmatmul.bf16.gmra.mxu0 %v2245
  %v2310 = vpop.f32.mrf.mxu0
  %v2311 = vadd.f32 %v2171, %v2310
  %v2312 = vpop.f32.mrf.mxu0
  %v2313 = vadd.f32 %v2173, %v2312
  %2314 = vmatmul.bf16.gmra.mxu0 %v2248
  %v2315 = vpop.f32.mrf.mxu0
  %v2316 = vadd.f32 %v2176, %v2315
  %v2317 = vpop.f32.mrf.mxu0
  %v2318 = vadd.f32 %v2178, %v2317
  %2319 = vmatmul.bf16.gmra.mxu0 %v2251
  %v2320 = vpop.f32.mrf.mxu0
  %v2321 = vadd.f32 %v2181, %v2320
  %v2322 = vpop.f32.mrf.mxu0
  %v2323 = vadd.f32 %v2183, %v2322
  %2324 = vmatmul.bf16.gmra.mxu0 %v2254
  %v2325 = vpop.f32.mrf.mxu0
  %v2326 = vadd.f32 %v2186, %v2325
  %v2327 = vpop.f32.mrf.mxu0
  %v2328 = vadd.f32 %v2188, %v2327
  %2329 = vmatmul.bf16.gmra.mxu0 %v2257
  %v2330 = vpop.f32.mrf.mxu0
  %v2331 = vadd.f32 %v2191, %v2330
  %v2332 = vpop.f32.mrf.mxu0
  %v2333 = vadd.f32 %v2193, %v2332
  %2334 = vmatmul.bf16.gmra.mxu0 %v2260
  %v2335 = vpop.f32.mrf.mxu0
  %v2336 = vadd.f32 %v2196, %v2335
  %v2337 = vpop.f32.mrf.mxu0
  %v2338 = vadd.f32 %v2198, %v2337
  %2339 = vmatmul.bf16.gmra.mxu0 %v2263
  %v2340 = vpop.f32.mrf.mxu0
  %v2341 = vadd.f32 %v2201, %v2340
  %v2342 = vpop.f32.mrf.mxu0
  %v2343 = vadd.f32 %v2203, %v2342
  %2344 = vmatmul.bf16.gmra.mxu0 %v2266
  %v2345 = vpop.f32.mrf.mxu0
  %v2346 = vadd.f32 %v2206, %v2345
  %v2347 = vpop.f32.mrf.mxu0
  %v2348 = vadd.f32 %v2208, %v2347
  %2349 = vmatmul.bf16.gmra.mxu0 %v2269
  %v2350 = vpop.f32.mrf.mxu0
  %v2351 = vadd.f32 %v2211, %v2350
  %v2352 = vpop.f32.mrf.mxu0
  %v2353 = vadd.f32 %v2213, %v2352
  %2354 = vmatmul.bf16.gmra.mxu0 %v2272
  %v2355 = vpop.f32.mrf.mxu0
  %v2356 = vadd.f32 %v2216, %v2355
  %v2357 = vpop.f32.mrf.mxu0
  %v2358 = vadd.f32 %v2218, %v2357
  %2359 = vmatmul.bf16.gmra.mxu0 %v2275
  %v2360 = vpop.f32.mrf.mxu0
  %v2361 = vadd.f32 %v2221, %v2360
  %v2362 = vpop.f32.mrf.mxu0
  %v2363 = vadd.f32 %v2223, %v2362
  %2364 = vmatmul.bf16.gmra.mxu0 %v2278
  %v2365 = vpop.f32.mrf.mxu0
  %v2366 = vadd.f32 %v2226, %v2365
  %v2367 = vpop.f32.mrf.mxu0
  %v2368 = vadd.f32 %v2228, %v2367
  %2369 = vmatmul.bf16.gmra.mxu0 %v2281
  %v2370 = vpop.f32.mrf.mxu0
  %v2371 = vadd.f32 %v2231, %v2370
  %v2372 = vpop.f32.mrf.mxu0
  %v2373 = vadd.f32 %v2233, %v2372
  %2374 = vdwg.mxu0
  %vm2375 = vcmask 1045504
  %v2376 = vrot.slane %v1881, 2
  %v2377 = vrot.slane %v1782, 2
  %v2378 = vsel %vm2375, %v2376, %v2377
  %v2379 = vrot.slane %v1898, 2
  %v2380 = vsel %vm2375, %v2377, %v2379
  %v2381 = vrot.slane %v1882, 2
  %v2382 = vrot.slane %v1785, 2
  %v2383 = vsel %vm2375, %v2381, %v2382
  %v2384 = vrot.slane %v1899, 2
  %v2385 = vsel %vm2375, %v2382, %v2384
  %v2386 = vrot.slane %v1883, 2
  %v2387 = vrot.slane %v1788, 2
  %v2388 = vsel %vm2375, %v2386, %v2387
  %v2389 = vrot.slane %v1900, 2
  %v2390 = vsel %vm2375, %v2387, %v2389
  %v2391 = vrot.slane %v1884, 2
  %v2392 = vrot.slane %v1791, 2
  %v2393 = vsel %vm2375, %v2391, %v2392
  %v2394 = vrot.slane %v1901, 2
  %v2395 = vsel %vm2375, %v2392, %v2394
  %v2396 = vrot.slane %v1885, 2
  %v2397 = vrot.slane %v1794, 2
  %v2398 = vsel %vm2375, %v2396, %v2397
  %v2399 = vrot.slane %v1902, 2
  %v2400 = vsel %vm2375, %v2397, %v2399
  %v2401 = vrot.slane %v1886, 2
  %v2402 = vrot.slane %v1797, 2
  %v2403 = vsel %vm2375, %v2401, %v2402
  %v2404 = vrot.slane %v1903, 2
  %v2405 = vsel %vm2375, %v2402, %v2404
  %v2406 = vrot.slane %v1887, 2
  %v2407 = vrot.slane %v1800, 2
  %v2408 = vsel %vm2375, %v2406, %v2407
  %v2409 = vrot.slane %v1904, 2
  %v2410 = vsel %vm2375, %v2407, %v2409
  %v2411 = vrot.slane %v1888, 2
  %v2412 = vrot.slane %v1803, 2
  %v2413 = vsel %vm2375, %v2411, %v2412
  %v2414 = vrot.slane %v1905, 2
  %v2415 = vsel %vm2375, %v2412, %v2414
  %v2416 = vrot.slane %v1889, 2
  %v2417 = vrot.slane %v1806, 2
  %v2418 = vsel %vm2375, %v2416, %v2417
  %v2419 = vrot.slane %v1906, 2
  %v2420 = vsel %vm2375, %v2417, %v2419
  %v2421 = vrot.slane %v1890, 2
  %v2422 = vrot.slane %v1809, 2
  %v2423 = vsel %vm2375, %v2421, %v2422
  %v2424 = vrot.slane %v1907, 2
  %v2425 = vsel %vm2375, %v2422, %v2424
  %v2426 = vrot.slane %v1891, 2
  %v2427 = vrot.slane %v1812, 2
  %v2428 = vsel %vm2375, %v2426, %v2427
  %v2429 = vrot.slane %v1908, 2
  %v2430 = vsel %vm2375, %v2427, %v2429
  %v2431 = vrot.slane %v1892, 2
  %v2432 = vrot.slane %v1815, 2
  %v2433 = vsel %vm2375, %v2431, %v2432
  %v2434 = vrot.slane %v1909, 2
  %v2435 = vsel %vm2375, %v2432, %v2434
  %v2436 = vrot.slane %v1893, 2
  %v2437 = vrot.slane %v1818, 2
  %v2438 = vsel %vm2375, %v2436, %v2437
  %v2439 = vrot.slane %v1910, 2
  %v2440 = vsel %vm2375, %v2437, %v2439
  %v2441 = vrot.slane %v1894, 2
  %v2442 = vrot.slane %v1821, 2
  %v2443 = vsel %vm2375, %v2441, %v2442
  %v2444 = vrot.slane %v1911, 2
  %v2445 = vsel %vm2375, %v2442, %v2444
  %v2446 = vrot.slane %v1895, 2
  %v2447 = vrot.slane %v1824, 2
  %v2448 = vsel %vm2375, %v2446, %v2447
  %v2449 = vrot.slane %v1912, 2
  %v2450 = vsel %vm2375, %v2447, %v2449
  %v2451 = vrot.slane %v1896, 2
  %v2452 = vrot.slane %v1827, 2
  %v2453 = vsel %vm2375, %v2451, %v2452
  %v2454 = vrot.slane %v1913, 2
  %v2455 = vsel %vm2375, %v2452, %v2454
  %v2488 = vpack.c.bf16 %v2380, %v2378
  %v2489 = vpack.c.bf16 %v2385, %v2383
  %v2490 = vpack.c.bf16 %v2390, %v2388
  %v2491 = vpack.c.bf16 %v2395, %v2393
  %v2492 = vpack.c.bf16 %v2400, %v2398
  %v2493 = vpack.c.bf16 %v2405, %v2403
  %v2494 = vpack.c.bf16 %v2410, %v2408
  %v2495 = vpack.c.bf16 %v2415, %v2413
  %v2496 = vpack.c.bf16 %v2420, %v2418
  %v2497 = vpack.c.bf16 %v2425, %v2423
  %v2498 = vpack.c.bf16 %v2430, %v2428
  %v2499 = vpack.c.bf16 %v2435, %v2433
  %v2500 = vpack.c.bf16 %v2440, %v2438
  %v2501 = vpack.c.bf16 %v2445, %v2443
  %v2502 = vpack.c.bf16 %v2450, %v2448
  %v2503 = vpack.c.bf16 %v2455, %v2453
  %s2504 = scalar_lea.vmem %s2, 4
  %v2505 = vld [vmem:[%s2504] sm:$0x3]
  %v2507 = vsel %vm255, %v2488, 0
  %v2510 = vsel %vm255, %v2489, 0
  %v2513 = vsel %vm255, %v2490, 0
  %v2516 = vsel %vm255, %v2491, 0
  %v2519 = vsel %vm255, %v2492, 0
  %v2522 = vsel %vm255, %v2493, 0
  %v2525 = vsel %vm255, %v2494, 0
  %v2528 = vsel %vm255, %v2495, 0
  %v2531 = vsel %vm255, %v2496, 0
  %v2534 = vsel %vm255, %v2497, 0
  %v2537 = vsel %vm255, %v2498, 0
  %v2540 = vsel %vm255, %v2499, 0
  %v2543 = vsel %vm255, %v2500, 0
  %v2546 = vsel %vm255, %v2501, 0
  %v2549 = vsel %vm255, %v2502, 0
  %v2552 = vsel %vm255, %v2503, 0
  %v2555 = vsel %vm352, %v2505, 0
  %2557 = vmatpush.bf16.msra.mxu0 0
  %2558 = vmatpush.bf16.msra.mxu0 0
  %2559 = vmatpush.bf16.msra.mxu0 0
  %2560 = vmatpush.bf16.msra.mxu0 0
  %2561 = vmatpush.bf16.msra.mxu0 0
  %2562 = vmatpush.bf16.msra.mxu0 0
  %2563 = vmatpush.bf16.msra.mxu0 0
  %2564 = vmatpush.bf16.msra.mxu0 %v2555
  %2565 = vmatmul.bf16.gmra.mxu0 %v2507
  %v2566 = vpop.f32.mrf.mxu0
  %v2567 = vadd.f32 0.0, %v2566
  %v2568 = vpop.f32.mrf.mxu0
  %v2569 = vadd.f32 0.0, %v2568
  %2570 = vmatmul.bf16.gmra.mxu0 %v2510
  %v2571 = vpop.f32.mrf.mxu0
  %v2572 = vadd.f32 0.0, %v2571
  %v2573 = vpop.f32.mrf.mxu0
  %v2574 = vadd.f32 0.0, %v2573
  %2575 = vmatmul.bf16.gmra.mxu0 %v2513
  %v2576 = vpop.f32.mrf.mxu0
  %v2577 = vadd.f32 0.0, %v2576
  %v2578 = vpop.f32.mrf.mxu0
  %v2579 = vadd.f32 0.0, %v2578
  %2580 = vmatmul.bf16.gmra.mxu0 %v2516
  %v2581 = vpop.f32.mrf.mxu0
  %v2582 = vadd.f32 0.0, %v2581
  %v2583 = vpop.f32.mrf.mxu0
  %v2584 = vadd.f32 0.0, %v2583
  %2585 = vmatmul.bf16.gmra.mxu0 %v2519
  %v2586 = vpop.f32.mrf.mxu0
  %v2587 = vadd.f32 0.0, %v2586
  %v2588 = vpop.f32.mrf.mxu0
  %v2589 = vadd.f32 0.0, %v2588
  %2590 = vmatmul.bf16.gmra.mxu0 %v2522
  %v2591 = vpop.f32.mrf.mxu0
  %v2592 = vadd.f32 0.0, %v2591
  %v2593 = vpop.f32.mrf.mxu0
  %v2594 = vadd.f32 0.0, %v2593
  %2595 = vmatmul.bf16.gmra.mxu0 %v2525
  %v2596 = vpop.f32.mrf.mxu0
  %v2597 = vadd.f32 0.0, %v2596
  %v2598 = vpop.f32.mrf.mxu0
  %v2599 = vadd.f32 0.0, %v2598
  %2600 = vmatmul.bf16.gmra.mxu0 %v2528
  %v2601 = vpop.f32.mrf.mxu0
  %v2602 = vadd.f32 0.0, %v2601
  %v2603 = vpop.f32.mrf.mxu0
  %v2604 = vadd.f32 0.0, %v2603
  %2605 = vmatmul.bf16.gmra.mxu0 %v2531
  %v2606 = vpop.f32.mrf.mxu0
  %v2607 = vadd.f32 0.0, %v2606
  %v2608 = vpop.f32.mrf.mxu0
  %v2609 = vadd.f32 0.0, %v2608
  %2610 = vmatmul.bf16.gmra.mxu0 %v2534
  %v2611 = vpop.f32.mrf.mxu0
  %v2612 = vadd.f32 0.0, %v2611
  %v2613 = vpop.f32.mrf.mxu0
  %v2614 = vadd.f32 0.0, %v2613
  %2615 = vmatmul.bf16.gmra.mxu0 %v2537
  %v2616 = vpop.f32.mrf.mxu0
  %v2617 = vadd.f32 0.0, %v2616
  %v2618 = vpop.f32.mrf.mxu0
  %v2619 = vadd.f32 0.0, %v2618
  %2620 = vmatmul.bf16.gmra.mxu0 %v2540
  %v2621 = vpop.f32.mrf.mxu0
  %v2622 = vadd.f32 0.0, %v2621
  %v2623 = vpop.f32.mrf.mxu0
  %v2624 = vadd.f32 0.0, %v2623
  %2625 = vmatmul.bf16.gmra.mxu0 %v2543
  %v2626 = vpop.f32.mrf.mxu0
  %v2627 = vadd.f32 0.0, %v2626
  %v2628 = vpop.f32.mrf.mxu0
  %v2629 = vadd.f32 0.0, %v2628
  %2630 = vmatmul.bf16.gmra.mxu0 %v2546
  %v2631 = vpop.f32.mrf.mxu0
  %v2632 = vadd.f32 0.0, %v2631
  %v2633 = vpop.f32.mrf.mxu0
  %v2634 = vadd.f32 0.0, %v2633
  %2635 = vmatmul.bf16.gmra.mxu0 %v2549
  %v2636 = vpop.f32.mrf.mxu0
  %v2637 = vadd.f32 0.0, %v2636
  %v2638 = vpop.f32.mrf.mxu0
  %v2639 = vadd.f32 0.0, %v2638
  %2640 = vmatmul.bf16.gmra.mxu0 %v2552
  %v2641 = vpop.f32.mrf.mxu0
  %v2642 = vadd.f32 0.0, %v2641
  %v2643 = vpop.f32.mrf.mxu0
  %v2644 = vadd.f32 0.0, %v2643
  %2645 = vdwg.mxu0
  %v2646 = vadd.f32 %v2296, %v2567
  %v2647 = vadd.f32 %v2298, %v2569
  %v2648 = vadd.f32 %v2301, %v2572
  %v2649 = vadd.f32 %v2303, %v2574
  %v2650 = vadd.f32 %v2306, %v2577
  %v2651 = vadd.f32 %v2308, %v2579
  %v2652 = vadd.f32 %v2311, %v2582
  %v2653 = vadd.f32 %v2313, %v2584
  %v2654 = vadd.f32 %v2316, %v2587
  %v2655 = vadd.f32 %v2318, %v2589
  %v2656 = vadd.f32 %v2321, %v2592
  %v2657 = vadd.f32 %v2323, %v2594
  %v2658 = vadd.f32 %v2326, %v2597
  %v2659 = vadd.f32 %v2328, %v2599
  %v2660 = vadd.f32 %v2331, %v2602
  %v2661 = vadd.f32 %v2333, %v2604
  %v2662 = vadd.f32 %v2336, %v2607
  %v2663 = vadd.f32 %v2338, %v2609
  %v2664 = vadd.f32 %v2341, %v2612
  %v2665 = vadd.f32 %v2343, %v2614
  %v2666 = vadd.f32 %v2346, %v2617
  %v2667 = vadd.f32 %v2348, %v2619
  %v2668 = vadd.f32 %v2351, %v2622
  %v2669 = vadd.f32 %v2353, %v2624
  %v2670 = vadd.f32 %v2356, %v2627
  %v2671 = vadd.f32 %v2358, %v2629
  %v2672 = vadd.f32 %v2361, %v2632
  %v2673 = vadd.f32 %v2363, %v2634
  %v2674 = vadd.f32 %v2366, %v2637
  %v2675 = vadd.f32 %v2368, %v2639
  %v2676 = vadd.f32 %v2371, %v2642
  %v2677 = vadd.f32 %v2373, %v2644
  %v2678 = vpack.c.bf16 %v1830, %v1897
  %s2679 = scalar_lea.vmem %s2, 6
  %v2680 = vld [vmem:[%s2679] sm:$0x3]
  %v2682 = vsel %vm255, %v2678, 0
  %v2685 = vsel %vm352, %v2680, 0
  %2687 = vmatpush.bf16.msra.mxu0 0
  %2688 = vmatpush.bf16.msra.mxu0 0
  %2689 = vmatpush.bf16.msra.mxu0 0
  %2690 = vmatpush.bf16.msra.mxu0 0
  %2691 = vmatpush.bf16.msra.mxu0 0
  %2692 = vmatpush.bf16.msra.mxu0 0
  %2693 = vmatpush.bf16.msra.mxu0 0
  %2694 = vmatpush.bf16.msra.mxu0 %v2685
  %2695 = vmatmul.bf16.gmra.mxu0 %v2239
  %v2696 = vpop.f32.mrf.mxu0
  %v2697 = vadd.f32 0.0, %v2696
  %v2698 = vpop.f32.mrf.mxu0
  %v2699 = vadd.f32 0.0, %v2698
  %2700 = vmatmul.bf16.gmra.mxu0 %v2242
  %v2701 = vpop.f32.mrf.mxu0
  %v2702 = vadd.f32 0.0, %v2701
  %v2703 = vpop.f32.mrf.mxu0
  %v2704 = vadd.f32 0.0, %v2703
  %2705 = vmatmul.bf16.gmra.mxu0 %v2245
  %v2706 = vpop.f32.mrf.mxu0
  %v2707 = vadd.f32 0.0, %v2706
  %v2708 = vpop.f32.mrf.mxu0
  %v2709 = vadd.f32 0.0, %v2708
  %2710 = vmatmul.bf16.gmra.mxu0 %v2248
  %v2711 = vpop.f32.mrf.mxu0
  %v2712 = vadd.f32 0.0, %v2711
  %v2713 = vpop.f32.mrf.mxu0
  %v2714 = vadd.f32 0.0, %v2713
  %2715 = vmatmul.bf16.gmra.mxu0 %v2251
  %v2716 = vpop.f32.mrf.mxu0
  %v2717 = vadd.f32 0.0, %v2716
  %v2718 = vpop.f32.mrf.mxu0
  %v2719 = vadd.f32 0.0, %v2718
  %2720 = vmatmul.bf16.gmra.mxu0 %v2254
  %v2721 = vpop.f32.mrf.mxu0
  %v2722 = vadd.f32 0.0, %v2721
  %v2723 = vpop.f32.mrf.mxu0
  %v2724 = vadd.f32 0.0, %v2723
  %2725 = vmatmul.bf16.gmra.mxu0 %v2257
  %v2726 = vpop.f32.mrf.mxu0
  %v2727 = vadd.f32 0.0, %v2726
  %v2728 = vpop.f32.mrf.mxu0
  %v2729 = vadd.f32 0.0, %v2728
  %2730 = vmatmul.bf16.gmra.mxu0 %v2260
  %v2731 = vpop.f32.mrf.mxu0
  %v2732 = vadd.f32 0.0, %v2731
  %v2733 = vpop.f32.mrf.mxu0
  %v2734 = vadd.f32 0.0, %v2733
  %2735 = vmatmul.bf16.gmra.mxu0 %v2263
  %v2736 = vpop.f32.mrf.mxu0
  %v2737 = vadd.f32 0.0, %v2736
  %v2738 = vpop.f32.mrf.mxu0
  %v2739 = vadd.f32 0.0, %v2738
  %2740 = vmatmul.bf16.gmra.mxu0 %v2266
  %v2741 = vpop.f32.mrf.mxu0
  %v2742 = vadd.f32 0.0, %v2741
  %v2743 = vpop.f32.mrf.mxu0
  %v2744 = vadd.f32 0.0, %v2743
  %2745 = vmatmul.bf16.gmra.mxu0 %v2269
  %v2746 = vpop.f32.mrf.mxu0
  %v2747 = vadd.f32 0.0, %v2746
  %v2748 = vpop.f32.mrf.mxu0
  %v2749 = vadd.f32 0.0, %v2748
  %2750 = vmatmul.bf16.gmra.mxu0 %v2272
  %v2751 = vpop.f32.mrf.mxu0
  %v2752 = vadd.f32 0.0, %v2751
  %v2753 = vpop.f32.mrf.mxu0
  %v2754 = vadd.f32 0.0, %v2753
  %2755 = vmatmul.bf16.gmra.mxu0 %v2275
  %v2756 = vpop.f32.mrf.mxu0
  %v2757 = vadd.f32 0.0, %v2756
  %v2758 = vpop.f32.mrf.mxu0
  %v2759 = vadd.f32 0.0, %v2758
  %2760 = vmatmul.bf16.gmra.mxu0 %v2278
  %v2761 = vpop.f32.mrf.mxu0
  %v2762 = vadd.f32 0.0, %v2761
  %v2763 = vpop.f32.mrf.mxu0
  %v2764 = vadd.f32 0.0, %v2763
  %2765 = vmatmul.bf16.gmra.mxu0 %v2281
  %v2766 = vpop.f32.mrf.mxu0
  %v2767 = vadd.f32 0.0, %v2766
  %v2768 = vpop.f32.mrf.mxu0
  %v2769 = vadd.f32 0.0, %v2768
  %2770 = vmatmul.bf16.gmra.mxu0 %v2682
  %v2771 = vpop.f32.mrf.mxu0
  %v2772 = vadd.f32 0.0, %v2771
  %v2773 = vpop.f32.mrf.mxu0
  %v2774 = vadd.f32 0.0, %v2773
  %2775 = vdwg.mxu0
  %v2776 = vadd.f32 %v2646, %v2697
  %v2777 = vadd.f32 %v2647, %v2699
  %v2778 = vadd.f32 %v2648, %v2702
  %v2779 = vadd.f32 %v2649, %v2704
  %v2780 = vadd.f32 %v2650, %v2707
  %v2781 = vadd.f32 %v2651, %v2709
  %v2782 = vadd.f32 %v2652, %v2712
  %v2783 = vadd.f32 %v2653, %v2714
  %v2784 = vadd.f32 %v2654, %v2717
  %v2785 = vadd.f32 %v2655, %v2719
  %v2786 = vadd.f32 %v2656, %v2722
  %v2787 = vadd.f32 %v2657, %v2724
  %v2788 = vadd.f32 %v2658, %v2727
  %v2789 = vadd.f32 %v2659, %v2729
  %v2790 = vadd.f32 %v2660, %v2732
  %v2791 = vadd.f32 %v2661, %v2734
  %v2792 = vadd.f32 %v2662, %v2737
  %v2793 = vadd.f32 %v2663, %v2739
  %v2794 = vadd.f32 %v2664, %v2742
  %v2795 = vadd.f32 %v2665, %v2744
  %v2796 = vadd.f32 %v2666, %v2747
  %v2797 = vadd.f32 %v2667, %v2749
  %v2798 = vadd.f32 %v2668, %v2752
  %v2799 = vadd.f32 %v2669, %v2754
  %v2800 = vadd.f32 %v2670, %v2757
  %v2801 = vadd.f32 %v2671, %v2759
  %v2802 = vadd.f32 %v2672, %v2762
  %v2803 = vadd.f32 %v2673, %v2764
  %v2804 = vadd.f32 %v2674, %v2767
  %v2805 = vadd.f32 %v2675, %v2769
  %v2806 = vadd.f32 %v2676, %v2772
  %v2807 = vadd.f32 %v2677, %v2774
  %v2810 = vrot.slane %v1897, 1
  %v2811 = vrot.slane %v1830, 1
  %v2812 = vsel %vm1964, %v2810, %v2811
  %v2813 = vrot.slane %v1914, 1
  %v2814 = vsel %vm1964, %v2811, %v2813
  %v2817 = vpack.c.bf16 %v2814, %v2812
  %s2818 = scalar_lea.vmem %s2, 8
  %v2819 = vld [vmem:[%s2818] sm:$0x3]
  %v2821 = vsel %vm255, %v2817, 0
  %v2824 = vsel %vm352, %v2819, 0
  %2826 = vmatpush.bf16.msra.mxu0 0
  %2827 = vmatpush.bf16.msra.mxu0 0
  %2828 = vmatpush.bf16.msra.mxu0 0
  %2829 = vmatpush.bf16.msra.mxu0 0
  %2830 = vmatpush.bf16.msra.mxu0 0
  %2831 = vmatpush.bf16.msra.mxu0 0
  %2832 = vmatpush.bf16.msra.mxu0 0
  %2833 = vmatpush.bf16.msra.mxu0 %v2824
  %2834 = vmatmul.bf16.gmra.mxu0 %v2099
  %v2835 = vpop.f32.mrf.mxu0
  %v2836 = vadd.f32 0.0, %v2835
  %v2837 = vpop.f32.mrf.mxu0
  %v2838 = vadd.f32 0.0, %v2837
  %2839 = vmatmul.bf16.gmra.mxu0 %v2102
  %v2840 = vpop.f32.mrf.mxu0
  %v2841 = vadd.f32 0.0, %v2840
  %v2842 = vpop.f32.mrf.mxu0
  %v2843 = vadd.f32 0.0, %v2842
  %2844 = vmatmul.bf16.gmra.mxu0 %v2105
  %v2845 = vpop.f32.mrf.mxu0
  %v2846 = vadd.f32 0.0, %v2845
  %v2847 = vpop.f32.mrf.mxu0
  %v2848 = vadd.f32 0.0, %v2847
  %2849 = vmatmul.bf16.gmra.mxu0 %v2108
  %v2850 = vpop.f32.mrf.mxu0
  %v2851 = vadd.f32 0.0, %v2850
  %v2852 = vpop.f32.mrf.mxu0
  %v2853 = vadd.f32 0.0, %v2852
  %2854 = vmatmul.bf16.gmra.mxu0 %v2111
  %v2855 = vpop.f32.mrf.mxu0
  %v2856 = vadd.f32 0.0, %v2855
  %v2857 = vpop.f32.mrf.mxu0
  %v2858 = vadd.f32 0.0, %v2857
  %2859 = vmatmul.bf16.gmra.mxu0 %v2114
  %v2860 = vpop.f32.mrf.mxu0
  %v2861 = vadd.f32 0.0, %v2860
  %v2862 = vpop.f32.mrf.mxu0
  %v2863 = vadd.f32 0.0, %v2862
  %2864 = vmatmul.bf16.gmra.mxu0 %v2117
  %v2865 = vpop.f32.mrf.mxu0
  %v2866 = vadd.f32 0.0, %v2865
  %v2867 = vpop.f32.mrf.mxu0
  %v2868 = vadd.f32 0.0, %v2867
  %2869 = vmatmul.bf16.gmra.mxu0 %v2120
  %v2870 = vpop.f32.mrf.mxu0
  %v2871 = vadd.f32 0.0, %v2870
  %v2872 = vpop.f32.mrf.mxu0
  %v2873 = vadd.f32 0.0, %v2872
  %2874 = vmatmul.bf16.gmra.mxu0 %v2123
  %v2875 = vpop.f32.mrf.mxu0
  %v2876 = vadd.f32 0.0, %v2875
  %v2877 = vpop.f32.mrf.mxu0
  %v2878 = vadd.f32 0.0, %v2877
  %2879 = vmatmul.bf16.gmra.mxu0 %v2126
  %v2880 = vpop.f32.mrf.mxu0
  %v2881 = vadd.f32 0.0, %v2880
  %v2882 = vpop.f32.mrf.mxu0
  %v2883 = vadd.f32 0.0, %v2882
  %2884 = vmatmul.bf16.gmra.mxu0 %v2129
  %v2885 = vpop.f32.mrf.mxu0
  %v2886 = vadd.f32 0.0, %v2885
  %v2887 = vpop.f32.mrf.mxu0
  %v2888 = vadd.f32 0.0, %v2887
  %2889 = vmatmul.bf16.gmra.mxu0 %v2132
  %v2890 = vpop.f32.mrf.mxu0
  %v2891 = vadd.f32 0.0, %v2890
  %v2892 = vpop.f32.mrf.mxu0
  %v2893 = vadd.f32 0.0, %v2892
  %2894 = vmatmul.bf16.gmra.mxu0 %v2135
  %v2895 = vpop.f32.mrf.mxu0
  %v2896 = vadd.f32 0.0, %v2895
  %v2897 = vpop.f32.mrf.mxu0
  %v2898 = vadd.f32 0.0, %v2897
  %2899 = vmatmul.bf16.gmra.mxu0 %v2138
  %v2900 = vpop.f32.mrf.mxu0
  %v2901 = vadd.f32 0.0, %v2900
  %v2902 = vpop.f32.mrf.mxu0
  %v2903 = vadd.f32 0.0, %v2902
  %2904 = vmatmul.bf16.gmra.mxu0 %v2141
  %v2905 = vpop.f32.mrf.mxu0
  %v2906 = vadd.f32 0.0, %v2905
  %v2907 = vpop.f32.mrf.mxu0
  %v2908 = vadd.f32 0.0, %v2907
  %2909 = vmatmul.bf16.gmra.mxu0 %v2821
  %v2910 = vpop.f32.mrf.mxu0
  %v2911 = vadd.f32 0.0, %v2910
  %v2912 = vpop.f32.mrf.mxu0
  %v2913 = vadd.f32 0.0, %v2912
  %2914 = vdwg.mxu0
  %v2915 = vadd.f32 %v2776, %v2836
  %v2916 = vadd.f32 %v2777, %v2838
  %v2917 = vadd.f32 %v2778, %v2841
  %v2918 = vadd.f32 %v2779, %v2843
  %v2919 = vadd.f32 %v2780, %v2846
  %v2920 = vadd.f32 %v2781, %v2848
  %v2921 = vadd.f32 %v2782, %v2851
  %v2922 = vadd.f32 %v2783, %v2853
  %v2923 = vadd.f32 %v2784, %v2856
  %v2924 = vadd.f32 %v2785, %v2858
  %v2925 = vadd.f32 %v2786, %v2861
  %v2926 = vadd.f32 %v2787, %v2863
  %v2927 = vadd.f32 %v2788, %v2866
  %v2928 = vadd.f32 %v2789, %v2868
  %v2929 = vadd.f32 %v2790, %v2871
  %v2930 = vadd.f32 %v2791, %v2873
  %v2931 = vadd.f32 %v2792, %v2876
  %v2932 = vadd.f32 %v2793, %v2878
  %v2933 = vadd.f32 %v2794, %v2881
  %v2934 = vadd.f32 %v2795, %v2883
  %v2935 = vadd.f32 %v2796, %v2886
  %v2936 = vadd.f32 %v2797, %v2888
  %v2937 = vadd.f32 %v2798, %v2891
  %v2938 = vadd.f32 %v2799, %v2893
  %v2939 = vadd.f32 %v2800, %v2896
  %v2940 = vadd.f32 %v2801, %v2898
  %v2941 = vadd.f32 %v2802, %v2901
  %v2942 = vadd.f32 %v2803, %v2903
  %v2943 = vadd.f32 %v2804, %v2906
  %v2944 = vadd.f32 %v2805, %v2908
  %v2945 = vadd.f32 %v2806, %v2911
  %v2946 = vadd.f32 %v2807, %v2913
  %v2947 = vrot.slane %v1897, 2
  %v2948 = vrot.slane %v1830, 2
  %v2949 = vsel %vm2375, %v2947, %v2948
  %v2950 = vrot.slane %v1914, 2
  %v2951 = vsel %vm2375, %v2948, %v2950
  %v2954 = vpack.c.bf16 %v2951, %v2949
  %s2955 = scalar_lea.vmem %s2, 10
  %v2956 = vld [vmem:[%s2955] sm:$0x3]
  %v2958 = vsel %vm255, %v2954, 0
  %v2961 = vsel %vm352, %v2956, 0
  %2963 = vmatpush.bf16.msra.mxu0 0
  %2964 = vmatpush.bf16.msra.mxu0 0
  %2965 = vmatpush.bf16.msra.mxu0 0
  %2966 = vmatpush.bf16.msra.mxu0 0
  %2967 = vmatpush.bf16.msra.mxu0 0
  %2968 = vmatpush.bf16.msra.mxu0 0
  %2969 = vmatpush.bf16.msra.mxu0 0
  %2970 = vmatpush.bf16.msra.mxu0 %v2961
  %2971 = vmatmul.bf16.gmra.mxu0 %v2510
  %v2972 = vpop.f32.mrf.mxu0
  %v2973 = vadd.f32 0.0, %v2972
  %v2974 = vpop.f32.mrf.mxu0
  %v2975 = vadd.f32 0.0, %v2974
  %2976 = vmatmul.bf16.gmra.mxu0 %v2513
  %v2977 = vpop.f32.mrf.mxu0
  %v2978 = vadd.f32 0.0, %v2977
  %v2979 = vpop.f32.mrf.mxu0
  %v2980 = vadd.f32 0.0, %v2979
  %2981 = vmatmul.bf16.gmra.mxu0 %v2516
  %v2982 = vpop.f32.mrf.mxu0
  %v2983 = vadd.f32 0.0, %v2982
  %v2984 = vpop.f32.mrf.mxu0
  %v2985 = vadd.f32 0.0, %v2984
  %2986 = vmatmul.bf16.gmra.mxu0 %v2519
  %v2987 = vpop.f32.mrf.mxu0
  %v2988 = vadd.f32 0.0, %v2987
  %v2989 = vpop.f32.mrf.mxu0
  %v2990 = vadd.f32 0.0, %v2989
  %2991 = vmatmul.bf16.gmra.mxu0 %v2522
  %v2992 = vpop.f32.mrf.mxu0
  %v2993 = vadd.f32 0.0, %v2992
  %v2994 = vpop.f32.mrf.mxu0
  %v2995 = vadd.f32 0.0, %v2994
  %2996 = vmatmul.bf16.gmra.mxu0 %v2525
  %v2997 = vpop.f32.mrf.mxu0
  %v2998 = vadd.f32 0.0, %v2997
  %v2999 = vpop.f32.mrf.mxu0
  %v3000 = vadd.f32 0.0, %v2999
  %3001 = vmatmul.bf16.gmra.mxu0 %v2528
  %v3002 = vpop.f32.mrf.mxu0
  %v3003 = vadd.f32 0.0, %v3002
  %v3004 = vpop.f32.mrf.mxu0
  %v3005 = vadd.f32 0.0, %v3004
  %3006 = vmatmul.bf16.gmra.mxu0 %v2531
  %v3007 = vpop.f32.mrf.mxu0
  %v3008 = vadd.f32 0.0, %v3007
  %v3009 = vpop.f32.mrf.mxu0
  %v3010 = vadd.f32 0.0, %v3009
  %3011 = vmatmul.bf16.gmra.mxu0 %v2534
  %v3012 = vpop.f32.mrf.mxu0
  %v3013 = vadd.f32 0.0, %v3012
  %v3014 = vpop.f32.mrf.mxu0
  %v3015 = vadd.f32 0.0, %v3014
  %3016 = vmatmul.bf16.gmra.mxu0 %v2537
  %v3017 = vpop.f32.mrf.mxu0
  %v3018 = vadd.f32 0.0, %v3017
  %v3019 = vpop.f32.mrf.mxu0
  %v3020 = vadd.f32 0.0, %v3019
  %3021 = vmatmul.bf16.gmra.mxu0 %v2540
  %v3022 = vpop.f32.mrf.mxu0
  %v3023 = vadd.f32 0.0, %v3022
  %v3024 = vpop.f32.mrf.mxu0
  %v3025 = vadd.f32 0.0, %v3024
  %3026 = vmatmul.bf16.gmra.mxu0 %v2543
  %v3027 = vpop.f32.mrf.mxu0
  %v3028 = vadd.f32 0.0, %v3027
  %v3029 = vpop.f32.mrf.mxu0
  %v3030 = vadd.f32 0.0, %v3029
  %3031 = vmatmul.bf16.gmra.mxu0 %v2546
  %v3032 = vpop.f32.mrf.mxu0
  %v3033 = vadd.f32 0.0, %v3032
  %v3034 = vpop.f32.mrf.mxu0
  %v3035 = vadd.f32 0.0, %v3034
  %3036 = vmatmul.bf16.gmra.mxu0 %v2549
  %v3037 = vpop.f32.mrf.mxu0
  %v3038 = vadd.f32 0.0, %v3037
  %v3039 = vpop.f32.mrf.mxu0
  %v3040 = vadd.f32 0.0, %v3039
  %3041 = vmatmul.bf16.gmra.mxu0 %v2552
  %v3042 = vpop.f32.mrf.mxu0
  %v3043 = vadd.f32 0.0, %v3042
  %v3044 = vpop.f32.mrf.mxu0
  %v3045 = vadd.f32 0.0, %v3044
  %3046 = vmatmul.bf16.gmra.mxu0 %v2958
  %v3047 = vpop.f32.mrf.mxu0
  %v3048 = vadd.f32 0.0, %v3047
  %v3049 = vpop.f32.mrf.mxu0
  %v3050 = vadd.f32 0.0, %v3049
  %3051 = vdwg.mxu0
  %v3052 = vadd.f32 %v2915, %v2973
  %v3053 = vadd.f32 %v2916, %v2975
  %v3054 = vadd.f32 %v2917, %v2978
  %v3055 = vadd.f32 %v2918, %v2980
  %v3056 = vadd.f32 %v2919, %v2983
  %v3057 = vadd.f32 %v2920, %v2985
  %v3058 = vadd.f32 %v2921, %v2988
  %v3059 = vadd.f32 %v2922, %v2990
  %v3060 = vadd.f32 %v2923, %v2993
  %v3061 = vadd.f32 %v2924, %v2995
  %v3062 = vadd.f32 %v2925, %v2998
  %v3063 = vadd.f32 %v2926, %v3000
  %v3064 = vadd.f32 %v2927, %v3003
  %v3065 = vadd.f32 %v2928, %v3005
  %v3066 = vadd.f32 %v2929, %v3008
  %v3067 = vadd.f32 %v2930, %v3010
  %v3068 = vadd.f32 %v2931, %v3013
  %v3069 = vadd.f32 %v2932, %v3015
  %v3070 = vadd.f32 %v2933, %v3018
  %v3071 = vadd.f32 %v2934, %v3020
  %v3072 = vadd.f32 %v2935, %v3023
  %v3073 = vadd.f32 %v2936, %v3025
  %v3074 = vadd.f32 %v2937, %v3028
  %v3075 = vadd.f32 %v2938, %v3030
  %v3076 = vadd.f32 %v2939, %v3033
  %v3077 = vadd.f32 %v2940, %v3035
  %v3078 = vadd.f32 %v2941, %v3038
  %v3079 = vadd.f32 %v2942, %v3040
  %v3080 = vadd.f32 %v2943, %v3043
  %v3081 = vadd.f32 %v2944, %v3045
  %v3082 = vadd.f32 %v2945, %v3048
  %v3083 = vadd.f32 %v2946, %v3050
  %s3084 = scalar_lea.vmem %s2, 12
  %v3085 = vld [vmem:[%s3084] sm:$0x3]
  %v3087 = vsel %vm352, %v3085, 0
  %3089 = vmatpush.bf16.msra.mxu0 0
  %3090 = vmatpush.bf16.msra.mxu0 0
  %3091 = vmatpush.bf16.msra.mxu0 0
  %3092 = vmatpush.bf16.msra.mxu0 0
  %3093 = vmatpush.bf16.msra.mxu0 0
  %3094 = vmatpush.bf16.msra.mxu0 0
  %3095 = vmatpush.bf16.msra.mxu0 0
  %3096 = vmatpush.bf16.msra.mxu0 %v3087
  %3097 = vmatmul.bf16.gmra.mxu0 %v2242
  %v3098 = vpop.f32.mrf.mxu0
  %v3099 = vadd.f32 0.0, %v3098
  %v3100 = vpop.f32.mrf.mxu0
  %v3101 = vadd.f32 0.0, %v3100
  %3102 = vmatmul.bf16.gmra.mxu0 %v2245
  %v3103 = vpop.f32.mrf.mxu0
  %v3104 = vadd.f32 0.0, %v3103
  %v3105 = vpop.f32.mrf.mxu0
  %v3106 = vadd.f32 0.0, %v3105
  %3107 = vmatmul.bf16.gmra.mxu0 %v2248
  %v3108 = vpop.f32.mrf.mxu0
  %v3109 = vadd.f32 0.0, %v3108
  %v3110 = vpop.f32.mrf.mxu0
  %v3111 = vadd.f32 0.0, %v3110
  %3112 = vmatmul.bf16.gmra.mxu0 %v2251
  %v3113 = vpop.f32.mrf.mxu0
  %v3114 = vadd.f32 0.0, %v3113
  %v3115 = vpop.f32.mrf.mxu0
  %v3116 = vadd.f32 0.0, %v3115
  %3117 = vmatmul.bf16.gmra.mxu0 %v2254
  %v3118 = vpop.f32.mrf.mxu0
  %v3119 = vadd.f32 0.0, %v3118
  %v3120 = vpop.f32.mrf.mxu0
  %v3121 = vadd.f32 0.0, %v3120
  %3122 = vmatmul.bf16.gmra.mxu0 %v2257
  %v3123 = vpop.f32.mrf.mxu0
  %v3124 = vadd.f32 0.0, %v3123
  %v3125 = vpop.f32.mrf.mxu0
  %v3126 = vadd.f32 0.0, %v3125
  %3127 = vmatmul.bf16.gmra.mxu0 %v2260
  %v3128 = vpop.f32.mrf.mxu0
  %v3129 = vadd.f32 0.0, %v3128
  %v3130 = vpop.f32.mrf.mxu0
  %v3131 = vadd.f32 0.0, %v3130
  %3132 = vmatmul.bf16.gmra.mxu0 %v2263
  %v3133 = vpop.f32.mrf.mxu0
  %v3134 = vadd.f32 0.0, %v3133
  %v3135 = vpop.f32.mrf.mxu0
  %v3136 = vadd.f32 0.0, %v3135
  %3137 = vmatmul.bf16.gmra.mxu0 %v2266
  %v3138 = vpop.f32.mrf.mxu0
  %v3139 = vadd.f32 0.0, %v3138
  %v3140 = vpop.f32.mrf.mxu0
  %v3141 = vadd.f32 0.0, %v3140
  %3142 = vmatmul.bf16.gmra.mxu0 %v2269
  %v3143 = vpop.f32.mrf.mxu0
  %v3144 = vadd.f32 0.0, %v3143
  %v3145 = vpop.f32.mrf.mxu0
  %v3146 = vadd.f32 0.0, %v3145
  %3147 = vmatmul.bf16.gmra.mxu0 %v2272
  %v3148 = vpop.f32.mrf.mxu0
  %v3149 = vadd.f32 0.0, %v3148
  %v3150 = vpop.f32.mrf.mxu0
  %v3151 = vadd.f32 0.0, %v3150
  %3152 = vmatmul.bf16.gmra.mxu0 %v2275
  %v3153 = vpop.f32.mrf.mxu0
  %v3154 = vadd.f32 0.0, %v3153
  %v3155 = vpop.f32.mrf.mxu0
  %v3156 = vadd.f32 0.0, %v3155
  %3157 = vmatmul.bf16.gmra.mxu0 %v2278
  %v3158 = vpop.f32.mrf.mxu0
  %v3159 = vadd.f32 0.0, %v3158
  %v3160 = vpop.f32.mrf.mxu0
  %v3161 = vadd.f32 0.0, %v3160
  %3162 = vmatmul.bf16.gmra.mxu0 %v2281
  %v3163 = vpop.f32.mrf.mxu0
  %v3164 = vadd.f32 0.0, %v3163
  %v3165 = vpop.f32.mrf.mxu0
  %v3166 = vadd.f32 0.0, %v3165
  %3167 = vmatmul.bf16.gmra.mxu0 %v2682
  %v3168 = vpop.f32.mrf.mxu0
  %v3169 = vadd.f32 0.0, %v3168
  %v3170 = vpop.f32.mrf.mxu0
  %v3171 = vadd.f32 0.0, %v3170
  %3172 = vmatmul.bf16.gmra.mxu0 %v2236
  %v3173 = vpop.f32.mrf.mxu0
  %v3174 = vadd.f32 0.0, %v3173
  %v3175 = vpop.f32.mrf.mxu0
  %v3176 = vadd.f32 0.0, %v3175
  %3177 = vdwg.mxu0
  %v3178 = vadd.f32 %v3052, %v3099
  %v3179 = vadd.f32 %v3053, %v3101
  %v3180 = vadd.f32 %v3054, %v3104
  %v3181 = vadd.f32 %v3055, %v3106
  %v3182 = vadd.f32 %v3056, %v3109
  %v3183 = vadd.f32 %v3057, %v3111
  %v3184 = vadd.f32 %v3058, %v3114
  %v3185 = vadd.f32 %v3059, %v3116
  %v3186 = vadd.f32 %v3060, %v3119
  %v3187 = vadd.f32 %v3061, %v3121
  %v3188 = vadd.f32 %v3062, %v3124
  %v3189 = vadd.f32 %v3063, %v3126
  %v3190 = vadd.f32 %v3064, %v3129
  %v3191 = vadd.f32 %v3065, %v3131
  %v3192 = vadd.f32 %v3066, %v3134
  %v3193 = vadd.f32 %v3067, %v3136
  %v3194 = vadd.f32 %v3068, %v3139
  %v3195 = vadd.f32 %v3069, %v3141
  %v3196 = vadd.f32 %v3070, %v3144
  %v3197 = vadd.f32 %v3071, %v3146
  %v3198 = vadd.f32 %v3072, %v3149
  %v3199 = vadd.f32 %v3073, %v3151
  %v3200 = vadd.f32 %v3074, %v3154
  %v3201 = vadd.f32 %v3075, %v3156
  %v3202 = vadd.f32 %v3076, %v3159
  %v3203 = vadd.f32 %v3077, %v3161
  %v3204 = vadd.f32 %v3078, %v3164
  %v3205 = vadd.f32 %v3079, %v3166
  %v3206 = vadd.f32 %v3080, %v3169
  %v3207 = vadd.f32 %v3081, %v3171
  %v3208 = vadd.f32 %v3082, %v3174
  %v3209 = vadd.f32 %v3083, %v3176
  %s3210 = scalar_lea.vmem %s2, 14
  %v3211 = vld [vmem:[%s3210] sm:$0x3]
  %v3213 = vsel %vm352, %v3211, 0
  %3215 = vmatpush.bf16.msra.mxu0 0
  %3216 = vmatpush.bf16.msra.mxu0 0
  %3217 = vmatpush.bf16.msra.mxu0 0
  %3218 = vmatpush.bf16.msra.mxu0 0
  %3219 = vmatpush.bf16.msra.mxu0 0
  %3220 = vmatpush.bf16.msra.mxu0 0
  %3221 = vmatpush.bf16.msra.mxu0 0
  %3222 = vmatpush.bf16.msra.mxu0 %v3213
  %3223 = vmatmul.bf16.gmra.mxu0 %v2102
  %v3224 = vpop.f32.mrf.mxu0
  %v3225 = vadd.f32 0.0, %v3224
  %v3226 = vpop.f32.mrf.mxu0
  %v3227 = vadd.f32 0.0, %v3226
  %3228 = vmatmul.bf16.gmra.mxu0 %v2105
  %v3229 = vpop.f32.mrf.mxu0
  %v3230 = vadd.f32 0.0, %v3229
  %v3231 = vpop.f32.mrf.mxu0
  %v3232 = vadd.f32 0.0, %v3231
  %3233 = vmatmul.bf16.gmra.mxu0 %v2108
  %v3234 = vpop.f32.mrf.mxu0
  %v3235 = vadd.f32 0.0, %v3234
  %v3236 = vpop.f32.mrf.mxu0
  %v3237 = vadd.f32 0.0, %v3236
  %3238 = vmatmul.bf16.gmra.mxu0 %v2111
  %v3239 = vpop.f32.mrf.mxu0
  %v3240 = vadd.f32 0.0, %v3239
  %v3241 = vpop.f32.mrf.mxu0
  %v3242 = vadd.f32 0.0, %v3241
  %3243 = vmatmul.bf16.gmra.mxu0 %v2114
  %v3244 = vpop.f32.mrf.mxu0
  %v3245 = vadd.f32 0.0, %v3244
  %v3246 = vpop.f32.mrf.mxu0
  %v3247 = vadd.f32 0.0, %v3246
  %3248 = vmatmul.bf16.gmra.mxu0 %v2117
  %v3249 = vpop.f32.mrf.mxu0
  %v3250 = vadd.f32 0.0, %v3249
  %v3251 = vpop.f32.mrf.mxu0
  %v3252 = vadd.f32 0.0, %v3251
  %3253 = vmatmul.bf16.gmra.mxu0 %v2120
  %v3254 = vpop.f32.mrf.mxu0
  %v3255 = vadd.f32 0.0, %v3254
  %v3256 = vpop.f32.mrf.mxu0
  %v3257 = vadd.f32 0.0, %v3256
  %3258 = vmatmul.bf16.gmra.mxu0 %v2123
  %v3259 = vpop.f32.mrf.mxu0
  %v3260 = vadd.f32 0.0, %v3259
  %v3261 = vpop.f32.mrf.mxu0
  %v3262 = vadd.f32 0.0, %v3261
  %3263 = vmatmul.bf16.gmra.mxu0 %v2126
  %v3264 = vpop.f32.mrf.mxu0
  %v3265 = vadd.f32 0.0, %v3264
  %v3266 = vpop.f32.mrf.mxu0
  %v3267 = vadd.f32 0.0, %v3266
  %3268 = vmatmul.bf16.gmra.mxu0 %v2129
  %v3269 = vpop.f32.mrf.mxu0
  %v3270 = vadd.f32 0.0, %v3269
  %v3271 = vpop.f32.mrf.mxu0
  %v3272 = vadd.f32 0.0, %v3271
  %3273 = vmatmul.bf16.gmra.mxu0 %v2132
  %v3274 = vpop.f32.mrf.mxu0
  %v3275 = vadd.f32 0.0, %v3274
  %v3276 = vpop.f32.mrf.mxu0
  %v3277 = vadd.f32 0.0, %v3276
  %3278 = vmatmul.bf16.gmra.mxu0 %v2135
  %v3279 = vpop.f32.mrf.mxu0
  %v3280 = vadd.f32 0.0, %v3279
  %v3281 = vpop.f32.mrf.mxu0
  %v3282 = vadd.f32 0.0, %v3281
  %3283 = vmatmul.bf16.gmra.mxu0 %v2138
  %v3284 = vpop.f32.mrf.mxu0
  %v3285 = vadd.f32 0.0, %v3284
  %v3286 = vpop.f32.mrf.mxu0
  %v3287 = vadd.f32 0.0, %v3286
  %3288 = vmatmul.bf16.gmra.mxu0 %v2141
  %v3289 = vpop.f32.mrf.mxu0
  %v3290 = vadd.f32 0.0, %v3289
  %v3291 = vpop.f32.mrf.mxu0
  %v3292 = vadd.f32 0.0, %v3291
  %3293 = vmatmul.bf16.gmra.mxu0 %v2821
  %v3294 = vpop.f32.mrf.mxu0
  %v3295 = vadd.f32 0.0, %v3294
  %v3296 = vpop.f32.mrf.mxu0
  %v3297 = vadd.f32 0.0, %v3296
  %3298 = vmatmul.bf16.gmra.mxu0 %v2096
  %v3299 = vpop.f32.mrf.mxu0
  %v3300 = vadd.f32 0.0, %v3299
  %v3301 = vpop.f32.mrf.mxu0
  %v3302 = vadd.f32 0.0, %v3301
  %3303 = vdwg.mxu0
  %v3304 = vadd.f32 %v3178, %v3225
  %v3305 = vadd.f32 %v3179, %v3227
  %v3306 = vadd.f32 %v3180, %v3230
  %v3307 = vadd.f32 %v3181, %v3232
  %v3308 = vadd.f32 %v3182, %v3235
  %v3309 = vadd.f32 %v3183, %v3237
  %v3310 = vadd.f32 %v3184, %v3240
  %v3311 = vadd.f32 %v3185, %v3242
  %v3312 = vadd.f32 %v3186, %v3245
  %v3313 = vadd.f32 %v3187, %v3247
  %v3314 = vadd.f32 %v3188, %v3250
  %v3315 = vadd.f32 %v3189, %v3252
  %v3316 = vadd.f32 %v3190, %v3255
  %v3317 = vadd.f32 %v3191, %v3257
  %v3318 = vadd.f32 %v3192, %v3260
  %v3319 = vadd.f32 %v3193, %v3262
  %v3320 = vadd.f32 %v3194, %v3265
  %v3321 = vadd.f32 %v3195, %v3267
  %v3322 = vadd.f32 %v3196, %v3270
  %v3323 = vadd.f32 %v3197, %v3272
  %v3324 = vadd.f32 %v3198, %v3275
  %v3325 = vadd.f32 %v3199, %v3277
  %v3326 = vadd.f32 %v3200, %v3280
  %v3327 = vadd.f32 %v3201, %v3282
  %v3328 = vadd.f32 %v3202, %v3285
  %v3329 = vadd.f32 %v3203, %v3287
  %v3330 = vadd.f32 %v3204, %v3290
  %v3331 = vadd.f32 %v3205, %v3292
  %v3332 = vadd.f32 %v3206, %v3295
  %v3333 = vadd.f32 %v3207, %v3297
  %v3334 = vadd.f32 %v3208, %v3300
  %v3335 = vadd.f32 %v3209, %v3302
  %s3336 = scalar_lea.vmem %s2, 16
  %v3337 = vld [vmem:[%s3336] sm:$0x3]
  %v3339 = vsel %vm352, %v3337, 0
  %3341 = vmatpush.bf16.msra.mxu0 0
  %3342 = vmatpush.bf16.msra.mxu0 0
  %3343 = vmatpush.bf16.msra.mxu0 0
  %3344 = vmatpush.bf16.msra.mxu0 0
  %3345 = vmatpush.bf16.msra.mxu0 0
  %3346 = vmatpush.bf16.msra.mxu0 0
  %3347 = vmatpush.bf16.msra.mxu0 0
  %3348 = vmatpush.bf16.msra.mxu0 %v3339
  %3349 = vmatmul.bf16.gmra.mxu0 %v2513
  %v3350 = vpop.f32.mrf.mxu0
  %v3351 = vadd.f32 0.0, %v3350
  %v3352 = vpop.f32.mrf.mxu0
  %v3353 = vadd.f32 0.0, %v3352
  %3354 = vmatmul.bf16.gmra.mxu0 %v2516
  %v3355 = vpop.f32.mrf.mxu0
  %v3356 = vadd.f32 0.0, %v3355
  %v3357 = vpop.f32.mrf.mxu0
  %v3358 = vadd.f32 0.0, %v3357
  %3359 = vmatmul.bf16.gmra.mxu0 %v2519
  %v3360 = vpop.f32.mrf.mxu0
  %v3361 = vadd.f32 0.0, %v3360
  %v3362 = vpop.f32.mrf.mxu0
  %v3363 = vadd.f32 0.0, %v3362
  %3364 = vmatmul.bf16.gmra.mxu0 %v2522
  %v3365 = vpop.f32.mrf.mxu0
  %v3366 = vadd.f32 0.0, %v3365
  %v3367 = vpop.f32.mrf.mxu0
  %v3368 = vadd.f32 0.0, %v3367
  %3369 = vmatmul.bf16.gmra.mxu0 %v2525
  %v3370 = vpop.f32.mrf.mxu0
  %v3371 = vadd.f32 0.0, %v3370
  %v3372 = vpop.f32.mrf.mxu0
  %v3373 = vadd.f32 0.0, %v3372
  %3374 = vmatmul.bf16.gmra.mxu0 %v2528
  %v3375 = vpop.f32.mrf.mxu0
  %v3376 = vadd.f32 0.0, %v3375
  %v3377 = vpop.f32.mrf.mxu0
  %v3378 = vadd.f32 0.0, %v3377
  %3379 = vmatmul.bf16.gmra.mxu0 %v2531
  %v3380 = vpop.f32.mrf.mxu0
  %v3381 = vadd.f32 0.0, %v3380
  %v3382 = vpop.f32.mrf.mxu0
  %v3383 = vadd.f32 0.0, %v3382
  %3384 = vmatmul.bf16.gmra.mxu0 %v2534
  %v3385 = vpop.f32.mrf.mxu0
  %v3386 = vadd.f32 0.0, %v3385
  %v3387 = vpop.f32.mrf.mxu0
  %v3388 = vadd.f32 0.0, %v3387
  %3389 = vmatmul.bf16.gmra.mxu0 %v2537
  %v3390 = vpop.f32.mrf.mxu0
  %v3391 = vadd.f32 0.0, %v3390
  %v3392 = vpop.f32.mrf.mxu0
  %v3393 = vadd.f32 0.0, %v3392
  %3394 = vmatmul.bf16.gmra.mxu0 %v2540
  %v3395 = vpop.f32.mrf.mxu0
  %v3396 = vadd.f32 0.0, %v3395
  %v3397 = vpop.f32.mrf.mxu0
  %v3398 = vadd.f32 0.0, %v3397
  %3399 = vmatmul.bf16.gmra.mxu0 %v2543
  %v3400 = vpop.f32.mrf.mxu0
  %v3401 = vadd.f32 0.0, %v3400
  %v3402 = vpop.f32.mrf.mxu0
  %v3403 = vadd.f32 0.0, %v3402
  %3404 = vmatmul.bf16.gmra.mxu0 %v2546
  %v3405 = vpop.f32.mrf.mxu0
  %v3406 = vadd.f32 0.0, %v3405
  %v3407 = vpop.f32.mrf.mxu0
  %v3408 = vadd.f32 0.0, %v3407
  %3409 = vmatmul.bf16.gmra.mxu0 %v2549
  %v3410 = vpop.f32.mrf.mxu0
  %v3411 = vadd.f32 0.0, %v3410
  %v3412 = vpop.f32.mrf.mxu0
  %v3413 = vadd.f32 0.0, %v3412
  %3414 = vmatmul.bf16.gmra.mxu0 %v2552
  %v3415 = vpop.f32.mrf.mxu0
  %v3416 = vadd.f32 0.0, %v3415
  %v3417 = vpop.f32.mrf.mxu0
  %v3418 = vadd.f32 0.0, %v3417
  %3419 = vmatmul.bf16.gmra.mxu0 %v2958
  %v3420 = vpop.f32.mrf.mxu0
  %v3421 = vadd.f32 0.0, %v3420
  %v3422 = vpop.f32.mrf.mxu0
  %v3423 = vadd.f32 0.0, %v3422
  %3424 = vmatmul.bf16.gmra.mxu0 %v2507
  %v3425 = vpop.f32.mrf.mxu0
  %v3426 = vadd.f32 0.0, %v3425
  %v3427 = vpop.f32.mrf.mxu0
  %v3428 = vadd.f32 0.0, %v3427
  %3429 = vdwg.mxu0
  %v3430 = vadd.f32 %v3304, %v3351
  %v3431 = vadd.f32 %v3305, %v3353
  %v3432 = vadd.f32 %v3306, %v3356
  %v3433 = vadd.f32 %v3307, %v3358
  %v3434 = vadd.f32 %v3308, %v3361
  %v3435 = vadd.f32 %v3309, %v3363
  %v3436 = vadd.f32 %v3310, %v3366
  %v3437 = vadd.f32 %v3311, %v3368
  %v3438 = vadd.f32 %v3312, %v3371
  %v3439 = vadd.f32 %v3313, %v3373
  %v3440 = vadd.f32 %v3314, %v3376
  %v3441 = vadd.f32 %v3315, %v3378
  %v3442 = vadd.f32 %v3316, %v3381
  %v3443 = vadd.f32 %v3317, %v3383
  %v3444 = vadd.f32 %v3318, %v3386
  %v3445 = vadd.f32 %v3319, %v3388
  %v3446 = vadd.f32 %v3320, %v3391
  %v3447 = vadd.f32 %v3321, %v3393
  %v3448 = vadd.f32 %v3322, %v3396
  %v3449 = vadd.f32 %v3323, %v3398
  %v3450 = vadd.f32 %v3324, %v3401
  %v3451 = vadd.f32 %v3325, %v3403
  %v3452 = vadd.f32 %v3326, %v3406
  %v3453 = vadd.f32 %v3327, %v3408
  %v3454 = vadd.f32 %v3328, %v3411
  %v3455 = vadd.f32 %v3329, %v3413
  %v3456 = vadd.f32 %v3330, %v3416
  %v3457 = vadd.f32 %v3331, %v3418
  %v3458 = vadd.f32 %v3332, %v3421
  %v3459 = vadd.f32 %v3333, %v3423
  %v3460 = vadd.f32 %v3334, %v3426
  %v3461 = vadd.f32 %v3335, %v3428
  %3494 = vrot.lane.b32.xlu0 %v1651, 120
  %v3495 = vpop.permute.xlu0 %3494
  %3496 = vrot.lane.b32.xlu0 %v1652, 120
  %v3497 = vpop.permute.xlu0 %3496
  %3498 = vrot.lane.b32.xlu0 %v1653, 120
  %v3499 = vpop.permute.xlu0 %3498
  %3500 = vrot.lane.b32.xlu0 %v1654, 120
  %v3501 = vpop.permute.xlu0 %3500
  %3502 = vrot.lane.b32.xlu0 %v1655, 120
  %v3503 = vpop.permute.xlu0 %3502
  %3504 = vrot.lane.b32.xlu0 %v1656, 120
  %v3505 = vpop.permute.xlu0 %3504
  %3506 = vrot.lane.b32.xlu0 %v1657, 120
  %v3507 = vpop.permute.xlu0 %3506
  %3508 = vrot.lane.b32.xlu0 %v1658, 120
  %v3509 = vpop.permute.xlu0 %3508
  %3510 = vrot.lane.b32.xlu0 %v1659, 120
  %v3511 = vpop.permute.xlu0 %3510
  %3512 = vrot.lane.b32.xlu0 %v1660, 120
  %v3513 = vpop.permute.xlu0 %3512
  %3514 = vrot.lane.b32.xlu0 %v1661, 120
  %v3515 = vpop.permute.xlu0 %3514
  %3516 = vrot.lane.b32.xlu0 %v1662, 120
  %v3517 = vpop.permute.xlu0 %3516
  %3518 = vrot.lane.b32.xlu0 %v1663, 120
  %v3519 = vpop.permute.xlu0 %3518
  %3520 = vrot.lane.b32.xlu0 %v1664, 120
  %v3521 = vpop.permute.xlu0 %3520
  %3522 = vrot.lane.b32.xlu0 %v1665, 120
  %v3523 = vpop.permute.xlu0 %3522
  %3524 = vrot.lane.b32.xlu0 %v1666, 120
  %v3525 = vpop.permute.xlu0 %3524
  %3526 = vrot.lane.b32.xlu0 %v1667, 120
  %v3527 = vpop.permute.xlu0 %3526
  %3528 = vrot.lane.b32.xlu0 %v1668, 120
  %v3529 = vpop.permute.xlu0 %3528
  %3530 = vrot.lane.b32.xlu0 %v1669, 120
  %v3531 = vpop.permute.xlu0 %3530
  %3532 = vrot.lane.b32.xlu0 %v1670, 120
  %v3533 = vpop.permute.xlu0 %3532
  %3534 = vrot.lane.b32.xlu0 %v1671, 120
  %v3535 = vpop.permute.xlu0 %3534
  %3536 = vrot.lane.b32.xlu0 %v1672, 120
  %v3537 = vpop.permute.xlu0 %3536
  %3538 = vrot.lane.b32.xlu0 %v1673, 120
  %v3539 = vpop.permute.xlu0 %3538
  %3540 = vrot.lane.b32.xlu0 %v1674, 120
  %v3541 = vpop.permute.xlu0 %3540
  %3542 = vrot.lane.b32.xlu0 %v1675, 120
  %v3543 = vpop.permute.xlu0 %3542
  %3544 = vrot.lane.b32.xlu0 %v1676, 120
  %v3545 = vpop.permute.xlu0 %3544
  %3546 = vrot.lane.b32.xlu0 %v1677, 120
  %v3547 = vpop.permute.xlu0 %3546
  %3548 = vrot.lane.b32.xlu0 %v1678, 120
  %v3549 = vpop.permute.xlu0 %3548
  %3550 = vrot.lane.b32.xlu0 %v1679, 120
  %v3551 = vpop.permute.xlu0 %3550
  %3552 = vrot.lane.b32.xlu0 %v1680, 120
  %v3553 = vpop.permute.xlu0 %3552
  %3554 = vrot.lane.b32.xlu0 %v1681, 120
  %v3555 = vpop.permute.xlu0 %3554
  %3556 = vrot.lane.b32.xlu0 %v1682, 120
  %v3557 = vpop.permute.xlu0 %3556
  %v3558 = vrot.slane %v3495, 7
  %v3559 = vrot.slane %v3497, 7
  %v3560 = vsel %vm1780, %v3558, %v3559
  %v3561 = vrot.slane %v3499, 7
  %v3562 = vrot.slane %v3501, 7
  %v3563 = vsel %vm1780, %v3561, %v3562
  %v3564 = vrot.slane %v3503, 7
  %v3565 = vrot.slane %v3505, 7
  %v3566 = vsel %vm1780, %v3564, %v3565
  %v3567 = vrot.slane %v3507, 7
  %v3568 = vrot.slane %v3509, 7
  %v3569 = vsel %vm1780, %v3567, %v3568
  %v3570 = vrot.slane %v3511, 7
  %v3571 = vrot.slane %v3513, 7
  %v3572 = vsel %vm1780, %v3570, %v3571
  %v3573 = vrot.slane %v3515, 7
  %v3574 = vrot.slane %v3517, 7
  %v3575 = vsel %vm1780, %v3573, %v3574
  %v3576 = vrot.slane %v3519, 7
  %v3577 = vrot.slane %v3521, 7
  %v3578 = vsel %vm1780, %v3576, %v3577
  %v3579 = vrot.slane %v3523, 7
  %v3580 = vrot.slane %v3525, 7
  %v3581 = vsel %vm1780, %v3579, %v3580
  %v3582 = vrot.slane %v3527, 7
  %v3583 = vrot.slane %v3529, 7
  %v3584 = vsel %vm1780, %v3582, %v3583
  %v3585 = vrot.slane %v3531, 7
  %v3586 = vrot.slane %v3533, 7
  %v3587 = vsel %vm1780, %v3585, %v3586
  %v3588 = vrot.slane %v3535, 7
  %v3589 = vrot.slane %v3537, 7
  %v3590 = vsel %vm1780, %v3588, %v3589
  %v3591 = vrot.slane %v3539, 7
  %v3592 = vrot.slane %v3541, 7
  %v3593 = vsel %vm1780, %v3591, %v3592
  %v3594 = vrot.slane %v3543, 7
  %v3595 = vrot.slane %v3545, 7
  %v3596 = vsel %vm1780, %v3594, %v3595
  %v3597 = vrot.slane %v3547, 7
  %v3598 = vrot.slane %v3549, 7
  %v3599 = vsel %vm1780, %v3597, %v3598
  %v3600 = vrot.slane %v3551, 7
  %v3601 = vrot.slane %v3553, 7
  %v3602 = vsel %vm1780, %v3600, %v3601
  %v3603 = vrot.slane %v3555, 7
  %v3604 = vrot.slane %v3557, 7
  %v3605 = vsel %vm1780, %v3603, %v3604
  %v3654 = vsel %vm1780, 0.0, %v3558
  %v3655 = vsel %vm1780, 0.0, %v3561
  %v3656 = vsel %vm1780, 0.0, %v3564
  %v3657 = vsel %vm1780, 0.0, %v3567
  %v3658 = vsel %vm1780, 0.0, %v3570
  %v3659 = vsel %vm1780, 0.0, %v3573
  %v3660 = vsel %vm1780, 0.0, %v3576
  %v3661 = vsel %vm1780, 0.0, %v3579
  %v3662 = vsel %vm1780, 0.0, %v3582
  %v3663 = vsel %vm1780, 0.0, %v3585
  %v3664 = vsel %vm1780, 0.0, %v3588
  %v3665 = vsel %vm1780, 0.0, %v3591
  %v3666 = vsel %vm1780, 0.0, %v3594
  %v3667 = vsel %vm1780, 0.0, %v3597
  %v3668 = vsel %vm1780, 0.0, %v3600
  %v3669 = vsel %vm1780, 0.0, %v3603
  %v3670 = vsel %vm1780, %v3559, 0.0
  %v3671 = vsel %vm1780, %v3562, 0.0
  %v3672 = vsel %vm1780, %v3565, 0.0
  %v3673 = vsel %vm1780, %v3568, 0.0
  %v3674 = vsel %vm1780, %v3571, 0.0
  %v3675 = vsel %vm1780, %v3574, 0.0
  %v3676 = vsel %vm1780, %v3577, 0.0
  %v3677 = vsel %vm1780, %v3580, 0.0
  %v3678 = vsel %vm1780, %v3583, 0.0
  %v3679 = vsel %vm1780, %v3586, 0.0
  %v3680 = vsel %vm1780, %v3589, 0.0
  %v3681 = vsel %vm1780, %v3592, 0.0
  %v3682 = vsel %vm1780, %v3595, 0.0
  %v3683 = vsel %vm1780, %v3598, 0.0
  %v3684 = vsel %vm1780, %v3601, 0.0
  %v3685 = vsel %vm1780, %v3604, 0.0
  %v3686 = vpack.c.bf16 %v3560, %v3654
  %v3687 = vpack.c.bf16 %v3563, %v3655
  %v3688 = vpack.c.bf16 %v3566, %v3656
  %v3689 = vpack.c.bf16 %v3569, %v3657
  %v3690 = vpack.c.bf16 %v3572, %v3658
  %v3691 = vpack.c.bf16 %v3575, %v3659
  %v3692 = vpack.c.bf16 %v3578, %v3660
  %v3693 = vpack.c.bf16 %v3581, %v3661
  %v3694 = vpack.c.bf16 %v3584, %v3662
  %v3695 = vpack.c.bf16 %v3587, %v3663
  %v3696 = vpack.c.bf16 %v3590, %v3664
  %v3697 = vpack.c.bf16 %v3593, %v3665
  %v3698 = vpack.c.bf16 %v3596, %v3666
  %v3699 = vpack.c.bf16 %v3599, %v3667
  %v3700 = vpack.c.bf16 %v3602, %v3668
  %v3731 = vrot.slane %v3654, 1
  %v3732 = vrot.slane %v3560, 1
  %v3733 = vsel %vm1964, %v3731, %v3732
  %v3734 = vrot.slane %v3670, 1
  %v3735 = vsel %vm1964, %v3732, %v3734
  %v3736 = vrot.slane %v3655, 1
  %v3737 = vrot.slane %v3563, 1
  %v3738 = vsel %vm1964, %v3736, %v3737
  %v3739 = vrot.slane %v3671, 1
  %v3740 = vsel %vm1964, %v3737, %v3739
  %v3741 = vrot.slane %v3656, 1
  %v3742 = vrot.slane %v3566, 1
  %v3743 = vsel %vm1964, %v3741, %v3742
  %v3744 = vrot.slane %v3672, 1
  %v3745 = vsel %vm1964, %v3742, %v3744
  %v3746 = vrot.slane %v3657, 1
  %v3747 = vrot.slane %v3569, 1
  %v3748 = vsel %vm1964, %v3746, %v3747
  %v3749 = vrot.slane %v3673, 1
  %v3750 = vsel %vm1964, %v3747, %v3749
  %v3751 = vrot.slane %v3658, 1
  %v3752 = vrot.slane %v3572, 1
  %v3753 = vsel %vm1964, %v3751, %v3752
  %v3754 = vrot.slane %v3674, 1
  %v3755 = vsel %vm1964, %v3752, %v3754
  %v3756 = vrot.slane %v3659, 1
  %v3757 = vrot.slane %v3575, 1
  %v3758 = vsel %vm1964, %v3756, %v3757
  %v3759 = vrot.slane %v3675, 1
  %v3760 = vsel %vm1964, %v3757, %v3759
  %v3761 = vrot.slane %v3660, 1
  %v3762 = vrot.slane %v3578, 1
  %v3763 = vsel %vm1964, %v3761, %v3762
  %v3764 = vrot.slane %v3676, 1
  %v3765 = vsel %vm1964, %v3762, %v3764
  %v3766 = vrot.slane %v3661, 1
  %v3767 = vrot.slane %v3581, 1
  %v3768 = vsel %vm1964, %v3766, %v3767
  %v3769 = vrot.slane %v3677, 1
  %v3770 = vsel %vm1964, %v3767, %v3769
  %v3771 = vrot.slane %v3662, 1
  %v3772 = vrot.slane %v3584, 1
  %v3773 = vsel %vm1964, %v3771, %v3772
  %v3774 = vrot.slane %v3678, 1
  %v3775 = vsel %vm1964, %v3772, %v3774
  %v3776 = vrot.slane %v3663, 1
  %v3777 = vrot.slane %v3587, 1
  %v3778 = vsel %vm1964, %v3776, %v3777
  %v3779 = vrot.slane %v3679, 1
  %v3780 = vsel %vm1964, %v3777, %v3779
  %v3781 = vrot.slane %v3664, 1
  %v3782 = vrot.slane %v3590, 1
  %v3783 = vsel %vm1964, %v3781, %v3782
  %v3784 = vrot.slane %v3680, 1
  %v3785 = vsel %vm1964, %v3782, %v3784
  %v3786 = vrot.slane %v3665, 1
  %v3787 = vrot.slane %v3593, 1
  %v3788 = vsel %vm1964, %v3786, %v3787
  %v3789 = vrot.slane %v3681, 1
  %v3790 = vsel %vm1964, %v3787, %v3789
  %v3791 = vrot.slane %v3666, 1
  %v3792 = vrot.slane %v3596, 1
  %v3793 = vsel %vm1964, %v3791, %v3792
  %v3794 = vrot.slane %v3682, 1
  %v3795 = vsel %vm1964, %v3792, %v3794
  %v3796 = vrot.slane %v3667, 1
  %v3797 = vrot.slane %v3599, 1
  %v3798 = vsel %vm1964, %v3796, %v3797
  %v3799 = vrot.slane %v3683, 1
  %v3800 = vsel %vm1964, %v3797, %v3799
  %v3801 = vrot.slane %v3668, 1
  %v3802 = vrot.slane %v3602, 1
  %v3803 = vsel %vm1964, %v3801, %v3802
  %v3804 = vrot.slane %v3684, 1
  %v3805 = vsel %vm1964, %v3802, %v3804
  %v3836 = vpack.c.bf16 %v3735, %v3733
  %v3837 = vpack.c.bf16 %v3740, %v3738
  %v3838 = vpack.c.bf16 %v3745, %v3743
  %v3839 = vpack.c.bf16 %v3750, %v3748
  %v3840 = vpack.c.bf16 %v3755, %v3753
  %v3841 = vpack.c.bf16 %v3760, %v3758
  %v3842 = vpack.c.bf16 %v3765, %v3763
  %v3843 = vpack.c.bf16 %v3770, %v3768
  %v3844 = vpack.c.bf16 %v3775, %v3773
  %v3845 = vpack.c.bf16 %v3780, %v3778
  %v3846 = vpack.c.bf16 %v3785, %v3783
  %v3847 = vpack.c.bf16 %v3790, %v3788
  %v3848 = vpack.c.bf16 %v3795, %v3793
  %v3849 = vpack.c.bf16 %v3800, %v3798
  %v3850 = vpack.c.bf16 %v3805, %v3803
  %v3852 = vsel %vm255, %v3836, 0
  %v3855 = vsel %vm255, %v3837, 0
  %v3858 = vsel %vm255, %v3838, 0
  %v3861 = vsel %vm255, %v3839, 0
  %v3864 = vsel %vm255, %v3840, 0
  %v3867 = vsel %vm255, %v3841, 0
  %v3870 = vsel %vm255, %v3842, 0
  %v3873 = vsel %vm255, %v3843, 0
  %v3876 = vsel %vm255, %v3844, 0
  %v3879 = vsel %vm255, %v3845, 0
  %v3882 = vsel %vm255, %v3846, 0
  %v3885 = vsel %vm255, %v3847, 0
  %v3888 = vsel %vm255, %v3848, 0
  %v3891 = vsel %vm255, %v3849, 0
  %v3894 = vsel %vm255, %v3850, 0
  %3896 = vmatpush.bf16.msra.mxu0 0
  %3897 = vmatpush.bf16.msra.mxu0 0
  %3898 = vmatpush.bf16.msra.mxu0 0
  %3899 = vmatpush.bf16.msra.mxu0 0
  %3900 = vmatpush.bf16.msra.mxu0 0
  %3901 = vmatpush.bf16.msra.mxu0 0
  %3902 = vmatpush.bf16.msra.mxu0 0
  %3903 = vmatpush.bf16.msra.mxu0 %v2144
  %3904 = vmatmul.bf16.gmra.mxu0 %v2096
  %v3905 = vpop.f32.mrf.mxu0
  %v3906 = vadd.f32 0.0, %v3905
  %v3907 = vpop.f32.mrf.mxu0
  %v3908 = vadd.f32 0.0, %v3907
  %3909 = vmatmul.bf16.gmra.mxu0 %v3852
  %v3910 = vpop.f32.mrf.mxu0
  %v3911 = vadd.f32 0.0, %v3910
  %v3912 = vpop.f32.mrf.mxu0
  %v3913 = vadd.f32 0.0, %v3912
  %3914 = vmatmul.bf16.gmra.mxu0 %v3855
  %v3915 = vpop.f32.mrf.mxu0
  %v3916 = vadd.f32 0.0, %v3915
  %v3917 = vpop.f32.mrf.mxu0
  %v3918 = vadd.f32 0.0, %v3917
  %3919 = vmatmul.bf16.gmra.mxu0 %v3858
  %v3920 = vpop.f32.mrf.mxu0
  %v3921 = vadd.f32 0.0, %v3920
  %v3922 = vpop.f32.mrf.mxu0
  %v3923 = vadd.f32 0.0, %v3922
  %3924 = vmatmul.bf16.gmra.mxu0 %v3861
  %v3925 = vpop.f32.mrf.mxu0
  %v3926 = vadd.f32 0.0, %v3925
  %v3927 = vpop.f32.mrf.mxu0
  %v3928 = vadd.f32 0.0, %v3927
  %3929 = vmatmul.bf16.gmra.mxu0 %v3864
  %v3930 = vpop.f32.mrf.mxu0
  %v3931 = vadd.f32 0.0, %v3930
  %v3932 = vpop.f32.mrf.mxu0
  %v3933 = vadd.f32 0.0, %v3932
  %3934 = vmatmul.bf16.gmra.mxu0 %v3867
  %v3935 = vpop.f32.mrf.mxu0
  %v3936 = vadd.f32 0.0, %v3935
  %v3937 = vpop.f32.mrf.mxu0
  %v3938 = vadd.f32 0.0, %v3937
  %3939 = vmatmul.bf16.gmra.mxu0 %v3870
  %v3940 = vpop.f32.mrf.mxu0
  %v3941 = vadd.f32 0.0, %v3940
  %v3942 = vpop.f32.mrf.mxu0
  %v3943 = vadd.f32 0.0, %v3942
  %3944 = vmatmul.bf16.gmra.mxu0 %v3873
  %v3945 = vpop.f32.mrf.mxu0
  %v3946 = vadd.f32 0.0, %v3945
  %v3947 = vpop.f32.mrf.mxu0
  %v3948 = vadd.f32 0.0, %v3947
  %3949 = vmatmul.bf16.gmra.mxu0 %v3876
  %v3950 = vpop.f32.mrf.mxu0
  %v3951 = vadd.f32 0.0, %v3950
  %v3952 = vpop.f32.mrf.mxu0
  %v3953 = vadd.f32 0.0, %v3952
  %3954 = vmatmul.bf16.gmra.mxu0 %v3879
  %v3955 = vpop.f32.mrf.mxu0
  %v3956 = vadd.f32 0.0, %v3955
  %v3957 = vpop.f32.mrf.mxu0
  %v3958 = vadd.f32 0.0, %v3957
  %3959 = vmatmul.bf16.gmra.mxu0 %v3882
  %v3960 = vpop.f32.mrf.mxu0
  %v3961 = vadd.f32 0.0, %v3960
  %v3962 = vpop.f32.mrf.mxu0
  %v3963 = vadd.f32 0.0, %v3962
  %3964 = vmatmul.bf16.gmra.mxu0 %v3885
  %v3965 = vpop.f32.mrf.mxu0
  %v3966 = vadd.f32 0.0, %v3965
  %v3967 = vpop.f32.mrf.mxu0
  %v3968 = vadd.f32 0.0, %v3967
  %3969 = vmatmul.bf16.gmra.mxu0 %v3888
  %v3970 = vpop.f32.mrf.mxu0
  %v3971 = vadd.f32 0.0, %v3970
  %v3972 = vpop.f32.mrf.mxu0
  %v3973 = vadd.f32 0.0, %v3972
  %3974 = vmatmul.bf16.gmra.mxu0 %v3891
  %v3975 = vpop.f32.mrf.mxu0
  %v3976 = vadd.f32 0.0, %v3975
  %v3977 = vpop.f32.mrf.mxu0
  %v3978 = vadd.f32 0.0, %v3977
  %3979 = vmatmul.bf16.gmra.mxu0 %v3894
  %v3980 = vpop.f32.mrf.mxu0
  %v3981 = vadd.f32 0.0, %v3980
  %v3982 = vpop.f32.mrf.mxu0
  %v3983 = vadd.f32 0.0, %v3982
  %3984 = vdwg.mxu0
  %v3986 = vsel %vm255, %v3686, 0
  %v3989 = vsel %vm255, %v3687, 0
  %v3992 = vsel %vm255, %v3688, 0
  %v3995 = vsel %vm255, %v3689, 0
  %v3998 = vsel %vm255, %v3690, 0
  %v4001 = vsel %vm255, %v3691, 0
  %v4004 = vsel %vm255, %v3692, 0
  %v4007 = vsel %vm255, %v3693, 0
  %v4010 = vsel %vm255, %v3694, 0
  %v4013 = vsel %vm255, %v3695, 0
  %v4016 = vsel %vm255, %v3696, 0
  %v4019 = vsel %vm255, %v3697, 0
  %v4022 = vsel %vm255, %v3698, 0
  %v4025 = vsel %vm255, %v3699, 0
  %v4028 = vsel %vm255, %v3700, 0
  %4030 = vmatpush.bf16.msra.mxu0 0
  %4031 = vmatpush.bf16.msra.mxu0 0
  %4032 = vmatpush.bf16.msra.mxu0 0
  %4033 = vmatpush.bf16.msra.mxu0 0
  %4034 = vmatpush.bf16.msra.mxu0 0
  %4035 = vmatpush.bf16.msra.mxu0 0
  %4036 = vmatpush.bf16.msra.mxu0 0
  %4037 = vmatpush.bf16.msra.mxu0 %v2284
  %4038 = vmatmul.bf16.gmra.mxu0 %v2236
  %v4039 = vpop.f32.mrf.mxu0
  %v4040 = vadd.f32 %v3906, %v4039
  %v4041 = vpop.f32.mrf.mxu0
  %v4042 = vadd.f32 %v3908, %v4041
  %4043 = vmatmul.bf16.gmra.mxu0 %v3986
  %v4044 = vpop.f32.mrf.mxu0
  %v4045 = vadd.f32 %v3911, %v4044
  %v4046 = vpop.f32.mrf.mxu0
  %v4047 = vadd.f32 %v3913, %v4046
  %4048 = vmatmul.bf16.gmra.mxu0 %v3989
  %v4049 = vpop.f32.mrf.mxu0
  %v4050 = vadd.f32 %v3916, %v4049
  %v4051 = vpop.f32.mrf.mxu0
  %v4052 = vadd.f32 %v3918, %v4051
  %4053 = vmatmul.bf16.gmra.mxu0 %v3992
  %v4054 = vpop.f32.mrf.mxu0
  %v4055 = vadd.f32 %v3921, %v4054
  %v4056 = vpop.f32.mrf.mxu0
  %v4057 = vadd.f32 %v3923, %v4056
  %4058 = vmatmul.bf16.gmra.mxu0 %v3995
  %v4059 = vpop.f32.mrf.mxu0
  %v4060 = vadd.f32 %v3926, %v4059
  %v4061 = vpop.f32.mrf.mxu0
  %v4062 = vadd.f32 %v3928, %v4061
  %4063 = vmatmul.bf16.gmra.mxu0 %v3998
  %v4064 = vpop.f32.mrf.mxu0
  %v4065 = vadd.f32 %v3931, %v4064
  %v4066 = vpop.f32.mrf.mxu0
  %v4067 = vadd.f32 %v3933, %v4066
  %4068 = vmatmul.bf16.gmra.mxu0 %v4001
  %v4069 = vpop.f32.mrf.mxu0
  %v4070 = vadd.f32 %v3936, %v4069
  %v4071 = vpop.f32.mrf.mxu0
  %v4072 = vadd.f32 %v3938, %v4071
  %4073 = vmatmul.bf16.gmra.mxu0 %v4004
  %v4074 = vpop.f32.mrf.mxu0
  %v4075 = vadd.f32 %v3941, %v4074
  %v4076 = vpop.f32.mrf.mxu0
  %v4077 = vadd.f32 %v3943, %v4076
  %4078 = vmatmul.bf16.gmra.mxu0 %v4007
  %v4079 = vpop.f32.mrf.mxu0
  %v4080 = vadd.f32 %v3946, %v4079
  %v4081 = vpop.f32.mrf.mxu0
  %v4082 = vadd.f32 %v3948, %v4081
  %4083 = vmatmul.bf16.gmra.mxu0 %v4010
  %v4084 = vpop.f32.mrf.mxu0
  %v4085 = vadd.f32 %v3951, %v4084
  %v4086 = vpop.f32.mrf.mxu0
  %v4087 = vadd.f32 %v3953, %v4086
  %4088 = vmatmul.bf16.gmra.mxu0 %v4013
  %v4089 = vpop.f32.mrf.mxu0
  %v4090 = vadd.f32 %v3956, %v4089
  %v4091 = vpop.f32.mrf.mxu0
  %v4092 = vadd.f32 %v3958, %v4091
  %4093 = vmatmul.bf16.gmra.mxu0 %v4016
  %v4094 = vpop.f32.mrf.mxu0
  %v4095 = vadd.f32 %v3961, %v4094
  %v4096 = vpop.f32.mrf.mxu0
  %v4097 = vadd.f32 %v3963, %v4096
  %4098 = vmatmul.bf16.gmra.mxu0 %v4019
  %v4099 = vpop.f32.mrf.mxu0
  %v4100 = vadd.f32 %v3966, %v4099
  %v4101 = vpop.f32.mrf.mxu0
  %v4102 = vadd.f32 %v3968, %v4101
  %4103 = vmatmul.bf16.gmra.mxu0 %v4022
  %v4104 = vpop.f32.mrf.mxu0
  %v4105 = vadd.f32 %v3971, %v4104
  %v4106 = vpop.f32.mrf.mxu0
  %v4107 = vadd.f32 %v3973, %v4106
  %4108 = vmatmul.bf16.gmra.mxu0 %v4025
  %v4109 = vpop.f32.mrf.mxu0
  %v4110 = vadd.f32 %v3976, %v4109
  %v4111 = vpop.f32.mrf.mxu0
  %v4112 = vadd.f32 %v3978, %v4111
  %4113 = vmatmul.bf16.gmra.mxu0 %v4028
  %v4114 = vpop.f32.mrf.mxu0
  %v4115 = vadd.f32 %v3981, %v4114
  %v4116 = vpop.f32.mrf.mxu0
  %v4117 = vadd.f32 %v3983, %v4116
  %4118 = vdwg.mxu0
  %v4119 = vrot.slane %v3654, 2
  %v4120 = vrot.slane %v3560, 2
  %v4121 = vsel %vm2375, %v4119, %v4120
  %v4122 = vrot.slane %v3670, 2
  %v4123 = vsel %vm2375, %v4120, %v4122
  %v4124 = vrot.slane %v3655, 2
  %v4125 = vrot.slane %v3563, 2
  %v4126 = vsel %vm2375, %v4124, %v4125
  %v4127 = vrot.slane %v3671, 2
  %v4128 = vsel %vm2375, %v4125, %v4127
  %v4129 = vrot.slane %v3656, 2
  %v4130 = vrot.slane %v3566, 2
  %v4131 = vsel %vm2375, %v4129, %v4130
  %v4132 = vrot.slane %v3672, 2
  %v4133 = vsel %vm2375, %v4130, %v4132
  %v4134 = vrot.slane %v3657, 2
  %v4135 = vrot.slane %v3569, 2
  %v4136 = vsel %vm2375, %v4134, %v4135
  %v4137 = vrot.slane %v3673, 2
  %v4138 = vsel %vm2375, %v4135, %v4137
  %v4139 = vrot.slane %v3658, 2
  %v4140 = vrot.slane %v3572, 2
  %v4141 = vsel %vm2375, %v4139, %v4140
  %v4142 = vrot.slane %v3674, 2
  %v4143 = vsel %vm2375, %v4140, %v4142
  %v4144 = vrot.slane %v3659, 2
  %v4145 = vrot.slane %v3575, 2
  %v4146 = vsel %vm2375, %v4144, %v4145
  %v4147 = vrot.slane %v3675, 2
  %v4148 = vsel %vm2375, %v4145, %v4147
  %v4149 = vrot.slane %v3660, 2
  %v4150 = vrot.slane %v3578, 2
  %v4151 = vsel %vm2375, %v4149, %v4150
  %v4152 = vrot.slane %v3676, 2
  %v4153 = vsel %vm2375, %v4150, %v4152
  %v4154 = vrot.slane %v3661, 2
  %v4155 = vrot.slane %v3581, 2
  %v4156 = vsel %vm2375, %v4154, %v4155
  %v4157 = vrot.slane %v3677, 2
  %v4158 = vsel %vm2375, %v4155, %v4157
  %v4159 = vrot.slane %v3662, 2
  %v4160 = vrot.slane %v3584, 2
  %v4161 = vsel %vm2375, %v4159, %v4160
  %v4162 = vrot.slane %v3678, 2
  %v4163 = vsel %vm2375, %v4160, %v4162
  %v4164 = vrot.slane %v3663, 2
  %v4165 = vrot.slane %v3587, 2
  %v4166 = vsel %vm2375, %v4164, %v4165
  %v4167 = vrot.slane %v3679, 2
  %v4168 = vsel %vm2375, %v4165, %v4167
  %v4169 = vrot.slane %v3664, 2
  %v4170 = vrot.slane %v3590, 2
  %v4171 = vsel %vm2375, %v4169, %v4170
  %v4172 = vrot.slane %v3680, 2
  %v4173 = vsel %vm2375, %v4170, %v4172
  %v4174 = vrot.slane %v3665, 2
  %v4175 = vrot.slane %v3593, 2
  %v4176 = vsel %vm2375, %v4174, %v4175
  %v4177 = vrot.slane %v3681, 2
  %v4178 = vsel %vm2375, %v4175, %v4177
  %v4179 = vrot.slane %v3666, 2
  %v4180 = vrot.slane %v3596, 2
  %v4181 = vsel %vm2375, %v4179, %v4180
  %v4182 = vrot.slane %v3682, 2
  %v4183 = vsel %vm2375, %v4180, %v4182
  %v4184 = vrot.slane %v3667, 2
  %v4185 = vrot.slane %v3599, 2
  %v4186 = vsel %vm2375, %v4184, %v4185
  %v4187 = vrot.slane %v3683, 2
  %v4188 = vsel %vm2375, %v4185, %v4187
  %v4189 = vrot.slane %v3668, 2
  %v4190 = vrot.slane %v3602, 2
  %v4191 = vsel %vm2375, %v4189, %v4190
  %v4192 = vrot.slane %v3684, 2
  %v4193 = vsel %vm2375, %v4190, %v4192
  %v4224 = vpack.c.bf16 %v4123, %v4121
  %v4225 = vpack.c.bf16 %v4128, %v4126
  %v4226 = vpack.c.bf16 %v4133, %v4131
  %v4227 = vpack.c.bf16 %v4138, %v4136
  %v4228 = vpack.c.bf16 %v4143, %v4141
  %v4229 = vpack.c.bf16 %v4148, %v4146
  %v4230 = vpack.c.bf16 %v4153, %v4151
  %v4231 = vpack.c.bf16 %v4158, %v4156
  %v4232 = vpack.c.bf16 %v4163, %v4161
  %v4233 = vpack.c.bf16 %v4168, %v4166
  %v4234 = vpack.c.bf16 %v4173, %v4171
  %v4235 = vpack.c.bf16 %v4178, %v4176
  %v4236 = vpack.c.bf16 %v4183, %v4181
  %v4237 = vpack.c.bf16 %v4188, %v4186
  %v4238 = vpack.c.bf16 %v4193, %v4191
  %v4240 = vsel %vm255, %v4224, 0
  %v4243 = vsel %vm255, %v4225, 0
  %v4246 = vsel %vm255, %v4226, 0
  %v4249 = vsel %vm255, %v4227, 0
  %v4252 = vsel %vm255, %v4228, 0
  %v4255 = vsel %vm255, %v4229, 0
  %v4258 = vsel %vm255, %v4230, 0
  %v4261 = vsel %vm255, %v4231, 0
  %v4264 = vsel %vm255, %v4232, 0
  %v4267 = vsel %vm255, %v4233, 0
  %v4270 = vsel %vm255, %v4234, 0
  %v4273 = vsel %vm255, %v4235, 0
  %v4276 = vsel %vm255, %v4236, 0
  %v4279 = vsel %vm255, %v4237, 0
  %v4282 = vsel %vm255, %v4238, 0
  %4284 = vmatpush.bf16.msra.mxu0 0
  %4285 = vmatpush.bf16.msra.mxu0 0
  %4286 = vmatpush.bf16.msra.mxu0 0
  %4287 = vmatpush.bf16.msra.mxu0 0
  %4288 = vmatpush.bf16.msra.mxu0 0
  %4289 = vmatpush.bf16.msra.mxu0 0
  %4290 = vmatpush.bf16.msra.mxu0 0
  %4291 = vmatpush.bf16.msra.mxu0 %v2555
  %4292 = vmatmul.bf16.gmra.mxu0 %v2507
  %v4293 = vpop.f32.mrf.mxu0
  %v4294 = vadd.f32 0.0, %v4293
  %v4295 = vpop.f32.mrf.mxu0
  %v4296 = vadd.f32 0.0, %v4295
  %4297 = vmatmul.bf16.gmra.mxu0 %v4240
  %v4298 = vpop.f32.mrf.mxu0
  %v4299 = vadd.f32 0.0, %v4298
  %v4300 = vpop.f32.mrf.mxu0
  %v4301 = vadd.f32 0.0, %v4300
  %4302 = vmatmul.bf16.gmra.mxu0 %v4243
  %v4303 = vpop.f32.mrf.mxu0
  %v4304 = vadd.f32 0.0, %v4303
  %v4305 = vpop.f32.mrf.mxu0
  %v4306 = vadd.f32 0.0, %v4305
  %4307 = vmatmul.bf16.gmra.mxu0 %v4246
  %v4308 = vpop.f32.mrf.mxu0
  %v4309 = vadd.f32 0.0, %v4308
  %v4310 = vpop.f32.mrf.mxu0
  %v4311 = vadd.f32 0.0, %v4310
  %4312 = vmatmul.bf16.gmra.mxu0 %v4249
  %v4313 = vpop.f32.mrf.mxu0
  %v4314 = vadd.f32 0.0, %v4313
  %v4315 = vpop.f32.mrf.mxu0
  %v4316 = vadd.f32 0.0, %v4315
  %4317 = vmatmul.bf16.gmra.mxu0 %v4252
  %v4318 = vpop.f32.mrf.mxu0
  %v4319 = vadd.f32 0.0, %v4318
  %v4320 = vpop.f32.mrf.mxu0
  %v4321 = vadd.f32 0.0, %v4320
  %4322 = vmatmul.bf16.gmra.mxu0 %v4255
  %v4323 = vpop.f32.mrf.mxu0
  %v4324 = vadd.f32 0.0, %v4323
  %v4325 = vpop.f32.mrf.mxu0
  %v4326 = vadd.f32 0.0, %v4325
  %4327 = vmatmul.bf16.gmra.mxu0 %v4258
  %v4328 = vpop.f32.mrf.mxu0
  %v4329 = vadd.f32 0.0, %v4328
  %v4330 = vpop.f32.mrf.mxu0
  %v4331 = vadd.f32 0.0, %v4330
  %4332 = vmatmul.bf16.gmra.mxu0 %v4261
  %v4333 = vpop.f32.mrf.mxu0
  %v4334 = vadd.f32 0.0, %v4333
  %v4335 = vpop.f32.mrf.mxu0
  %v4336 = vadd.f32 0.0, %v4335
  %4337 = vmatmul.bf16.gmra.mxu0 %v4264
  %v4338 = vpop.f32.mrf.mxu0
  %v4339 = vadd.f32 0.0, %v4338
  %v4340 = vpop.f32.mrf.mxu0
  %v4341 = vadd.f32 0.0, %v4340
  %4342 = vmatmul.bf16.gmra.mxu0 %v4267
  %v4343 = vpop.f32.mrf.mxu0
  %v4344 = vadd.f32 0.0, %v4343
  %v4345 = vpop.f32.mrf.mxu0
  %v4346 = vadd.f32 0.0, %v4345
  %4347 = vmatmul.bf16.gmra.mxu0 %v4270
  %v4348 = vpop.f32.mrf.mxu0
  %v4349 = vadd.f32 0.0, %v4348
  %v4350 = vpop.f32.mrf.mxu0
  %v4351 = vadd.f32 0.0, %v4350
  %4352 = vmatmul.bf16.gmra.mxu0 %v4273
  %v4353 = vpop.f32.mrf.mxu0
  %v4354 = vadd.f32 0.0, %v4353
  %v4355 = vpop.f32.mrf.mxu0
  %v4356 = vadd.f32 0.0, %v4355
  %4357 = vmatmul.bf16.gmra.mxu0 %v4276
  %v4358 = vpop.f32.mrf.mxu0
  %v4359 = vadd.f32 0.0, %v4358
  %v4360 = vpop.f32.mrf.mxu0
  %v4361 = vadd.f32 0.0, %v4360
  %4362 = vmatmul.bf16.gmra.mxu0 %v4279
  %v4363 = vpop.f32.mrf.mxu0
  %v4364 = vadd.f32 0.0, %v4363
  %v4365 = vpop.f32.mrf.mxu0
  %v4366 = vadd.f32 0.0, %v4365
  %4367 = vmatmul.bf16.gmra.mxu0 %v4282
  %v4368 = vpop.f32.mrf.mxu0
  %v4369 = vadd.f32 0.0, %v4368
  %v4370 = vpop.f32.mrf.mxu0
  %v4371 = vadd.f32 0.0, %v4370
  %4372 = vdwg.mxu0
  %v4373 = vadd.f32 %v4040, %v4294
  %v4374 = vadd.f32 %v4042, %v4296
  %v4375 = vadd.f32 %v4045, %v4299
  %v4376 = vadd.f32 %v4047, %v4301
  %v4377 = vadd.f32 %v4050, %v4304
  %v4378 = vadd.f32 %v4052, %v4306
  %v4379 = vadd.f32 %v4055, %v4309
  %v4380 = vadd.f32 %v4057, %v4311
  %v4381 = vadd.f32 %v4060, %v4314
  %v4382 = vadd.f32 %v4062, %v4316
  %v4383 = vadd.f32 %v4065, %v4319
  %v4384 = vadd.f32 %v4067, %v4321
  %v4385 = vadd.f32 %v4070, %v4324
  %v4386 = vadd.f32 %v4072, %v4326
  %v4387 = vadd.f32 %v4075, %v4329
  %v4388 = vadd.f32 %v4077, %v4331
  %v4389 = vadd.f32 %v4080, %v4334
  %v4390 = vadd.f32 %v4082, %v4336
  %v4391 = vadd.f32 %v4085, %v4339
  %v4392 = vadd.f32 %v4087, %v4341
  %v4393 = vadd.f32 %v4090, %v4344
  %v4394 = vadd.f32 %v4092, %v4346
  %v4395 = vadd.f32 %v4095, %v4349
  %v4396 = vadd.f32 %v4097, %v4351
  %v4397 = vadd.f32 %v4100, %v4354
  %v4398 = vadd.f32 %v4102, %v4356
  %v4399 = vadd.f32 %v4105, %v4359
  %v4400 = vadd.f32 %v4107, %v4361
  %v4401 = vadd.f32 %v4110, %v4364
  %v4402 = vadd.f32 %v4112, %v4366
  %v4403 = vadd.f32 %v4115, %v4369
  %v4404 = vadd.f32 %v4117, %v4371
  %v4405 = vpack.c.bf16 %v3605, %v3669
  %v4407 = vsel %vm255, %v4405, 0
  %4409 = vmatpush.bf16.msra.mxu0 0
  %4410 = vmatpush.bf16.msra.mxu0 0
  %4411 = vmatpush.bf16.msra.mxu0 0
  %4412 = vmatpush.bf16.msra.mxu0 0
  %4413 = vmatpush.bf16.msra.mxu0 0
  %4414 = vmatpush.bf16.msra.mxu0 0
  %4415 = vmatpush.bf16.msra.mxu0 0
  %4416 = vmatpush.bf16.msra.mxu0 %v2685
  %4417 = vmatmul.bf16.gmra.mxu0 %v3986
  %v4418 = vpop.f32.mrf.mxu0
  %v4419 = vadd.f32 0.0, %v4418
  %v4420 = vpop.f32.mrf.mxu0
  %v4421 = vadd.f32 0.0, %v4420
  %4422 = vmatmul.bf16.gmra.mxu0 %v3989
  %v4423 = vpop.f32.mrf.mxu0
  %v4424 = vadd.f32 0.0, %v4423
  %v4425 = vpop.f32.mrf.mxu0
  %v4426 = vadd.f32 0.0, %v4425
  %4427 = vmatmul.bf16.gmra.mxu0 %v3992
  %v4428 = vpop.f32.mrf.mxu0
  %v4429 = vadd.f32 0.0, %v4428
  %v4430 = vpop.f32.mrf.mxu0
  %v4431 = vadd.f32 0.0, %v4430
  %4432 = vmatmul.bf16.gmra.mxu0 %v3995
  %v4433 = vpop.f32.mrf.mxu0
  %v4434 = vadd.f32 0.0, %v4433
  %v4435 = vpop.f32.mrf.mxu0
  %v4436 = vadd.f32 0.0, %v4435
  %4437 = vmatmul.bf16.gmra.mxu0 %v3998
  %v4438 = vpop.f32.mrf.mxu0
  %v4439 = vadd.f32 0.0, %v4438
  %v4440 = vpop.f32.mrf.mxu0
  %v4441 = vadd.f32 0.0, %v4440
  %4442 = vmatmul.bf16.gmra.mxu0 %v4001
  %v4443 = vpop.f32.mrf.mxu0
  %v4444 = vadd.f32 0.0, %v4443
  %v4445 = vpop.f32.mrf.mxu0
  %v4446 = vadd.f32 0.0, %v4445
  %4447 = vmatmul.bf16.gmra.mxu0 %v4004
  %v4448 = vpop.f32.mrf.mxu0
  %v4449 = vadd.f32 0.0, %v4448
  %v4450 = vpop.f32.mrf.mxu0
  %v4451 = vadd.f32 0.0, %v4450
  %4452 = vmatmul.bf16.gmra.mxu0 %v4007
  %v4453 = vpop.f32.mrf.mxu0
  %v4454 = vadd.f32 0.0, %v4453
  %v4455 = vpop.f32.mrf.mxu0
  %v4456 = vadd.f32 0.0, %v4455
  %4457 = vmatmul.bf16.gmra.mxu0 %v4010
  %v4458 = vpop.f32.mrf.mxu0
  %v4459 = vadd.f32 0.0, %v4458
  %v4460 = vpop.f32.mrf.mxu0
  %v4461 = vadd.f32 0.0, %v4460
  %4462 = vmatmul.bf16.gmra.mxu0 %v4013
  %v4463 = vpop.f32.mrf.mxu0
  %v4464 = vadd.f32 0.0, %v4463
  %v4465 = vpop.f32.mrf.mxu0
  %v4466 = vadd.f32 0.0, %v4465
  %4467 = vmatmul.bf16.gmra.mxu0 %v4016
  %v4468 = vpop.f32.mrf.mxu0
  %v4469 = vadd.f32 0.0, %v4468
  %v4470 = vpop.f32.mrf.mxu0
  %v4471 = vadd.f32 0.0, %v4470
  %4472 = vmatmul.bf16.gmra.mxu0 %v4019
  %v4473 = vpop.f32.mrf.mxu0
  %v4474 = vadd.f32 0.0, %v4473
  %v4475 = vpop.f32.mrf.mxu0
  %v4476 = vadd.f32 0.0, %v4475
  %4477 = vmatmul.bf16.gmra.mxu0 %v4022
  %v4478 = vpop.f32.mrf.mxu0
  %v4479 = vadd.f32 0.0, %v4478
  %v4480 = vpop.f32.mrf.mxu0
  %v4481 = vadd.f32 0.0, %v4480
  %4482 = vmatmul.bf16.gmra.mxu0 %v4025
  %v4483 = vpop.f32.mrf.mxu0
  %v4484 = vadd.f32 0.0, %v4483
  %v4485 = vpop.f32.mrf.mxu0
  %v4486 = vadd.f32 0.0, %v4485
  %4487 = vmatmul.bf16.gmra.mxu0 %v4028
  %v4488 = vpop.f32.mrf.mxu0
  %v4489 = vadd.f32 0.0, %v4488
  %v4490 = vpop.f32.mrf.mxu0
  %v4491 = vadd.f32 0.0, %v4490
  %4492 = vmatmul.bf16.gmra.mxu0 %v4407
  %v4493 = vpop.f32.mrf.mxu0
  %v4494 = vadd.f32 0.0, %v4493
  %v4495 = vpop.f32.mrf.mxu0
  %v4496 = vadd.f32 0.0, %v4495
  %4497 = vdwg.mxu0
  %v4498 = vadd.f32 %v4373, %v4419
  %v4499 = vadd.f32 %v4374, %v4421
  %v4500 = vadd.f32 %v4375, %v4424
  %v4501 = vadd.f32 %v4376, %v4426
  %v4502 = vadd.f32 %v4377, %v4429
  %v4503 = vadd.f32 %v4378, %v4431
  %v4504 = vadd.f32 %v4379, %v4434
  %v4505 = vadd.f32 %v4380, %v4436
  %v4506 = vadd.f32 %v4381, %v4439
  %v4507 = vadd.f32 %v4382, %v4441
  %v4508 = vadd.f32 %v4383, %v4444
  %v4509 = vadd.f32 %v4384, %v4446
  %v4510 = vadd.f32 %v4385, %v4449
  %v4511 = vadd.f32 %v4386, %v4451
  %v4512 = vadd.f32 %v4387, %v4454
  %v4513 = vadd.f32 %v4388, %v4456
  %v4514 = vadd.f32 %v4389, %v4459
  %v4515 = vadd.f32 %v4390, %v4461
  %v4516 = vadd.f32 %v4391, %v4464
  %v4517 = vadd.f32 %v4392, %v4466
  %v4518 = vadd.f32 %v4393, %v4469
  %v4519 = vadd.f32 %v4394, %v4471
  %v4520 = vadd.f32 %v4395, %v4474
  %v4521 = vadd.f32 %v4396, %v4476
  %v4522 = vadd.f32 %v4397, %v4479
  %v4523 = vadd.f32 %v4398, %v4481
  %v4524 = vadd.f32 %v4399, %v4484
  %v4525 = vadd.f32 %v4400, %v4486
  %v4526 = vadd.f32 %v4401, %v4489
  %v4527 = vadd.f32 %v4402, %v4491
  %v4528 = vadd.f32 %v4403, %v4494
  %v4529 = vadd.f32 %v4404, %v4496
  %v4532 = vrot.slane %v3669, 1
  %v4533 = vrot.slane %v3605, 1
  %v4534 = vsel %vm1964, %v4532, %v4533
  %v4535 = vrot.slane %v3685, 1
  %v4536 = vsel %vm1964, %v4533, %v4535
  %v4539 = vpack.c.bf16 %v4536, %v4534
  %v4541 = vsel %vm255, %v4539, 0
  %4543 = vmatpush.bf16.msra.mxu0 0
  %4544 = vmatpush.bf16.msra.mxu0 0
  %4545 = vmatpush.bf16.msra.mxu0 0
  %4546 = vmatpush.bf16.msra.mxu0 0
  %4547 = vmatpush.bf16.msra.mxu0 0
  %4548 = vmatpush.bf16.msra.mxu0 0
  %4549 = vmatpush.bf16.msra.mxu0 0
  %4550 = vmatpush.bf16.msra.mxu0 %v2824
  %4551 = vmatmul.bf16.gmra.mxu0 %v3852
  %v4552 = vpop.f32.mrf.mxu0
  %v4553 = vadd.f32 0.0, %v4552
  %v4554 = vpop.f32.mrf.mxu0
  %v4555 = vadd.f32 0.0, %v4554
  %4556 = vmatmul.bf16.gmra.mxu0 %v3855
  %v4557 = vpop.f32.mrf.mxu0
  %v4558 = vadd.f32 0.0, %v4557
  %v4559 = vpop.f32.mrf.mxu0
  %v4560 = vadd.f32 0.0, %v4559
  %4561 = vmatmul.bf16.gmra.mxu0 %v3858
  %v4562 = vpop.f32.mrf.mxu0
  %v4563 = vadd.f32 0.0, %v4562
  %v4564 = vpop.f32.mrf.mxu0
  %v4565 = vadd.f32 0.0, %v4564
  %4566 = vmatmul.bf16.gmra.mxu0 %v3861
  %v4567 = vpop.f32.mrf.mxu0
  %v4568 = vadd.f32 0.0, %v4567
  %v4569 = vpop.f32.mrf.mxu0
  %v4570 = vadd.f32 0.0, %v4569
  %4571 = vmatmul.bf16.gmra.mxu0 %v3864
  %v4572 = vpop.f32.mrf.mxu0
  %v4573 = vadd.f32 0.0, %v4572
  %v4574 = vpop.f32.mrf.mxu0
  %v4575 = vadd.f32 0.0, %v4574
  %4576 = vmatmul.bf16.gmra.mxu0 %v3867
  %v4577 = vpop.f32.mrf.mxu0
  %v4578 = vadd.f32 0.0, %v4577
  %v4579 = vpop.f32.mrf.mxu0
  %v4580 = vadd.f32 0.0, %v4579
  %4581 = vmatmul.bf16.gmra.mxu0 %v3870
  %v4582 = vpop.f32.mrf.mxu0
  %v4583 = vadd.f32 0.0, %v4582
  %v4584 = vpop.f32.mrf.mxu0
  %v4585 = vadd.f32 0.0, %v4584
  %4586 = vmatmul.bf16.gmra.mxu0 %v3873
  %v4587 = vpop.f32.mrf.mxu0
  %v4588 = vadd.f32 0.0, %v4587
  %v4589 = vpop.f32.mrf.mxu0
  %v4590 = vadd.f32 0.0, %v4589
  %4591 = vmatmul.bf16.gmra.mxu0 %v3876
  %v4592 = vpop.f32.mrf.mxu0
  %v4593 = vadd.f32 0.0, %v4592
  %v4594 = vpop.f32.mrf.mxu0
  %v4595 = vadd.f32 0.0, %v4594
  %4596 = vmatmul.bf16.gmra.mxu0 %v3879
  %v4597 = vpop.f32.mrf.mxu0
  %v4598 = vadd.f32 0.0, %v4597
  %v4599 = vpop.f32.mrf.mxu0
  %v4600 = vadd.f32 0.0, %v4599
  %4601 = vmatmul.bf16.gmra.mxu0 %v3882
  %v4602 = vpop.f32.mrf.mxu0
  %v4603 = vadd.f32 0.0, %v4602
  %v4604 = vpop.f32.mrf.mxu0
  %v4605 = vadd.f32 0.0, %v4604
  %4606 = vmatmul.bf16.gmra.mxu0 %v3885
  %v4607 = vpop.f32.mrf.mxu0
  %v4608 = vadd.f32 0.0, %v4607
  %v4609 = vpop.f32.mrf.mxu0
  %v4610 = vadd.f32 0.0, %v4609
  %4611 = vmatmul.bf16.gmra.mxu0 %v3888
  %v4612 = vpop.f32.mrf.mxu0
  %v4613 = vadd.f32 0.0, %v4612
  %v4614 = vpop.f32.mrf.mxu0
  %v4615 = vadd.f32 0.0, %v4614
  %4616 = vmatmul.bf16.gmra.mxu0 %v3891
  %v4617 = vpop.f32.mrf.mxu0
  %v4618 = vadd.f32 0.0, %v4617
  %v4619 = vpop.f32.mrf.mxu0
  %v4620 = vadd.f32 0.0, %v4619
  %4621 = vmatmul.bf16.gmra.mxu0 %v3894
  %v4622 = vpop.f32.mrf.mxu0
  %v4623 = vadd.f32 0.0, %v4622
  %v4624 = vpop.f32.mrf.mxu0
  %v4625 = vadd.f32 0.0, %v4624
  %4626 = vmatmul.bf16.gmra.mxu0 %v4541
  %v4627 = vpop.f32.mrf.mxu0
  %v4628 = vadd.f32 0.0, %v4627
  %v4629 = vpop.f32.mrf.mxu0
  %v4630 = vadd.f32 0.0, %v4629
  %4631 = vdwg.mxu0
  %v4632 = vadd.f32 %v4498, %v4553
  %v4633 = vadd.f32 %v4499, %v4555
  %v4634 = vadd.f32 %v4500, %v4558
  %v4635 = vadd.f32 %v4501, %v4560
  %v4636 = vadd.f32 %v4502, %v4563
  %v4637 = vadd.f32 %v4503, %v4565
  %v4638 = vadd.f32 %v4504, %v4568
  %v4639 = vadd.f32 %v4505, %v4570
  %v4640 = vadd.f32 %v4506, %v4573
  %v4641 = vadd.f32 %v4507, %v4575
  %v4642 = vadd.f32 %v4508, %v4578
  %v4643 = vadd.f32 %v4509, %v4580
  %v4644 = vadd.f32 %v4510, %v4583
  %v4645 = vadd.f32 %v4511, %v4585
  %v4646 = vadd.f32 %v4512, %v4588
  %v4647 = vadd.f32 %v4513, %v4590
  %v4648 = vadd.f32 %v4514, %v4593
  %v4649 = vadd.f32 %v4515, %v4595
  %v4650 = vadd.f32 %v4516, %v4598
  %v4651 = vadd.f32 %v4517, %v4600
  %v4652 = vadd.f32 %v4518, %v4603
  %v4653 = vadd.f32 %v4519, %v4605
  %v4654 = vadd.f32 %v4520, %v4608
  %v4655 = vadd.f32 %v4521, %v4610
  %v4656 = vadd.f32 %v4522, %v4613
  %v4657 = vadd.f32 %v4523, %v4615
  %v4658 = vadd.f32 %v4524, %v4618
  %v4659 = vadd.f32 %v4525, %v4620
  %v4660 = vadd.f32 %v4526, %v4623
  %v4661 = vadd.f32 %v4527, %v4625
  %v4662 = vadd.f32 %v4528, %v4628
  %v4663 = vadd.f32 %v4529, %v4630
  %v4664 = vrot.slane %v3669, 2
  %v4665 = vrot.slane %v3605, 2
  %v4666 = vsel %vm2375, %v4664, %v4665
  %v4667 = vrot.slane %v3685, 2
  %v4668 = vsel %vm2375, %v4665, %v4667
  %v4671 = vpack.c.bf16 %v4668, %v4666
  %v4673 = vsel %vm255, %v4671, 0
  %4675 = vmatpush.bf16.msra.mxu0 0
  %4676 = vmatpush.bf16.msra.mxu0 0
  %4677 = vmatpush.bf16.msra.mxu0 0
  %4678 = vmatpush.bf16.msra.mxu0 0
  %4679 = vmatpush.bf16.msra.mxu0 0
  %4680 = vmatpush.bf16.msra.mxu0 0
  %4681 = vmatpush.bf16.msra.mxu0 0
  %4682 = vmatpush.bf16.msra.mxu0 %v2961
  %4683 = vmatmul.bf16.gmra.mxu0 %v4240
  %v4684 = vpop.f32.mrf.mxu0
  %v4685 = vadd.f32 0.0, %v4684
  %v4686 = vpop.f32.mrf.mxu0
  %v4687 = vadd.f32 0.0, %v4686
  %4688 = vmatmul.bf16.gmra.mxu0 %v4243
  %v4689 = vpop.f32.mrf.mxu0
  %v4690 = vadd.f32 0.0, %v4689
  %v4691 = vpop.f32.mrf.mxu0
  %v4692 = vadd.f32 0.0, %v4691
  %4693 = vmatmul.bf16.gmra.mxu0 %v4246
  %v4694 = vpop.f32.mrf.mxu0
  %v4695 = vadd.f32 0.0, %v4694
  %v4696 = vpop.f32.mrf.mxu0
  %v4697 = vadd.f32 0.0, %v4696
  %4698 = vmatmul.bf16.gmra.mxu0 %v4249
  %v4699 = vpop.f32.mrf.mxu0
  %v4700 = vadd.f32 0.0, %v4699
  %v4701 = vpop.f32.mrf.mxu0
  %v4702 = vadd.f32 0.0, %v4701
  %4703 = vmatmul.bf16.gmra.mxu0 %v4252
  %v4704 = vpop.f32.mrf.mxu0
  %v4705 = vadd.f32 0.0, %v4704
  %v4706 = vpop.f32.mrf.mxu0
  %v4707 = vadd.f32 0.0, %v4706
  %4708 = vmatmul.bf16.gmra.mxu0 %v4255
  %v4709 = vpop.f32.mrf.mxu0
  %v4710 = vadd.f32 0.0, %v4709
  %v4711 = vpop.f32.mrf.mxu0
  %v4712 = vadd.f32 0.0, %v4711
  %4713 = vmatmul.bf16.gmra.mxu0 %v4258
  %v4714 = vpop.f32.mrf.mxu0
  %v4715 = vadd.f32 0.0, %v4714
  %v4716 = vpop.f32.mrf.mxu0
  %v4717 = vadd.f32 0.0, %v4716
  %4718 = vmatmul.bf16.gmra.mxu0 %v4261
  %v4719 = vpop.f32.mrf.mxu0
  %v4720 = vadd.f32 0.0, %v4719
  %v4721 = vpop.f32.mrf.mxu0
  %v4722 = vadd.f32 0.0, %v4721
  %4723 = vmatmul.bf16.gmra.mxu0 %v4264
  %v4724 = vpop.f32.mrf.mxu0
  %v4725 = vadd.f32 0.0, %v4724
  %v4726 = vpop.f32.mrf.mxu0
  %v4727 = vadd.f32 0.0, %v4726
  %4728 = vmatmul.bf16.gmra.mxu0 %v4267
  %v4729 = vpop.f32.mrf.mxu0
  %v4730 = vadd.f32 0.0, %v4729
  %v4731 = vpop.f32.mrf.mxu0
  %v4732 = vadd.f32 0.0, %v4731
  %4733 = vmatmul.bf16.gmra.mxu0 %v4270
  %v4734 = vpop.f32.mrf.mxu0
  %v4735 = vadd.f32 0.0, %v4734
  %v4736 = vpop.f32.mrf.mxu0
  %v4737 = vadd.f32 0.0, %v4736
  %4738 = vmatmul.bf16.gmra.mxu0 %v4273
  %v4739 = vpop.f32.mrf.mxu0
  %v4740 = vadd.f32 0.0, %v4739
  %v4741 = vpop.f32.mrf.mxu0
  %v4742 = vadd.f32 0.0, %v4741
  %4743 = vmatmul.bf16.gmra.mxu0 %v4276
  %v4744 = vpop.f32.mrf.mxu0
  %v4745 = vadd.f32 0.0, %v4744
  %v4746 = vpop.f32.mrf.mxu0
  %v4747 = vadd.f32 0.0, %v4746
  %4748 = vmatmul.bf16.gmra.mxu0 %v4279
  %v4749 = vpop.f32.mrf.mxu0
  %v4750 = vadd.f32 0.0, %v4749
  %v4751 = vpop.f32.mrf.mxu0
  %v4752 = vadd.f32 0.0, %v4751
  %4753 = vmatmul.bf16.gmra.mxu0 %v4282
  %v4754 = vpop.f32.mrf.mxu0
  %v4755 = vadd.f32 0.0, %v4754
  %v4756 = vpop.f32.mrf.mxu0
  %v4757 = vadd.f32 0.0, %v4756
  %4758 = vmatmul.bf16.gmra.mxu0 %v4673
  %v4759 = vpop.f32.mrf.mxu0
  %v4760 = vadd.f32 0.0, %v4759
  %v4761 = vpop.f32.mrf.mxu0
  %v4762 = vadd.f32 0.0, %v4761
  %4763 = vdwg.mxu0
  %v4764 = vadd.f32 %v4632, %v4685
  %v4765 = vadd.f32 %v4633, %v4687
  %v4766 = vadd.f32 %v4634, %v4690
  %v4767 = vadd.f32 %v4635, %v4692
  %v4768 = vadd.f32 %v4636, %v4695
  %v4769 = vadd.f32 %v4637, %v4697
  %v4770 = vadd.f32 %v4638, %v4700
  %v4771 = vadd.f32 %v4639, %v4702
  %v4772 = vadd.f32 %v4640, %v4705
  %v4773 = vadd.f32 %v4641, %v4707
  %v4774 = vadd.f32 %v4642, %v4710
  %v4775 = vadd.f32 %v4643, %v4712
  %v4776 = vadd.f32 %v4644, %v4715
  %v4777 = vadd.f32 %v4645, %v4717
  %v4778 = vadd.f32 %v4646, %v4720
  %v4779 = vadd.f32 %v4647, %v4722
  %v4780 = vadd.f32 %v4648, %v4725
  %v4781 = vadd.f32 %v4649, %v4727
  %v4782 = vadd.f32 %v4650, %v4730
  %v4783 = vadd.f32 %v4651, %v4732
  %v4784 = vadd.f32 %v4652, %v4735
  %v4785 = vadd.f32 %v4653, %v4737
  %v4786 = vadd.f32 %v4654, %v4740
  %v4787 = vadd.f32 %v4655, %v4742
  %v4788 = vadd.f32 %v4656, %v4745
  %v4789 = vadd.f32 %v4657, %v4747
  %v4790 = vadd.f32 %v4658, %v4750
  %v4791 = vadd.f32 %v4659, %v4752
  %v4792 = vadd.f32 %v4660, %v4755
  %v4793 = vadd.f32 %v4661, %v4757
  %v4794 = vadd.f32 %v4662, %v4760
  %v4795 = vadd.f32 %v4663, %v4762
  %4796 = vmatpush.bf16.msra.mxu0 0
  %4797 = vmatpush.bf16.msra.mxu0 0
  %4798 = vmatpush.bf16.msra.mxu0 0
  %4799 = vmatpush.bf16.msra.mxu0 0
  %4800 = vmatpush.bf16.msra.mxu0 0
  %4801 = vmatpush.bf16.msra.mxu0 0
  %4802 = vmatpush.bf16.msra.mxu0 0
  %4803 = vmatpush.bf16.msra.mxu0 %v3087
  %4804 = vmatmul.bf16.gmra.mxu0 %v3989
  %v4805 = vpop.f32.mrf.mxu0
  %v4806 = vadd.f32 0.0, %v4805
  %v4807 = vpop.f32.mrf.mxu0
  %v4808 = vadd.f32 0.0, %v4807
  %4809 = vmatmul.bf16.gmra.mxu0 %v3992
  %v4810 = vpop.f32.mrf.mxu0
  %v4811 = vadd.f32 0.0, %v4810
  %v4812 = vpop.f32.mrf.mxu0
  %v4813 = vadd.f32 0.0, %v4812
  %4814 = vmatmul.bf16.gmra.mxu0 %v3995
  %v4815 = vpop.f32.mrf.mxu0
  %v4816 = vadd.f32 0.0, %v4815
  %v4817 = vpop.f32.mrf.mxu0
  %v4818 = vadd.f32 0.0, %v4817
  %4819 = vmatmul.bf16.gmra.mxu0 %v3998
  %v4820 = vpop.f32.mrf.mxu0
  %v4821 = vadd.f32 0.0, %v4820
  %v4822 = vpop.f32.mrf.mxu0
  %v4823 = vadd.f32 0.0, %v4822
  %4824 = vmatmul.bf16.gmra.mxu0 %v4001
  %v4825 = vpop.f32.mrf.mxu0
  %v4826 = vadd.f32 0.0, %v4825
  %v4827 = vpop.f32.mrf.mxu0
  %v4828 = vadd.f32 0.0, %v4827
  %4829 = vmatmul.bf16.gmra.mxu0 %v4004
  %v4830 = vpop.f32.mrf.mxu0
  %v4831 = vadd.f32 0.0, %v4830
  %v4832 = vpop.f32.mrf.mxu0
  %v4833 = vadd.f32 0.0, %v4832
  %4834 = vmatmul.bf16.gmra.mxu0 %v4007
  %v4835 = vpop.f32.mrf.mxu0
  %v4836 = vadd.f32 0.0, %v4835
  %v4837 = vpop.f32.mrf.mxu0
  %v4838 = vadd.f32 0.0, %v4837
  %4839 = vmatmul.bf16.gmra.mxu0 %v4010
  %v4840 = vpop.f32.mrf.mxu0
  %v4841 = vadd.f32 0.0, %v4840
  %v4842 = vpop.f32.mrf.mxu0
  %v4843 = vadd.f32 0.0, %v4842
  %4844 = vmatmul.bf16.gmra.mxu0 %v4013
  %v4845 = vpop.f32.mrf.mxu0
  %v4846 = vadd.f32 0.0, %v4845
  %v4847 = vpop.f32.mrf.mxu0
  %v4848 = vadd.f32 0.0, %v4847
  %4849 = vmatmul.bf16.gmra.mxu0 %v4016
  %v4850 = vpop.f32.mrf.mxu0
  %v4851 = vadd.f32 0.0, %v4850
  %v4852 = vpop.f32.mrf.mxu0
  %v4853 = vadd.f32 0.0, %v4852
  %4854 = vmatmul.bf16.gmra.mxu0 %v4019
  %v4855 = vpop.f32.mrf.mxu0
  %v4856 = vadd.f32 0.0, %v4855
  %v4857 = vpop.f32.mrf.mxu0
  %v4858 = vadd.f32 0.0, %v4857
  %4859 = vmatmul.bf16.gmra.mxu0 %v4022
  %v4860 = vpop.f32.mrf.mxu0
  %v4861 = vadd.f32 0.0, %v4860
  %v4862 = vpop.f32.mrf.mxu0
  %v4863 = vadd.f32 0.0, %v4862
  %4864 = vmatmul.bf16.gmra.mxu0 %v4025
  %v4865 = vpop.f32.mrf.mxu0
  %v4866 = vadd.f32 0.0, %v4865
  %v4867 = vpop.f32.mrf.mxu0
  %v4868 = vadd.f32 0.0, %v4867
  %4869 = vmatmul.bf16.gmra.mxu0 %v4028
  %v4870 = vpop.f32.mrf.mxu0
  %v4871 = vadd.f32 0.0, %v4870
  %v4872 = vpop.f32.mrf.mxu0
  %v4873 = vadd.f32 0.0, %v4872
  %4874 = vmatmul.bf16.gmra.mxu0 %v4407
  %v4875 = vpop.f32.mrf.mxu0
  %v4876 = vadd.f32 0.0, %v4875
  %v4877 = vpop.f32.mrf.mxu0
  %v4878 = vadd.f32 0.0, %v4877
  %4879 = vmatmul.bf16.gmra.mxu0 %v2236
  %v4880 = vpop.f32.mrf.mxu0
  %v4881 = vadd.f32 0.0, %v4880
  %v4882 = vpop.f32.mrf.mxu0
  %v4883 = vadd.f32 0.0, %v4882
  %4884 = vdwg.mxu0
  %v4885 = vadd.f32 %v4764, %v4806
  %v4886 = vadd.f32 %v4765, %v4808
  %v4887 = vadd.f32 %v4766, %v4811
  %v4888 = vadd.f32 %v4767, %v4813
  %v4889 = vadd.f32 %v4768, %v4816
  %v4890 = vadd.f32 %v4769, %v4818
  %v4891 = vadd.f32 %v4770, %v4821
  %v4892 = vadd.f32 %v4771, %v4823
  %v4893 = vadd.f32 %v4772, %v4826
  %v4894 = vadd.f32 %v4773, %v4828
  %v4895 = vadd.f32 %v4774, %v4831
  %v4896 = vadd.f32 %v4775, %v4833
  %v4897 = vadd.f32 %v4776, %v4836
  %v4898 = vadd.f32 %v4777, %v4838
  %v4899 = vadd.f32 %v4778, %v4841
  %v4900 = vadd.f32 %v4779, %v4843
  %v4901 = vadd.f32 %v4780, %v4846
  %v4902 = vadd.f32 %v4781, %v4848
  %v4903 = vadd.f32 %v4782, %v4851
  %v4904 = vadd.f32 %v4783, %v4853
  %v4905 = vadd.f32 %v4784, %v4856
  %v4906 = vadd.f32 %v4785, %v4858
  %v4907 = vadd.f32 %v4786, %v4861
  %v4908 = vadd.f32 %v4787, %v4863
  %v4909 = vadd.f32 %v4788, %v4866
  %v4910 = vadd.f32 %v4789, %v4868
  %v4911 = vadd.f32 %v4790, %v4871
  %v4912 = vadd.f32 %v4791, %v4873
  %v4913 = vadd.f32 %v4792, %v4876
  %v4914 = vadd.f32 %v4793, %v4878
  %v4915 = vadd.f32 %v4794, %v4881
  %v4916 = vadd.f32 %v4795, %v4883
  %4917 = vmatpush.bf16.msra.mxu0 0
  %4918 = vmatpush.bf16.msra.mxu0 0
  %4919 = vmatpush.bf16.msra.mxu0 0
  %4920 = vmatpush.bf16.msra.mxu0 0
  %4921 = vmatpush.bf16.msra.mxu0 0
  %4922 = vmatpush.bf16.msra.mxu0 0
  %4923 = vmatpush.bf16.msra.mxu0 0
  %4924 = vmatpush.bf16.msra.mxu0 %v3213
  %4925 = vmatmul.bf16.gmra.mxu0 %v3855
  %v4926 = vpop.f32.mrf.mxu0
  %v4927 = vadd.f32 0.0, %v4926
  %v4928 = vpop.f32.mrf.mxu0
  %v4929 = vadd.f32 0.0, %v4928
  %4930 = vmatmul.bf16.gmra.mxu0 %v3858
  %v4931 = vpop.f32.mrf.mxu0
  %v4932 = vadd.f32 0.0, %v4931
  %v4933 = vpop.f32.mrf.mxu0
  %v4934 = vadd.f32 0.0, %v4933
  %4935 = vmatmul.bf16.gmra.mxu0 %v3861
  %v4936 = vpop.f32.mrf.mxu0
  %v4937 = vadd.f32 0.0, %v4936
  %v4938 = vpop.f32.mrf.mxu0
  %v4939 = vadd.f32 0.0, %v4938
  %4940 = vmatmul.bf16.gmra.mxu0 %v3864
  %v4941 = vpop.f32.mrf.mxu0
  %v4942 = vadd.f32 0.0, %v4941
  %v4943 = vpop.f32.mrf.mxu0
  %v4944 = vadd.f32 0.0, %v4943
  %4945 = vmatmul.bf16.gmra.mxu0 %v3867
  %v4946 = vpop.f32.mrf.mxu0
  %v4947 = vadd.f32 0.0, %v4946
  %v4948 = vpop.f32.mrf.mxu0
  %v4949 = vadd.f32 0.0, %v4948
  %4950 = vmatmul.bf16.gmra.mxu0 %v3870
  %v4951 = vpop.f32.mrf.mxu0
  %v4952 = vadd.f32 0.0, %v4951
  %v4953 = vpop.f32.mrf.mxu0
  %v4954 = vadd.f32 0.0, %v4953
  %4955 = vmatmul.bf16.gmra.mxu0 %v3873
  %v4956 = vpop.f32.mrf.mxu0
  %v4957 = vadd.f32 0.0, %v4956
  %v4958 = vpop.f32.mrf.mxu0
  %v4959 = vadd.f32 0.0, %v4958
  %4960 = vmatmul.bf16.gmra.mxu0 %v3876
  %v4961 = vpop.f32.mrf.mxu0
  %v4962 = vadd.f32 0.0, %v4961
  %v4963 = vpop.f32.mrf.mxu0
  %v4964 = vadd.f32 0.0, %v4963
  %4965 = vmatmul.bf16.gmra.mxu0 %v3879
  %v4966 = vpop.f32.mrf.mxu0
  %v4967 = vadd.f32 0.0, %v4966
  %v4968 = vpop.f32.mrf.mxu0
  %v4969 = vadd.f32 0.0, %v4968
  %4970 = vmatmul.bf16.gmra.mxu0 %v3882
  %v4971 = vpop.f32.mrf.mxu0
  %v4972 = vadd.f32 0.0, %v4971
  %v4973 = vpop.f32.mrf.mxu0
  %v4974 = vadd.f32 0.0, %v4973
  %4975 = vmatmul.bf16.gmra.mxu0 %v3885
  %v4976 = vpop.f32.mrf.mxu0
  %v4977 = vadd.f32 0.0, %v4976
  %v4978 = vpop.f32.mrf.mxu0
  %v4979 = vadd.f32 0.0, %v4978
  %4980 = vmatmul.bf16.gmra.mxu0 %v3888
  %v4981 = vpop.f32.mrf.mxu0
  %v4982 = vadd.f32 0.0, %v4981
  %v4983 = vpop.f32.mrf.mxu0
  %v4984 = vadd.f32 0.0, %v4983
  %4985 = vmatmul.bf16.gmra.mxu0 %v3891
  %v4986 = vpop.f32.mrf.mxu0
  %v4987 = vadd.f32 0.0, %v4986
  %v4988 = vpop.f32.mrf.mxu0
  %v4989 = vadd.f32 0.0, %v4988
  %4990 = vmatmul.bf16.gmra.mxu0 %v3894
  %v4991 = vpop.f32.mrf.mxu0
  %v4992 = vadd.f32 0.0, %v4991
  %v4993 = vpop.f32.mrf.mxu0
  %v4994 = vadd.f32 0.0, %v4993
  %4995 = vmatmul.bf16.gmra.mxu0 %v4541
  %v4996 = vpop.f32.mrf.mxu0
  %v4997 = vadd.f32 0.0, %v4996
  %v4998 = vpop.f32.mrf.mxu0
  %v4999 = vadd.f32 0.0, %v4998
  %5000 = vmatmul.bf16.gmra.mxu0 %v2096
  %v5001 = vpop.f32.mrf.mxu0
  %v5002 = vadd.f32 0.0, %v5001
  %v5003 = vpop.f32.mrf.mxu0
  %v5004 = vadd.f32 0.0, %v5003
  %5005 = vdwg.mxu0
  %v5006 = vadd.f32 %v4885, %v4927
  %v5007 = vadd.f32 %v4886, %v4929
  %v5008 = vadd.f32 %v4887, %v4932
  %v5009 = vadd.f32 %v4888, %v4934
  %v5010 = vadd.f32 %v4889, %v4937
  %v5011 = vadd.f32 %v4890, %v4939
  %v5012 = vadd.f32 %v4891, %v4942
  %v5013 = vadd.f32 %v4892, %v4944
  %v5014 = vadd.f32 %v4893, %v4947
  %v5015 = vadd.f32 %v4894, %v4949
  %v5016 = vadd.f32 %v4895, %v4952
  %v5017 = vadd.f32 %v4896, %v4954
  %v5018 = vadd.f32 %v4897, %v4957
  %v5019 = vadd.f32 %v4898, %v4959
  %v5020 = vadd.f32 %v4899, %v4962
  %v5021 = vadd.f32 %v4900, %v4964
  %v5022 = vadd.f32 %v4901, %v4967
  %v5023 = vadd.f32 %v4902, %v4969
  %v5024 = vadd.f32 %v4903, %v4972
  %v5025 = vadd.f32 %v4904, %v4974
  %v5026 = vadd.f32 %v4905, %v4977
  %v5027 = vadd.f32 %v4906, %v4979
  %v5028 = vadd.f32 %v4907, %v4982
  %v5029 = vadd.f32 %v4908, %v4984
  %v5030 = vadd.f32 %v4909, %v4987
  %v5031 = vadd.f32 %v4910, %v4989
  %v5032 = vadd.f32 %v4911, %v4992
  %v5033 = vadd.f32 %v4912, %v4994
  %v5034 = vadd.f32 %v4913, %v4997
  %v5035 = vadd.f32 %v4914, %v4999
  %v5036 = vadd.f32 %v4915, %v5002
  %v5037 = vadd.f32 %v4916, %v5004
  %5038 = vmatpush.bf16.msra.mxu0 0
  %5039 = vmatpush.bf16.msra.mxu0 0
  %5040 = vmatpush.bf16.msra.mxu0 0
  %5041 = vmatpush.bf16.msra.mxu0 0
  %5042 = vmatpush.bf16.msra.mxu0 0
  %5043 = vmatpush.bf16.msra.mxu0 0
  %5044 = vmatpush.bf16.msra.mxu0 0
  %5045 = vmatpush.bf16.msra.mxu0 %v3339
  %5046 = vmatmul.bf16.gmra.mxu0 %v4243
  %v5047 = vpop.f32.mrf.mxu0
  %v5048 = vadd.f32 0.0, %v5047
  %v5049 = vpop.f32.mrf.mxu0
  %v5050 = vadd.f32 0.0, %v5049
  %5051 = vmatmul.bf16.gmra.mxu0 %v4246
  %v5052 = vpop.f32.mrf.mxu0
  %v5053 = vadd.f32 0.0, %v5052
  %v5054 = vpop.f32.mrf.mxu0
  %v5055 = vadd.f32 0.0, %v5054
  %5056 = vmatmul.bf16.gmra.mxu0 %v4249
  %v5057 = vpop.f32.mrf.mxu0
  %v5058 = vadd.f32 0.0, %v5057
  %v5059 = vpop.f32.mrf.mxu0
  %v5060 = vadd.f32 0.0, %v5059
  %5061 = vmatmul.bf16.gmra.mxu0 %v4252
  %v5062 = vpop.f32.mrf.mxu0
  %v5063 = vadd.f32 0.0, %v5062
  %v5064 = vpop.f32.mrf.mxu0
  %v5065 = vadd.f32 0.0, %v5064
  %5066 = vmatmul.bf16.gmra.mxu0 %v4255
  %v5067 = vpop.f32.mrf.mxu0
  %v5068 = vadd.f32 0.0, %v5067
  %v5069 = vpop.f32.mrf.mxu0
  %v5070 = vadd.f32 0.0, %v5069
  %5071 = vmatmul.bf16.gmra.mxu0 %v4258
  %v5072 = vpop.f32.mrf.mxu0
  %v5073 = vadd.f32 0.0, %v5072
  %v5074 = vpop.f32.mrf.mxu0
  %v5075 = vadd.f32 0.0, %v5074
  %5076 = vmatmul.bf16.gmra.mxu0 %v4261
  %v5077 = vpop.f32.mrf.mxu0
  %v5078 = vadd.f32 0.0, %v5077
  %v5079 = vpop.f32.mrf.mxu0
  %v5080 = vadd.f32 0.0, %v5079
  %5081 = vmatmul.bf16.gmra.mxu0 %v4264
  %v5082 = vpop.f32.mrf.mxu0
  %v5083 = vadd.f32 0.0, %v5082
  %v5084 = vpop.f32.mrf.mxu0
  %v5085 = vadd.f32 0.0, %v5084
  %5086 = vmatmul.bf16.gmra.mxu0 %v4267
  %v5087 = vpop.f32.mrf.mxu0
  %v5088 = vadd.f32 0.0, %v5087
  %v5089 = vpop.f32.mrf.mxu0
  %v5090 = vadd.f32 0.0, %v5089
  %5091 = vmatmul.bf16.gmra.mxu0 %v4270
  %v5092 = vpop.f32.mrf.mxu0
  %v5093 = vadd.f32 0.0, %v5092
  %v5094 = vpop.f32.mrf.mxu0
  %v5095 = vadd.f32 0.0, %v5094
  %5096 = vmatmul.bf16.gmra.mxu0 %v4273
  %v5097 = vpop.f32.mrf.mxu0
  %v5098 = vadd.f32 0.0, %v5097
  %v5099 = vpop.f32.mrf.mxu0
  %v5100 = vadd.f32 0.0, %v5099
  %5101 = vmatmul.bf16.gmra.mxu0 %v4276
  %v5102 = vpop.f32.mrf.mxu0
  %v5103 = vadd.f32 0.0, %v5102
  %v5104 = vpop.f32.mrf.mxu0
  %v5105 = vadd.f32 0.0, %v5104
  %5106 = vmatmul.bf16.gmra.mxu0 %v4279
  %v5107 = vpop.f32.mrf.mxu0
  %v5108 = vadd.f32 0.0, %v5107
  %v5109 = vpop.f32.mrf.mxu0
  %v5110 = vadd.f32 0.0, %v5109
  %5111 = vmatmul.bf16.gmra.mxu0 %v4282
  %v5112 = vpop.f32.mrf.mxu0
  %v5113 = vadd.f32 0.0, %v5112
  %v5114 = vpop.f32.mrf.mxu0
  %v5115 = vadd.f32 0.0, %v5114
  %5116 = vmatmul.bf16.gmra.mxu0 %v4673
  %v5117 = vpop.f32.mrf.mxu0
  %v5118 = vadd.f32 0.0, %v5117
  %v5119 = vpop.f32.mrf.mxu0
  %v5120 = vadd.f32 0.0, %v5119
  %5121 = vmatmul.bf16.gmra.mxu0 %v2507
  %v5122 = vpop.f32.mrf.mxu0
  %v5123 = vadd.f32 0.0, %v5122
  %v5124 = vpop.f32.mrf.mxu0
  %v5125 = vadd.f32 0.0, %v5124
  %5126 = vdwg.mxu0
  %v5127 = vadd.f32 %v5006, %v5048
  %v5128 = vadd.f32 %v5007, %v5050
  %v5129 = vadd.f32 %v5008, %v5053
  %v5130 = vadd.f32 %v5009, %v5055
  %v5131 = vadd.f32 %v5010, %v5058
  %v5132 = vadd.f32 %v5011, %v5060
  %v5133 = vadd.f32 %v5012, %v5063
  %v5134 = vadd.f32 %v5013, %v5065
  %v5135 = vadd.f32 %v5014, %v5068
  %v5136 = vadd.f32 %v5015, %v5070
  %v5137 = vadd.f32 %v5016, %v5073
  %v5138 = vadd.f32 %v5017, %v5075
  %v5139 = vadd.f32 %v5018, %v5078
  %v5140 = vadd.f32 %v5019, %v5080
  %v5141 = vadd.f32 %v5020, %v5083
  %v5142 = vadd.f32 %v5021, %v5085
  %v5143 = vadd.f32 %v5022, %v5088
  %v5144 = vadd.f32 %v5023, %v5090
  %v5145 = vadd.f32 %v5024, %v5093
  %v5146 = vadd.f32 %v5025, %v5095
  %v5147 = vadd.f32 %v5026, %v5098
  %v5148 = vadd.f32 %v5027, %v5100
  %v5149 = vadd.f32 %v5028, %v5103
  %v5150 = vadd.f32 %v5029, %v5105
  %v5151 = vadd.f32 %v5030, %v5108
  %v5152 = vadd.f32 %v5031, %v5110
  %v5153 = vadd.f32 %v5032, %v5113
  %v5154 = vadd.f32 %v5033, %v5115
  %v5155 = vadd.f32 %v5034, %v5118
  %v5156 = vadd.f32 %v5035, %v5120
  %v5157 = vadd.f32 %v5036, %v5123
  %v5158 = vadd.f32 %v5037, %v5125
  %v5159 = vsel %vm255, %v3430, 0.0
  %v5160 = vsel %vm255, %v3431, 0.0
  %v5161 = vadd.f32 %v5159, %v5160
  %v5162 = vsel %vm255, %v3432, 0.0
  %v5163 = vadd.f32 %v5161, %v5162
  %v5164 = vsel %vm255, %v3433, 0.0
  %v5165 = vadd.f32 %v5163, %v5164
  %v5166 = vsel %vm255, %v3434, 0.0
  %v5167 = vadd.f32 %v5165, %v5166
  %v5168 = vsel %vm255, %v3435, 0.0
  %v5169 = vadd.f32 %v5167, %v5168
  %v5170 = vsel %vm255, %v3436, 0.0
  %v5171 = vadd.f32 %v5169, %v5170
  %v5172 = vsel %vm255, %v3437, 0.0
  %v5173 = vadd.f32 %v5171, %v5172
  %v5174 = vsel %vm255, %v3438, 0.0
  %v5175 = vadd.f32 %v5173, %v5174
  %v5176 = vsel %vm255, %v3439, 0.0
  %v5177 = vadd.f32 %v5175, %v5176
  %v5178 = vsel %vm255, %v3440, 0.0
  %v5179 = vadd.f32 %v5177, %v5178
  %v5180 = vsel %vm255, %v3441, 0.0
  %v5181 = vadd.f32 %v5179, %v5180
  %v5182 = vsel %vm255, %v3442, 0.0
  %v5183 = vadd.f32 %v5181, %v5182
  %v5184 = vsel %vm255, %v3443, 0.0
  %v5185 = vadd.f32 %v5183, %v5184
  %v5186 = vsel %vm255, %v3444, 0.0
  %v5187 = vadd.f32 %v5185, %v5186
  %v5188 = vsel %vm255, %v3445, 0.0
  %v5189 = vadd.f32 %v5187, %v5188
  %v5190 = vsel %vm255, %v3446, 0.0
  %v5191 = vadd.f32 %v5189, %v5190
  %v5192 = vsel %vm255, %v3447, 0.0
  %v5193 = vadd.f32 %v5191, %v5192
  %v5194 = vsel %vm255, %v3448, 0.0
  %v5195 = vadd.f32 %v5193, %v5194
  %v5196 = vsel %vm255, %v3449, 0.0
  %v5197 = vadd.f32 %v5195, %v5196
  %v5198 = vsel %vm255, %v3450, 0.0
  %v5199 = vadd.f32 %v5197, %v5198
  %v5200 = vsel %vm255, %v3451, 0.0
  %v5201 = vadd.f32 %v5199, %v5200
  %v5202 = vsel %vm255, %v3452, 0.0
  %v5203 = vadd.f32 %v5201, %v5202
  %v5204 = vsel %vm255, %v3453, 0.0
  %v5205 = vadd.f32 %v5203, %v5204
  %v5206 = vsel %vm255, %v3454, 0.0
  %v5207 = vadd.f32 %v5205, %v5206
  %v5208 = vsel %vm255, %v3455, 0.0
  %v5209 = vadd.f32 %v5207, %v5208
  %v5210 = vsel %vm255, %v3456, 0.0
  %v5211 = vadd.f32 %v5209, %v5210
  %v5212 = vsel %vm255, %v3457, 0.0
  %v5213 = vadd.f32 %v5211, %v5212
  %v5214 = vsel %vm255, %v3458, 0.0
  %v5215 = vadd.f32 %v5213, %v5214
  %v5216 = vsel %vm255, %v3459, 0.0
  %v5217 = vadd.f32 %v5215, %v5216
  %v5218 = vsel %vm255, %v3460, 0.0
  %v5219 = vadd.f32 %v5217, %v5218
  %v5220 = vsel %vm255, %v3461, 0.0
  %v5221 = vadd.f32 %v5219, %v5220
  %v5222 = vsel %vm255, %v5127, 0.0
  %v5223 = vadd.f32 %v5221, %v5222
  %v5224 = vsel %vm255, %v5128, 0.0
  %v5225 = vadd.f32 %v5223, %v5224
  %v5226 = vsel %vm255, %v5129, 0.0
  %v5227 = vadd.f32 %v5225, %v5226
  %v5228 = vsel %vm255, %v5130, 0.0
  %v5229 = vadd.f32 %v5227, %v5228
  %v5230 = vsel %vm255, %v5131, 0.0
  %v5231 = vadd.f32 %v5229, %v5230
  %v5232 = vsel %vm255, %v5132, 0.0
  %v5233 = vadd.f32 %v5231, %v5232
  %v5234 = vsel %vm255, %v5133, 0.0
  %v5235 = vadd.f32 %v5233, %v5234
  %v5236 = vsel %vm255, %v5134, 0.0
  %v5237 = vadd.f32 %v5235, %v5236
  %v5238 = vsel %vm255, %v5135, 0.0
  %v5239 = vadd.f32 %v5237, %v5238
  %v5240 = vsel %vm255, %v5136, 0.0
  %v5241 = vadd.f32 %v5239, %v5240
  %v5242 = vsel %vm255, %v5137, 0.0
  %v5243 = vadd.f32 %v5241, %v5242
  %v5244 = vsel %vm255, %v5138, 0.0
  %v5245 = vadd.f32 %v5243, %v5244
  %v5246 = vsel %vm255, %v5139, 0.0
  %v5247 = vadd.f32 %v5245, %v5246
  %v5248 = vsel %vm255, %v5140, 0.0
  %v5249 = vadd.f32 %v5247, %v5248
  %v5250 = vsel %vm255, %v5141, 0.0
  %v5251 = vadd.f32 %v5249, %v5250
  %v5252 = vsel %vm255, %v5142, 0.0
  %v5253 = vadd.f32 %v5251, %v5252
  %v5254 = vsel %vm255, %v5143, 0.0
  %v5255 = vadd.f32 %v5253, %v5254
  %v5256 = vsel %vm255, %v5144, 0.0
  %v5257 = vadd.f32 %v5255, %v5256
  %v5258 = vsel %vm255, %v5145, 0.0
  %v5259 = vadd.f32 %v5257, %v5258
  %v5260 = vsel %vm255, %v5146, 0.0
  %v5261 = vadd.f32 %v5259, %v5260
  %v5262 = vsel %vm255, %v5147, 0.0
  %v5263 = vadd.f32 %v5261, %v5262
  %v5264 = vsel %vm255, %v5148, 0.0
  %v5265 = vadd.f32 %v5263, %v5264
  %v5266 = vsel %vm255, %v5149, 0.0
  %v5267 = vadd.f32 %v5265, %v5266
  %v5268 = vsel %vm255, %v5150, 0.0
  %v5269 = vadd.f32 %v5267, %v5268
  %v5270 = vsel %vm255, %v5151, 0.0
  %v5271 = vadd.f32 %v5269, %v5270
  %v5272 = vsel %vm255, %v5152, 0.0
  %v5273 = vadd.f32 %v5271, %v5272
  %v5274 = vsel %vm255, %v5153, 0.0
  %v5275 = vadd.f32 %v5273, %v5274
  %v5276 = vsel %vm255, %v5154, 0.0
  %v5277 = vadd.f32 %v5275, %v5276
  %v5278 = vsel %vm255, %v5155, 0.0
  %v5279 = vadd.f32 %v5277, %v5278
  %v5280 = vsel %vm255, %v5156, 0.0
  %v5281 = vadd.f32 %v5279, %v5280
  %v5282 = vsel %vm255, %v5157, 0.0
  %v5283 = vadd.f32 %v5281, %v5282
  %v5284 = vsel %vm255, %v5158, 0.0
  %v5285 = vadd.f32 %v5283, %v5284
  %v5286 = vrot.slane %v5285, 4
  %v5287 = vadd.f32 %v5285, %v5286
  %v5288 = vrot.slane %v5287, 2
  %v5289 = vadd.f32 %v5287, %v5288
  %v5290 = vrot.slane %v5289, 1
  %v5291 = vadd.f32 %v5289, %v5290
  %v5292 = vmul.f32 %v5291, 0.001953125
  %v5293 = vsub.f32 %v3430, %v5292
  %v5294 = vsub.f32 %v3431, %v5292
  %v5295 = vsub.f32 %v3432, %v5292
  %v5296 = vsub.f32 %v3433, %v5292
  %v5297 = vsub.f32 %v3434, %v5292
  %v5298 = vsub.f32 %v3435, %v5292
  %v5299 = vsub.f32 %v3436, %v5292
  %v5300 = vsub.f32 %v3437, %v5292
  %v5301 = vsub.f32 %v3438, %v5292
  %v5302 = vsub.f32 %v3439, %v5292
  %v5303 = vsub.f32 %v3440, %v5292
  %v5304 = vsub.f32 %v3441, %v5292
  %v5305 = vsub.f32 %v3442, %v5292
  %v5306 = vsub.f32 %v3443, %v5292
  %v5307 = vsub.f32 %v3444, %v5292
  %v5308 = vsub.f32 %v3445, %v5292
  %v5309 = vsub.f32 %v3446, %v5292
  %v5310 = vsub.f32 %v3447, %v5292
  %v5311 = vsub.f32 %v3448, %v5292
  %v5312 = vsub.f32 %v3449, %v5292
  %v5313 = vsub.f32 %v3450, %v5292
  %v5314 = vsub.f32 %v3451, %v5292
  %v5315 = vsub.f32 %v3452, %v5292
  %v5316 = vsub.f32 %v3453, %v5292
  %v5317 = vsub.f32 %v3454, %v5292
  %v5318 = vsub.f32 %v3455, %v5292
  %v5319 = vsub.f32 %v3456, %v5292
  %v5320 = vsub.f32 %v3457, %v5292
  %v5321 = vsub.f32 %v3458, %v5292
  %v5322 = vsub.f32 %v3459, %v5292
  %v5323 = vsub.f32 %v3460, %v5292
  %v5324 = vsub.f32 %v3461, %v5292
  %v5325 = vsub.f32 %v5127, %v5292
  %v5326 = vsub.f32 %v5128, %v5292
  %v5327 = vsub.f32 %v5129, %v5292
  %v5328 = vsub.f32 %v5130, %v5292
  %v5329 = vsub.f32 %v5131, %v5292
  %v5330 = vsub.f32 %v5132, %v5292
  %v5331 = vsub.f32 %v5133, %v5292
  %v5332 = vsub.f32 %v5134, %v5292
  %v5333 = vsub.f32 %v5135, %v5292
  %v5334 = vsub.f32 %v5136, %v5292
  %v5335 = vsub.f32 %v5137, %v5292
  %v5336 = vsub.f32 %v5138, %v5292
  %v5337 = vsub.f32 %v5139, %v5292
  %v5338 = vsub.f32 %v5140, %v5292
  %v5339 = vsub.f32 %v5141, %v5292
  %v5340 = vsub.f32 %v5142, %v5292
  %v5341 = vsub.f32 %v5143, %v5292
  %v5342 = vsub.f32 %v5144, %v5292
  %v5343 = vsub.f32 %v5145, %v5292
  %v5344 = vsub.f32 %v5146, %v5292
  %v5345 = vsub.f32 %v5147, %v5292
  %v5346 = vsub.f32 %v5148, %v5292
  %v5347 = vsub.f32 %v5149, %v5292
  %v5348 = vsub.f32 %v5150, %v5292
  %v5349 = vsub.f32 %v5151, %v5292
  %v5350 = vsub.f32 %v5152, %v5292
  %v5351 = vsub.f32 %v5153, %v5292
  %v5352 = vsub.f32 %v5154, %v5292
  %v5353 = vsub.f32 %v5155, %v5292
  %v5354 = vsub.f32 %v5156, %v5292
  %v5355 = vsub.f32 %v5157, %v5292
  %v5356 = vsub.f32 %v5158, %v5292
  %v5357 = vmul.f32 %v5293, %v5293
  %v5358 = vmul.f32 %v5294, %v5294
  %v5359 = vmul.f32 %v5295, %v5295
  %v5360 = vmul.f32 %v5296, %v5296
  %v5361 = vmul.f32 %v5297, %v5297
  %v5362 = vmul.f32 %v5298, %v5298
  %v5363 = vmul.f32 %v5299, %v5299
  %v5364 = vmul.f32 %v5300, %v5300
  %v5365 = vmul.f32 %v5301, %v5301
  %v5366 = vmul.f32 %v5302, %v5302
  %v5367 = vmul.f32 %v5303, %v5303
  %v5368 = vmul.f32 %v5304, %v5304
  %v5369 = vmul.f32 %v5305, %v5305
  %v5370 = vmul.f32 %v5306, %v5306
  %v5371 = vmul.f32 %v5307, %v5307
  %v5372 = vmul.f32 %v5308, %v5308
  %v5373 = vmul.f32 %v5309, %v5309
  %v5374 = vmul.f32 %v5310, %v5310
  %v5375 = vmul.f32 %v5311, %v5311
  %v5376 = vmul.f32 %v5312, %v5312
  %v5377 = vmul.f32 %v5313, %v5313
  %v5378 = vmul.f32 %v5314, %v5314
  %v5379 = vmul.f32 %v5315, %v5315
  %v5380 = vmul.f32 %v5316, %v5316
  %v5381 = vmul.f32 %v5317, %v5317
  %v5382 = vmul.f32 %v5318, %v5318
  %v5383 = vmul.f32 %v5319, %v5319
  %v5384 = vmul.f32 %v5320, %v5320
  %v5385 = vmul.f32 %v5321, %v5321
  %v5386 = vmul.f32 %v5322, %v5322
  %v5387 = vmul.f32 %v5323, %v5323
  %v5388 = vmul.f32 %v5324, %v5324
  %v5389 = vmul.f32 %v5325, %v5325
  %v5390 = vmul.f32 %v5326, %v5326
  %v5391 = vmul.f32 %v5327, %v5327
  %v5392 = vmul.f32 %v5328, %v5328
  %v5393 = vmul.f32 %v5329, %v5329
  %v5394 = vmul.f32 %v5330, %v5330
  %v5395 = vmul.f32 %v5331, %v5331
  %v5396 = vmul.f32 %v5332, %v5332
  %v5397 = vmul.f32 %v5333, %v5333
  %v5398 = vmul.f32 %v5334, %v5334
  %v5399 = vmul.f32 %v5335, %v5335
  %v5400 = vmul.f32 %v5336, %v5336
  %v5401 = vmul.f32 %v5337, %v5337
  %v5402 = vmul.f32 %v5338, %v5338
  %v5403 = vmul.f32 %v5339, %v5339
  %v5404 = vmul.f32 %v5340, %v5340
  %v5405 = vmul.f32 %v5341, %v5341
  %v5406 = vmul.f32 %v5342, %v5342
  %v5407 = vmul.f32 %v5343, %v5343
  %v5408 = vmul.f32 %v5344, %v5344
  %v5409 = vmul.f32 %v5345, %v5345
  %v5410 = vmul.f32 %v5346, %v5346
  %v5411 = vmul.f32 %v5347, %v5347
  %v5412 = vmul.f32 %v5348, %v5348
  %v5413 = vmul.f32 %v5349, %v5349
  %v5414 = vmul.f32 %v5350, %v5350
  %v5415 = vmul.f32 %v5351, %v5351
  %v5416 = vmul.f32 %v5352, %v5352
  %v5417 = vmul.f32 %v5353, %v5353
  %v5418 = vmul.f32 %v5354, %v5354
  %v5419 = vmul.f32 %v5355, %v5355
  %v5420 = vmul.f32 %v5356, %v5356
  %v5421 = vsel %vm255, %v5357, 0.0
  %v5422 = vsel %vm255, %v5358, 0.0
  %v5423 = vadd.f32 %v5421, %v5422
  %v5424 = vsel %vm255, %v5359, 0.0
  %v5425 = vadd.f32 %v5423, %v5424
  %v5426 = vsel %vm255, %v5360, 0.0
  %v5427 = vadd.f32 %v5425, %v5426
  %v5428 = vsel %vm255, %v5361, 0.0
  %v5429 = vadd.f32 %v5427, %v5428
  %v5430 = vsel %vm255, %v5362, 0.0
  %v5431 = vadd.f32 %v5429, %v5430
  %v5432 = vsel %vm255, %v5363, 0.0
  %v5433 = vadd.f32 %v5431, %v5432
  %v5434 = vsel %vm255, %v5364, 0.0
  %v5435 = vadd.f32 %v5433, %v5434
  %v5436 = vsel %vm255, %v5365, 0.0
  %v5437 = vadd.f32 %v5435, %v5436
  %v5438 = vsel %vm255, %v5366, 0.0
  %v5439 = vadd.f32 %v5437, %v5438
  %v5440 = vsel %vm255, %v5367, 0.0
  %v5441 = vadd.f32 %v5439, %v5440
  %v5442 = vsel %vm255, %v5368, 0.0
  %v5443 = vadd.f32 %v5441, %v5442
  %v5444 = vsel %vm255, %v5369, 0.0
  %v5445 = vadd.f32 %v5443, %v5444
  %v5446 = vsel %vm255, %v5370, 0.0
  %v5447 = vadd.f32 %v5445, %v5446
  %v5448 = vsel %vm255, %v5371, 0.0
  %v5449 = vadd.f32 %v5447, %v5448
  %v5450 = vsel %vm255, %v5372, 0.0
  %v5451 = vadd.f32 %v5449, %v5450
  %v5452 = vsel %vm255, %v5373, 0.0
  %v5453 = vadd.f32 %v5451, %v5452
  %v5454 = vsel %vm255, %v5374, 0.0
  %v5455 = vadd.f32 %v5453, %v5454
  %v5456 = vsel %vm255, %v5375, 0.0
  %v5457 = vadd.f32 %v5455, %v5456
  %v5458 = vsel %vm255, %v5376, 0.0
  %v5459 = vadd.f32 %v5457, %v5458
  %v5460 = vsel %vm255, %v5377, 0.0
  %v5461 = vadd.f32 %v5459, %v5460
  %v5462 = vsel %vm255, %v5378, 0.0
  %v5463 = vadd.f32 %v5461, %v5462
  %v5464 = vsel %vm255, %v5379, 0.0
  %v5465 = vadd.f32 %v5463, %v5464
  %v5466 = vsel %vm255, %v5380, 0.0
  %v5467 = vadd.f32 %v5465, %v5466
  %v5468 = vsel %vm255, %v5381, 0.0
  %v5469 = vadd.f32 %v5467, %v5468
  %v5470 = vsel %vm255, %v5382, 0.0
  %v5471 = vadd.f32 %v5469, %v5470
  %v5472 = vsel %vm255, %v5383, 0.0
  %v5473 = vadd.f32 %v5471, %v5472
  %v5474 = vsel %vm255, %v5384, 0.0
  %v5475 = vadd.f32 %v5473, %v5474
  %v5476 = vsel %vm255, %v5385, 0.0
  %v5477 = vadd.f32 %v5475, %v5476
  %v5478 = vsel %vm255, %v5386, 0.0
  %v5479 = vadd.f32 %v5477, %v5478
  %v5480 = vsel %vm255, %v5387, 0.0
  %v5481 = vadd.f32 %v5479, %v5480
  %v5482 = vsel %vm255, %v5388, 0.0
  %v5483 = vadd.f32 %v5481, %v5482
  %v5484 = vsel %vm255, %v5389, 0.0
  %v5485 = vadd.f32 %v5483, %v5484
  %v5486 = vsel %vm255, %v5390, 0.0
  %v5487 = vadd.f32 %v5485, %v5486
  %v5488 = vsel %vm255, %v5391, 0.0
  %v5489 = vadd.f32 %v5487, %v5488
  %v5490 = vsel %vm255, %v5392, 0.0
  %v5491 = vadd.f32 %v5489, %v5490
  %v5492 = vsel %vm255, %v5393, 0.0
  %v5493 = vadd.f32 %v5491, %v5492
  %v5494 = vsel %vm255, %v5394, 0.0
  %v5495 = vadd.f32 %v5493, %v5494
  %v5496 = vsel %vm255, %v5395, 0.0
  %v5497 = vadd.f32 %v5495, %v5496
  %v5498 = vsel %vm255, %v5396, 0.0
  %v5499 = vadd.f32 %v5497, %v5498
  %v5500 = vsel %vm255, %v5397, 0.0
  %v5501 = vadd.f32 %v5499, %v5500
  %v5502 = vsel %vm255, %v5398, 0.0
  %v5503 = vadd.f32 %v5501, %v5502
  %v5504 = vsel %vm255, %v5399, 0.0
  %v5505 = vadd.f32 %v5503, %v5504
  %v5506 = vsel %vm255, %v5400, 0.0
  %v5507 = vadd.f32 %v5505, %v5506
  %v5508 = vsel %vm255, %v5401, 0.0
  %v5509 = vadd.f32 %v5507, %v5508
  %v5510 = vsel %vm255, %v5402, 0.0
  %v5511 = vadd.f32 %v5509, %v5510
  %v5512 = vsel %vm255, %v5403, 0.0
  %v5513 = vadd.f32 %v5511, %v5512
  %v5514 = vsel %vm255, %v5404, 0.0
  %v5515 = vadd.f32 %v5513, %v5514
  %v5516 = vsel %vm255, %v5405, 0.0
  %v5517 = vadd.f32 %v5515, %v5516
  %v5518 = vsel %vm255, %v5406, 0.0
  %v5519 = vadd.f32 %v5517, %v5518
  %v5520 = vsel %vm255, %v5407, 0.0
  %v5521 = vadd.f32 %v5519, %v5520
  %v5522 = vsel %vm255, %v5408, 0.0
  %v5523 = vadd.f32 %v5521, %v5522
  %v5524 = vsel %vm255, %v5409, 0.0
  %v5525 = vadd.f32 %v5523, %v5524
  %v5526 = vsel %vm255, %v5410, 0.0
  %v5527 = vadd.f32 %v5525, %v5526
  %v5528 = vsel %vm255, %v5411, 0.0
  %v5529 = vadd.f32 %v5527, %v5528
  %v5530 = vsel %vm255, %v5412, 0.0
  %v5531 = vadd.f32 %v5529, %v5530
  %v5532 = vsel %vm255, %v5413, 0.0
  %v5533 = vadd.f32 %v5531, %v5532
  %v5534 = vsel %vm255, %v5414, 0.0
  %v5535 = vadd.f32 %v5533, %v5534
  %v5536 = vsel %vm255, %v5415, 0.0
  %v5537 = vadd.f32 %v5535, %v5536
  %v5538 = vsel %vm255, %v5416, 0.0
  %v5539 = vadd.f32 %v5537, %v5538
  %v5540 = vsel %vm255, %v5417, 0.0
  %v5541 = vadd.f32 %v5539, %v5540
  %v5542 = vsel %vm255, %v5418, 0.0
  %v5543 = vadd.f32 %v5541, %v5542
  %v5544 = vsel %vm255, %v5419, 0.0
  %v5545 = vadd.f32 %v5543, %v5544
  %v5546 = vsel %vm255, %v5420, 0.0
  %v5547 = vadd.f32 %v5545, %v5546
  %v5548 = vrot.slane %v5547, 4
  %v5549 = vadd.f32 %v5547, %v5548
  %v5550 = vrot.slane %v5549, 2
  %v5551 = vadd.f32 %v5549, %v5550
  %v5552 = vrot.slane %v5551, 1
  %v5553 = vadd.f32 %v5551, %v5552
  %v5554 = vmul.f32 %v5553, 0.001953125
  %v5555 = vld [vmem:[%s6] sm:$0x1]
  %v5556 = vadd.f32 %v5554, 1e-05
  %v5557 = vrsqrt.pop %v5556
  %v5558 = vmul.f32 %v5557, %v5556
  %v5559 = vmul.f32 %v5558, %v5557
  %v5560 = vmul.f32 0.5, %v5559
  %v5561 = vsub.f32 1.5, %v5560
  %v5562 = vmul.f32 %v5557, %v5561
  %vm5563 = vweird.f32 %v5556
  %vm5564 = vweird.f32 %v5557
  %vm5565 = vmor %vm5563, %vm5564
  %v5566 = vsel %vm5565, %v5557, %v5562
  %v5567 = vmul.f32 %v5555, %v5566
  %v5568 = vperm.slane %v5567, 0
  %v5569 = vmul.f32 %v5293, %v5568
  %v5570 = vmul.f32 %v5294, %v5568
  %v5571 = vmul.f32 %v5295, %v5568
  %v5572 = vmul.f32 %v5296, %v5568
  %v5573 = vmul.f32 %v5297, %v5568
  %v5574 = vmul.f32 %v5298, %v5568
  %v5575 = vmul.f32 %v5299, %v5568
  %v5576 = vmul.f32 %v5300, %v5568
  %v5577 = vmul.f32 %v5301, %v5568
  %v5578 = vmul.f32 %v5302, %v5568
  %v5579 = vmul.f32 %v5303, %v5568
  %v5580 = vmul.f32 %v5304, %v5568
  %v5581 = vmul.f32 %v5305, %v5568
  %v5582 = vmul.f32 %v5306, %v5568
  %v5583 = vmul.f32 %v5307, %v5568
  %v5584 = vmul.f32 %v5308, %v5568
  %v5585 = vmul.f32 %v5309, %v5568
  %v5586 = vmul.f32 %v5310, %v5568
  %v5587 = vmul.f32 %v5311, %v5568
  %v5588 = vmul.f32 %v5312, %v5568
  %v5589 = vmul.f32 %v5313, %v5568
  %v5590 = vmul.f32 %v5314, %v5568
  %v5591 = vmul.f32 %v5315, %v5568
  %v5592 = vmul.f32 %v5316, %v5568
  %v5593 = vmul.f32 %v5317, %v5568
  %v5594 = vmul.f32 %v5318, %v5568
  %v5595 = vmul.f32 %v5319, %v5568
  %v5596 = vmul.f32 %v5320, %v5568
  %v5597 = vmul.f32 %v5321, %v5568
  %v5598 = vmul.f32 %v5322, %v5568
  %v5599 = vmul.f32 %v5323, %v5568
  %v5600 = vmul.f32 %v5324, %v5568
  %v5601 = vmul.f32 %v5325, %v5568
  %v5602 = vmul.f32 %v5326, %v5568
  %v5603 = vmul.f32 %v5327, %v5568
  %v5604 = vmul.f32 %v5328, %v5568
  %v5605 = vmul.f32 %v5329, %v5568
  %v5606 = vmul.f32 %v5330, %v5568
  %v5607 = vmul.f32 %v5331, %v5568
  %v5608 = vmul.f32 %v5332, %v5568
  %v5609 = vmul.f32 %v5333, %v5568
  %v5610 = vmul.f32 %v5334, %v5568
  %v5611 = vmul.f32 %v5335, %v5568
  %v5612 = vmul.f32 %v5336, %v5568
  %v5613 = vmul.f32 %v5337, %v5568
  %v5614 = vmul.f32 %v5338, %v5568
  %v5615 = vmul.f32 %v5339, %v5568
  %v5616 = vmul.f32 %v5340, %v5568
  %v5617 = vmul.f32 %v5341, %v5568
  %v5618 = vmul.f32 %v5342, %v5568
  %v5619 = vmul.f32 %v5343, %v5568
  %v5620 = vmul.f32 %v5344, %v5568
  %v5621 = vmul.f32 %v5345, %v5568
  %v5622 = vmul.f32 %v5346, %v5568
  %v5623 = vmul.f32 %v5347, %v5568
  %v5624 = vmul.f32 %v5348, %v5568
  %v5625 = vmul.f32 %v5349, %v5568
  %v5626 = vmul.f32 %v5350, %v5568
  %v5627 = vmul.f32 %v5351, %v5568
  %v5628 = vmul.f32 %v5352, %v5568
  %v5629 = vmul.f32 %v5353, %v5568
  %v5630 = vmul.f32 %v5354, %v5568
  %v5631 = vmul.f32 %v5355, %v5568
  %v5632 = vmul.f32 %v5356, %v5568
  %v5633 = vld [vmem:[%s6 + $0x1] sm:$0x1]
  %v5634 = vperm.slane %v5633, 0
  %v5635 = vadd.f32 %v5569, %v5634
  %v5636 = vadd.f32 %v5570, %v5634
  %v5637 = vadd.f32 %v5571, %v5634
  %v5638 = vadd.f32 %v5572, %v5634
  %v5639 = vadd.f32 %v5573, %v5634
  %v5640 = vadd.f32 %v5574, %v5634
  %v5641 = vadd.f32 %v5575, %v5634
  %v5642 = vadd.f32 %v5576, %v5634
  %v5643 = vadd.f32 %v5577, %v5634
  %v5644 = vadd.f32 %v5578, %v5634
  %v5645 = vadd.f32 %v5579, %v5634
  %v5646 = vadd.f32 %v5580, %v5634
  %v5647 = vadd.f32 %v5581, %v5634
  %v5648 = vadd.f32 %v5582, %v5634
  %v5649 = vadd.f32 %v5583, %v5634
  %v5650 = vadd.f32 %v5584, %v5634
  %v5651 = vadd.f32 %v5585, %v5634
  %v5652 = vadd.f32 %v5586, %v5634
  %v5653 = vadd.f32 %v5587, %v5634
  %v5654 = vadd.f32 %v5588, %v5634
  %v5655 = vadd.f32 %v5589, %v5634
  %v5656 = vadd.f32 %v5590, %v5634
  %v5657 = vadd.f32 %v5591, %v5634
  %v5658 = vadd.f32 %v5592, %v5634
  %v5659 = vadd.f32 %v5593, %v5634
  %v5660 = vadd.f32 %v5594, %v5634
  %v5661 = vadd.f32 %v5595, %v5634
  %v5662 = vadd.f32 %v5596, %v5634
  %v5663 = vadd.f32 %v5597, %v5634
  %v5664 = vadd.f32 %v5598, %v5634
  %v5665 = vadd.f32 %v5599, %v5634
  %v5666 = vadd.f32 %v5600, %v5634
  %v5667 = vadd.f32 %v5601, %v5634
  %v5668 = vadd.f32 %v5602, %v5634
  %v5669 = vadd.f32 %v5603, %v5634
  %v5670 = vadd.f32 %v5604, %v5634
  %v5671 = vadd.f32 %v5605, %v5634
  %v5672 = vadd.f32 %v5606, %v5634
  %v5673 = vadd.f32 %v5607, %v5634
  %v5674 = vadd.f32 %v5608, %v5634
  %v5675 = vadd.f32 %v5609, %v5634
  %v5676 = vadd.f32 %v5610, %v5634
  %v5677 = vadd.f32 %v5611, %v5634
  %v5678 = vadd.f32 %v5612, %v5634
  %v5679 = vadd.f32 %v5613, %v5634
  %v5680 = vadd.f32 %v5614, %v5634
  %v5681 = vadd.f32 %v5615, %v5634
  %v5682 = vadd.f32 %v5616, %v5634
  %v5683 = vadd.f32 %v5617, %v5634
  %v5684 = vadd.f32 %v5618, %v5634
  %v5685 = vadd.f32 %v5619, %v5634
  %v5686 = vadd.f32 %v5620, %v5634
  %v5687 = vadd.f32 %v5621, %v5634
  %v5688 = vadd.f32 %v5622, %v5634
  %v5689 = vadd.f32 %v5623, %v5634
  %v5690 = vadd.f32 %v5624, %v5634
  %v5691 = vadd.f32 %v5625, %v5634
  %v5692 = vadd.f32 %v5626, %v5634
  %v5693 = vadd.f32 %v5627, %v5634
  %v5694 = vadd.f32 %v5628, %v5634
  %v5695 = vadd.f32 %v5629, %v5634
  %v5696 = vadd.f32 %v5630, %v5634
  %v5697 = vadd.f32 %v5631, %v5634
  %v5698 = vadd.f32 %v5632, %v5634
  %v5699 = vmax.f32 %v5635, 0.0
  %v5700 = vmax.f32 %v5636, 0.0
  %v5701 = vmax.f32 %v5637, 0.0
  %v5702 = vmax.f32 %v5638, 0.0
  %v5703 = vmax.f32 %v5639, 0.0
  %v5704 = vmax.f32 %v5640, 0.0
  %v5705 = vmax.f32 %v5641, 0.0
  %v5706 = vmax.f32 %v5642, 0.0
  %v5707 = vmax.f32 %v5643, 0.0
  %v5708 = vmax.f32 %v5644, 0.0
  %v5709 = vmax.f32 %v5645, 0.0
  %v5710 = vmax.f32 %v5646, 0.0
  %v5711 = vmax.f32 %v5647, 0.0
  %v5712 = vmax.f32 %v5648, 0.0
  %v5713 = vmax.f32 %v5649, 0.0
  %v5714 = vmax.f32 %v5650, 0.0
  %v5715 = vmax.f32 %v5651, 0.0
  %v5716 = vmax.f32 %v5652, 0.0
  %v5717 = vmax.f32 %v5653, 0.0
  %v5718 = vmax.f32 %v5654, 0.0
  %v5719 = vmax.f32 %v5655, 0.0
  %v5720 = vmax.f32 %v5656, 0.0
  %v5721 = vmax.f32 %v5657, 0.0
  %v5722 = vmax.f32 %v5658, 0.0
  %v5723 = vmax.f32 %v5659, 0.0
  %v5724 = vmax.f32 %v5660, 0.0
  %v5725 = vmax.f32 %v5661, 0.0
  %v5726 = vmax.f32 %v5662, 0.0
  %v5727 = vmax.f32 %v5663, 0.0
  %v5728 = vmax.f32 %v5664, 0.0
  %v5729 = vmax.f32 %v5665, 0.0
  %v5730 = vmax.f32 %v5666, 0.0
  %v5731 = vmax.f32 %v5667, 0.0
  %v5732 = vmax.f32 %v5668, 0.0
  %v5733 = vmax.f32 %v5669, 0.0
  %v5734 = vmax.f32 %v5670, 0.0
  %v5735 = vmax.f32 %v5671, 0.0
  %v5736 = vmax.f32 %v5672, 0.0
  %v5737 = vmax.f32 %v5673, 0.0
  %v5738 = vmax.f32 %v5674, 0.0
  %v5739 = vmax.f32 %v5675, 0.0
  %v5740 = vmax.f32 %v5676, 0.0
  %v5741 = vmax.f32 %v5677, 0.0
  %v5742 = vmax.f32 %v5678, 0.0
  %v5743 = vmax.f32 %v5679, 0.0
  %v5744 = vmax.f32 %v5680, 0.0
  %v5745 = vmax.f32 %v5681, 0.0
  %v5746 = vmax.f32 %v5682, 0.0
  %v5747 = vmax.f32 %v5683, 0.0
  %v5748 = vmax.f32 %v5684, 0.0
  %v5749 = vmax.f32 %v5685, 0.0
  %v5750 = vmax.f32 %v5686, 0.0
  %v5751 = vmax.f32 %v5687, 0.0
  %v5752 = vmax.f32 %v5688, 0.0
  %v5753 = vmax.f32 %v5689, 0.0
  %v5754 = vmax.f32 %v5690, 0.0
  %v5755 = vmax.f32 %v5691, 0.0
  %v5756 = vmax.f32 %v5692, 0.0
  %v5757 = vmax.f32 %v5693, 0.0
  %v5758 = vmax.f32 %v5694, 0.0
  %v5759 = vmax.f32 %v5695, 0.0
  %v5760 = vmax.f32 %v5696, 0.0
  %v5761 = vmax.f32 %v5697, 0.0
  %v5762 = vmax.f32 %v5698, 0.0
  %v5763 = vpack.c.bf16 %v5700, %v5699
  %v5764 = vpack.c.bf16 %v5702, %v5701
  %v5765 = vpack.c.bf16 %v5704, %v5703
  %v5766 = vpack.c.bf16 %v5706, %v5705
  %v5767 = vpack.c.bf16 %v5708, %v5707
  %v5768 = vpack.c.bf16 %v5710, %v5709
  %v5769 = vpack.c.bf16 %v5712, %v5711
  %v5770 = vpack.c.bf16 %v5714, %v5713
  %v5771 = vpack.c.bf16 %v5716, %v5715
  %v5772 = vpack.c.bf16 %v5718, %v5717
  %v5773 = vpack.c.bf16 %v5720, %v5719
  %v5774 = vpack.c.bf16 %v5722, %v5721
  %v5775 = vpack.c.bf16 %v5724, %v5723
  %v5776 = vpack.c.bf16 %v5726, %v5725
  %v5777 = vpack.c.bf16 %v5728, %v5727
  %v5778 = vpack.c.bf16 %v5730, %v5729
  %v5779 = vpack.c.bf16 %v5732, %v5731
  %v5780 = vpack.c.bf16 %v5734, %v5733
  %v5781 = vpack.c.bf16 %v5736, %v5735
  %v5782 = vpack.c.bf16 %v5738, %v5737
  %v5783 = vpack.c.bf16 %v5740, %v5739
  %v5784 = vpack.c.bf16 %v5742, %v5741
  %v5785 = vpack.c.bf16 %v5744, %v5743
  %v5786 = vpack.c.bf16 %v5746, %v5745
  %v5787 = vpack.c.bf16 %v5748, %v5747
  %v5788 = vpack.c.bf16 %v5750, %v5749
  %v5789 = vpack.c.bf16 %v5752, %v5751
  %v5790 = vpack.c.bf16 %v5754, %v5753
  %v5791 = vpack.c.bf16 %v5756, %v5755
  %v5792 = vpack.c.bf16 %v5758, %v5757
  %v5793 = vpack.c.bf16 %v5760, %v5759
  %v5794 = vpack.c.bf16 %v5762, %v5761
  %v5795 = vld [vmem:[%s3] sm:$0x3]
  %v5797 = vsel %vm255, %v5763, 0
  %v5800 = vsel %vm255, %v5764, 0
  %v5803 = vsel %vm255, %v5765, 0
  %v5806 = vsel %vm255, %v5766, 0
  %v5809 = vsel %vm255, %v5767, 0
  %v5812 = vsel %vm255, %v5768, 0
  %v5815 = vsel %vm255, %v5769, 0
  %v5818 = vsel %vm255, %v5770, 0
  %v5821 = vsel %vm255, %v5771, 0
  %v5824 = vsel %vm255, %v5772, 0
  %v5827 = vsel %vm255, %v5773, 0
  %v5830 = vsel %vm255, %v5774, 0
  %v5833 = vsel %vm255, %v5775, 0
  %v5836 = vsel %vm255, %v5776, 0
  %v5839 = vsel %vm255, %v5777, 0
  %v5842 = vsel %vm255, %v5778, 0
  %v5845 = vsel %vm255, %v5779, 0
  %v5848 = vsel %vm255, %v5780, 0
  %v5851 = vsel %vm255, %v5781, 0
  %v5854 = vsel %vm255, %v5782, 0
  %v5857 = vsel %vm255, %v5783, 0
  %v5860 = vsel %vm255, %v5784, 0
  %v5863 = vsel %vm255, %v5785, 0
  %v5866 = vsel %vm255, %v5786, 0
  %v5869 = vsel %vm255, %v5787, 0
  %v5872 = vsel %vm255, %v5788, 0
  %v5875 = vsel %vm255, %v5789, 0
  %v5878 = vsel %vm255, %v5790, 0
  %v5881 = vsel %vm255, %v5791, 0
  %v5884 = vsel %vm255, %v5792, 0
  %v5887 = vsel %vm255, %v5793, 0
  %v5890 = vsel %vm255, %v5794, 0
  %v5893 = vsel %vm352, %v5795, 0
  %5895 = vmatpush.bf16.msra.mxu0 0
  %5896 = vmatpush.bf16.msra.mxu0 0
  %5897 = vmatpush.bf16.msra.mxu0 0
  %5898 = vmatpush.bf16.msra.mxu0 0
  %5899 = vmatpush.bf16.msra.mxu0 0
  %5900 = vmatpush.bf16.msra.mxu0 0
  %5901 = vmatpush.bf16.msra.mxu0 0
  %5902 = vmatpush.bf16.msra.mxu0 %v5893
  %5903 = vmatmul.bf16.gmra.mxu0 %v5797
  %v5904 = vpop.f32.mrf.mxu0
  %v5905 = vadd.f32 0.0, %v5904
  %v5906 = vpop.f32.mrf.mxu0
  %v5907 = vadd.f32 0.0, %v5906
  %5908 = vmatmul.bf16.gmra.mxu0 %v5800
  %v5909 = vpop.f32.mrf.mxu0
  %v5910 = vadd.f32 0.0, %v5909
  %v5911 = vpop.f32.mrf.mxu0
  %v5912 = vadd.f32 0.0, %v5911
  %5913 = vmatmul.bf16.gmra.mxu0 %v5803
  %v5914 = vpop.f32.mrf.mxu0
  %v5915 = vadd.f32 0.0, %v5914
  %v5916 = vpop.f32.mrf.mxu0
  %v5917 = vadd.f32 0.0, %v5916
  %5918 = vmatmul.bf16.gmra.mxu0 %v5806
  %v5919 = vpop.f32.mrf.mxu0
  %v5920 = vadd.f32 0.0, %v5919
  %v5921 = vpop.f32.mrf.mxu0
  %v5922 = vadd.f32 0.0, %v5921
  %5923 = vmatmul.bf16.gmra.mxu0 %v5809
  %v5924 = vpop.f32.mrf.mxu0
  %v5925 = vadd.f32 0.0, %v5924
  %v5926 = vpop.f32.mrf.mxu0
  %v5927 = vadd.f32 0.0, %v5926
  %5928 = vmatmul.bf16.gmra.mxu0 %v5812
  %v5929 = vpop.f32.mrf.mxu0
  %v5930 = vadd.f32 0.0, %v5929
  %v5931 = vpop.f32.mrf.mxu0
  %v5932 = vadd.f32 0.0, %v5931
  %5933 = vmatmul.bf16.gmra.mxu0 %v5815
  %v5934 = vpop.f32.mrf.mxu0
  %v5935 = vadd.f32 0.0, %v5934
  %v5936 = vpop.f32.mrf.mxu0
  %v5937 = vadd.f32 0.0, %v5936
  %5938 = vmatmul.bf16.gmra.mxu0 %v5818
  %v5939 = vpop.f32.mrf.mxu0
  %v5940 = vadd.f32 0.0, %v5939
  %v5941 = vpop.f32.mrf.mxu0
  %v5942 = vadd.f32 0.0, %v5941
  %5943 = vmatmul.bf16.gmra.mxu0 %v5821
  %v5944 = vpop.f32.mrf.mxu0
  %v5945 = vadd.f32 0.0, %v5944
  %v5946 = vpop.f32.mrf.mxu0
  %v5947 = vadd.f32 0.0, %v5946
  %5948 = vmatmul.bf16.gmra.mxu0 %v5824
  %v5949 = vpop.f32.mrf.mxu0
  %v5950 = vadd.f32 0.0, %v5949
  %v5951 = vpop.f32.mrf.mxu0
  %v5952 = vadd.f32 0.0, %v5951
  %5953 = vmatmul.bf16.gmra.mxu0 %v5827
  %v5954 = vpop.f32.mrf.mxu0
  %v5955 = vadd.f32 0.0, %v5954
  %v5956 = vpop.f32.mrf.mxu0
  %v5957 = vadd.f32 0.0, %v5956
  %5958 = vmatmul.bf16.gmra.mxu0 %v5830
  %v5959 = vpop.f32.mrf.mxu0
  %v5960 = vadd.f32 0.0, %v5959
  %v5961 = vpop.f32.mrf.mxu0
  %v5962 = vadd.f32 0.0, %v5961
  %5963 = vmatmul.bf16.gmra.mxu0 %v5833
  %v5964 = vpop.f32.mrf.mxu0
  %v5965 = vadd.f32 0.0, %v5964
  %v5966 = vpop.f32.mrf.mxu0
  %v5967 = vadd.f32 0.0, %v5966
  %5968 = vmatmul.bf16.gmra.mxu0 %v5836
  %v5969 = vpop.f32.mrf.mxu0
  %v5970 = vadd.f32 0.0, %v5969
  %v5971 = vpop.f32.mrf.mxu0
  %v5972 = vadd.f32 0.0, %v5971
  %5973 = vmatmul.bf16.gmra.mxu0 %v5839
  %v5974 = vpop.f32.mrf.mxu0
  %v5975 = vadd.f32 0.0, %v5974
  %v5976 = vpop.f32.mrf.mxu0
  %v5977 = vadd.f32 0.0, %v5976
  %5978 = vmatmul.bf16.gmra.mxu0 %v5842
  %v5979 = vpop.f32.mrf.mxu0
  %v5980 = vadd.f32 0.0, %v5979
  %v5981 = vpop.f32.mrf.mxu0
  %v5982 = vadd.f32 0.0, %v5981
  %5983 = vmatmul.bf16.gmra.mxu0 %v5845
  %v5984 = vpop.f32.mrf.mxu0
  %v5985 = vadd.f32 0.0, %v5984
  %v5986 = vpop.f32.mrf.mxu0
  %v5987 = vadd.f32 0.0, %v5986
  %5988 = vmatmul.bf16.gmra.mxu0 %v5848
  %v5989 = vpop.f32.mrf.mxu0
  %v5990 = vadd.f32 0.0, %v5989
  %v5991 = vpop.f32.mrf.mxu0
  %v5992 = vadd.f32 0.0, %v5991
  %5993 = vmatmul.bf16.gmra.mxu0 %v5851
  %v5994 = vpop.f32.mrf.mxu0
  %v5995 = vadd.f32 0.0, %v5994
  %v5996 = vpop.f32.mrf.mxu0
  %v5997 = vadd.f32 0.0, %v5996
  %5998 = vmatmul.bf16.gmra.mxu0 %v5854
  %v5999 = vpop.f32.mrf.mxu0
  %v6000 = vadd.f32 0.0, %v5999
  %v6001 = vpop.f32.mrf.mxu0
  %v6002 = vadd.f32 0.0, %v6001
  %6003 = vmatmul.bf16.gmra.mxu0 %v5857
  %v6004 = vpop.f32.mrf.mxu0
  %v6005 = vadd.f32 0.0, %v6004
  %v6006 = vpop.f32.mrf.mxu0
  %v6007 = vadd.f32 0.0, %v6006
  %6008 = vmatmul.bf16.gmra.mxu0 %v5860
  %v6009 = vpop.f32.mrf.mxu0
  %v6010 = vadd.f32 0.0, %v6009
  %v6011 = vpop.f32.mrf.mxu0
  %v6012 = vadd.f32 0.0, %v6011
  %6013 = vmatmul.bf16.gmra.mxu0 %v5863
  %v6014 = vpop.f32.mrf.mxu0
  %v6015 = vadd.f32 0.0, %v6014
  %v6016 = vpop.f32.mrf.mxu0
  %v6017 = vadd.f32 0.0, %v6016
  %6018 = vmatmul.bf16.gmra.mxu0 %v5866
  %v6019 = vpop.f32.mrf.mxu0
  %v6020 = vadd.f32 0.0, %v6019
  %v6021 = vpop.f32.mrf.mxu0
  %v6022 = vadd.f32 0.0, %v6021
  %6023 = vmatmul.bf16.gmra.mxu0 %v5869
  %v6024 = vpop.f32.mrf.mxu0
  %v6025 = vadd.f32 0.0, %v6024
  %v6026 = vpop.f32.mrf.mxu0
  %v6027 = vadd.f32 0.0, %v6026
  %6028 = vmatmul.bf16.gmra.mxu0 %v5872
  %v6029 = vpop.f32.mrf.mxu0
  %v6030 = vadd.f32 0.0, %v6029
  %v6031 = vpop.f32.mrf.mxu0
  %v6032 = vadd.f32 0.0, %v6031
  %6033 = vmatmul.bf16.gmra.mxu0 %v5875
  %v6034 = vpop.f32.mrf.mxu0
  %v6035 = vadd.f32 0.0, %v6034
  %v6036 = vpop.f32.mrf.mxu0
  %v6037 = vadd.f32 0.0, %v6036
  %6038 = vmatmul.bf16.gmra.mxu0 %v5878
  %v6039 = vpop.f32.mrf.mxu0
  %v6040 = vadd.f32 0.0, %v6039
  %v6041 = vpop.f32.mrf.mxu0
  %v6042 = vadd.f32 0.0, %v6041
  %6043 = vmatmul.bf16.gmra.mxu0 %v5881
  %v6044 = vpop.f32.mrf.mxu0
  %v6045 = vadd.f32 0.0, %v6044
  %v6046 = vpop.f32.mrf.mxu0
  %v6047 = vadd.f32 0.0, %v6046
  %6048 = vmatmul.bf16.gmra.mxu0 %v5884
  %v6049 = vpop.f32.mrf.mxu0
  %v6050 = vadd.f32 0.0, %v6049
  %v6051 = vpop.f32.mrf.mxu0
  %v6052 = vadd.f32 0.0, %v6051
  %6053 = vmatmul.bf16.gmra.mxu0 %v5887
  %v6054 = vpop.f32.mrf.mxu0
  %v6055 = vadd.f32 0.0, %v6054
  %v6056 = vpop.f32.mrf.mxu0
  %v6057 = vadd.f32 0.0, %v6056
  %6058 = vmatmul.bf16.gmra.mxu0 %v5890
  %v6059 = vpop.f32.mrf.mxu0
  %v6060 = vadd.f32 0.0, %v6059
  %v6061 = vpop.f32.mrf.mxu0
  %v6062 = vadd.f32 0.0, %v6061
  %6063 = vdwg.mxu0
  %v6064 = vsel %vm525, %v5905, 0.0
  %v6065 = vsel %vm525, %v5907, 0.0
  %v6066 = vadd.f32 %v6064, %v6065
  %v6067 = vsel %vm525, %v5910, 0.0
  %v6068 = vadd.f32 %v6066, %v6067
  %v6069 = vsel %vm525, %v5912, 0.0
  %v6070 = vadd.f32 %v6068, %v6069
  %v6071 = vsel %vm525, %v5915, 0.0
  %v6072 = vadd.f32 %v6070, %v6071
  %v6073 = vsel %vm525, %v5917, 0.0
  %v6074 = vadd.f32 %v6072, %v6073
  %v6075 = vsel %vm525, %v5920, 0.0
  %v6076 = vadd.f32 %v6074, %v6075
  %v6077 = vsel %vm525, %v5922, 0.0
  %v6078 = vadd.f32 %v6076, %v6077
  %v6079 = vsel %vm525, %v5925, 0.0
  %v6080 = vadd.f32 %v6078, %v6079
  %v6081 = vsel %vm525, %v5927, 0.0
  %v6082 = vadd.f32 %v6080, %v6081
  %v6083 = vsel %vm525, %v5930, 0.0
  %v6084 = vadd.f32 %v6082, %v6083
  %v6085 = vsel %vm525, %v5932, 0.0
  %v6086 = vadd.f32 %v6084, %v6085
  %v6087 = vsel %vm525, %v5935, 0.0
  %v6088 = vadd.f32 %v6086, %v6087
  %v6089 = vsel %vm525, %v5937, 0.0
  %v6090 = vadd.f32 %v6088, %v6089
  %v6091 = vsel %vm525, %v5940, 0.0
  %v6092 = vadd.f32 %v6090, %v6091
  %v6093 = vsel %vm525, %v5942, 0.0
  %v6094 = vadd.f32 %v6092, %v6093
  %v6095 = vsel %vm525, %v5945, 0.0
  %v6096 = vadd.f32 %v6094, %v6095
  %v6097 = vsel %vm525, %v5947, 0.0
  %v6098 = vadd.f32 %v6096, %v6097
  %v6099 = vsel %vm525, %v5950, 0.0
  %v6100 = vadd.f32 %v6098, %v6099
  %v6101 = vsel %vm525, %v5952, 0.0
  %v6102 = vadd.f32 %v6100, %v6101
  %v6103 = vsel %vm525, %v5955, 0.0
  %v6104 = vadd.f32 %v6102, %v6103
  %v6105 = vsel %vm525, %v5957, 0.0
  %v6106 = vadd.f32 %v6104, %v6105
  %v6107 = vsel %vm525, %v5960, 0.0
  %v6108 = vadd.f32 %v6106, %v6107
  %v6109 = vsel %vm525, %v5962, 0.0
  %v6110 = vadd.f32 %v6108, %v6109
  %v6111 = vsel %vm525, %v5965, 0.0
  %v6112 = vadd.f32 %v6110, %v6111
  %v6113 = vsel %vm525, %v5967, 0.0
  %v6114 = vadd.f32 %v6112, %v6113
  %v6115 = vsel %vm525, %v5970, 0.0
  %v6116 = vadd.f32 %v6114, %v6115
  %v6117 = vsel %vm525, %v5972, 0.0
  %v6118 = vadd.f32 %v6116, %v6117
  %v6119 = vsel %vm525, %v5975, 0.0
  %v6120 = vadd.f32 %v6118, %v6119
  %v6121 = vsel %vm525, %v5977, 0.0
  %v6122 = vadd.f32 %v6120, %v6121
  %v6123 = vsel %vm525, %v5980, 0.0
  %v6124 = vadd.f32 %v6122, %v6123
  %v6125 = vsel %vm525, %v5982, 0.0
  %v6126 = vadd.f32 %v6124, %v6125
  %v6127 = vsel %vm525, %v5985, 0.0
  %v6128 = vadd.f32 %v6126, %v6127
  %v6129 = vsel %vm525, %v5987, 0.0
  %v6130 = vadd.f32 %v6128, %v6129
  %v6131 = vsel %vm525, %v5990, 0.0
  %v6132 = vadd.f32 %v6130, %v6131
  %v6133 = vsel %vm525, %v5992, 0.0
  %v6134 = vadd.f32 %v6132, %v6133
  %v6135 = vsel %vm525, %v5995, 0.0
  %v6136 = vadd.f32 %v6134, %v6135
  %v6137 = vsel %vm525, %v5997, 0.0
  %v6138 = vadd.f32 %v6136, %v6137
  %v6139 = vsel %vm525, %v6000, 0.0
  %v6140 = vadd.f32 %v6138, %v6139
  %v6141 = vsel %vm525, %v6002, 0.0
  %v6142 = vadd.f32 %v6140, %v6141
  %v6143 = vsel %vm525, %v6005, 0.0
  %v6144 = vadd.f32 %v6142, %v6143
  %v6145 = vsel %vm525, %v6007, 0.0
  %v6146 = vadd.f32 %v6144, %v6145
  %v6147 = vsel %vm525, %v6010, 0.0
  %v6148 = vadd.f32 %v6146, %v6147
  %v6149 = vsel %vm525, %v6012, 0.0
  %v6150 = vadd.f32 %v6148, %v6149
  %v6151 = vsel %vm525, %v6015, 0.0
  %v6152 = vadd.f32 %v6150, %v6151
  %v6153 = vsel %vm525, %v6017, 0.0
  %v6154 = vadd.f32 %v6152, %v6153
  %v6155 = vsel %vm525, %v6020, 0.0
  %v6156 = vadd.f32 %v6154, %v6155
  %v6157 = vsel %vm525, %v6022, 0.0
  %v6158 = vadd.f32 %v6156, %v6157
  %v6159 = vsel %vm525, %v6025, 0.0
  %v6160 = vadd.f32 %v6158, %v6159
  %v6161 = vsel %vm525, %v6027, 0.0
  %v6162 = vadd.f32 %v6160, %v6161
  %v6163 = vsel %vm525, %v6030, 0.0
  %v6164 = vadd.f32 %v6162, %v6163
  %v6165 = vsel %vm525, %v6032, 0.0
  %v6166 = vadd.f32 %v6164, %v6165
  %v6167 = vsel %vm525, %v6035, 0.0
  %v6168 = vadd.f32 %v6166, %v6167
  %v6169 = vsel %vm525, %v6037, 0.0
  %v6170 = vadd.f32 %v6168, %v6169
  %v6171 = vsel %vm525, %v6040, 0.0
  %v6172 = vadd.f32 %v6170, %v6171
  %v6173 = vsel %vm525, %v6042, 0.0
  %v6174 = vadd.f32 %v6172, %v6173
  %v6175 = vsel %vm525, %v6045, 0.0
  %v6176 = vadd.f32 %v6174, %v6175
  %v6177 = vsel %vm525, %v6047, 0.0
  %v6178 = vadd.f32 %v6176, %v6177
  %v6179 = vsel %vm525, %v6050, 0.0
  %v6180 = vadd.f32 %v6178, %v6179
  %v6181 = vsel %vm525, %v6052, 0.0
  %v6182 = vadd.f32 %v6180, %v6181
  %v6183 = vsel %vm525, %v6055, 0.0
  %v6184 = vadd.f32 %v6182, %v6183
  %v6185 = vsel %vm525, %v6057, 0.0
  %v6186 = vadd.f32 %v6184, %v6185
  %v6187 = vsel %vm525, %v6060, 0.0
  %v6188 = vadd.f32 %v6186, %v6187
  %v6189 = vsel %vm525, %v6062, 0.0
  %v6190 = vadd.f32 %v6188, %v6189
  %v6191 = vrot.slane %v6190, 4
  %v6192 = vadd.f32 %v6190, %v6191
  %v6193 = vrot.slane %v6192, 2
  %v6194 = vadd.f32 %v6192, %v6193
  %v6195 = vrot.slane %v6194, 1
  %v6196 = vadd.f32 %v6194, %v6195
  %v6197 = vmul.f32 %v6196, 0.001953125
  %v6198 = vsub.f32 %v5905, %v6197
  %v6199 = vsub.f32 %v5907, %v6197
  %v6200 = vsub.f32 %v5910, %v6197
  %v6201 = vsub.f32 %v5912, %v6197
  %v6202 = vsub.f32 %v5915, %v6197
  %v6203 = vsub.f32 %v5917, %v6197
  %v6204 = vsub.f32 %v5920, %v6197
  %v6205 = vsub.f32 %v5922, %v6197
  %v6206 = vsub.f32 %v5925, %v6197
  %v6207 = vsub.f32 %v5927, %v6197
  %v6208 = vsub.f32 %v5930, %v6197
  %v6209 = vsub.f32 %v5932, %v6197
  %v6210 = vsub.f32 %v5935, %v6197
  %v6211 = vsub.f32 %v5937, %v6197
  %v6212 = vsub.f32 %v5940, %v6197
  %v6213 = vsub.f32 %v5942, %v6197
  %v6214 = vsub.f32 %v5945, %v6197
  %v6215 = vsub.f32 %v5947, %v6197
  %v6216 = vsub.f32 %v5950, %v6197
  %v6217 = vsub.f32 %v5952, %v6197
  %v6218 = vsub.f32 %v5955, %v6197
  %v6219 = vsub.f32 %v5957, %v6197
  %v6220 = vsub.f32 %v5960, %v6197
  %v6221 = vsub.f32 %v5962, %v6197
  %v6222 = vsub.f32 %v5965, %v6197
  %v6223 = vsub.f32 %v5967, %v6197
  %v6224 = vsub.f32 %v5970, %v6197
  %v6225 = vsub.f32 %v5972, %v6197
  %v6226 = vsub.f32 %v5975, %v6197
  %v6227 = vsub.f32 %v5977, %v6197
  %v6228 = vsub.f32 %v5980, %v6197
  %v6229 = vsub.f32 %v5982, %v6197
  %v6230 = vsub.f32 %v5985, %v6197
  %v6231 = vsub.f32 %v5987, %v6197
  %v6232 = vsub.f32 %v5990, %v6197
  %v6233 = vsub.f32 %v5992, %v6197
  %v6234 = vsub.f32 %v5995, %v6197
  %v6235 = vsub.f32 %v5997, %v6197
  %v6236 = vsub.f32 %v6000, %v6197
  %v6237 = vsub.f32 %v6002, %v6197
  %v6238 = vsub.f32 %v6005, %v6197
  %v6239 = vsub.f32 %v6007, %v6197
  %v6240 = vsub.f32 %v6010, %v6197
  %v6241 = vsub.f32 %v6012, %v6197
  %v6242 = vsub.f32 %v6015, %v6197
  %v6243 = vsub.f32 %v6017, %v6197
  %v6244 = vsub.f32 %v6020, %v6197
  %v6245 = vsub.f32 %v6022, %v6197
  %v6246 = vsub.f32 %v6025, %v6197
  %v6247 = vsub.f32 %v6027, %v6197
  %v6248 = vsub.f32 %v6030, %v6197
  %v6249 = vsub.f32 %v6032, %v6197
  %v6250 = vsub.f32 %v6035, %v6197
  %v6251 = vsub.f32 %v6037, %v6197
  %v6252 = vsub.f32 %v6040, %v6197
  %v6253 = vsub.f32 %v6042, %v6197
  %v6254 = vsub.f32 %v6045, %v6197
  %v6255 = vsub.f32 %v6047, %v6197
  %v6256 = vsub.f32 %v6050, %v6197
  %v6257 = vsub.f32 %v6052, %v6197
  %v6258 = vsub.f32 %v6055, %v6197
  %v6259 = vsub.f32 %v6057, %v6197
  %v6260 = vsub.f32 %v6060, %v6197
  %v6261 = vsub.f32 %v6062, %v6197
  %v6262 = vmul.f32 %v6198, %v6198
  %v6263 = vmul.f32 %v6199, %v6199
  %v6264 = vmul.f32 %v6200, %v6200
  %v6265 = vmul.f32 %v6201, %v6201
  %v6266 = vmul.f32 %v6202, %v6202
  %v6267 = vmul.f32 %v6203, %v6203
  %v6268 = vmul.f32 %v6204, %v6204
  %v6269 = vmul.f32 %v6205, %v6205
  %v6270 = vmul.f32 %v6206, %v6206
  %v6271 = vmul.f32 %v6207, %v6207
  %v6272 = vmul.f32 %v6208, %v6208
  %v6273 = vmul.f32 %v6209, %v6209
  %v6274 = vmul.f32 %v6210, %v6210
  %v6275 = vmul.f32 %v6211, %v6211
  %v6276 = vmul.f32 %v6212, %v6212
  %v6277 = vmul.f32 %v6213, %v6213
  %v6278 = vmul.f32 %v6214, %v6214
  %v6279 = vmul.f32 %v6215, %v6215
  %v6280 = vmul.f32 %v6216, %v6216
  %v6281 = vmul.f32 %v6217, %v6217
  %v6282 = vmul.f32 %v6218, %v6218
  %v6283 = vmul.f32 %v6219, %v6219
  %v6284 = vmul.f32 %v6220, %v6220
  %v6285 = vmul.f32 %v6221, %v6221
  %v6286 = vmul.f32 %v6222, %v6222
  %v6287 = vmul.f32 %v6223, %v6223
  %v6288 = vmul.f32 %v6224, %v6224
  %v6289 = vmul.f32 %v6225, %v6225
  %v6290 = vmul.f32 %v6226, %v6226
  %v6291 = vmul.f32 %v6227, %v6227
  %v6292 = vmul.f32 %v6228, %v6228
  %v6293 = vmul.f32 %v6229, %v6229
  %v6294 = vmul.f32 %v6230, %v6230
  %v6295 = vmul.f32 %v6231, %v6231
  %v6296 = vmul.f32 %v6232, %v6232
  %v6297 = vmul.f32 %v6233, %v6233
  %v6298 = vmul.f32 %v6234, %v6234
  %v6299 = vmul.f32 %v6235, %v6235
  %v6300 = vmul.f32 %v6236, %v6236
  %v6301 = vmul.f32 %v6237, %v6237
  %v6302 = vmul.f32 %v6238, %v6238
  %v6303 = vmul.f32 %v6239, %v6239
  %v6304 = vmul.f32 %v6240, %v6240
  %v6305 = vmul.f32 %v6241, %v6241
  %v6306 = vmul.f32 %v6242, %v6242
  %v6307 = vmul.f32 %v6243, %v6243
  %v6308 = vmul.f32 %v6244, %v6244
  %v6309 = vmul.f32 %v6245, %v6245
  %v6310 = vmul.f32 %v6246, %v6246
  %v6311 = vmul.f32 %v6247, %v6247
  %v6312 = vmul.f32 %v6248, %v6248
  %v6313 = vmul.f32 %v6249, %v6249
  %v6314 = vmul.f32 %v6250, %v6250
  %v6315 = vmul.f32 %v6251, %v6251
  %v6316 = vmul.f32 %v6252, %v6252
  %v6317 = vmul.f32 %v6253, %v6253
  %v6318 = vmul.f32 %v6254, %v6254
  %v6319 = vmul.f32 %v6255, %v6255
  %v6320 = vmul.f32 %v6256, %v6256
  %v6321 = vmul.f32 %v6257, %v6257
  %v6322 = vmul.f32 %v6258, %v6258
  %v6323 = vmul.f32 %v6259, %v6259
  %v6324 = vmul.f32 %v6260, %v6260
  %v6325 = vmul.f32 %v6261, %v6261
  %v6326 = vsel %vm525, %v6262, 0.0
  %v6327 = vsel %vm525, %v6263, 0.0
  %v6328 = vadd.f32 %v6326, %v6327
  %v6329 = vsel %vm525, %v6264, 0.0
  %v6330 = vadd.f32 %v6328, %v6329
  %v6331 = vsel %vm525, %v6265, 0.0
  %v6332 = vadd.f32 %v6330, %v6331
  %v6333 = vsel %vm525, %v6266, 0.0
  %v6334 = vadd.f32 %v6332, %v6333
  %v6335 = vsel %vm525, %v6267, 0.0
  %v6336 = vadd.f32 %v6334, %v6335
  %v6337 = vsel %vm525, %v6268, 0.0
  %v6338 = vadd.f32 %v6336, %v6337
  %v6339 = vsel %vm525, %v6269, 0.0
  %v6340 = vadd.f32 %v6338, %v6339
  %v6341 = vsel %vm525, %v6270, 0.0
  %v6342 = vadd.f32 %v6340, %v6341
  %v6343 = vsel %vm525, %v6271, 0.0
  %v6344 = vadd.f32 %v6342, %v6343
  %v6345 = vsel %vm525, %v6272, 0.0
  %v6346 = vadd.f32 %v6344, %v6345
  %v6347 = vsel %vm525, %v6273, 0.0
  %v6348 = vadd.f32 %v6346, %v6347
  %v6349 = vsel %vm525, %v6274, 0.0
  %v6350 = vadd.f32 %v6348, %v6349
  %v6351 = vsel %vm525, %v6275, 0.0
  %v6352 = vadd.f32 %v6350, %v6351
  %v6353 = vsel %vm525, %v6276, 0.0
  %v6354 = vadd.f32 %v6352, %v6353
  %v6355 = vsel %vm525, %v6277, 0.0
  %v6356 = vadd.f32 %v6354, %v6355
  %v6357 = vsel %vm525, %v6278, 0.0
  %v6358 = vadd.f32 %v6356, %v6357
  %v6359 = vsel %vm525, %v6279, 0.0
  %v6360 = vadd.f32 %v6358, %v6359
  %v6361 = vsel %vm525, %v6280, 0.0
  %v6362 = vadd.f32 %v6360, %v6361
  %v6363 = vsel %vm525, %v6281, 0.0
  %v6364 = vadd.f32 %v6362, %v6363
  %v6365 = vsel %vm525, %v6282, 0.0
  %v6366 = vadd.f32 %v6364, %v6365
  %v6367 = vsel %vm525, %v6283, 0.0
  %v6368 = vadd.f32 %v6366, %v6367
  %v6369 = vsel %vm525, %v6284, 0.0
  %v6370 = vadd.f32 %v6368, %v6369
  %v6371 = vsel %vm525, %v6285, 0.0
  %v6372 = vadd.f32 %v6370, %v6371
  %v6373 = vsel %vm525, %v6286, 0.0
  %v6374 = vadd.f32 %v6372, %v6373
  %v6375 = vsel %vm525, %v6287, 0.0
  %v6376 = vadd.f32 %v6374, %v6375
  %v6377 = vsel %vm525, %v6288, 0.0
  %v6378 = vadd.f32 %v6376, %v6377
  %v6379 = vsel %vm525, %v6289, 0.0
  %v6380 = vadd.f32 %v6378, %v6379
  %v6381 = vsel %vm525, %v6290, 0.0
  %v6382 = vadd.f32 %v6380, %v6381
  %v6383 = vsel %vm525, %v6291, 0.0
  %v6384 = vadd.f32 %v6382, %v6383
  %v6385 = vsel %vm525, %v6292, 0.0
  %v6386 = vadd.f32 %v6384, %v6385
  %v6387 = vsel %vm525, %v6293, 0.0
  %v6388 = vadd.f32 %v6386, %v6387
  %v6389 = vsel %vm525, %v6294, 0.0
  %v6390 = vadd.f32 %v6388, %v6389
  %v6391 = vsel %vm525, %v6295, 0.0
  %v6392 = vadd.f32 %v6390, %v6391
  %v6393 = vsel %vm525, %v6296, 0.0
  %v6394 = vadd.f32 %v6392, %v6393
  %v6395 = vsel %vm525, %v6297, 0.0
  %v6396 = vadd.f32 %v6394, %v6395
  %v6397 = vsel %vm525, %v6298, 0.0
  %v6398 = vadd.f32 %v6396, %v6397
  %v6399 = vsel %vm525, %v6299, 0.0
  %v6400 = vadd.f32 %v6398, %v6399
  %v6401 = vsel %vm525, %v6300, 0.0
  %v6402 = vadd.f32 %v6400, %v6401
  %v6403 = vsel %vm525, %v6301, 0.0
  %v6404 = vadd.f32 %v6402, %v6403
  %v6405 = vsel %vm525, %v6302, 0.0
  %v6406 = vadd.f32 %v6404, %v6405
  %v6407 = vsel %vm525, %v6303, 0.0
  %v6408 = vadd.f32 %v6406, %v6407
  %v6409 = vsel %vm525, %v6304, 0.0
  %v6410 = vadd.f32 %v6408, %v6409
  %v6411 = vsel %vm525, %v6305, 0.0
  %v6412 = vadd.f32 %v6410, %v6411
  %v6413 = vsel %vm525, %v6306, 0.0
  %v6414 = vadd.f32 %v6412, %v6413
  %v6415 = vsel %vm525, %v6307, 0.0
  %v6416 = vadd.f32 %v6414, %v6415
  %v6417 = vsel %vm525, %v6308, 0.0
  %v6418 = vadd.f32 %v6416, %v6417
  %v6419 = vsel %vm525, %v6309, 0.0
  %v6420 = vadd.f32 %v6418, %v6419
  %v6421 = vsel %vm525, %v6310, 0.0
  %v6422 = vadd.f32 %v6420, %v6421
  %v6423 = vsel %vm525, %v6311, 0.0
  %v6424 = vadd.f32 %v6422, %v6423
  %v6425 = vsel %vm525, %v6312, 0.0
  %v6426 = vadd.f32 %v6424, %v6425
  %v6427 = vsel %vm525, %v6313, 0.0
  %v6428 = vadd.f32 %v6426, %v6427
  %v6429 = vsel %vm525, %v6314, 0.0
  %v6430 = vadd.f32 %v6428, %v6429
  %v6431 = vsel %vm525, %v6315, 0.0
  %v6432 = vadd.f32 %v6430, %v6431
  %v6433 = vsel %vm525, %v6316, 0.0
  %v6434 = vadd.f32 %v6432, %v6433
  %v6435 = vsel %vm525, %v6317, 0.0
  %v6436 = vadd.f32 %v6434, %v6435
  %v6437 = vsel %vm525, %v6318, 0.0
  %v6438 = vadd.f32 %v6436, %v6437
  %v6439 = vsel %vm525, %v6319, 0.0
  %v6440 = vadd.f32 %v6438, %v6439
  %v6441 = vsel %vm525, %v6320, 0.0
  %v6442 = vadd.f32 %v6440, %v6441
  %v6443 = vsel %vm525, %v6321, 0.0
  %v6444 = vadd.f32 %v6442, %v6443
  %v6445 = vsel %vm525, %v6322, 0.0
  %v6446 = vadd.f32 %v6444, %v6445
  %v6447 = vsel %vm525, %v6323, 0.0
  %v6448 = vadd.f32 %v6446, %v6447
  %v6449 = vsel %vm525, %v6324, 0.0
  %v6450 = vadd.f32 %v6448, %v6449
  %v6451 = vsel %vm525, %v6325, 0.0
  %v6452 = vadd.f32 %v6450, %v6451
  %v6453 = vrot.slane %v6452, 4
  %v6454 = vadd.f32 %v6452, %v6453
  %v6455 = vrot.slane %v6454, 2
  %v6456 = vadd.f32 %v6454, %v6455
  %v6457 = vrot.slane %v6456, 1
  %v6458 = vadd.f32 %v6456, %v6457
  %v6459 = vmul.f32 %v6458, 0.001953125
  %v6460 = vld [vmem:[%s7] sm:$0x1]
  %v6461 = vadd.f32 %v6459, 1e-05
  %v6462 = vrsqrt.pop %v6461
  %v6463 = vmul.f32 %v6462, %v6461
  %v6464 = vmul.f32 %v6463, %v6462
  %v6465 = vmul.f32 0.5, %v6464
  %v6466 = vsub.f32 1.5, %v6465
  %v6467 = vmul.f32 %v6462, %v6466
  %vm6468 = vweird.f32 %v6461
  %vm6469 = vweird.f32 %v6462
  %vm6470 = vmor %vm6468, %vm6469
  %v6471 = vsel %vm6470, %v6462, %v6467
  %v6472 = vmul.f32 %v6460, %v6471
  %v6473 = vperm.slane %v6472, 0
  %v6474 = vmul.f32 %v6198, %v6473
  %v6475 = vmul.f32 %v6199, %v6473
  %v6476 = vmul.f32 %v6200, %v6473
  %v6477 = vmul.f32 %v6201, %v6473
  %v6478 = vmul.f32 %v6202, %v6473
  %v6479 = vmul.f32 %v6203, %v6473
  %v6480 = vmul.f32 %v6204, %v6473
  %v6481 = vmul.f32 %v6205, %v6473
  %v6482 = vmul.f32 %v6206, %v6473
  %v6483 = vmul.f32 %v6207, %v6473
  %v6484 = vmul.f32 %v6208, %v6473
  %v6485 = vmul.f32 %v6209, %v6473
  %v6486 = vmul.f32 %v6210, %v6473
  %v6487 = vmul.f32 %v6211, %v6473
  %v6488 = vmul.f32 %v6212, %v6473
  %v6489 = vmul.f32 %v6213, %v6473
  %v6490 = vmul.f32 %v6214, %v6473
  %v6491 = vmul.f32 %v6215, %v6473
  %v6492 = vmul.f32 %v6216, %v6473
  %v6493 = vmul.f32 %v6217, %v6473
  %v6494 = vmul.f32 %v6218, %v6473
  %v6495 = vmul.f32 %v6219, %v6473
  %v6496 = vmul.f32 %v6220, %v6473
  %v6497 = vmul.f32 %v6221, %v6473
  %v6498 = vmul.f32 %v6222, %v6473
  %v6499 = vmul.f32 %v6223, %v6473
  %v6500 = vmul.f32 %v6224, %v6473
  %v6501 = vmul.f32 %v6225, %v6473
  %v6502 = vmul.f32 %v6226, %v6473
  %v6503 = vmul.f32 %v6227, %v6473
  %v6504 = vmul.f32 %v6228, %v6473
  %v6505 = vmul.f32 %v6229, %v6473
  %v6506 = vmul.f32 %v6230, %v6473
  %v6507 = vmul.f32 %v6231, %v6473
  %v6508 = vmul.f32 %v6232, %v6473
  %v6509 = vmul.f32 %v6233, %v6473
  %v6510 = vmul.f32 %v6234, %v6473
  %v6511 = vmul.f32 %v6235, %v6473
  %v6512 = vmul.f32 %v6236, %v6473
  %v6513 = vmul.f32 %v6237, %v6473
  %v6514 = vmul.f32 %v6238, %v6473
  %v6515 = vmul.f32 %v6239, %v6473
  %v6516 = vmul.f32 %v6240, %v6473
  %v6517 = vmul.f32 %v6241, %v6473
  %v6518 = vmul.f32 %v6242, %v6473
  %v6519 = vmul.f32 %v6243, %v6473
  %v6520 = vmul.f32 %v6244, %v6473
  %v6521 = vmul.f32 %v6245, %v6473
  %v6522 = vmul.f32 %v6246, %v6473
  %v6523 = vmul.f32 %v6247, %v6473
  %v6524 = vmul.f32 %v6248, %v6473
  %v6525 = vmul.f32 %v6249, %v6473
  %v6526 = vmul.f32 %v6250, %v6473
  %v6527 = vmul.f32 %v6251, %v6473
  %v6528 = vmul.f32 %v6252, %v6473
  %v6529 = vmul.f32 %v6253, %v6473
  %v6530 = vmul.f32 %v6254, %v6473
  %v6531 = vmul.f32 %v6255, %v6473
  %v6532 = vmul.f32 %v6256, %v6473
  %v6533 = vmul.f32 %v6257, %v6473
  %v6534 = vmul.f32 %v6258, %v6473
  %v6535 = vmul.f32 %v6259, %v6473
  %v6536 = vmul.f32 %v6260, %v6473
  %v6537 = vmul.f32 %v6261, %v6473
  %v6538 = vld [vmem:[%s7 + $0x1] sm:$0x1]
  %v6539 = vperm.slane %v6538, 0
  %v6540 = vadd.f32 %v6474, %v6539
  %v6541 = vadd.f32 %v6475, %v6539
  %v6542 = vadd.f32 %v6476, %v6539
  %v6543 = vadd.f32 %v6477, %v6539
  %v6544 = vadd.f32 %v6478, %v6539
  %v6545 = vadd.f32 %v6479, %v6539
  %v6546 = vadd.f32 %v6480, %v6539
  %v6547 = vadd.f32 %v6481, %v6539
  %v6548 = vadd.f32 %v6482, %v6539
  %v6549 = vadd.f32 %v6483, %v6539
  %v6550 = vadd.f32 %v6484, %v6539
  %v6551 = vadd.f32 %v6485, %v6539
  %v6552 = vadd.f32 %v6486, %v6539
  %v6553 = vadd.f32 %v6487, %v6539
  %v6554 = vadd.f32 %v6488, %v6539
  %v6555 = vadd.f32 %v6489, %v6539
  %v6556 = vadd.f32 %v6490, %v6539
  %v6557 = vadd.f32 %v6491, %v6539
  %v6558 = vadd.f32 %v6492, %v6539
  %v6559 = vadd.f32 %v6493, %v6539
  %v6560 = vadd.f32 %v6494, %v6539
  %v6561 = vadd.f32 %v6495, %v6539
  %v6562 = vadd.f32 %v6496, %v6539
  %v6563 = vadd.f32 %v6497, %v6539
  %v6564 = vadd.f32 %v6498, %v6539
  %v6565 = vadd.f32 %v6499, %v6539
  %v6566 = vadd.f32 %v6500, %v6539
  %v6567 = vadd.f32 %v6501, %v6539
  %v6568 = vadd.f32 %v6502, %v6539
  %v6569 = vadd.f32 %v6503, %v6539
  %v6570 = vadd.f32 %v6504, %v6539
  %v6571 = vadd.f32 %v6505, %v6539
  %v6572 = vadd.f32 %v6506, %v6539
  %v6573 = vadd.f32 %v6507, %v6539
  %v6574 = vadd.f32 %v6508, %v6539
  %v6575 = vadd.f32 %v6509, %v6539
  %v6576 = vadd.f32 %v6510, %v6539
  %v6577 = vadd.f32 %v6511, %v6539
  %v6578 = vadd.f32 %v6512, %v6539
  %v6579 = vadd.f32 %v6513, %v6539
  %v6580 = vadd.f32 %v6514, %v6539
  %v6581 = vadd.f32 %v6515, %v6539
  %v6582 = vadd.f32 %v6516, %v6539
  %v6583 = vadd.f32 %v6517, %v6539
  %v6584 = vadd.f32 %v6518, %v6539
  %v6585 = vadd.f32 %v6519, %v6539
  %v6586 = vadd.f32 %v6520, %v6539
  %v6587 = vadd.f32 %v6521, %v6539
  %v6588 = vadd.f32 %v6522, %v6539
  %v6589 = vadd.f32 %v6523, %v6539
  %v6590 = vadd.f32 %v6524, %v6539
  %v6591 = vadd.f32 %v6525, %v6539
  %v6592 = vadd.f32 %v6526, %v6539
  %v6593 = vadd.f32 %v6527, %v6539
  %v6594 = vadd.f32 %v6528, %v6539
  %v6595 = vadd.f32 %v6529, %v6539
  %v6596 = vadd.f32 %v6530, %v6539
  %v6597 = vadd.f32 %v6531, %v6539
  %v6598 = vadd.f32 %v6532, %v6539
  %v6599 = vadd.f32 %v6533, %v6539
  %v6600 = vadd.f32 %v6534, %v6539
  %v6601 = vadd.f32 %v6535, %v6539
  %v6602 = vadd.f32 %v6536, %v6539
  %v6603 = vadd.f32 %v6537, %v6539
  %v6604 = vadd.f32 %v6540, %v1002
  %v6605 = vadd.f32 %v6541, %v1003
  %v6606 = vadd.f32 %v6542, %v1004
  %v6607 = vadd.f32 %v6543, %v1005
  %v6608 = vadd.f32 %v6544, %v1006
  %v6609 = vadd.f32 %v6545, %v1007
  %v6610 = vadd.f32 %v6546, %v1008
  %v6611 = vadd.f32 %v6547, %v1009
  %v6612 = vadd.f32 %v6548, %v1010
  %v6613 = vadd.f32 %v6549, %v1011
  %v6614 = vadd.f32 %v6550, %v1012
  %v6615 = vadd.f32 %v6551, %v1013
  %v6616 = vadd.f32 %v6552, %v1014
  %v6617 = vadd.f32 %v6553, %v1015
  %v6618 = vadd.f32 %v6554, %v1016
  %v6619 = vadd.f32 %v6555, %v1017
  %v6620 = vadd.f32 %v6556, %v1018
  %v6621 = vadd.f32 %v6557, %v1019
  %v6622 = vadd.f32 %v6558, %v1020
  %v6623 = vadd.f32 %v6559, %v1021
  %v6624 = vadd.f32 %v6560, %v1022
  %v6625 = vadd.f32 %v6561, %v1023
  %v6626 = vadd.f32 %v6562, %v1024
  %v6627 = vadd.f32 %v6563, %v1025
  %v6628 = vadd.f32 %v6564, %v1026
  %v6629 = vadd.f32 %v6565, %v1027
  %v6630 = vadd.f32 %v6566, %v1028
  %v6631 = vadd.f32 %v6567, %v1029
  %v6632 = vadd.f32 %v6568, %v1030
  %v6633 = vadd.f32 %v6569, %v1031
  %v6634 = vadd.f32 %v6570, %v1032
  %v6635 = vadd.f32 %v6571, %v1033
  %v6636 = vadd.f32 %v6572, %v1034
  %v6637 = vadd.f32 %v6573, %v1035
  %v6638 = vadd.f32 %v6574, %v1036
  %v6639 = vadd.f32 %v6575, %v1037
  %v6640 = vadd.f32 %v6576, %v1038
  %v6641 = vadd.f32 %v6577, %v1039
  %v6642 = vadd.f32 %v6578, %v1040
  %v6643 = vadd.f32 %v6579, %v1041
  %v6644 = vadd.f32 %v6580, %v1042
  %v6645 = vadd.f32 %v6581, %v1043
  %v6646 = vadd.f32 %v6582, %v1044
  %v6647 = vadd.f32 %v6583, %v1045
  %v6648 = vadd.f32 %v6584, %v1046
  %v6649 = vadd.f32 %v6585, %v1047
  %v6650 = vadd.f32 %v6586, %v1048
  %v6651 = vadd.f32 %v6587, %v1049
  %v6652 = vadd.f32 %v6588, %v1050
  %v6653 = vadd.f32 %v6589, %v1051
  %v6654 = vadd.f32 %v6590, %v1052
  %v6655 = vadd.f32 %v6591, %v1053
  %v6656 = vadd.f32 %v6592, %v1054
  %v6657 = vadd.f32 %v6593, %v1055
  %v6658 = vadd.f32 %v6594, %v1056
  %v6659 = vadd.f32 %v6595, %v1057
  %v6660 = vadd.f32 %v6596, %v1058
  %v6661 = vadd.f32 %v6597, %v1059
  %v6662 = vadd.f32 %v6598, %v1060
  %v6663 = vadd.f32 %v6599, %v1061
  %v6664 = vadd.f32 %v6600, %v1062
  %v6665 = vadd.f32 %v6601, %v1063
  %v6666 = vadd.f32 %v6602, %v1064
  %v6667 = vadd.f32 %v6603, %v1065
  %6668 = vst.msk [vmem:[%s8] sm:$0xff] %vm525, %v6604
  %6669 = vst.msk [vmem:[%s8 + $0x8] sm:$0xff] %vm525, %v6605
  %6670 = vst.msk [vmem:[%s8 + $0x10] sm:$0xff] %vm525, %v6606
  %6671 = vst.msk [vmem:[%s8 + $0x18] sm:$0xff] %vm525, %v6607
  %6672 = vst.msk [vmem:[%s8 + $0x20] sm:$0xff] %vm525, %v6608
  %6673 = vst.msk [vmem:[%s8 + $0x28] sm:$0xff] %vm525, %v6609
  %6674 = vst.msk [vmem:[%s8 + $0x30] sm:$0xff] %vm525, %v6610
  %6675 = vst.msk [vmem:[%s8 + $0x38] sm:$0xff] %vm525, %v6611
  %6676 = vst.msk [vmem:[%s8 + $0x40] sm:$0xff] %vm525, %v6612
  %6677 = vst.msk [vmem:[%s8 + $0x48] sm:$0xff] %vm525, %v6613
  %6678 = vst.msk [vmem:[%s8 + $0x50] sm:$0xff] %vm525, %v6614
  %6679 = vst.msk [vmem:[%s8 + $0x58] sm:$0xff] %vm525, %v6615
  %6680 = vst.msk [vmem:[%s8 + $0x60] sm:$0xff] %vm525, %v6616
  %6681 = vst.msk [vmem:[%s8 + $0x68] sm:$0xff] %vm525, %v6617
  %6682 = vst.msk [vmem:[%s8 + $0x70] sm:$0xff] %vm525, %v6618
  %6683 = vst.msk [vmem:[%s8 + $0x78] sm:$0xff] %vm525, %v6619
  %6684 = vst.msk [vmem:[%s8 + $0x80] sm:$0xff] %vm525, %v6620
  %6685 = vst.msk [vmem:[%s8 + $0x88] sm:$0xff] %vm525, %v6621
  %6686 = vst.msk [vmem:[%s8 + $0x90] sm:$0xff] %vm525, %v6622
  %6687 = vst.msk [vmem:[%s8 + $0x98] sm:$0xff] %vm525, %v6623
  %6688 = vst.msk [vmem:[%s8 + $0xa0] sm:$0xff] %vm525, %v6624
  %6689 = vst.msk [vmem:[%s8 + $0xa8] sm:$0xff] %vm525, %v6625
  %6690 = vst.msk [vmem:[%s8 + $0xb0] sm:$0xff] %vm525, %v6626
  %6691 = vst.msk [vmem:[%s8 + $0xb8] sm:$0xff] %vm525, %v6627
  %6692 = vst.msk [vmem:[%s8 + $0xc0] sm:$0xff] %vm525, %v6628
  %6693 = vst.msk [vmem:[%s8 + $0xc8] sm:$0xff] %vm525, %v6629
  %6694 = vst.msk [vmem:[%s8 + $0xd0] sm:$0xff] %vm525, %v6630
  %6695 = vst.msk [vmem:[%s8 + $0xd8] sm:$0xff] %vm525, %v6631
  %6696 = vst.msk [vmem:[%s8 + $0xe0] sm:$0xff] %vm525, %v6632
  %6697 = vst.msk [vmem:[%s8 + $0xe8] sm:$0xff] %vm525, %v6633
  %6698 = vst.msk [vmem:[%s8 + $0xf0] sm:$0xff] %vm525, %v6634
  %6699 = vst.msk [vmem:[%s8 + $0xf8] sm:$0xff] %vm525, %v6635
  %6700 = vst.msk [vmem:[%s8 + $0x100] sm:$0xff] %vm525, %v6636
  %6701 = vst.msk [vmem:[%s8 + $0x108] sm:$0xff] %vm525, %v6637
  %6702 = vst.msk [vmem:[%s8 + $0x110] sm:$0xff] %vm525, %v6638
  %6703 = vst.msk [vmem:[%s8 + $0x118] sm:$0xff] %vm525, %v6639
  %6704 = vst.msk [vmem:[%s8 + $0x120] sm:$0xff] %vm525, %v6640
  %6705 = vst.msk [vmem:[%s8 + $0x128] sm:$0xff] %vm525, %v6641
  %6706 = vst.msk [vmem:[%s8 + $0x130] sm:$0xff] %vm525, %v6642
  %6707 = vst.msk [vmem:[%s8 + $0x138] sm:$0xff] %vm525, %v6643
  %6708 = vst.msk [vmem:[%s8 + $0x140] sm:$0xff] %vm525, %v6644
  %6709 = vst.msk [vmem:[%s8 + $0x148] sm:$0xff] %vm525, %v6645
  %6710 = vst.msk [vmem:[%s8 + $0x150] sm:$0xff] %vm525, %v6646
  %6711 = vst.msk [vmem:[%s8 + $0x158] sm:$0xff] %vm525, %v6647
  %6712 = vst.msk [vmem:[%s8 + $0x160] sm:$0xff] %vm525, %v6648
  %6713 = vst.msk [vmem:[%s8 + $0x168] sm:$0xff] %vm525, %v6649
  %6714 = vst.msk [vmem:[%s8 + $0x170] sm:$0xff] %vm525, %v6650
  %6715 = vst.msk [vmem:[%s8 + $0x178] sm:$0xff] %vm525, %v6651
  %6716 = vst.msk [vmem:[%s8 + $0x180] sm:$0xff] %vm525, %v6652
  %6717 = vst.msk [vmem:[%s8 + $0x188] sm:$0xff] %vm525, %v6653
  %6718 = vst.msk [vmem:[%s8 + $0x190] sm:$0xff] %vm525, %v6654
  %6719 = vst.msk [vmem:[%s8 + $0x198] sm:$0xff] %vm525, %v6655
  %6720 = vst.msk [vmem:[%s8 + $0x1a0] sm:$0xff] %vm525, %v6656
  %6721 = vst.msk [vmem:[%s8 + $0x1a8] sm:$0xff] %vm525, %v6657
  %6722 = vst.msk [vmem:[%s8 + $0x1b0] sm:$0xff] %vm525, %v6658
  %6723 = vst.msk [vmem:[%s8 + $0x1b8] sm:$0xff] %vm525, %v6659
  %6724 = vst.msk [vmem:[%s8 + $0x1c0] sm:$0xff] %vm525, %v6660
  %6725 = vst.msk [vmem:[%s8 + $0x1c8] sm:$0xff] %vm525, %v6661
  %6726 = vst.msk [vmem:[%s8 + $0x1d0] sm:$0xff] %vm525, %v6662
  %6727 = vst.msk [vmem:[%s8 + $0x1d8] sm:$0xff] %vm525, %v6663
  %6728 = vst.msk [vmem:[%s8 + $0x1e0] sm:$0xff] %vm525, %v6664
  %6729 = vst.msk [vmem:[%s8 + $0x1e8] sm:$0xff] %vm525, %v6665
  %6730 = vst.msk [vmem:[%s8 + $0x1f0] sm:$0xff] %vm525, %v6666
  %6731 = vst.msk [vmem:[%s8 + $0x1f8] sm:$0xff] %vm525, %v6667
  // Predicated region
  $region34: #{residual_forward.1} parent=0 // pred_check
    _
  $region35: #{residual_forward.1} parent=0 // pred_check_branch
    %6733 = sbr.rel (0) target = $region37
  $region36: #{residual_forward.1} parent=0 // pred_region
    _
  $region37: #{residual_forward.1} parent=0 // pred_fallthru
    _
  // Predicated region
  $region38: #{residual_forward.1} parent=0 // pred_check
    _
  $region39: #{residual_forward.1} parent=0 // pred_check_branch
    %6735 = sbr.rel (0) target = $region41
  $region40: #{residual_forward.1} parent=0 // pred_region
    _
  $region41: #{residual_forward.1} parent=0 // pred_fallthru
    _

</llo_original>
